<compile_context>
chip_gen: v7x
topology: tpu7x:2x2x1
jax: 0.10.0
libtpu: 0.0.40
codegen_flags: <defaults>
</compile_context>

<pallas_src>
import jax
import jax.numpy as jnp
import numpy as np
from jax.experimental import pallas as pl
from jax.experimental.pallas import tpu as pltpu

F32 = jnp.float32
HI = jax.lax.Precision.HIGHEST
_SMEM = pl.BlockSpec(memory_space=pltpu.MemorySpace.SMEM)

_VMEM_LIMIT_CACHE = None


def _vmem_limit():
    """Per-generation VMEM limit (~60% of physical, capped at 96 MiB)."""
    global _VMEM_LIMIT_CACHE
    if _VMEM_LIMIT_CACHE is None:
        try:
            cap = int(pltpu.get_tpu_info().vmem_capacity_bytes)
        except Exception:
            cap = 64 * 1024 * 1024
        _VMEM_LIMIT_CACHE = max(32 * 1024 * 1024,
                                min(int(cap * 0.6), 96 * 1024 * 1024))
    return _VMEM_LIMIT_CACHE


def _vmem_budget():
    # Per-block data budget (inputs+outputs of one grid step, pre double-buffer).
    return _vmem_limit() // 6


def _cparams(n_grid_axes):
    return pltpu.CompilerParams(
        dimension_semantics=("parallel",) * n_grid_axes,
        vmem_limit_bytes=_vmem_limit())


def _pad_to(n, m):
    return ((n + m - 1) // m) * m


def _rows_for_budget(total_rows, bytes_per_row, budget):
    """Pick an output-row tile (multiple of 8 when tiled) under a VMEM budget."""
    t = max(8, (int(budget) // max(int(bytes_per_row), 1)) // 8 * 8)
    if t >= total_rows:
        return total_rows, 1
    return t, -(-total_rows // t)


def _overlap_blocks(a, rows_per_block, halo, n_blk):
    """(B, C, H, W) -> (B*n_blk, C, rows_per_block+halo, W).

    Block i holds rows [i*rpb, i*rpb + rpb + halo) (zero padded past the end),
    so halo'd row windows become plain, full-extent BlockSpec blocks."""
    B, C, Hr, Wd = a.shape
    need = n_blk * rows_per_block + halo
    if need > Hr:
        a = jnp.pad(a, ((0, 0), (0, 0), (0, need - Hr), (0, 0)))
    blocks = [a[:, :, i * rows_per_block:i * rows_per_block + rows_per_block + halo, :]
              for i in range(n_blk)]
    st = jnp.stack(blocks, axis=1)                 # (B, n_blk, C, rpb+halo, W)
    return st.reshape(B * n_blk, C, rows_per_block + halo, Wd)


# ---------------------------------------------------------------------------
# conv1 (1x1): channel contraction on the MXU, pixels on lanes
# ---------------------------------------------------------------------------

def _conv1x1_kernel(x_ref, w_ref, b_ref, o_ref):
    xb = x_ref[0].astype(F32)                               # (Cin, TN)
    o_ref[0] = jnp.dot(w_ref[...], xb,
                       preferred_element_type=F32) + b_ref[...]


def conv1x1(x_bcn, w, b):
    """x_bcn: (B, Cin, N) pixels-on-lanes (input dtype) -> (B, Cout, Np) f32."""
    B, Cin, N = x_bcn.shape
    Cout = w.shape[0]
    TN = None
    for cand in (2048, 1024, 512):
        if N % cand == 0:
            TN = cand
            break
    if TN is None:
        TN = 1024 if N >= 1024 else _pad_to(N, 128)
    Np = _pad_to(N, TN)
    if Np != N:
        x_bcn = jnp.pad(x_bcn, ((0, 0), (0, 0), (0, Np - N)))
    return pl.pallas_call(
        _conv1x1_kernel,
        out_shape=jax.ShapeDtypeStruct((B, Cout, Np), F32),
        grid=(B, Np // TN),
        in_specs=[pl.BlockSpec((1, Cin, TN), lambda b, j: (b, 0, j)),
                  pl.BlockSpec((Cout, Cin), lambda b, j: (0, 0)),
                  pl.BlockSpec((Cout, 1), lambda b, j: (0, 0))],
        out_specs=pl.BlockSpec((1, Cout, TN), lambda b, j: (b, 0, j)),
        compiler_params=_cparams(2),
    )(x_bcn, w.astype(F32), b.reshape(Cout, 1).astype(F32))


# ---------------------------------------------------------------------------
# conv2: 3x3, stride 2 — 4-phase even/odd split, row-tiled, hoisted slices
# ---------------------------------------------------------------------------

def _conv2_kernel(p00_ref, p01_ref, p10_ref, p11_ref, w_ref, b_ref, o_ref):
    Cout, THo, Wo = o_ref.shape[1], o_ref.shape[2], o_ref.shape[3]
    Cin = p00_ref.shape[1]
    refs = ((p00_ref, p01_ref), (p10_ref, p11_ref))
    accs = [jnp.zeros((THo, Wo), F32) + b_ref[o] for o in range(Cout)]
    for dy in range(3):
        for dx in range(3):
            py, px, ry, rx = dy & 1, dx & 1, dy // 2, dx // 2
            # one shifted load of all input channels per (dy, dx)
            src = refs[py][px][0, :, ry:ry + THo, rx:rx + Wo]   # (Cin, THo, Wo)
            for ci in range(Cin):
                plane = src[ci]
                for o in range(Cout):
                    accs[o] = accs[o] + (
                        w_ref[((o * Cin + ci) * 3 + dy) * 3 + dx] * plane)
    for o in range(Cout):
        o_ref[0, o] = accs[o]


def conv3x3_s2(x, w, b):
    B, Cin, H, W = x.shape
    Cout = w.shape[0]
    Ho, Wo = (H - 3) // 2 + 1, (W - 3) // 2 + 1
    He, We = _pad_to(H, 2), _pad_to(W, 2)
    xe = jnp.pad(x, ((0, 0), (0, 0), (0, He - H), (0, We - W)))
    Hh, Wh = He // 2, We // 2
    bpr = 16 * Cin * Wh + 4 * Cout * Wo           # bytes / output row (in + out)
    THo, n_blk = _rows_for_budget(Ho, bpr, _vmem_budget())
    halo = 1                                      # even-row phases need 1 extra row
    phases = [_overlap_blocks(xe[:, :, py::2, px::2], THo, halo, n_blk)
              for py in (0, 1) for px in (0, 1)]
    Hop = n_blk * THo
    out = pl.pallas_call(
        _conv2_kernel,
        out_shape=jax.ShapeDtypeStruct((B, Cout, Hop, Wo), F32),
        grid=(B, n_blk),
        in_specs=[pl.BlockSpec((1, Cin, THo + halo, Wh),
                               lambda bb, i: (bb * n_blk + i, 0, 0, 0))] * 4
                 + [_SMEM, _SMEM],
        out_specs=pl.BlockSpec((1, Cout, THo, Wo), lambda bb, i: (bb, 0, i, 0)),
        compiler_params=_cparams(2),
    )(*phases, w.reshape(-1).astype(F32), b.astype(F32))
    return out[:, :, :Ho, :]


# ---------------------------------------------------------------------------
# max_pool2d(kernel=7, stride=3): row-phase split + dense vectorised maxima
# ---------------------------------------------------------------------------

def _maxpool_kernel(r0_ref, r1_ref, r2_ref, o_ref):
    C, THp, W7 = o_ref.shape[1], o_ref.shape[2], o_ref.shape[3]
    r0 = r0_ref[0]
    r1 = r1_ref[0]
    r2 = r2_ref[0]                                         # (C, THp+2, W)
    g = jnp.maximum(jnp.maximum(r0[:, 0:THp + 1, :], r1[:, 0:THp + 1, :]),
                    r2[:, 0:THp + 1, :])                   # 3-row group maxima
    colmax = jnp.maximum(jnp.maximum(g[:, 0:THp, :], g[:, 1:THp + 1, :]),
                         r0[:, 2:THp + 2, :])              # 7-row column max
    m = colmax[:, :, 0:W7]
    for dx in range(1, 7):                                 # sliding 7-wide max
        m = jnp.maximum(m, colmax[:, :, dx:dx + W7])
    o_ref[0] = m


def maxpool_7_3(x):
    B, C, H, W = x.shape
    Hp, Wp = (H - 7) // 3 + 1, (W - 7) // 3 + 1
    W7 = W - 6
    bpr = 12 * C * W + 4 * C * W7
    THp, n_blk = _rows_for_budget(Hp, bpr, _vmem_budget())
    halo = 2
    phs = [_overlap_blocks(x[:, :, r::3, :], THp, halo, n_blk) for r in range(3)]
    Hpp = n_blk * THp
    out = pl.pallas_call(
        _maxpool_kernel,
        out_shape=jax.ShapeDtypeStruct((B, C, Hpp, W7), F32),
        grid=(B, n_blk),
        in_specs=[pl.BlockSpec((1, C, THp + halo, W),
                               lambda bb, i: (bb * n_blk + i, 0, 0, 0))] * 3,
        out_specs=pl.BlockSpec((1, C, THp, W7), lambda bb, i: (bb, 0, i, 0)),
        compiler_params=_cparams(2),
    )(*phs)
    # final stride-3 lane subsample: tiny XLA slice on the pooled map
    return out[:, :, :Hp, 0:3 * (Wp - 1) + 1:3]


# ---------------------------------------------------------------------------
# conv3: 3x3, stride 1, padding 1 — row-tiled, hoisted shifted slices
# ---------------------------------------------------------------------------

def _conv3_kernel(v_ref, w_ref, b_ref, o_ref):
    Cout, THc, Wo = o_ref.shape[1], o_ref.shape[2], o_ref.shape[3]
    Cin = v_ref.shape[1]
    accs = [jnp.zeros((THc, Wo), F32) + b_ref[o] for o in range(Cout)]
    for dy in range(3):
        for dx in range(3):
            src = v_ref[0, :, dy:dy + THc, dx:dx + Wo]      # (Cin, THc, Wo)
            for ci in range(Cin):
                plane = src[ci]
                for o in range(Cout):
                    accs[o] = accs[o] + (
                        w_ref[((o * Cin + ci) * 3 + dy) * 3 + dx] * plane)
    for o in range(Cout):
        o_ref[0, o] = accs[o]


def conv3x3_p1(x, w, b):
    B, Cin, H, W = x.shape
    Cout = w.shape[0]
    xp = jnp.pad(x, ((0, 0), (0, 0), (1, 1), (1, 1)))
    bpr = 4 * Cin * (W + 2) + 4 * Cout * W
    THc, n_blk = _rows_for_budget(H, bpr, _vmem_budget())
    halo = 2
    xb = _overlap_blocks(xp, THc, halo, n_blk)
    Hop = n_blk * THc
    out = pl.pallas_call(
        _conv3_kernel,
        out_shape=jax.ShapeDtypeStruct((B, Cout, Hop, W), F32),
        grid=(B, n_blk),
        in_specs=[pl.BlockSpec((1, Cin, THc + halo, W + 2),
                               lambda bb, i: (bb * n_blk + i, 0, 0, 0)),
                  _SMEM, _SMEM],
        out_specs=pl.BlockSpec((1, Cout, THc, W), lambda bb, i: (bb, 0, i, 0)),
        compiler_params=_cparams(2),
    )(xb, w.reshape(-1).astype(F32), b.astype(F32))
    return out[:, :, :H, :]


# ---------------------------------------------------------------------------
# Fused tail: Up(W4@c3) + (W4@Wf)@c1_ + b', sigmoid, gate — writes x.dtype
# ---------------------------------------------------------------------------

def _tail_kernel(x_ref, c1_ref, c3m_ref, ah_ref, awt_ref, wp_ref, bp_ref, o_ref):
    nf, TH, W = o_ref.shape[1], o_ref.shape[2], o_ref.shape[3]
    f = c1_ref.shape[1]
    Wp = awt_ref.shape[0]
    awt = awt_ref[...]                                          # (Wp, W)
    # upsample (row direction) of the W4-projected pooled map: one 2-D matmul
    t = jnp.dot(ah_ref[...], c3m_ref[0],
                preferred_element_type=F32)                     # (TH, nf*Wp)
    c1 = c1_ref[0].astype(F32)                                  # (f, TH, W)
    for o in range(nf):
        up = jnp.dot(t[:, o * Wp:(o + 1) * Wp], awt,
                     preferred_element_type=F32)                # (TH, W)
        acc = up + bp_ref[o]
        for ci in range(f):
            acc = acc + wp_ref[o * f + ci] * c1[ci]
        o_ref[0, o] = (x_ref[0, o].astype(F32)
                       * jax.nn.sigmoid(acc)).astype(o_ref.dtype)


def fused_tail(x, c1_, c3m, Ah, AwT, wprime, bprime):
    B, nf, H, W = x.shape
    f = c1_.shape[1]
    Hp = c3m.shape[1]
    Wp = AwT.shape[0]
    xbytes = x.dtype.itemsize
    bpr = W * (2 * nf * xbytes + 4 * f) + 4 * Hp
    TH, n_blk = _rows_for_budget(H, bpr, _vmem_budget())
    Hpad = n_blk * TH
    if Hpad != H:
        x = jnp.pad(x, ((0, 0), (0, 0), (0, Hpad - H), (0, 0)))
        c1_ = jnp.pad(c1_, ((0, 0), (0, 0), (0, Hpad - H), (0, 0)))
        Ah = jnp.pad(Ah, ((0, Hpad - H), (0, 0)))
    out = pl.pallas_call(
        _tail_kernel,
        out_shape=jax.ShapeDtypeStruct((B, nf, Hpad, W), x.dtype),
        grid=(B, n_blk),
        in_specs=[pl.BlockSpec((1, nf, TH, W), lambda b, i: (b, 0, i, 0)),
                  pl.BlockSpec((1, f, TH, W), lambda b, i: (b, 0, i, 0)),
                  pl.BlockSpec((1, Hp, nf * Wp), lambda b, i: (b, 0, 0)),
                  pl.BlockSpec((TH, Hp), lambda b, i: (i, 0)),
                  pl.BlockSpec((Wp, W), lambda b, i: (0, 0)),
                  _SMEM, _SMEM],
        out_specs=pl.BlockSpec((1, nf, TH, W), lambda b, i: (b, 0, i, 0)),
        compiler_params=_cparams(2),
    )(x, c1_, c3m, Ah, AwT,
      wprime.reshape(-1).astype(F32), bprime.astype(F32))
    return out[:, :, :H, :]


# ---------------------------------------------------------------------------
# Bilinear interpolation matrix (align_corners=False, matches F.interpolate)
# ---------------------------------------------------------------------------

def bilinear_matrix(out_size, in_size):
    i = jnp.arange(out_size, dtype=F32)
    scale = in_size / out_size
    src = jnp.maximum((i + 0.5) * scale - 0.5, 0.0)
    i0 = jnp.clip(jnp.floor(src).astype(jnp.int32), 0, in_size - 1)
    i1 = jnp.minimum(i0 + 1, in_size - 1)
    w1 = src - i0.astype(F32)
    w0 = 1.0 - w1
    A = jnp.zeros((out_size, in_size), F32)
    A = A.at[jnp.arange(out_size), i0].add(w0)
    A = A.at[jnp.arange(out_size), i1].add(w1)
    return A


# ---------------------------------------------------------------------------
# ESA forward (Pallas path)
# ---------------------------------------------------------------------------

def esa_forward(x_nchw, p):
    x = x_nchw                                   # kept in input dtype
    B, nf, H, W = x.shape
    f = p['w1'].shape[0]
    N = H * W

    # conv1: 1x1 on the MXU, lane-dense pixel tiles
    c1_ = conv1x1(x.reshape(B, nf, N), p['w1'].reshape(f, nf), p['b1'])
    c1_ = c1_[:, :, :N].reshape(B, f, H, W)

    # conv2: 3x3 stride 2 (4-phase decomposition, row-tiled)
    c1 = conv3x3_s2(c1_, p['w2'], p['b2'])

    # max_pool2d(kernel=7, stride=3): vectorised separable max
    vmax = maxpool_7_3(c1)

    # conv3: 3x3 pad 1 on the pooled map
    c3 = conv3x3_p1(vmax, p['w3'], p['b3'])

    # linearity fold (all tiny, in XLA):
    #   conv4(conv_f(c1_) + Up(c3)) = (W4 Wf) c1_ + Up(W4 c3) + (W4 bf + b4)
    W4 = p['w4'].reshape(nf, f).astype(F32)
    Wf = p['wf'].reshape(f, f).astype(F32)
    wprime = jnp.dot(W4, Wf, precision=HI)                         # (nf, f)
    bprime = jnp.dot(W4, p['bf'].astype(F32), precision=HI) + p['b4'].astype(F32)
    c3w = jnp.einsum('of,bfpq->bopq', W4, c3, precision=HI)        # pooled res
    Hp, Wp = c3.shape[2], c3.shape[3]
    c3m = jnp.transpose(c3w, (0, 2, 1, 3)).reshape(B, Hp, nf * Wp)

    Ah = bilinear_matrix(H, Hp)
    AwT = bilinear_matrix(W, Wp).T

    return fused_tail(x, c1_, c3m, Ah, AwT, wprime, bprime)


# ---------------------------------------------------------------------------
# Pure-XLA reference (for correctness check)
# ---------------------------------------------------------------------------

def esa_reference(x, p):
    def conv(inp, w, b, stride=1, pad=0):
        y = jax.lax.conv_general_dilated(
            inp, w, (stride, stride), [(pad, pad), (pad, pad)],
            dimension_numbers=('NCHW', 'OIHW', 'NCHW'), precision=HI)
        return y + b.reshape(1, -1, 1, 1)

    c1_ = conv(x, p['w1'], p['b1'])
    c1 = conv(c1_, p['w2'], p['b2'], stride=2, pad=0)
    vmax = jax.lax.reduce_window(c1, -jnp.inf, jax.lax.max,
                                 (1, 1, 7, 7), (1, 1, 3, 3), 'VALID')
    c3 = conv(vmax, p['w3'], p['b3'], pad=1)
    H, W = x.shape[2], x.shape[3]
    Ah = bilinear_matrix(H, c3.shape[2])
    Aw = bilinear_matrix(W, c3.shape[3])
    c3_up = jnp.einsum('Hh,bchw,Ww->bcHW', Ah, c3, Aw, precision=HI)
    cf = conv(c1_, p['wf'], p['bf'])
    c4 = conv(c3_up + cf, p['w4'], p['b4'])
    return x * jax.nn.sigmoid(c4)


# ---------------------------------------------------------------------------

if __name__ == "__main__":
    fwd = jax.jit(esa_forward)
    ref_fn = jax.jit(esa_reference)

    def run_case(key, B, n_feats, f, H, W):
        kk = jax.random.split(key, 11)

        def init_conv(kw_key, kb_key, cout, cin, ksize):
            w = 0.1 * jax.random.normal(kw_key, (cout, cin, ksize, ksize), F32)
            b = 0.1 * jax.random.normal(kb_key, (cout,), F32)
            return w, b

        p = {}
        p['w1'], p['b1'] = init_conv(kk[0], kk[1], f, n_feats, 1)   # conv1
        p['wf'], p['bf'] = init_conv(kk[2], kk[3], f, f, 1)         # conv_f
        p['w2'], p['b2'] = init_conv(kk[4], kk[5], f, f, 3)         # conv2
        p['w3'], p['b3'] = init_conv(kk[6], kk[7], f, f, 3)         # conv3
        p['w4'], p['b4'] = init_conv(kk[8], kk[9], n_feats, f, 1)   # conv4
        x = jax.random.normal(kk[10], (B, n_feats, H, W), F32)

        out = jax.block_until_ready(fwd(x, p))
        ref = jax.block_until_ready(ref_fn(x, p))
        assert out.shape == x.shape and out.dtype == x.dtype
        np.testing.assert_allclose(np.asarray(out), np.asarray(ref),
                                   rtol=2e-3, atol=2e-3)

    key = jax.random.PRNGKey(0)
    k1, k2 = jax.random.split(key)
    run_case(k1, B=2, n_feats=8, f=4, H=32, W=32)
    # non-128-multiple spatial size: exercises padded tiles / odd pooled sizes
    run_case(k2, B=2, n_feats=8, f=4, H=20, W=20)
    print("KERNEL_OK")
</pallas_src>

<mosaic_0001>
module attributes {stable_mosaic.version = 11 : i64} {
  func.func private @main(%arg0: i32) attributes {dimension_semantics = [#tpu.dimension_semantics<core_parallel>], iteration_bounds = array<i64: 2>, tpu.core_type = #tpu.core_type<sc_scalar_subcore>, window_params = []} {
    return
  }
}

module attributes {stable_mosaic.version = 11 : i64} {
  func.func private @main(%arg0: i32) attributes {dimension_semantics = [#tpu.dimension_semantics<core_parallel>], iteration_bounds = array<i64: 2>, tpu.core_type = #tpu.core_type<sc_scalar_subcore>, window_params = []} {
    return
  }
}

module attributes {stable_mosaic.version = 11 : i64} {
  func.func @_conv1x1_kernel(%arg0: i32, %arg1: i32, %arg2: memref<1x8x1024xf32, #tpu.memory_space<vmem>>, %arg3: memref<4x8xf32, #tpu.memory_space<vmem>>, %arg4: memref<4x1xf32, #tpu.memory_space<vmem>>, %arg5: memref<1x4x1024xf32, #tpu.memory_space<vmem>>) attributes {dimension_semantics = [#tpu.dimension_semantics<parallel>, #tpu.dimension_semantics<parallel>], iteration_bounds = array<i64: 2, 1>, scalar_prefetch = 0 : i64, scratch_operands = 0 : i64, tpu.core_type = #tpu.core_type<tc>, window_params = [{transform_indices = @transform_0, window_bounds = array<i64: 1, 8, 1024>}, {pipeline_mode = #tpu.pipeline_mode<synchronous>, transform_indices = @transform_1, window_bounds = array<i64: 4, 8>}, {pipeline_mode = #tpu.pipeline_mode<synchronous>, transform_indices = @transform_2, window_bounds = array<i64: 4, 1>}, {transform_indices = @transform_3, window_bounds = array<i64: 1, 4, 1024>}]} {
    %c0 = arith.constant 0 : index
    %c0_0 = arith.constant 0 : index
    %c0_1 = arith.constant 0 : index
    %0 = vector.load %arg2[%c0, %c0_0, %c0_1] : memref<1x8x1024xf32, #tpu.memory_space<vmem>>, vector<1x8x1024xf32>
    %1 = vector.shape_cast %0 : vector<1x8x1024xf32> to vector<8x1024xf32>
    %c0_2 = arith.constant 0 : index
    %c0_3 = arith.constant 0 : index
    %2 = vector.load %arg3[%c0_2, %c0_3] : memref<4x8xf32, #tpu.memory_space<vmem>>, vector<4x8xf32>
    %cst = arith.constant dense<0.000000e+00> : vector<4x1024xf32>
    %3 = tpu.matmul %2, %1, %cst {dimension_numbers = #tpu.dot_dimension_numbers<[1], [0], [0], [1], [0, 0, 1, 1], [], []>} : vector<4x8xf32>, vector<8x1024xf32>, vector<4x1024xf32> -> vector<4x1024xf32>
    %c0_4 = arith.constant 0 : index
    %c0_5 = arith.constant 0 : index
    %4 = vector.load %arg4[%c0_4, %c0_5] : memref<4x1xf32, #tpu.memory_space<vmem>>, vector<4x1xf32>
    %5 = vector.broadcast %4 : vector<4x1xf32> to vector<4x1024xf32>
    %6 = arith.addf %3, %5 : vector<4x1024xf32>
    %c0_6 = arith.constant 0 : index
    %c0_7 = arith.constant 0 : index
    %c0_8 = arith.constant 0 : index
    %7 = vector.load %arg5[%c0_6, %c0_7, %c0_8] : memref<1x4x1024xf32, #tpu.memory_space<vmem>>, vector<1x4x1024xf32>
    %8 = vector.shape_cast %7 : vector<1x4x1024xf32> to vector<4x1024xf32>
    %9 = vector.shape_cast %6 : vector<4x1024xf32> to vector<1x4x1024xf32>
    tpu.vector_store %arg5[%c0_6, %c0_7, %c0_8], %9 {strides = array<i32>} : memref<1x4x1024xf32, #tpu.memory_space<vmem>>, vector<1x4x1024xf32>,
    return
  }
  func.func @transform_0(%arg0: i32, %arg1: i32) -> (i32, i32, i32) {
    %c0_i32 = arith.constant 0 : i32
    %c0_i32_0 = arith.constant 0 : i32
    return %arg0, %c0_i32, %arg1 : i32, i32, i32
  }
  func.func @transform_1(%arg0: i32, %arg1: i32) -> (i32, i32) {
    %c0_i32 = arith.constant 0 : i32
    %c0_i32_0 = arith.constant 0 : i32
    %c0_i32_1 = arith.constant 0 : i32
    return %c0_i32, %c0_i32_0 : i32, i32
  }
  func.func @transform_2(%arg0: i32, %arg1: i32) -> (i32, i32) {
    %c0_i32 = arith.constant 0 : i32
    %c0_i32_0 = arith.constant 0 : i32
    %c0_i32_1 = arith.constant 0 : i32
    return %c0_i32, %c0_i32_0 : i32, i32
  }
  func.func @transform_3(%arg0: i32, %arg1: i32) -> (i32, i32, i32) {
    %c0_i32 = arith.constant 0 : i32
    %c0_i32_0 = arith.constant 0 : i32
    return %arg0, %c0_i32, %arg1 : i32, i32, i32
  }
}

module attributes {stable_mosaic.version = 11 : i64} {
  func.func @_conv2_kernel(%arg0: i32, %arg1: i32, %arg2: memref<1x4x16x16xf32, #tpu.memory_space<vmem>>, %arg3: memref<1x4x16x16xf32, #tpu.memory_space<vmem>>, %arg4: memref<1x4x16x16xf32, #tpu.memory_space<vmem>>, %arg5: memref<1x4x16x16xf32, #tpu.memory_space<vmem>>, %arg6: memref<144xf32, #tpu.memory_space<smem>>, %arg7: memref<4xf32, #tpu.memory_space<smem>>, %arg8: memref<1x4x15x15xf32, #tpu.memory_space<vmem>>) attributes {dimension_semantics = [#tpu.dimension_semantics<parallel>, #tpu.dimension_semantics<parallel>], iteration_bounds = array<i64: 2, 1>, scalar_prefetch = 0 : i64, scratch_operands = 0 : i64, tpu.core_type = #tpu.core_type<tc>, window_params = [{transform_indices = @transform_0, window_bounds = array<i64: 1, 4, 16, 16>}, {transform_indices = @transform_1, window_bounds = array<i64: 1, 4, 16, 16>}, {transform_indices = @transform_2, window_bounds = array<i64: 1, 4, 16, 16>}, {transform_indices = @transform_3, window_bounds = array<i64: 1, 4, 16, 16>}, {transform_indices = @transform_4, window_bounds = array<i64: 144>}, {transform_indices = @transform_5, window_bounds = array<i64: 4>}, {transform_indices = @transform_6, window_bounds = array<i64: 1, 4, 15, 15>}]} {
    %cst = arith.constant 0.000000e+00 : f32
    %0 = vector.broadcast %cst : f32 to vector<15x15xf32>
    %c0 = arith.constant 0 : index
    %1 = memref.load %arg7[%c0] : memref<4xf32, #tpu.memory_space<smem>>
    %2 = vector.broadcast %1 : f32 to vector<15x15xf32>
    %3 = arith.addf %0, %2 : vector<15x15xf32>
    %cst_0 = arith.constant 0.000000e+00 : f32
    %4 = vector.broadcast %cst_0 : f32 to vector<15x15xf32>
    %c1 = arith.constant 1 : index
    %5 = memref.load %arg7[%c1] : memref<4xf32, #tpu.memory_space<smem>>
    %6 = vector.broadcast %5 : f32 to vector<15x15xf32>
    %7 = arith.addf %4, %6 : vector<15x15xf32>
    %cst_1 = arith.constant 0.000000e+00 : f32
    %8 = vector.broadcast %cst_1 : f32 to vector<15x15xf32>
    %c2 = arith.constant 2 : index
    %9 = memref.load %arg7[%c2] : memref<4xf32, #tpu.memory_space<smem>>
    %10 = vector.broadcast %9 : f32 to vector<15x15xf32>
    %11 = arith.addf %8, %10 : vector<15x15xf32>
    %cst_2 = arith.constant 0.000000e+00 : f32
    %12 = vector.broadcast %cst_2 : f32 to vector<15x15xf32>
    %c3 = arith.constant 3 : index
    %13 = memref.load %arg7[%c3] : memref<4xf32, #tpu.memory_space<smem>>
    %14 = vector.broadcast %13 : f32 to vector<15x15xf32>
    %15 = arith.addf %12, %14 : vector<15x15xf32>
    %c0_3 = arith.constant 0 : index
    %c0_4 = arith.constant 0 : index
    %c0_5 = arith.constant 0 : index
    %c0_6 = arith.constant 0 : index
    %16 = vector.load %arg2[%c0_3, %c0_4, %c0_5, %c0_6] : memref<1x4x16x16xf32, #tpu.memory_space<vmem>>, vector<1x4x15x15xf32>
    %17 = vector.shape_cast %16 : vector<1x4x15x15xf32> to vector<4x15x15xf32>
    %18 = vector.extract_strided_slice %17 {offsets = [0, 0, 0], sizes = [1, 15, 15], strides = [1, 1, 1]} : vector<4x15x15xf32> to vector<1x15x15xf32>
    %19 = vector.shape_cast %18 : vector<1x15x15xf32> to vector<15x15xf32>
    %c0_7 = arith.constant 0 : index
    %20 = memref.load %arg6[%c0_7] : memref<144xf32, #tpu.memory_space<smem>>
    %21 = vector.broadcast %20 : f32 to vector<15x15xf32>
    %22 = arith.mulf %21, %19 : vector<15x15xf32>
    %23 = arith.addf %3, %22 : vector<15x15xf32>
    %c36 = arith.constant 36 : index
    %24 = memref.load %arg6[%c36] : memref<144xf32, #tpu.memory_space<smem>>
    %25 = vector.broadcast %24 : f32 to vector<15x15xf32>
    %26 = arith.mulf %25, %19 : vector<15x15xf32>
    %27 = arith.addf %7, %26 : vector<15x15xf32>
    %c72 = arith.constant 72 : index
    %28 = memref.load %arg6[%c72] : memref<144xf32, #tpu.memory_space<smem>>
    %29 = vector.broadcast %28 : f32 to vector<15x15xf32>
    %30 = arith.mulf %29, %19 : vector<15x15xf32>
    %31 = arith.addf %11, %30 : vector<15x15xf32>
    %c108 = arith.constant 108 : index
    %32 = memref.load %arg6[%c108] : memref<144xf32, #tpu.memory_space<smem>>
    %33 = vector.broadcast %32 : f32 to vector<15x15xf32>
    %34 = arith.mulf %33, %19 : vector<15x15xf32>
    %35 = arith.addf %15, %34 : vector<15x15xf32>
    %36 = vector.extract_strided_slice %17 {offsets = [1, 0, 0], sizes = [1, 15, 15], strides = [1, 1, 1]} : vector<4x15x15xf32> to vector<1x15x15xf32>
    %37 = vector.shape_cast %36 : vector<1x15x15xf32> to vector<15x15xf32>
    %c9 = arith.constant 9 : index
    %38 = memref.load %arg6[%c9] : memref<144xf32, #tpu.memory_space<smem>>
    %39 = vector.broadcast %38 : f32 to vector<15x15xf32>
    %40 = arith.mulf %39, %37 : vector<15x15xf32>
    %41 = arith.addf %23, %40 : vector<15x15xf32>
    %c45 = arith.constant 45 : index
    %42 = memref.load %arg6[%c45] : memref<144xf32, #tpu.memory_space<smem>>
    %43 = vector.broadcast %42 : f32 to vector<15x15xf32>
    %44 = arith.mulf %43, %37 : vector<15x15xf32>
    %45 = arith.addf %27, %44 : vector<15x15xf32>
    %c81 = arith.constant 81 : index
    %46 = memref.load %arg6[%c81] : memref<144xf32, #tpu.memory_space<smem>>
    %47 = vector.broadcast %46 : f32 to vector<15x15xf32>
    %48 = arith.mulf %47, %37 : vector<15x15xf32>
    %49 = arith.addf %31, %48 : vector<15x15xf32>
    %c117 = arith.constant 117 : index
    %50 = memref.load %arg6[%c117] : memref<144xf32, #tpu.memory_space<smem>>
    %51 = vector.broadcast %50 : f32 to vector<15x15xf32>
    %52 = arith.mulf %51, %37 : vector<15x15xf32>
    %53 = arith.addf %35, %52 : vector<15x15xf32>
    %54 = vector.extract_strided_slice %17 {offsets = [2, 0, 0], sizes = [1, 15, 15], strides = [1, 1, 1]} : vector<4x15x15xf32> to vector<1x15x15xf32>
    %55 = vector.shape_cast %54 : vector<1x15x15xf32> to vector<15x15xf32>
    %c18 = arith.constant 18 : index
    %56 = memref.load %arg6[%c18] : memref<144xf32, #tpu.memory_space<smem>>
    %57 = vector.broadcast %56 : f32 to vector<15x15xf32>
    %58 = arith.mulf %57, %55 : vector<15x15xf32>
    %59 = arith.addf %41, %58 : vector<15x15xf32>
    %c54 = arith.constant 54 : index
    %60 = memref.load %arg6[%c54] : memref<144xf32, #tpu.memory_space<smem>>
    %61 = vector.broadcast %60 : f32 to vector<15x15xf32>
    %62 = arith.mulf %61, %55 : vector<15x15xf32>
    %63 = arith.addf %45, %62 : vector<15x15xf32>
    %c90 = arith.constant 90 : index
    %64 = memref.load %arg6[%c90] : memref<144xf32, #tpu.memory_space<smem>>
    %65 = vector.broadcast %64 : f32 to vector<15x15xf32>
    %66 = arith.mulf %65, %55 : vector<15x15xf32>
    %67 = arith.addf %49, %66 : vector<15x15xf32>
    %c126 = arith.constant 126 : index
    %68 = memref.load %arg6[%c126] : memref<144xf32, #tpu.memory_space<smem>>
    %69 = vector.broadcast %68 : f32 to vector<15x15xf32>
    %70 = arith.mulf %69, %55 : vector<15x15xf32>
    %71 = arith.addf %53, %70 : vector<15x15xf32>
    %72 = vector.extract_strided_slice %17 {offsets = [3, 0, 0], sizes = [1, 15, 15], strides = [1, 1, 1]} : vector<4x15x15xf32> to vector<1x15x15xf32>
    %73 = vector.shape_cast %72 : vector<1x15x15xf32> to vector<15x15xf32>
    %c27 = arith.constant 27 : index
    %74 = memref.load %arg6[%c27] : memref<144xf32, #tpu.memory_space<smem>>
    %75 = vector.broadcast %74 : f32 to vector<15x15xf32>
    %76 = arith.mulf %75, %73 : vector<15x15xf32>
    %77 = arith.addf %59, %76 : vector<15x15xf32>
    %c63 = arith.constant 63 : index
    %78 = memref.load %arg6[%c63] : memref<144xf32, #tpu.memory_space<smem>>
    %79 = vector.broadcast %78 : f32 to vector<15x15xf32>
    %80 = arith.mulf %79, %73 : vector<15x15xf32>
    %81 = arith.addf %63, %80 : vector<15x15xf32>
    %c99 = arith.constant 99 : index
    %82 = memref.load %arg6[%c99] : memref<144xf32, #tpu.memory_space<smem>>
    %83 = vector.broadcast %82 : f32 to vector<15x15xf32>
    %84 = arith.mulf %83, %73 : vector<15x15xf32>
    %85 = arith.addf %67, %84 : vector<15x15xf32>
    %c135 = arith.constant 135 : index
    %86 = memref.load %arg6[%c135] : memref<144xf32, #tpu.memory_space<smem>>
    %87 = vector.broadcast %86 : f32 to vector<15x15xf32>
    %88 = arith.mulf %87, %73 : vector<15x15xf32>
    %89 = arith.addf %71, %88 : vector<15x15xf32>
    %c0_8 = arith.constant 0 : index
    %c0_9 = arith.constant 0 : index
    %c0_10 = arith.constant 0 : index
    %c0_11 = arith.constant 0 : index
    %90 = vector.load %arg3[%c0_8, %c0_9, %c0_10, %c0_11] : memref<1x4x16x16xf32, #tpu.memory_space<vmem>>, vector<1x4x15x15xf32>
    %91 = vector.shape_cast %90 : vector<1x4x15x15xf32> to vector<4x15x15xf32>
    %92 = vector.extract_strided_slice %91 {offsets = [0, 0, 0], sizes = [1, 15, 15], strides = [1, 1, 1]} : vector<4x15x15xf32> to vector<1x15x15xf32>
    %93 = vector.shape_cast %92 : vector<1x15x15xf32> to vector<15x15xf32>
    %c1_12 = arith.constant 1 : index
    %94 = memref.load %arg6[%c1_12] : memref<144xf32, #tpu.memory_space<smem>>
    %95 = vector.broadcast %94 : f32 to vector<15x15xf32>
    %96 = arith.mulf %95, %93 : vector<15x15xf32>
    %97 = arith.addf %77, %96 : vector<15x15xf32>
    %c37 = arith.constant 37 : index
    %98 = memref.load %arg6[%c37] : memref<144xf32, #tpu.memory_space<smem>>
    %99 = vector.broadcast %98 : f32 to vector<15x15xf32>
    %100 = arith.mulf %99, %93 : vector<15x15xf32>
    %101 = arith.addf %81, %100 : vector<15x15xf32>
    %c73 = arith.constant 73 : index
    %102 = memref.load %arg6[%c73] : memref<144xf32, #tpu.memory_space<smem>>
    %103 = vector.broadcast %102 : f32 to vector<15x15xf32>
    %104 = arith.mulf %103, %93 : vector<15x15xf32>
    %105 = arith.addf %85, %104 : vector<15x15xf32>
    %c109 = arith.constant 109 : index
    %106 = memref.load %arg6[%c109] : memref<144xf32, #tpu.memory_space<smem>>
    %107 = vector.broadcast %106 : f32 to vector<15x15xf32>
    %108 = arith.mulf %107, %93 : vector<15x15xf32>
    %109 = arith.addf %89, %108 : vector<15x15xf32>
    %110 = vector.extract_strided_slice %91 {offsets = [1, 0, 0], sizes = [1, 15, 15], strides = [1, 1, 1]} : vector<4x15x15xf32> to vector<1x15x15xf32>
    %111 = vector.shape_cast %110 : vector<1x15x15xf32> to vector<15x15xf32>
    %c10 = arith.constant 10 : index
    %112 = memref.load %arg6[%c10] : memref<144xf32, #tpu.memory_space<smem>>
    %113 = vector.broadcast %112 : f32 to vector<15x15xf32>
    %114 = arith.mulf %113, %111 : vector<15x15xf32>
    %115 = arith.addf %97, %114 : vector<15x15xf32>
    %c46 = arith.constant 46 : index
    %116 = memref.load %arg6[%c46] : memref<144xf32, #tpu.memory_space<smem>>
    %117 = vector.broadcast %116 : f32 to vector<15x15xf32>
    %118 = arith.mulf %117, %111 : vector<15x15xf32>
    %119 = arith.addf %101, %118 : vector<15x15xf32>
    %c82 = arith.constant 82 : index
    %120 = memref.load %arg6[%c82] : memref<144xf32, #tpu.memory_space<smem>>
    %121 = vector.broadcast %120 : f32 to vector<15x15xf32>
    %122 = arith.mulf %121, %111 : vector<15x15xf32>
    %123 = arith.addf %105, %122 : vector<15x15xf32>
    %c118 = arith.constant 118 : index
    %124 = memref.load %arg6[%c118] : memref<144xf32, #tpu.memory_space<smem>>
    %125 = vector.broadcast %124 : f32 to vector<15x15xf32>
    %126 = arith.mulf %125, %111 : vector<15x15xf32>
    %127 = arith.addf %109, %126 : vector<15x15xf32>
    %128 = vector.extract_strided_slice %91 {offsets = [2, 0, 0], sizes = [1, 15, 15], strides = [1, 1, 1]} : vector<4x15x15xf32> to vector<1x15x15xf32>
    %129 = vector.shape_cast %128 : vector<1x15x15xf32> to vector<15x15xf32>
    %c19 = arith.constant 19 : index
    %130 = memref.load %arg6[%c19] : memref<144xf32, #tpu.memory_space<smem>>
    %131 = vector.broadcast %130 : f32 to vector<15x15xf32>
    %132 = arith.mulf %131, %129 : vector<15x15xf32>
    %133 = arith.addf %115, %132 : vector<15x15xf32>
    %c55 = arith.constant 55 : index
    %134 = memref.load %arg6[%c55] : memref<144xf32, #tpu.memory_space<smem>>
    %135 = vector.broadcast %134 : f32 to vector<15x15xf32>
    %136 = arith.mulf %135, %129 : vector<15x15xf32>
    %137 = arith.addf %119, %136 : vector<15x15xf32>
    %c91 = arith.constant 91 : index
    %138 = memref.load %arg6[%c91] : memref<144xf32, #tpu.memory_space<smem>>
    %139 = vector.broadcast %138 : f32 to vector<15x15xf32>
    %140 = arith.mulf %139, %129 : vector<15x15xf32>
    %141 = arith.addf %123, %140 : vector<15x15xf32>
    %c127 = arith.constant 127 : index
    %142 = memref.load %arg6[%c127] : memref<144xf32, #tpu.memory_space<smem>>
    %143 = vector.broadcast %142 : f32 to vector<15x15xf32>
    %144 = arith.mulf %143, %129 : vector<15x15xf32>
    %145 = arith.addf %127, %144 : vector<15x15xf32>
    %146 = vector.extract_strided_slice %91 {offsets = [3, 0, 0], sizes = [1, 15, 15], strides = [1, 1, 1]} : vector<4x15x15xf32> to vector<1x15x15xf32>
    %147 = vector.shape_cast %146 : vector<1x15x15xf32> to vector<15x15xf32>
    %c28 = arith.constant 28 : index
    %148 = memref.load %arg6[%c28] : memref<144xf32, #tpu.memory_space<smem>>
    %149 = vector.broadcast %148 : f32 to vector<15x15xf32>
    %150 = arith.mulf %149, %147 : vector<15x15xf32>
    %151 = arith.addf %133, %150 : vector<15x15xf32>
    %c64 = arith.constant 64 : index
    %152 = memref.load %arg6[%c64] : memref<144xf32, #tpu.memory_space<smem>>
    %153 = vector.broadcast %152 : f32 to vector<15x15xf32>
    %154 = arith.mulf %153, %147 : vector<15x15xf32>
    %155 = arith.addf %137, %154 : vector<15x15xf32>
    %c100 = arith.constant 100 : index
    %156 = memref.load %arg6[%c100] : memref<144xf32, #tpu.memory_space<smem>>
    %157 = vector.broadcast %156 : f32 to vector<15x15xf32>
    %158 = arith.mulf %157, %147 : vector<15x15xf32>
    %159 = arith.addf %141, %158 : vector<15x15xf32>
    %c136 = arith.constant 136 : index
    %160 = memref.load %arg6[%c136] : memref<144xf32, #tpu.memory_space<smem>>
    %161 = vector.broadcast %160 : f32 to vector<15x15xf32>
    %162 = arith.mulf %161, %147 : vector<15x15xf32>
    %163 = arith.addf %145, %162 : vector<15x15xf32>
    %c0_13 = arith.constant 0 : index
    %c0_14 = arith.constant 0 : index
    %c0_15 = arith.constant 0 : index
    %c1_16 = arith.constant 1 : index
    %164 = vector.load %arg2[%c0_13, %c0_14, %c0_15, %c1_16] : memref<1x4x16x16xf32, #tpu.memory_space<vmem>>, vector<1x4x15x15xf32>
    %165 = vector.shape_cast %164 : vector<1x4x15x15xf32> to vector<4x15x15xf32>
    %166 = vector.extract_strided_slice %165 {offsets = [0, 0, 0], sizes = [1, 15, 15], strides = [1, 1, 1]} : vector<4x15x15xf32> to vector<1x15x15xf32>
    %167 = vector.shape_cast %166 : vector<1x15x15xf32> to vector<15x15xf32>
    %c2_17 = arith.constant 2 : index
    %168 = memref.load %arg6[%c2_17] : memref<144xf32, #tpu.memory_space<smem>>
    %169 = vector.broadcast %168 : f32 to vector<15x15xf32>
    %170 = arith.mulf %169, %167 : vector<15x15xf32>
    %171 = arith.addf %151, %170 : vector<15x15xf32>
    %c38 = arith.constant 38 : index
    %172 = memref.load %arg6[%c38] : memref<144xf32, #tpu.memory_space<smem>>
    %173 = vector.broadcast %172 : f32 to vector<15x15xf32>
    %174 = arith.mulf %173, %167 : vector<15x15xf32>
    %175 = arith.addf %155, %174 : vector<15x15xf32>
    %c74 = arith.constant 74 : index
    %176 = memref.load %arg6[%c74] : memref<144xf32, #tpu.memory_space<smem>>
    %177 = vector.broadcast %176 : f32 to vector<15x15xf32>
    %178 = arith.mulf %177, %167 : vector<15x15xf32>
    %179 = arith.addf %159, %178 : vector<15x15xf32>
    %c110 = arith.constant 110 : index
    %180 = memref.load %arg6[%c110] : memref<144xf32, #tpu.memory_space<smem>>
    %181 = vector.broadcast %180 : f32 to vector<15x15xf32>
    %182 = arith.mulf %181, %167 : vector<15x15xf32>
    %183 = arith.addf %163, %182 : vector<15x15xf32>
    %184 = vector.extract_strided_slice %165 {offsets = [1, 0, 0], sizes = [1, 15, 15], strides = [1, 1, 1]} : vector<4x15x15xf32> to vector<1x15x15xf32>
    %185 = vector.shape_cast %184 : vector<1x15x15xf32> to vector<15x15xf32>
    %c11 = arith.constant 11 : index
    %186 = memref.load %arg6[%c11] : memref<144xf32, #tpu.memory_space<smem>>
    %187 = vector.broadcast %186 : f32 to vector<15x15xf32>
    %188 = arith.mulf %187, %185 : vector<15x15xf32>
    %189 = arith.addf %171, %188 : vector<15x15xf32>
    %c47 = arith.constant 47 : index
    %190 = memref.load %arg6[%c47] : memref<144xf32, #tpu.memory_space<smem>>
    %191 = vector.broadcast %190 : f32 to vector<15x15xf32>
    %192 = arith.mulf %191, %185 : vector<15x15xf32>
    %193 = arith.addf %175, %192 : vector<15x15xf32>
    %c83 = arith.constant 83 : index
    %194 = memref.load %arg6[%c83] : memref<144xf32, #tpu.memory_space<smem>>
    %195 = vector.broadcast %194 : f32 to vector<15x15xf32>
    %196 = arith.mulf %195, %185 : vector<15x15xf32>
    %197 = arith.addf %179, %196 : vector<15x15xf32>
    %c119 = arith.constant 119 : index
    %198 = memref.load %arg6[%c119] : memref<144xf32, #tpu.memory_space<smem>>
    %199 = vector.broadcast %198 : f32 to vector<15x15xf32>
    %200 = arith.mulf %199, %185 : vector<15x15xf32>
    %201 = arith.addf %183, %200 : vector<15x15xf32>
    %202 = vector.extract_strided_slice %165 {offsets = [2, 0, 0], sizes = [1, 15, 15], strides = [1, 1, 1]} : vector<4x15x15xf32> to vector<1x15x15xf32>
    %203 = vector.shape_cast %202 : vector<1x15x15xf32> to vector<15x15xf32>
    %c20 = arith.constant 20 : index
    %204 = memref.load %arg6[%c20] : memref<144xf32, #tpu.memory_space<smem>>
    %205 = vector.broadcast %204 : f32 to vector<15x15xf32>
    %206 = arith.mulf %205, %203 : vector<15x15xf32>
    %207 = arith.addf %189, %206 : vector<15x15xf32>
    %c56 = arith.constant 56 : index
    %208 = memref.load %arg6[%c56] : memref<144xf32, #tpu.memory_space<smem>>
    %209 = vector.broadcast %208 : f32 to vector<15x15xf32>
    %210 = arith.mulf %209, %203 : vector<15x15xf32>
    %211 = arith.addf %193, %210 : vector<15x15xf32>
    %c92 = arith.constant 92 : index
    %212 = memref.load %arg6[%c92] : memref<144xf32, #tpu.memory_space<smem>>
    %213 = vector.broadcast %212 : f32 to vector<15x15xf32>
    %214 = arith.mulf %213, %203 : vector<15x15xf32>
    %215 = arith.addf %197, %214 : vector<15x15xf32>
    %c128 = arith.constant 128 : index
    %216 = memref.load %arg6[%c128] : memref<144xf32, #tpu.memory_space<smem>>
    %217 = vector.broadcast %216 : f32 to vector<15x15xf32>
    %218 = arith.mulf %217, %203 : vector<15x15xf32>
    %219 = arith.addf %201, %218 : vector<15x15xf32>
    %220 = vector.extract_strided_slice %165 {offsets = [3, 0, 0], sizes = [1, 15, 15], strides = [1, 1, 1]} : vector<4x15x15xf32> to vector<1x15x15xf32>
    %221 = vector.shape_cast %220 : vector<1x15x15xf32> to vector<15x15xf32>
    %c29 = arith.constant 29 : index
    %222 = memref.load %arg6[%c29] : memref<144xf32, #tpu.memory_space<smem>>
    %223 = vector.broadcast %222 : f32 to vector<15x15xf32>
    %224 = arith.mulf %223, %221 : vector<15x15xf32>
    %225 = arith.addf %207, %224 : vector<15x15xf32>
    %c65 = arith.constant 65 : index
    %226 = memref.load %arg6[%c65] : memref<144xf32, #tpu.memory_space<smem>>
    %227 = vector.broadcast %226 : f32 to vector<15x15xf32>
    %228 = arith.mulf %227, %221 : vector<15x15xf32>
    %229 = arith.addf %211, %228 : vector<15x15xf32>
    %c101 = arith.constant 101 : index
    %230 = memref.load %arg6[%c101] : memref<144xf32, #tpu.memory_space<smem>>
    %231 = vector.broadcast %230 : f32 to vector<15x15xf32>
    %232 = arith.mulf %231, %221 : vector<15x15xf32>
    %233 = arith.addf %215, %232 : vector<15x15xf32>
    %c137 = arith.constant 137 : index
    %234 = memref.load %arg6[%c137] : memref<144xf32, #tpu.memory_space<smem>>
    %235 = vector.broadcast %234 : f32 to vector<15x15xf32>
    %236 = arith.mulf %235, %221 : vector<15x15xf32>
    %237 = arith.addf %219, %236 : vector<15x15xf32>
    %c0_18 = arith.constant 0 : index
    %c0_19 = arith.constant 0 : index
    %c0_20 = arith.constant 0 : index
    %c0_21 = arith.constant 0 : index
    %238 = vector.load %arg4[%c0_18, %c0_19, %c0_20, %c0_21] : memref<1x4x16x16xf32, #tpu.memory_space<vmem>>, vector<1x4x15x15xf32>
    %239 = vector.shape_cast %238 : vector<1x4x15x15xf32> to vector<4x15x15xf32>
    %240 = vector.extract_strided_slice %239 {offsets = [0, 0, 0], sizes = [1, 15, 15], strides = [1, 1, 1]} : vector<4x15x15xf32> to vector<1x15x15xf32>
    %241 = vector.shape_cast %240 : vector<1x15x15xf32> to vector<15x15xf32>
    %c3_22 = arith.constant 3 : index
    %242 = memref.load %arg6[%c3_22] : memref<144xf32, #tpu.memory_space<smem>>
    %243 = vector.broadcast %242 : f32 to vector<15x15xf32>
    %244 = arith.mulf %243, %241 : vector<15x15xf32>
    %245 = arith.addf %225, %244 : vector<15x15xf32>
    %c39 = arith.constant 39 : index
    %246 = memref.load %arg6[%c39] : memref<144xf32, #tpu.memory_space<smem>>
    %247 = vector.broadcast %246 : f32 to vector<15x15xf32>
    %248 = arith.mulf %247, %241 : vector<15x15xf32>
    %249 = arith.addf %229, %248 : vector<15x15xf32>
    %c75 = arith.constant 75 : index
    %250 = memref.load %arg6[%c75] : memref<144xf32, #tpu.memory_space<smem>>
    %251 = vector.broadcast %250 : f32 to vector<15x15xf32>
    %252 = arith.mulf %251, %241 : vector<15x15xf32>
    %253 = arith.addf %233, %252 : vector<15x15xf32>
    %c111 = arith.constant 111 : index
    %254 = memref.load %arg6[%c111] : memref<144xf32, #tpu.memory_space<smem>>
    %255 = vector.broadcast %254 : f32 to vector<15x15xf32>
    %256 = arith.mulf %255, %241 : vector<15x15xf32>
    %257 = arith.addf %237, %256 : vector<15x15xf32>
    %258 = vector.extract_strided_slice %239 {offsets = [1, 0, 0], sizes = [1, 15, 15], strides = [1, 1, 1]} : vector<4x15x15xf32> to vector<1x15x15xf32>
    %259 = vector.shape_cast %258 : vector<1x15x15xf32> to vector<15x15xf32>
    %c12 = arith.constant 12 : index
    %260 = memref.load %arg6[%c12] : memref<144xf32, #tpu.memory_space<smem>>
    %261 = vector.broadcast %260 : f32 to vector<15x15xf32>
    %262 = arith.mulf %261, %259 : vector<15x15xf32>
    %263 = arith.addf %245, %262 : vector<15x15xf32>
    %c48 = arith.constant 48 : index
    %264 = memref.load %arg6[%c48] : memref<144xf32, #tpu.memory_space<smem>>
    %265 = vector.broadcast %264 : f32 to vector<15x15xf32>
    %266 = arith.mulf %265, %259 : vector<15x15xf32>
    %267 = arith.addf %249, %266 : vector<15x15xf32>
    %c84 = arith.constant 84 : index
    %268 = memref.load %arg6[%c84] : memref<144xf32, #tpu.memory_space<smem>>
    %269 = vector.broadcast %268 : f32 to vector<15x15xf32>
    %270 = arith.mulf %269, %259 : vector<15x15xf32>
    %271 = arith.addf %253, %270 : vector<15x15xf32>
    %c120 = arith.constant 120 : index
    %272 = memref.load %arg6[%c120] : memref<144xf32, #tpu.memory_space<smem>>
    %273 = vector.broadcast %272 : f32 to vector<15x15xf32>
    %274 = arith.mulf %273, %259 : vector<15x15xf32>
    %275 = arith.addf %257, %274 : vector<15x15xf32>
    %276 = vector.extract_strided_slice %239 {offsets = [2, 0, 0], sizes = [1, 15, 15], strides = [1, 1, 1]} : vector<4x15x15xf32> to vector<1x15x15xf32>
    %277 = vector.shape_cast %276 : vector<1x15x15xf32> to vector<15x15xf32>
    %c21 = arith.constant 21 : index
    %278 = memref.load %arg6[%c21] : memref<144xf32, #tpu.memory_space<smem>>
    %279 = vector.broadcast %278 : f32 to vector<15x15xf32>
    %280 = arith.mulf %279, %277 : vector<15x15xf32>
    %281 = arith.addf %263, %280 : vector<15x15xf32>
    %c57 = arith.constant 57 : index
    %282 = memref.load %arg6[%c57] : memref<144xf32, #tpu.memory_space<smem>>
    %283 = vector.broadcast %282 : f32 to vector<15x15xf32>
    %284 = arith.mulf %283, %277 : vector<15x15xf32>
    %285 = arith.addf %267, %284 : vector<15x15xf32>
    %c93 = arith.constant 93 : index
    %286 = memref.load %arg6[%c93] : memref<144xf32, #tpu.memory_space<smem>>
    %287 = vector.broadcast %286 : f32 to vector<15x15xf32>
    %288 = arith.mulf %287, %277 : vector<15x15xf32>
    %289 = arith.addf %271, %288 : vector<15x15xf32>
    %c129 = arith.constant 129 : index
    %290 = memref.load %arg6[%c129] : memref<144xf32, #tpu.memory_space<smem>>
    %291 = vector.broadcast %290 : f32 to vector<15x15xf32>
    %292 = arith.mulf %291, %277 : vector<15x15xf32>
    %293 = arith.addf %275, %292 : vector<15x15xf32>
    %294 = vector.extract_strided_slice %239 {offsets = [3, 0, 0], sizes = [1, 15, 15], strides = [1, 1, 1]} : vector<4x15x15xf32> to vector<1x15x15xf32>
    %295 = vector.shape_cast %294 : vector<1x15x15xf32> to vector<15x15xf32>
    %c30 = arith.constant 30 : index
    %296 = memref.load %arg6[%c30] : memref<144xf32, #tpu.memory_space<smem>>
    %297 = vector.broadcast %296 : f32 to vector<15x15xf32>
    %298 = arith.mulf %297, %295 : vector<15x15xf32>
    %299 = arith.addf %281, %298 : vector<15x15xf32>
    %c66 = arith.constant 66 : index
    %300 = memref.load %arg6[%c66] : memref<144xf32, #tpu.memory_space<smem>>
    %301 = vector.broadcast %300 : f32 to vector<15x15xf32>
    %302 = arith.mulf %301, %295 : vector<15x15xf32>
    %303 = arith.addf %285, %302 : vector<15x15xf32>
    %c102 = arith.constant 102 : index
    %304 = memref.load %arg6[%c102] : memref<144xf32, #tpu.memory_space<smem>>
    %305 = vector.broadcast %304 : f32 to vector<15x15xf32>
    %306 = arith.mulf %305, %295 : vector<15x15xf32>
    %307 = arith.addf %289, %306 : vector<15x15xf32>
    %c138 = arith.constant 138 : index
    %308 = memref.load %arg6[%c138] : memref<144xf32, #tpu.memory_space<smem>>
    %309 = vector.broadcast %308 : f32 to vector<15x15xf32>
    %310 = arith.mulf %309, %295 : vector<15x15xf32>
    %311 = arith.addf %293, %310 : vector<15x15xf32>
    %c0_23 = arith.constant 0 : index
    %c0_24 = arith.constant 0 : index
    %c0_25 = arith.constant 0 : index
    %c0_26 = arith.constant 0 : index
    %312 = vector.load %arg5[%c0_23, %c0_24, %c0_25, %c0_26] : memref<1x4x16x16xf32, #tpu.memory_space<vmem>>, vector<1x4x15x15xf32>
    %313 = vector.shape_cast %312 : vector<1x4x15x15xf32> to vector<4x15x15xf32>
    %314 = vector.extract_strided_slice %313 {offsets = [0, 0, 0], sizes = [1, 15, 15], strides = [1, 1, 1]} : vector<4x15x15xf32> to vector<1x15x15xf32>
    %315 = vector.shape_cast %314 : vector<1x15x15xf32> to vector<15x15xf32>
    %c4 = arith.constant 4 : index
    %316 = memref.load %arg6[%c4] : memref<144xf32, #tpu.memory_space<smem>>
    %317 = vector.broadcast %316 : f32 to vector<15x15xf32>
    %318 = arith.mulf %317, %315 : vector<15x15xf32>
    %319 = arith.addf %299, %318 : vector<15x15xf32>
    %c40 = arith.constant 40 : index
    %320 = memref.load %arg6[%c40] : memref<144xf32, #tpu.memory_space<smem>>
    %321 = vector.broadcast %320 : f32 to vector<15x15xf32>
    %322 = arith.mulf %321, %315 : vector<15x15xf32>
    %323 = arith.addf %303, %322 : vector<15x15xf32>
    %c76 = arith.constant 76 : index
    %324 = memref.load %arg6[%c76] : memref<144xf32, #tpu.memory_space<smem>>
    %325 = vector.broadcast %324 : f32 to vector<15x15xf32>
    %326 = arith.mulf %325, %315 : vector<15x15xf32>
    %327 = arith.addf %307, %326 : vector<15x15xf32>
    %c112 = arith.constant 112 : index
    %328 = memref.load %arg6[%c112] : memref<144xf32, #tpu.memory_space<smem>>
    %329 = vector.broadcast %328 : f32 to vector<15x15xf32>
    %330 = arith.mulf %329, %315 : vector<15x15xf32>
    %331 = arith.addf %311, %330 : vector<15x15xf32>
    %332 = vector.extract_strided_slice %313 {offsets = [1, 0, 0], sizes = [1, 15, 15], strides = [1, 1, 1]} : vector<4x15x15xf32> to vector<1x15x15xf32>
    %333 = vector.shape_cast %332 : vector<1x15x15xf32> to vector<15x15xf32>
    %c13 = arith.constant 13 : index
    %334 = memref.load %arg6[%c13] : memref<144xf32, #tpu.memory_space<smem>>
    %335 = vector.broadcast %334 : f32 to vector<15x15xf32>
    %336 = arith.mulf %335, %333 : vector<15x15xf32>
    %337 = arith.addf %319, %336 : vector<15x15xf32>
    %c49 = arith.constant 49 : index
    %338 = memref.load %arg6[%c49] : memref<144xf32, #tpu.memory_space<smem>>
    %339 = vector.broadcast %338 : f32 to vector<15x15xf32>
    %340 = arith.mulf %339, %333 : vector<15x15xf32>
    %341 = arith.addf %323, %340 : vector<15x15xf32>
    %c85 = arith.constant 85 : index
    %342 = memref.load %arg6[%c85] : memref<144xf32, #tpu.memory_space<smem>>
    %343 = vector.broadcast %342 : f32 to vector<15x15xf32>
    %344 = arith.mulf %343, %333 : vector<15x15xf32>
    %345 = arith.addf %327, %344 : vector<15x15xf32>
    %c121 = arith.constant 121 : index
    %346 = memref.load %arg6[%c121] : memref<144xf32, #tpu.memory_space<smem>>
    %347 = vector.broadcast %346 : f32 to vector<15x15xf32>
    %348 = arith.mulf %347, %333 : vector<15x15xf32>
    %349 = arith.addf %331, %348 : vector<15x15xf32>
    %350 = vector.extract_strided_slice %313 {offsets = [2, 0, 0], sizes = [1, 15, 15], strides = [1, 1, 1]} : vector<4x15x15xf32> to vector<1x15x15xf32>
    %351 = vector.shape_cast %350 : vector<1x15x15xf32> to vector<15x15xf32>
    %c22 = arith.constant 22 : index
    %352 = memref.load %arg6[%c22] : memref<144xf32, #tpu.memory_space<smem>>
    %353 = vector.broadcast %352 : f32 to vector<15x15xf32>
    %354 = arith.mulf %353, %351 : vector<15x15xf32>
    %355 = arith.addf %337, %354 : vector<15x15xf32>
    %c58 = arith.constant 58 : index
    %356 = memref.load %arg6[%c58] : memref<144xf32, #tpu.memory_space<smem>>
    %357 = vector.broadcast %356 : f32 to vector<15x15xf32>
    %358 = arith.mulf %357, %351 : vector<15x15xf32>
    %359 = arith.addf %341, %358 : vector<15x15xf32>
    %c94 = arith.constant 94 : index
    %360 = memref.load %arg6[%c94] : memref<144xf32, #tpu.memory_space<smem>>
    %361 = vector.broadcast %360 : f32 to vector<15x15xf32>
    %362 = arith.mulf %361, %351 : vector<15x15xf32>
    %363 = arith.addf %345, %362 : vector<15x15xf32>
    %c130 = arith.constant 130 : index
    %364 = memref.load %arg6[%c130] : memref<144xf32, #tpu.memory_space<smem>>
    %365 = vector.broadcast %364 : f32 to vector<15x15xf32>
    %366 = arith.mulf %365, %351 : vector<15x15xf32>
    %367 = arith.addf %349, %366 : vector<15x15xf32>
    %368 = vector.extract_strided_slice %313 {offsets = [3, 0, 0], sizes = [1, 15, 15], strides = [1, 1, 1]} : vector<4x15x15xf32> to vector<1x15x15xf32>
    %369 = vector.shape_cast %368 : vector<1x15x15xf32> to vector<15x15xf32>
    %c31 = arith.constant 31 : index
    %370 = memref.load %arg6[%c31] : memref<144xf32, #tpu.memory_space<smem>>
    %371 = vector.broadcast %370 : f32 to vector<15x15xf32>
    %372 = arith.mulf %371, %369 : vector<15x15xf32>
    %373 = arith.addf %355, %372 : vector<15x15xf32>
    %c67 = arith.constant 67 : index
    %374 = memref.load %arg6[%c67] : memref<144xf32, #tpu.memory_space<smem>>
    %375 = vector.broadcast %374 : f32 to vector<15x15xf32>
    %376 = arith.mulf %375, %369 : vector<15x15xf32>
    %377 = arith.addf %359, %376 : vector<15x15xf32>
    %c103 = arith.constant 103 : index
    %378 = memref.load %arg6[%c103] : memref<144xf32, #tpu.memory_space<smem>>
    %379 = vector.broadcast %378 : f32 to vector<15x15xf32>
    %380 = arith.mulf %379, %369 : vector<15x15xf32>
    %381 = arith.addf %363, %380 : vector<15x15xf32>
    %c139 = arith.constant 139 : index
    %382 = memref.load %arg6[%c139] : memref<144xf32, #tpu.memory_space<smem>>
    %383 = vector.broadcast %382 : f32 to vector<15x15xf32>
    %384 = arith.mulf %383, %369 : vector<15x15xf32>
    %385 = arith.addf %367, %384 : vector<15x15xf32>
    %c0_27 = arith.constant 0 : index
    %c0_28 = arith.constant 0 : index
    %c0_29 = arith.constant 0 : index
    %c1_30 = arith.constant 1 : index
    %386 = vector.load %arg4[%c0_27, %c0_28, %c0_29, %c1_30] : memref<1x4x16x16xf32, #tpu.memory_space<vmem>>, vector<1x4x15x15xf32>
    %387 = vector.shape_cast %386 : vector<1x4x15x15xf32> to vector<4x15x15xf32>
    %388 = vector.extract_strided_slice %387 {offsets = [0, 0, 0], sizes = [1, 15, 15], strides = [1, 1, 1]} : vector<4x15x15xf32> to vector<1x15x15xf32>
    %389 = vector.shape_cast %388 : vector<1x15x15xf32> to vector<15x15xf32>
    %c5 = arith.constant 5 : index
    %390 = memref.load %arg6[%c5] : memref<144xf32, #tpu.memory_space<smem>>
    %391 = vector.broadcast %390 : f32 to vector<15x15xf32>
    %392 = arith.mulf %391, %389 : vector<15x15xf32>
    %393 = arith.addf %373, %392 : vector<15x15xf32>
    %c41 = arith.constant 41 : index
    %394 = memref.load %arg6[%c41] : memref<144xf32, #tpu.memory_space<smem>>
    %395 = vector.broadcast %394 : f32 to vector<15x15xf32>
    %396 = arith.mulf %395, %389 : vector<15x15xf32>
    %397 = arith.addf %377, %396 : vector<15x15xf32>
    %c77 = arith.constant 77 : index
    %398 = memref.load %arg6[%c77] : memref<144xf32, #tpu.memory_space<smem>>
    %399 = vector.broadcast %398 : f32 to vector<15x15xf32>
    %400 = arith.mulf %399, %389 : vector<15x15xf32>
    %401 = arith.addf %381, %400 : vector<15x15xf32>
    %c113 = arith.constant 113 : index
    %402 = memref.load %arg6[%c113] : memref<144xf32, #tpu.memory_space<smem>>
    %403 = vector.broadcast %402 : f32 to vector<15x15xf32>
    %404 = arith.mulf %403, %389 : vector<15x15xf32>
    %405 = arith.addf %385, %404 : vector<15x15xf32>
    %406 = vector.extract_strided_slice %387 {offsets = [1, 0, 0], sizes = [1, 15, 15], strides = [1, 1, 1]} : vector<4x15x15xf32> to vector<1x15x15xf32>
    %407 = vector.shape_cast %406 : vector<1x15x15xf32> to vector<15x15xf32>
    %c14 = arith.constant 14 : index
    %408 = memref.load %arg6[%c14] : memref<144xf32, #tpu.memory_space<smem>>
    %409 = vector.broadcast %408 : f32 to vector<15x15xf32>
    %410 = arith.mulf %409, %407 : vector<15x15xf32>
    %411 = arith.addf %393, %410 : vector<15x15xf32>
    %c50 = arith.constant 50 : index
    %412 = memref.load %arg6[%c50] : memref<144xf32, #tpu.memory_space<smem>>
    %413 = vector.broadcast %412 : f32 to vector<15x15xf32>
    %414 = arith.mulf %413, %407 : vector<15x15xf32>
    %415 = arith.addf %397, %414 : vector<15x15xf32>
    %c86 = arith.constant 86 : index
    %416 = memref.load %arg6[%c86] : memref<144xf32, #tpu.memory_space<smem>>
    %417 = vector.broadcast %416 : f32 to vector<15x15xf32>
    %418 = arith.mulf %417, %407 : vector<15x15xf32>
    %419 = arith.addf %401, %418 : vector<15x15xf32>
    %c122 = arith.constant 122 : index
    %420 = memref.load %arg6[%c122] : memref<144xf32, #tpu.memory_space<smem>>
    %421 = vector.broadcast %420 : f32 to vector<15x15xf32>
    %422 = arith.mulf %421, %407 : vector<15x15xf32>
    %423 = arith.addf %405, %422 : vector<15x15xf32>
    %424 = vector.extract_strided_slice %387 {offsets = [2, 0, 0], sizes = [1, 15, 15], strides = [1, 1, 1]} : vector<4x15x15xf32> to vector<1x15x15xf32>
    %425 = vector.shape_cast %424 : vector<1x15x15xf32> to vector<15x15xf32>
    %c23 = arith.constant 23 : index
    %426 = memref.load %arg6[%c23] : memref<144xf32, #tpu.memory_space<smem>>
    %427 = vector.broadcast %426 : f32 to vector<15x15xf32>
    %428 = arith.mulf %427, %425 : vector<15x15xf32>
    %429 = arith.addf %411, %428 : vector<15x15xf32>
    %c59 = arith.constant 59 : index
    %430 = memref.load %arg6[%c59] : memref<144xf32, #tpu.memory_space<smem>>
    %431 = vector.broadcast %430 : f32 to vector<15x15xf32>
    %432 = arith.mulf %431, %425 : vector<15x15xf32>
    %433 = arith.addf %415, %432 : vector<15x15xf32>
    %c95 = arith.constant 95 : index
    %434 = memref.load %arg6[%c95] : memref<144xf32, #tpu.memory_space<smem>>
    %435 = vector.broadcast %434 : f32 to vector<15x15xf32>
    %436 = arith.mulf %435, %425 : vector<15x15xf32>
    %437 = arith.addf %419, %436 : vector<15x15xf32>
    %c131 = arith.constant 131 : index
    %438 = memref.load %arg6[%c131] : memref<144xf32, #tpu.memory_space<smem>>
    %439 = vector.broadcast %438 : f32 to vector<15x15xf32>
    %440 = arith.mulf %439, %425 : vector<15x15xf32>
    %441 = arith.addf %423, %440 : vector<15x15xf32>
    %442 = vector.extract_strided_slice %387 {offsets = [3, 0, 0], sizes = [1, 15, 15], strides = [1, 1, 1]} : vector<4x15x15xf32> to vector<1x15x15xf32>
    %443 = vector.shape_cast %442 : vector<1x15x15xf32> to vector<15x15xf32>
    %c32 = arith.constant 32 : index
    %444 = memref.load %arg6[%c32] : memref<144xf32, #tpu.memory_space<smem>>
    %445 = vector.broadcast %444 : f32 to vector<15x15xf32>
    %446 = arith.mulf %445, %443 : vector<15x15xf32>
    %447 = arith.addf %429, %446 : vector<15x15xf32>
    %c68 = arith.constant 68 : index
    %448 = memref.load %arg6[%c68] : memref<144xf32, #tpu.memory_space<smem>>
    %449 = vector.broadcast %448 : f32 to vector<15x15xf32>
    %450 = arith.mulf %449, %443 : vector<15x15xf32>
    %451 = arith.addf %433, %450 : vector<15x15xf32>
    %c104 = arith.constant 104 : index
    %452 = memref.load %arg6[%c104] : memref<144xf32, #tpu.memory_space<smem>>
    %453 = vector.broadcast %452 : f32 to vector<15x15xf32>
    %454 = arith.mulf %453, %443 : vector<15x15xf32>
    %455 = arith.addf %437, %454 : vector<15x15xf32>
    %c140 = arith.constant 140 : index
    %456 = memref.load %arg6[%c140] : memref<144xf32, #tpu.memory_space<smem>>
    %457 = vector.broadcast %456 : f32 to vector<15x15xf32>
    %458 = arith.mulf %457, %443 : vector<15x15xf32>
    %459 = arith.addf %441, %458 : vector<15x15xf32>
    %c0_31 = arith.constant 0 : index
    %c0_32 = arith.constant 0 : index
    %c1_33 = arith.constant 1 : index
    %c0_34 = arith.constant 0 : index
    %460 = vector.load %arg2[%c0_31, %c0_32, %c1_33, %c0_34] : memref<1x4x16x16xf32, #tpu.memory_space<vmem>>, vector<1x4x15x15xf32>
    %461 = vector.shape_cast %460 : vector<1x4x15x15xf32> to vector<4x15x15xf32>
    %462 = vector.extract_strided_slice %461 {offsets = [0, 0, 0], sizes = [1, 15, 15], strides = [1, 1, 1]} : vector<4x15x15xf32> to vector<1x15x15xf32>
    %463 = vector.shape_cast %462 : vector<1x15x15xf32> to vector<15x15xf32>
    %c6 = arith.constant 6 : index
    %464 = memref.load %arg6[%c6] : memref<144xf32, #tpu.memory_space<smem>>
    %465 = vector.broadcast %464 : f32 to vector<15x15xf32>
    %466 = arith.mulf %465, %463 : vector<15x15xf32>
    %467 = arith.addf %447, %466 : vector<15x15xf32>
    %c42 = arith.constant 42 : index
    %468 = memref.load %arg6[%c42] : memref<144xf32, #tpu.memory_space<smem>>
    %469 = vector.broadcast %468 : f32 to vector<15x15xf32>
    %470 = arith.mulf %469, %463 : vector<15x15xf32>
    %471 = arith.addf %451, %470 : vector<15x15xf32>
    %c78 = arith.constant 78 : index
    %472 = memref.load %arg6[%c78] : memref<144xf32, #tpu.memory_space<smem>>
    %473 = vector.broadcast %472 : f32 to vector<15x15xf32>
    %474 = arith.mulf %473, %463 : vector<15x15xf32>
    %475 = arith.addf %455, %474 : vector<15x15xf32>
    %c114 = arith.constant 114 : index
    %476 = memref.load %arg6[%c114] : memref<144xf32, #tpu.memory_space<smem>>
    %477 = vector.broadcast %476 : f32 to vector<15x15xf32>
    %478 = arith.mulf %477, %463 : vector<15x15xf32>
    %479 = arith.addf %459, %478 : vector<15x15xf32>
    %480 = vector.extract_strided_slice %461 {offsets = [1, 0, 0], sizes = [1, 15, 15], strides = [1, 1, 1]} : vector<4x15x15xf32> to vector<1x15x15xf32>
    %481 = vector.shape_cast %480 : vector<1x15x15xf32> to vector<15x15xf32>
    %c15 = arith.constant 15 : index
    %482 = memref.load %arg6[%c15] : memref<144xf32, #tpu.memory_space<smem>>
    %483 = vector.broadcast %482 : f32 to vector<15x15xf32>
    %484 = arith.mulf %483, %481 : vector<15x15xf32>
    %485 = arith.addf %467, %484 : vector<15x15xf32>
    %c51 = arith.constant 51 : index
    %486 = memref.load %arg6[%c51] : memref<144xf32, #tpu.memory_space<smem>>
    %487 = vector.broadcast %486 : f32 to vector<15x15xf32>
    %488 = arith.mulf %487, %481 : vector<15x15xf32>
    %489 = arith.addf %471, %488 : vector<15x15xf32>
    %c87 = arith.constant 87 : index
    %490 = memref.load %arg6[%c87] : memref<144xf32, #tpu.memory_space<smem>>
    %491 = vector.broadcast %490 : f32 to vector<15x15xf32>
    %492 = arith.mulf %491, %481 : vector<15x15xf32>
    %493 = arith.addf %475, %492 : vector<15x15xf32>
    %c123 = arith.constant 123 : index
    %494 = memref.load %arg6[%c123] : memref<144xf32, #tpu.memory_space<smem>>
    %495 = vector.broadcast %494 : f32 to vector<15x15xf32>
    %496 = arith.mulf %495, %481 : vector<15x15xf32>
    %497 = arith.addf %479, %496 : vector<15x15xf32>
    %498 = vector.extract_strided_slice %461 {offsets = [2, 0, 0], sizes = [1, 15, 15], strides = [1, 1, 1]} : vector<4x15x15xf32> to vector<1x15x15xf32>
    %499 = vector.shape_cast %498 : vector<1x15x15xf32> to vector<15x15xf32>
    %c24 = arith.constant 24 : index
    %500 = memref.load %arg6[%c24] : memref<144xf32, #tpu.memory_space<smem>>
    %501 = vector.broadcast %500 : f32 to vector<15x15xf32>
    %502 = arith.mulf %501, %499 : vector<15x15xf32>
    %503 = arith.addf %485, %502 : vector<15x15xf32>
    %c60 = arith.constant 60 : index
    %504 = memref.load %arg6[%c60] : memref<144xf32, #tpu.memory_space<smem>>
    %505 = vector.broadcast %504 : f32 to vector<15x15xf32>
    %506 = arith.mulf %505, %499 : vector<15x15xf32>
    %507 = arith.addf %489, %506 : vector<15x15xf32>
    %c96 = arith.constant 96 : index
    %508 = memref.load %arg6[%c96] : memref<144xf32, #tpu.memory_space<smem>>
    %509 = vector.broadcast %508 : f32 to vector<15x15xf32>
    %510 = arith.mulf %509, %499 : vector<15x15xf32>
    %511 = arith.addf %493, %510 : vector<15x15xf32>
    %c132 = arith.constant 132 : index
    %512 = memref.load %arg6[%c132] : memref<144xf32, #tpu.memory_space<smem>>
    %513 = vector.broadcast %512 : f32 to vector<15x15xf32>
    %514 = arith.mulf %513, %499 : vector<15x15xf32>
    %515 = arith.addf %497, %514 : vector<15x15xf32>
    %516 = vector.extract_strided_slice %461 {offsets = [3, 0, 0], sizes = [1, 15, 15], strides = [1, 1, 1]} : vector<4x15x15xf32> to vector<1x15x15xf32>
    %517 = vector.shape_cast %516 : vector<1x15x15xf32> to vector<15x15xf32>
    %c33 = arith.constant 33 : index
    %518 = memref.load %arg6[%c33] : memref<144xf32, #tpu.memory_space<smem>>
    %519 = vector.broadcast %518 : f32 to vector<15x15xf32>
    %520 = arith.mulf %519, %517 : vector<15x15xf32>
    %521 = arith.addf %503, %520 : vector<15x15xf32>
    %c69 = arith.constant 69 : index
    %522 = memref.load %arg6[%c69] : memref<144xf32, #tpu.memory_space<smem>>
    %523 = vector.broadcast %522 : f32 to vector<15x15xf32>
    %524 = arith.mulf %523, %517 : vector<15x15xf32>
    %525 = arith.addf %507, %524 : vector<15x15xf32>
    %c105 = arith.constant 105 : index
    %526 = memref.load %arg6[%c105] : memref<144xf32, #tpu.memory_space<smem>>
    %527 = vector.broadcast %526 : f32 to vector<15x15xf32>
    %528 = arith.mulf %527, %517 : vector<15x15xf32>
    %529 = arith.addf %511, %528 : vector<15x15xf32>
    %c141 = arith.constant 141 : index
    %530 = memref.load %arg6[%c141] : memref<144xf32, #tpu.memory_space<smem>>
    %531 = vector.broadcast %530 : f32 to vector<15x15xf32>
    %532 = arith.mulf %531, %517 : vector<15x15xf32>
    %533 = arith.addf %515, %532 : vector<15x15xf32>
    %c0_35 = arith.constant 0 : index
    %c0_36 = arith.constant 0 : index
    %c1_37 = arith.constant 1 : index
    %c0_38 = arith.constant 0 : index
    %534 = vector.load %arg3[%c0_35, %c0_36, %c1_37, %c0_38] : memref<1x4x16x16xf32, #tpu.memory_space<vmem>>, vector<1x4x15x15xf32>
    %535 = vector.shape_cast %534 : vector<1x4x15x15xf32> to vector<4x15x15xf32>
    %536 = vector.extract_strided_slice %535 {offsets = [0, 0, 0], sizes = [1, 15, 15], strides = [1, 1, 1]} : vector<4x15x15xf32> to vector<1x15x15xf32>
    %537 = vector.shape_cast %536 : vector<1x15x15xf32> to vector<15x15xf32>
    %c7 = arith.constant 7 : index
    %538 = memref.load %arg6[%c7] : memref<144xf32, #tpu.memory_space<smem>>
    %539 = vector.broadcast %538 : f32 to vector<15x15xf32>
    %540 = arith.mulf %539, %537 : vector<15x15xf32>
    %541 = arith.addf %521, %540 : vector<15x15xf32>
    %c43 = arith.constant 43 : index
    %542 = memref.load %arg6[%c43] : memref<144xf32, #tpu.memory_space<smem>>
    %543 = vector.broadcast %542 : f32 to vector<15x15xf32>
    %544 = arith.mulf %543, %537 : vector<15x15xf32>
    %545 = arith.addf %525, %544 : vector<15x15xf32>
    %c79 = arith.constant 79 : index
    %546 = memref.load %arg6[%c79] : memref<144xf32, #tpu.memory_space<smem>>
    %547 = vector.broadcast %546 : f32 to vector<15x15xf32>
    %548 = arith.mulf %547, %537 : vector<15x15xf32>
    %549 = arith.addf %529, %548 : vector<15x15xf32>
    %c115 = arith.constant 115 : index
    %550 = memref.load %arg6[%c115] : memref<144xf32, #tpu.memory_space<smem>>
    %551 = vector.broadcast %550 : f32 to vector<15x15xf32>
    %552 = arith.mulf %551, %537 : vector<15x15xf32>
    %553 = arith.addf %533, %552 : vector<15x15xf32>
    %554 = vector.extract_strided_slice %535 {offsets = [1, 0, 0], sizes = [1, 15, 15], strides = [1, 1, 1]} : vector<4x15x15xf32> to vector<1x15x15xf32>
    %555 = vector.shape_cast %554 : vector<1x15x15xf32> to vector<15x15xf32>
    %c16 = arith.constant 16 : index
    %556 = memref.load %arg6[%c16] : memref<144xf32, #tpu.memory_space<smem>>
    %557 = vector.broadcast %556 : f32 to vector<15x15xf32>
    %558 = arith.mulf %557, %555 : vector<15x15xf32>
    %559 = arith.addf %541, %558 : vector<15x15xf32>
    %c52 = arith.constant 52 : index
    %560 = memref.load %arg6[%c52] : memref<144xf32, #tpu.memory_space<smem>>
    %561 = vector.broadcast %560 : f32 to vector<15x15xf32>
    %562 = arith.mulf %561, %555 : vector<15x15xf32>
    %563 = arith.addf %545, %562 : vector<15x15xf32>
    %c88 = arith.constant 88 : index
    %564 = memref.load %arg6[%c88] : memref<144xf32, #tpu.memory_space<smem>>
    %565 = vector.broadcast %564 : f32 to vector<15x15xf32>
    %566 = arith.mulf %565, %555 : vector<15x15xf32>
    %567 = arith.addf %549, %566 : vector<15x15xf32>
    %c124 = arith.constant 124 : index
    %568 = memref.load %arg6[%c124] : memref<144xf32, #tpu.memory_space<smem>>
    %569 = vector.broadcast %568 : f32 to vector<15x15xf32>
    %570 = arith.mulf %569, %555 : vector<15x15xf32>
    %571 = arith.addf %553, %570 : vector<15x15xf32>
    %572 = vector.extract_strided_slice %535 {offsets = [2, 0, 0], sizes = [1, 15, 15], strides = [1, 1, 1]} : vector<4x15x15xf32> to vector<1x15x15xf32>
    %573 = vector.shape_cast %572 : vector<1x15x15xf32> to vector<15x15xf32>
    %c25 = arith.constant 25 : index
    %574 = memref.load %arg6[%c25] : memref<144xf32, #tpu.memory_space<smem>>
    %575 = vector.broadcast %574 : f32 to vector<15x15xf32>
    %576 = arith.mulf %575, %573 : vector<15x15xf32>
    %577 = arith.addf %559, %576 : vector<15x15xf32>
    %c61 = arith.constant 61 : index
    %578 = memref.load %arg6[%c61] : memref<144xf32, #tpu.memory_space<smem>>
    %579 = vector.broadcast %578 : f32 to vector<15x15xf32>
    %580 = arith.mulf %579, %573 : vector<15x15xf32>
    %581 = arith.addf %563, %580 : vector<15x15xf32>
    %c97 = arith.constant 97 : index
    %582 = memref.load %arg6[%c97] : memref<144xf32, #tpu.memory_space<smem>>
    %583 = vector.broadcast %582 : f32 to vector<15x15xf32>
    %584 = arith.mulf %583, %573 : vector<15x15xf32>
    %585 = arith.addf %567, %584 : vector<15x15xf32>
    %c133 = arith.constant 133 : index
    %586 = memref.load %arg6[%c133] : memref<144xf32, #tpu.memory_space<smem>>
    %587 = vector.broadcast %586 : f32 to vector<15x15xf32>
    %588 = arith.mulf %587, %573 : vector<15x15xf32>
    %589 = arith.addf %571, %588 : vector<15x15xf32>
    %590 = vector.extract_strided_slice %535 {offsets = [3, 0, 0], sizes = [1, 15, 15], strides = [1, 1, 1]} : vector<4x15x15xf32> to vector<1x15x15xf32>
    %591 = vector.shape_cast %590 : vector<1x15x15xf32> to vector<15x15xf32>
    %c34 = arith.constant 34 : index
    %592 = memref.load %arg6[%c34] : memref<144xf32, #tpu.memory_space<smem>>
    %593 = vector.broadcast %592 : f32 to vector<15x15xf32>
    %594 = arith.mulf %593, %591 : vector<15x15xf32>
    %595 = arith.addf %577, %594 : vector<15x15xf32>
    %c70 = arith.constant 70 : index
    %596 = memref.load %arg6[%c70] : memref<144xf32, #tpu.memory_space<smem>>
    %597 = vector.broadcast %596 : f32 to vector<15x15xf32>
    %598 = arith.mulf %597, %591 : vector<15x15xf32>
    %599 = arith.addf %581, %598 : vector<15x15xf32>
    %c106 = arith.constant 106 : index
    %600 = memref.load %arg6[%c106] : memref<144xf32, #tpu.memory_space<smem>>
    %601 = vector.broadcast %600 : f32 to vector<15x15xf32>
    %602 = arith.mulf %601, %591 : vector<15x15xf32>
    %603 = arith.addf %585, %602 : vector<15x15xf32>
    %c142 = arith.constant 142 : index
    %604 = memref.load %arg6[%c142] : memref<144xf32, #tpu.memory_space<smem>>
    %605 = vector.broadcast %604 : f32 to vector<15x15xf32>
    %606 = arith.mulf %605, %591 : vector<15x15xf32>
    %607 = arith.addf %589, %606 : vector<15x15xf32>
    %c0_39 = arith.constant 0 : index
    %c0_40 = arith.constant 0 : index
    %c1_41 = arith.constant 1 : index
    %c1_42 = arith.constant 1 : index
    %608 = vector.load %arg2[%c0_39, %c0_40, %c1_41, %c1_42] : memref<1x4x16x16xf32, #tpu.memory_space<vmem>>, vector<1x4x15x15xf32>
    %609 = vector.shape_cast %608 : vector<1x4x15x15xf32> to vector<4x15x15xf32>
    %610 = vector.extract_strided_slice %609 {offsets = [0, 0, 0], sizes = [1, 15, 15], strides = [1, 1, 1]} : vector<4x15x15xf32> to vector<1x15x15xf32>
    %611 = vector.shape_cast %610 : vector<1x15x15xf32> to vector<15x15xf32>
    %c8 = arith.constant 8 : index
    %612 = memref.load %arg6[%c8] : memref<144xf32, #tpu.memory_space<smem>>
    %613 = vector.broadcast %612 : f32 to vector<15x15xf32>
    %614 = arith.mulf %613, %611 : vector<15x15xf32>
    %615 = arith.addf %595, %614 : vector<15x15xf32>
    %c44 = arith.constant 44 : index
    %616 = memref.load %arg6[%c44] : memref<144xf32, #tpu.memory_space<smem>>
    %617 = vector.broadcast %616 : f32 to vector<15x15xf32>
    %618 = arith.mulf %617, %611 : vector<15x15xf32>
    %619 = arith.addf %599, %618 : vector<15x15xf32>
    %c80 = arith.constant 80 : index
    %620 = memref.load %arg6[%c80] : memref<144xf32, #tpu.memory_space<smem>>
    %621 = vector.broadcast %620 : f32 to vector<15x15xf32>
    %622 = arith.mulf %621, %611 : vector<15x15xf32>
    %623 = arith.addf %603, %622 : vector<15x15xf32>
    %c116 = arith.constant 116 : index
    %624 = memref.load %arg6[%c116] : memref<144xf32, #tpu.memory_space<smem>>
    %625 = vector.broadcast %624 : f32 to vector<15x15xf32>
    %626 = arith.mulf %625, %611 : vector<15x15xf32>
    %627 = arith.addf %607, %626 : vector<15x15xf32>
    %628 = vector.extract_strided_slice %609 {offsets = [1, 0, 0], sizes = [1, 15, 15], strides = [1, 1, 1]} : vector<4x15x15xf32> to vector<1x15x15xf32>
    %629 = vector.shape_cast %628 : vector<1x15x15xf32> to vector<15x15xf32>
    %c17 = arith.constant 17 : index
    %630 = memref.load %arg6[%c17] : memref<144xf32, #tpu.memory_space<smem>>
    %631 = vector.broadcast %630 : f32 to vector<15x15xf32>
    %632 = arith.mulf %631, %629 : vector<15x15xf32>
    %633 = arith.addf %615, %632 : vector<15x15xf32>
    %c53 = arith.constant 53 : index
    %634 = memref.load %arg6[%c53] : memref<144xf32, #tpu.memory_space<smem>>
    %635 = vector.broadcast %634 : f32 to vector<15x15xf32>
    %636 = arith.mulf %635, %629 : vector<15x15xf32>
    %637 = arith.addf %619, %636 : vector<15x15xf32>
    %c89 = arith.constant 89 : index
    %638 = memref.load %arg6[%c89] : memref<144xf32, #tpu.memory_space<smem>>
    %639 = vector.broadcast %638 : f32 to vector<15x15xf32>
    %640 = arith.mulf %639, %629 : vector<15x15xf32>
    %641 = arith.addf %623, %640 : vector<15x15xf32>
    %c125 = arith.constant 125 : index
    %642 = memref.load %arg6[%c125] : memref<144xf32, #tpu.memory_space<smem>>
    %643 = vector.broadcast %642 : f32 to vector<15x15xf32>
    %644 = arith.mulf %643, %629 : vector<15x15xf32>
    %645 = arith.addf %627, %644 : vector<15x15xf32>
    %646 = vector.extract_strided_slice %609 {offsets = [2, 0, 0], sizes = [1, 15, 15], strides = [1, 1, 1]} : vector<4x15x15xf32> to vector<1x15x15xf32>
    %647 = vector.shape_cast %646 : vector<1x15x15xf32> to vector<15x15xf32>
    %c26 = arith.constant 26 : index
    %648 = memref.load %arg6[%c26] : memref<144xf32, #tpu.memory_space<smem>>
    %649 = vector.broadcast %648 : f32 to vector<15x15xf32>
    %650 = arith.mulf %649, %647 : vector<15x15xf32>
    %651 = arith.addf %633, %650 : vector<15x15xf32>
    %c62 = arith.constant 62 : index
    %652 = memref.load %arg6[%c62] : memref<144xf32, #tpu.memory_space<smem>>
    %653 = vector.broadcast %652 : f32 to vector<15x15xf32>
    %654 = arith.mulf %653, %647 : vector<15x15xf32>
    %655 = arith.addf %637, %654 : vector<15x15xf32>
    %c98 = arith.constant 98 : index
    %656 = memref.load %arg6[%c98] : memref<144xf32, #tpu.memory_space<smem>>
    %657 = vector.broadcast %656 : f32 to vector<15x15xf32>
    %658 = arith.mulf %657, %647 : vector<15x15xf32>
    %659 = arith.addf %641, %658 : vector<15x15xf32>
    %c134 = arith.constant 134 : index
    %660 = memref.load %arg6[%c134] : memref<144xf32, #tpu.memory_space<smem>>
    %661 = vector.broadcast %660 : f32 to vector<15x15xf32>
    %662 = arith.mulf %661, %647 : vector<15x15xf32>
    %663 = arith.addf %645, %662 : vector<15x15xf32>
    %664 = vector.extract_strided_slice %609 {offsets = [3, 0, 0], sizes = [1, 15, 15], strides = [1, 1, 1]} : vector<4x15x15xf32> to vector<1x15x15xf32>
    %665 = vector.shape_cast %664 : vector<1x15x15xf32> to vector<15x15xf32>
    %c35 = arith.constant 35 : index
    %666 = memref.load %arg6[%c35] : memref<144xf32, #tpu.memory_space<smem>>
    %667 = vector.broadcast %666 : f32 to vector<15x15xf32>
    %668 = arith.mulf %667, %665 : vector<15x15xf32>
    %669 = arith.addf %651, %668 : vector<15x15xf32>
    %c71 = arith.constant 71 : index
    %670 = memref.load %arg6[%c71] : memref<144xf32, #tpu.memory_space<smem>>
    %671 = vector.broadcast %670 : f32 to vector<15x15xf32>
    %672 = arith.mulf %671, %665 : vector<15x15xf32>
    %673 = arith.addf %655, %672 : vector<15x15xf32>
    %c107 = arith.constant 107 : index
    %674 = memref.load %arg6[%c107] : memref<144xf32, #tpu.memory_space<smem>>
    %675 = vector.broadcast %674 : f32 to vector<15x15xf32>
    %676 = arith.mulf %675, %665 : vector<15x15xf32>
    %677 = arith.addf %659, %676 : vector<15x15xf32>
    %c143 = arith.constant 143 : index
    %678 = memref.load %arg6[%c143] : memref<144xf32, #tpu.memory_space<smem>>
    %679 = vector.broadcast %678 : f32 to vector<15x15xf32>
    %680 = arith.mulf %679, %665 : vector<15x15xf32>
    %681 = arith.addf %663, %680 : vector<15x15xf32>
    %c0_43 = arith.constant 0 : index
    %c0_44 = arith.constant 0 : index
    %c0_45 = arith.constant 0 : index
    %c0_46 = arith.constant 0 : index
    %682 = vector.load %arg8[%c0_43, %c0_44, %c0_45, %c0_46] : memref<1x4x15x15xf32, #tpu.memory_space<vmem>>, vector<1x1x15x15xf32>
    %683 = vector.shape_cast %682 : vector<1x1x15x15xf32> to vector<15x15xf32>
    %684 = vector.shape_cast %669 : vector<15x15xf32> to vector<1x1x15x15xf32>
    tpu.vector_store %arg8[%c0_43, %c0_44, %c0_45, %c0_46], %684 {strides = array<i32>} : memref<1x4x15x15xf32, #tpu.memory_space<vmem>>, vector<1x1x15x15xf32>,
    %c0_47 = arith.constant 0 : index
    %c1_48 = arith.constant 1 : index
    %c0_49 = arith.constant 0 : index
    %c0_50 = arith.constant 0 : index
    %685 = vector.load %arg8[%c0_47, %c1_48, %c0_49, %c0_50] : memref<1x4x15x15xf32, #tpu.memory_space<vmem>>, vector<1x1x15x15xf32>
    %686 = vector.shape_cast %685 : vector<1x1x15x15xf32> to vector<15x15xf32>
    %687 = vector.shape_cast %673 : vector<15x15xf32> to vector<1x1x15x15xf32>
    tpu.vector_store %arg8[%c0_47, %c1_48, %c0_49, %c0_50], %687 {strides = array<i32>} : memref<1x4x15x15xf32, #tpu.memory_space<vmem>>, vector<1x1x15x15xf32>,
    %c0_51 = arith.constant 0 : index
    %c2_52 = arith.constant 2 : index
    %c0_53 = arith.constant 0 : index
    %c0_54 = arith.constant 0 : index
    %688 = vector.load %arg8[%c0_51, %c2_52, %c0_53, %c0_54] : memref<1x4x15x15xf32, #tpu.memory_space<vmem>>, vector<1x1x15x15xf32>
    %689 = vector.shape_cast %688 : vector<1x1x15x15xf32> to vector<15x15xf32>
    %690 = vector.shape_cast %677 : vector<15x15xf32> to vector<1x1x15x15xf32>
    tpu.vector_store %arg8[%c0_51, %c2_52, %c0_53, %c0_54], %690 {strides = array<i32>} : memref<1x4x15x15xf32, #tpu.memory_space<vmem>>, vector<1x1x15x15xf32>,
    %c0_55 = arith.constant 0 : index
    %c3_56 = arith.constant 3 : index
    %c0_57 = arith.constant 0 : index
    %c0_58 = arith.constant 0 : index
    %691 = vector.load %arg8[%c0_55, %c3_56, %c0_57, %c0_58] : memref<1x4x15x15xf32, #tpu.memory_space<vmem>>, vector<1x1x15x15xf32>
    %692 = vector.shape_cast %691 : vector<1x1x15x15xf32> to vector<15x15xf32>
    %693 = vector.shape_cast %681 : vector<15x15xf32> to vector<1x1x15x15xf32>
    tpu.vector_store %arg8[%c0_55, %c3_56, %c0_57, %c0_58], %693 {strides = array<i32>} : memref<1x4x15x15xf32, #tpu.memory_space<vmem>>, vector<1x1x15x15xf32>,
    return
  }
  func.func @transform_0(%arg0: i32, %arg1: i32) -> (i32, i32, i32, i32) {
    %c1_i32 = arith.constant 1 : i32
    %0 = arith.muli %arg0, %c1_i32 : i32
    %1 = arith.addi %0, %arg1 : i32
    %c0_i32 = arith.constant 0 : i32
    %c0_i32_0 = arith.constant 0 : i32
    %c0_i32_1 = arith.constant 0 : i32
    %c0_i32_2 = arith.constant 0 : i32
    return %1, %c0_i32, %c0_i32_0, %c0_i32_1 : i32, i32, i32, i32
  }
  func.func @transform_1(%arg0: i32, %arg1: i32) -> (i32, i32, i32, i32) {
    %c1_i32 = arith.constant 1 : i32
    %0 = arith.muli %arg0, %c1_i32 : i32
    %1 = arith.addi %0, %arg1 : i32
    %c0_i32 = arith.constant 0 : i32
    %c0_i32_0 = arith.constant 0 : i32
    %c0_i32_1 = arith.constant 0 : i32
    %c0_i32_2 = arith.constant 0 : i32
    return %1, %c0_i32, %c0_i32_0, %c0_i32_1 : i32, i32, i32, i32
  }
  func.func @transform_2(%arg0: i32, %arg1: i32) -> (i32, i32, i32, i32) {
    %c1_i32 = arith.constant 1 : i32
    %0 = arith.muli %arg0, %c1_i32 : i32
    %1 = arith.addi %0, %arg1 : i32
    %c0_i32 = arith.constant 0 : i32
    %c0_i32_0 = arith.constant 0 : i32
    %c0_i32_1 = arith.constant 0 : i32
    %c0_i32_2 = arith.constant 0 : i32
    return %1, %c0_i32, %c0_i32_0, %c0_i32_1 : i32, i32, i32, i32
  }
  func.func @transform_3(%arg0: i32, %arg1: i32) -> (i32, i32, i32, i32) {
    %c1_i32 = arith.constant 1 : i32
    %0 = arith.muli %arg0, %c1_i32 : i32
    %1 = arith.addi %0, %arg1 : i32
    %c0_i32 = arith.constant 0 : i32
    %c0_i32_0 = arith.constant 0 : i32
    %c0_i32_1 = arith.constant 0 : i32
    %c0_i32_2 = arith.constant 0 : i32
    return %1, %c0_i32, %c0_i32_0, %c0_i32_1 : i32, i32, i32, i32
  }
  func.func @transform_4(%arg0: i32, %arg1: i32) -> i32 {
    %c0_i32 = arith.constant 0 : i32
    %c0_i32_0 = arith.constant 0 : i32
    return %c0_i32 : i32
  }
  func.func @transform_5(%arg0: i32, %arg1: i32) -> i32 {
    %c0_i32 = arith.constant 0 : i32
    %c0_i32_0 = arith.constant 0 : i32
    return %c0_i32 : i32
  }
  func.func @transform_6(%arg0: i32, %arg1: i32) -> (i32, i32, i32, i32) {
    %c0_i32 = arith.constant 0 : i32
    %c0_i32_0 = arith.constant 0 : i32
    %c0_i32_1 = arith.constant 0 : i32
    return %arg0, %c0_i32, %arg1, %c0_i32_0 : i32, i32, i32, i32
  }
}

module attributes {stable_mosaic.version = 11 : i64} {
  func.func @_maxpool_kernel(%arg0: i32, %arg1: i32, %arg2: memref<1x4x5x15xf32, #tpu.memory_space<vmem>>, %arg3: memref<1x4x5x15xf32, #tpu.memory_space<vmem>>, %arg4: memref<1x4x5x15xf32, #tpu.memory_space<vmem>>, %arg5: memref<1x4x3x9xf32, #tpu.memory_space<vmem>>) attributes {dimension_semantics = [#tpu.dimension_semantics<parallel>, #tpu.dimension_semantics<parallel>], iteration_bounds = array<i64: 2, 1>, scalar_prefetch = 0 : i64, scratch_operands = 0 : i64, tpu.core_type = #tpu.core_type<tc>, window_params = [{transform_indices = @transform_0, window_bounds = array<i64: 1, 4, 5, 15>}, {transform_indices = @transform_1, window_bounds = array<i64: 1, 4, 5, 15>}, {transform_indices = @transform_2, window_bounds = array<i64: 1, 4, 5, 15>}, {transform_indices = @transform_3, window_bounds = array<i64: 1, 4, 3, 9>}]} {
    %c0 = arith.constant 0 : index
    %c0_0 = arith.constant 0 : index
    %c0_1 = arith.constant 0 : index
    %c0_2 = arith.constant 0 : index
    %0 = vector.load %arg2[%c0, %c0_0, %c0_1, %c0_2] : memref<1x4x5x15xf32, #tpu.memory_space<vmem>>, vector<1x4x5x15xf32>
    %1 = vector.shape_cast %0 : vector<1x4x5x15xf32> to vector<4x5x15xf32>
    %c0_3 = arith.constant 0 : index
    %c0_4 = arith.constant 0 : index
    %c0_5 = arith.constant 0 : index
    %c0_6 = arith.constant 0 : index
    %2 = vector.load %arg3[%c0_3, %c0_4, %c0_5, %c0_6] : memref<1x4x5x15xf32, #tpu.memory_space<vmem>>, vector<1x4x5x15xf32>
    %3 = vector.shape_cast %2 : vector<1x4x5x15xf32> to vector<4x5x15xf32>
    %c0_7 = arith.constant 0 : index
    %c0_8 = arith.constant 0 : index
    %c0_9 = arith.constant 0 : index
    %c0_10 = arith.constant 0 : index
    %4 = vector.load %arg4[%c0_7, %c0_8, %c0_9, %c0_10] : memref<1x4x5x15xf32, #tpu.memory_space<vmem>>, vector<1x4x5x15xf32>
    %5 = vector.shape_cast %4 : vector<1x4x5x15xf32> to vector<4x5x15xf32>
    %6 = vector.extract_strided_slice %1 {offsets = [0, 0, 0], sizes = [4, 4, 15], strides = [1, 1, 1]} : vector<4x5x15xf32> to vector<4x4x15xf32>
    %7 = vector.extract_strided_slice %3 {offsets = [0, 0, 0], sizes = [4, 4, 15], strides = [1, 1, 1]} : vector<4x5x15xf32> to vector<4x4x15xf32>
    %8 = arith.maximumf %6, %7 : vector<4x4x15xf32>
    %9 = vector.extract_strided_slice %5 {offsets = [0, 0, 0], sizes = [4, 4, 15], strides = [1, 1, 1]} : vector<4x5x15xf32> to vector<4x4x15xf32>
    %10 = arith.maximumf %8, %9 : vector<4x4x15xf32>
    %11 = vector.extract_strided_slice %10 {offsets = [0, 0, 0], sizes = [4, 3, 15], strides = [1, 1, 1]} : vector<4x4x15xf32> to vector<4x3x15xf32>
    %12 = vector.extract_strided_slice %10 {offsets = [0, 1, 0], sizes = [4, 3, 15], strides = [1, 1, 1]} : vector<4x4x15xf32> to vector<4x3x15xf32>
    %13 = arith.maximumf %11, %12 : vector<4x3x15xf32>
    %14 = vector.extract_strided_slice %1 {offsets = [0, 2, 0], sizes = [4, 3, 15], strides = [1, 1, 1]} : vector<4x5x15xf32> to vector<4x3x15xf32>
    %15 = arith.maximumf %13, %14 : vector<4x3x15xf32>
    %16 = vector.extract_strided_slice %15 {offsets = [0, 0, 0], sizes = [4, 3, 9], strides = [1, 1, 1]} : vector<4x3x15xf32> to vector<4x3x9xf32>
    %17 = vector.extract_strided_slice %15 {offsets = [0, 0, 1], sizes = [4, 3, 9], strides = [1, 1, 1]} : vector<4x3x15xf32> to vector<4x3x9xf32>
    %18 = arith.maximumf %16, %17 : vector<4x3x9xf32>
    %19 = vector.extract_strided_slice %15 {offsets = [0, 0, 2], sizes = [4, 3, 9], strides = [1, 1, 1]} : vector<4x3x15xf32> to vector<4x3x9xf32>
    %20 = arith.maximumf %18, %19 : vector<4x3x9xf32>
    %21 = vector.extract_strided_slice %15 {offsets = [0, 0, 3], sizes = [4, 3, 9], strides = [1, 1, 1]} : vector<4x3x15xf32> to vector<4x3x9xf32>
    %22 = arith.maximumf %20, %21 : vector<4x3x9xf32>
    %23 = vector.extract_strided_slice %15 {offsets = [0, 0, 4], sizes = [4, 3, 9], strides = [1, 1, 1]} : vector<4x3x15xf32> to vector<4x3x9xf32>
    %24 = arith.maximumf %22, %23 : vector<4x3x9xf32>
    %25 = vector.extract_strided_slice %15 {offsets = [0, 0, 5], sizes = [4, 3, 9], strides = [1, 1, 1]} : vector<4x3x15xf32> to vector<4x3x9xf32>
    %26 = arith.maximumf %24, %25 : vector<4x3x9xf32>
    %27 = vector.extract_strided_slice %15 {offsets = [0, 0, 6], sizes = [4, 3, 9], strides = [1, 1, 1]} : vector<4x3x15xf32> to vector<4x3x9xf32>
    %28 = arith.maximumf %26, %27 : vector<4x3x9xf32>
    %c0_11 = arith.constant 0 : index
    %c0_12 = arith.constant 0 : index
    %c0_13 = arith.constant 0 : index
    %c0_14 = arith.constant 0 : index
    %29 = vector.load %arg5[%c0_11, %c0_12, %c0_13, %c0_14] : memref<1x4x3x9xf32, #tpu.memory_space<vmem>>, vector<1x4x3x9xf32>
    %30 = vector.shape_cast %29 : vector<1x4x3x9xf32> to vector<4x3x9xf32>
    %31 = vector.shape_cast %28 : vector<4x3x9xf32> to vector<1x4x3x9xf32>
    tpu.vector_store %arg5[%c0_11, %c0_12, %c0_13, %c0_14], %31 {strides = array<i32>} : memref<1x4x3x9xf32, #tpu.memory_space<vmem>>, vector<1x4x3x9xf32>,
    return
  }
  func.func @transform_0(%arg0: i32, %arg1: i32) -> (i32, i32, i32, i32) {
    %c1_i32 = arith.constant 1 : i32
    %0 = arith.muli %arg0, %c1_i32 : i32
    %1 = arith.addi %0, %arg1 : i32
    %c0_i32 = arith.constant 0 : i32
    %c0_i32_0 = arith.constant 0 : i32
    %c0_i32_1 = arith.constant 0 : i32
    %c0_i32_2 = arith.constant 0 : i32
    return %1, %c0_i32, %c0_i32_0, %c0_i32_1 : i32, i32, i32, i32
  }
  func.func @transform_1(%arg0: i32, %arg1: i32) -> (i32, i32, i32, i32) {
    %c1_i32 = arith.constant 1 : i32
    %0 = arith.muli %arg0, %c1_i32 : i32
    %1 = arith.addi %0, %arg1 : i32
    %c0_i32 = arith.constant 0 : i32
    %c0_i32_0 = arith.constant 0 : i32
    %c0_i32_1 = arith.constant 0 : i32
    %c0_i32_2 = arith.constant 0 : i32
    return %1, %c0_i32, %c0_i32_0, %c0_i32_1 : i32, i32, i32, i32
  }
  func.func @transform_2(%arg0: i32, %arg1: i32) -> (i32, i32, i32, i32) {
    %c1_i32 = arith.constant 1 : i32
    %0 = arith.muli %arg0, %c1_i32 : i32
    %1 = arith.addi %0, %arg1 : i32
    %c0_i32 = arith.constant 0 : i32
    %c0_i32_0 = arith.constant 0 : i32
    %c0_i32_1 = arith.constant 0 : i32
    %c0_i32_2 = arith.constant 0 : i32
    return %1, %c0_i32, %c0_i32_0, %c0_i32_1 : i32, i32, i32, i32
  }
  func.func @transform_3(%arg0: i32, %arg1: i32) -> (i32, i32, i32, i32) {
    %c0_i32 = arith.constant 0 : i32
    %c0_i32_0 = arith.constant 0 : i32
    %c0_i32_1 = arith.constant 0 : i32
    return %arg0, %c0_i32, %arg1, %c0_i32_0 : i32, i32, i32, i32
  }
}

module attributes {stable_mosaic.version = 11 : i64} {
  func.func @_conv3_kernel(%arg0: i32, %arg1: i32, %arg2: memref<1x4x5x5xf32, #tpu.memory_space<vmem>>, %arg3: memref<144xf32, #tpu.memory_space<smem>>, %arg4: memref<4xf32, #tpu.memory_space<smem>>, %arg5: memref<1x4x3x3xf32, #tpu.memory_space<vmem>>) attributes {dimension_semantics = [#tpu.dimension_semantics<parallel>, #tpu.dimension_semantics<parallel>], iteration_bounds = array<i64: 2, 1>, scalar_prefetch = 0 : i64, scratch_operands = 0 : i64, tpu.core_type = #tpu.core_type<tc>, window_params = [{transform_indices = @transform_0, window_bounds = array<i64: 1, 4, 5, 5>}, {transform_indices = @transform_1, window_bounds = array<i64: 144>}, {transform_indices = @transform_2, window_bounds = array<i64: 4>}, {transform_indices = @transform_3, window_bounds = array<i64: 1, 4, 3, 3>}]} {
    %cst = arith.constant 0.000000e+00 : f32
    %0 = vector.broadcast %cst : f32 to vector<3x3xf32>
    %c0 = arith.constant 0 : index
    %1 = memref.load %arg4[%c0] : memref<4xf32, #tpu.memory_space<smem>>
    %2 = vector.broadcast %1 : f32 to vector<3x3xf32>
    %3 = arith.addf %0, %2 : vector<3x3xf32>
    %cst_0 = arith.constant 0.000000e+00 : f32
    %4 = vector.broadcast %cst_0 : f32 to vector<3x3xf32>
    %c1 = arith.constant 1 : index
    %5 = memref.load %arg4[%c1] : memref<4xf32, #tpu.memory_space<smem>>
    %6 = vector.broadcast %5 : f32 to vector<3x3xf32>
    %7 = arith.addf %4, %6 : vector<3x3xf32>
    %cst_1 = arith.constant 0.000000e+00 : f32
    %8 = vector.broadcast %cst_1 : f32 to vector<3x3xf32>
    %c2 = arith.constant 2 : index
    %9 = memref.load %arg4[%c2] : memref<4xf32, #tpu.memory_space<smem>>
    %10 = vector.broadcast %9 : f32 to vector<3x3xf32>
    %11 = arith.addf %8, %10 : vector<3x3xf32>
    %cst_2 = arith.constant 0.000000e+00 : f32
    %12 = vector.broadcast %cst_2 : f32 to vector<3x3xf32>
    %c3 = arith.constant 3 : index
    %13 = memref.load %arg4[%c3] : memref<4xf32, #tpu.memory_space<smem>>
    %14 = vector.broadcast %13 : f32 to vector<3x3xf32>
    %15 = arith.addf %12, %14 : vector<3x3xf32>
    %c0_3 = arith.constant 0 : index
    %c0_4 = arith.constant 0 : index
    %c0_5 = arith.constant 0 : index
    %c0_6 = arith.constant 0 : index
    %16 = vector.load %arg2[%c0_3, %c0_4, %c0_5, %c0_6] : memref<1x4x5x5xf32, #tpu.memory_space<vmem>>, vector<1x4x3x3xf32>
    %17 = vector.shape_cast %16 : vector<1x4x3x3xf32> to vector<4x3x3xf32>
    %18 = vector.extract_strided_slice %17 {offsets = [0, 0, 0], sizes = [1, 3, 3], strides = [1, 1, 1]} : vector<4x3x3xf32> to vector<1x3x3xf32>
    %19 = vector.shape_cast %18 : vector<1x3x3xf32> to vector<3x3xf32>
    %c0_7 = arith.constant 0 : index
    %20 = memref.load %arg3[%c0_7] : memref<144xf32, #tpu.memory_space<smem>>
    %21 = vector.broadcast %20 : f32 to vector<3x3xf32>
    %22 = arith.mulf %21, %19 : vector<3x3xf32>
    %23 = arith.addf %3, %22 : vector<3x3xf32>
    %c36 = arith.constant 36 : index
    %24 = memref.load %arg3[%c36] : memref<144xf32, #tpu.memory_space<smem>>
    %25 = vector.broadcast %24 : f32 to vector<3x3xf32>
    %26 = arith.mulf %25, %19 : vector<3x3xf32>
    %27 = arith.addf %7, %26 : vector<3x3xf32>
    %c72 = arith.constant 72 : index
    %28 = memref.load %arg3[%c72] : memref<144xf32, #tpu.memory_space<smem>>
    %29 = vector.broadcast %28 : f32 to vector<3x3xf32>
    %30 = arith.mulf %29, %19 : vector<3x3xf32>
    %31 = arith.addf %11, %30 : vector<3x3xf32>
    %c108 = arith.constant 108 : index
    %32 = memref.load %arg3[%c108] : memref<144xf32, #tpu.memory_space<smem>>
    %33 = vector.broadcast %32 : f32 to vector<3x3xf32>
    %34 = arith.mulf %33, %19 : vector<3x3xf32>
    %35 = arith.addf %15, %34 : vector<3x3xf32>
    %36 = vector.extract_strided_slice %17 {offsets = [1, 0, 0], sizes = [1, 3, 3], strides = [1, 1, 1]} : vector<4x3x3xf32> to vector<1x3x3xf32>
    %37 = vector.shape_cast %36 : vector<1x3x3xf32> to vector<3x3xf32>
    %c9 = arith.constant 9 : index
    %38 = memref.load %arg3[%c9] : memref<144xf32, #tpu.memory_space<smem>>
    %39 = vector.broadcast %38 : f32 to vector<3x3xf32>
    %40 = arith.mulf %39, %37 : vector<3x3xf32>
    %41 = arith.addf %23, %40 : vector<3x3xf32>
    %c45 = arith.constant 45 : index
    %42 = memref.load %arg3[%c45] : memref<144xf32, #tpu.memory_space<smem>>
    %43 = vector.broadcast %42 : f32 to vector<3x3xf32>
    %44 = arith.mulf %43, %37 : vector<3x3xf32>
    %45 = arith.addf %27, %44 : vector<3x3xf32>
    %c81 = arith.constant 81 : index
    %46 = memref.load %arg3[%c81] : memref<144xf32, #tpu.memory_space<smem>>
    %47 = vector.broadcast %46 : f32 to vector<3x3xf32>
    %48 = arith.mulf %47, %37 : vector<3x3xf32>
    %49 = arith.addf %31, %48 : vector<3x3xf32>
    %c117 = arith.constant 117 : index
    %50 = memref.load %arg3[%c117] : memref<144xf32, #tpu.memory_space<smem>>
    %51 = vector.broadcast %50 : f32 to vector<3x3xf32>
    %52 = arith.mulf %51, %37 : vector<3x3xf32>
    %53 = arith.addf %35, %52 : vector<3x3xf32>
    %54 = vector.extract_strided_slice %17 {offsets = [2, 0, 0], sizes = [1, 3, 3], strides = [1, 1, 1]} : vector<4x3x3xf32> to vector<1x3x3xf32>
    %55 = vector.shape_cast %54 : vector<1x3x3xf32> to vector<3x3xf32>
    %c18 = arith.constant 18 : index
    %56 = memref.load %arg3[%c18] : memref<144xf32, #tpu.memory_space<smem>>
    %57 = vector.broadcast %56 : f32 to vector<3x3xf32>
    %58 = arith.mulf %57, %55 : vector<3x3xf32>
    %59 = arith.addf %41, %58 : vector<3x3xf32>
    %c54 = arith.constant 54 : index
    %60 = memref.load %arg3[%c54] : memref<144xf32, #tpu.memory_space<smem>>
    %61 = vector.broadcast %60 : f32 to vector<3x3xf32>
    %62 = arith.mulf %61, %55 : vector<3x3xf32>
    %63 = arith.addf %45, %62 : vector<3x3xf32>
    %c90 = arith.constant 90 : index
    %64 = memref.load %arg3[%c90] : memref<144xf32, #tpu.memory_space<smem>>
    %65 = vector.broadcast %64 : f32 to vector<3x3xf32>
    %66 = arith.mulf %65, %55 : vector<3x3xf32>
    %67 = arith.addf %49, %66 : vector<3x3xf32>
    %c126 = arith.constant 126 : index
    %68 = memref.load %arg3[%c126] : memref<144xf32, #tpu.memory_space<smem>>
    %69 = vector.broadcast %68 : f32 to vector<3x3xf32>
    %70 = arith.mulf %69, %55 : vector<3x3xf32>
    %71 = arith.addf %53, %70 : vector<3x3xf32>
    %72 = vector.extract_strided_slice %17 {offsets = [3, 0, 0], sizes = [1, 3, 3], strides = [1, 1, 1]} : vector<4x3x3xf32> to vector<1x3x3xf32>
    %73 = vector.shape_cast %72 : vector<1x3x3xf32> to vector<3x3xf32>
    %c27 = arith.constant 27 : index
    %74 = memref.load %arg3[%c27] : memref<144xf32, #tpu.memory_space<smem>>
    %75 = vector.broadcast %74 : f32 to vector<3x3xf32>
    %76 = arith.mulf %75, %73 : vector<3x3xf32>
    %77 = arith.addf %59, %76 : vector<3x3xf32>
    %c63 = arith.constant 63 : index
    %78 = memref.load %arg3[%c63] : memref<144xf32, #tpu.memory_space<smem>>
    %79 = vector.broadcast %78 : f32 to vector<3x3xf32>
    %80 = arith.mulf %79, %73 : vector<3x3xf32>
    %81 = arith.addf %63, %80 : vector<3x3xf32>
    %c99 = arith.constant 99 : index
    %82 = memref.load %arg3[%c99] : memref<144xf32, #tpu.memory_space<smem>>
    %83 = vector.broadcast %82 : f32 to vector<3x3xf32>
    %84 = arith.mulf %83, %73 : vector<3x3xf32>
    %85 = arith.addf %67, %84 : vector<3x3xf32>
    %c135 = arith.constant 135 : index
    %86 = memref.load %arg3[%c135] : memref<144xf32, #tpu.memory_space<smem>>
    %87 = vector.broadcast %86 : f32 to vector<3x3xf32>
    %88 = arith.mulf %87, %73 : vector<3x3xf32>
    %89 = arith.addf %71, %88 : vector<3x3xf32>
    %c0_8 = arith.constant 0 : index
    %c0_9 = arith.constant 0 : index
    %c0_10 = arith.constant 0 : index
    %c1_11 = arith.constant 1 : index
    %90 = vector.load %arg2[%c0_8, %c0_9, %c0_10, %c1_11] : memref<1x4x5x5xf32, #tpu.memory_space<vmem>>, vector<1x4x3x3xf32>
    %91 = vector.shape_cast %90 : vector<1x4x3x3xf32> to vector<4x3x3xf32>
    %92 = vector.extract_strided_slice %91 {offsets = [0, 0, 0], sizes = [1, 3, 3], strides = [1, 1, 1]} : vector<4x3x3xf32> to vector<1x3x3xf32>
    %93 = vector.shape_cast %92 : vector<1x3x3xf32> to vector<3x3xf32>
    %c1_12 = arith.constant 1 : index
    %94 = memref.load %arg3[%c1_12] : memref<144xf32, #tpu.memory_space<smem>>
    %95 = vector.broadcast %94 : f32 to vector<3x3xf32>
    %96 = arith.mulf %95, %93 : vector<3x3xf32>
    %97 = arith.addf %77, %96 : vector<3x3xf32>
    %c37 = arith.constant 37 : index
    %98 = memref.load %arg3[%c37] : memref<144xf32, #tpu.memory_space<smem>>
    %99 = vector.broadcast %98 : f32 to vector<3x3xf32>
    %100 = arith.mulf %99, %93 : vector<3x3xf32>
    %101 = arith.addf %81, %100 : vector<3x3xf32>
    %c73 = arith.constant 73 : index
    %102 = memref.load %arg3[%c73] : memref<144xf32, #tpu.memory_space<smem>>
    %103 = vector.broadcast %102 : f32 to vector<3x3xf32>
    %104 = arith.mulf %103, %93 : vector<3x3xf32>
    %105 = arith.addf %85, %104 : vector<3x3xf32>
    %c109 = arith.constant 109 : index
    %106 = memref.load %arg3[%c109] : memref<144xf32, #tpu.memory_space<smem>>
    %107 = vector.broadcast %106 : f32 to vector<3x3xf32>
    %108 = arith.mulf %107, %93 : vector<3x3xf32>
    %109 = arith.addf %89, %108 : vector<3x3xf32>
    %110 = vector.extract_strided_slice %91 {offsets = [1, 0, 0], sizes = [1, 3, 3], strides = [1, 1, 1]} : vector<4x3x3xf32> to vector<1x3x3xf32>
    %111 = vector.shape_cast %110 : vector<1x3x3xf32> to vector<3x3xf32>
    %c10 = arith.constant 10 : index
    %112 = memref.load %arg3[%c10] : memref<144xf32, #tpu.memory_space<smem>>
    %113 = vector.broadcast %112 : f32 to vector<3x3xf32>
    %114 = arith.mulf %113, %111 : vector<3x3xf32>
    %115 = arith.addf %97, %114 : vector<3x3xf32>
    %c46 = arith.constant 46 : index
    %116 = memref.load %arg3[%c46] : memref<144xf32, #tpu.memory_space<smem>>
    %117 = vector.broadcast %116 : f32 to vector<3x3xf32>
    %118 = arith.mulf %117, %111 : vector<3x3xf32>
    %119 = arith.addf %101, %118 : vector<3x3xf32>
    %c82 = arith.constant 82 : index
    %120 = memref.load %arg3[%c82] : memref<144xf32, #tpu.memory_space<smem>>
    %121 = vector.broadcast %120 : f32 to vector<3x3xf32>
    %122 = arith.mulf %121, %111 : vector<3x3xf32>
    %123 = arith.addf %105, %122 : vector<3x3xf32>
    %c118 = arith.constant 118 : index
    %124 = memref.load %arg3[%c118] : memref<144xf32, #tpu.memory_space<smem>>
    %125 = vector.broadcast %124 : f32 to vector<3x3xf32>
    %126 = arith.mulf %125, %111 : vector<3x3xf32>
    %127 = arith.addf %109, %126 : vector<3x3xf32>
    %128 = vector.extract_strided_slice %91 {offsets = [2, 0, 0], sizes = [1, 3, 3], strides = [1, 1, 1]} : vector<4x3x3xf32> to vector<1x3x3xf32>
    %129 = vector.shape_cast %128 : vector<1x3x3xf32> to vector<3x3xf32>
    %c19 = arith.constant 19 : index
    %130 = memref.load %arg3[%c19] : memref<144xf32, #tpu.memory_space<smem>>
    %131 = vector.broadcast %130 : f32 to vector<3x3xf32>
    %132 = arith.mulf %131, %129 : vector<3x3xf32>
    %133 = arith.addf %115, %132 : vector<3x3xf32>
    %c55 = arith.constant 55 : index
    %134 = memref.load %arg3[%c55] : memref<144xf32, #tpu.memory_space<smem>>
    %135 = vector.broadcast %134 : f32 to vector<3x3xf32>
    %136 = arith.mulf %135, %129 : vector<3x3xf32>
    %137 = arith.addf %119, %136 : vector<3x3xf32>
    %c91 = arith.constant 91 : index
    %138 = memref.load %arg3[%c91] : memref<144xf32, #tpu.memory_space<smem>>
    %139 = vector.broadcast %138 : f32 to vector<3x3xf32>
    %140 = arith.mulf %139, %129 : vector<3x3xf32>
    %141 = arith.addf %123, %140 : vector<3x3xf32>
    %c127 = arith.constant 127 : index
    %142 = memref.load %arg3[%c127] : memref<144xf32, #tpu.memory_space<smem>>
    %143 = vector.broadcast %142 : f32 to vector<3x3xf32>
    %144 = arith.mulf %143, %129 : vector<3x3xf32>
    %145 = arith.addf %127, %144 : vector<3x3xf32>
    %146 = vector.extract_strided_slice %91 {offsets = [3, 0, 0], sizes = [1, 3, 3], strides = [1, 1, 1]} : vector<4x3x3xf32> to vector<1x3x3xf32>
    %147 = vector.shape_cast %146 : vector<1x3x3xf32> to vector<3x3xf32>
    %c28 = arith.constant 28 : index
    %148 = memref.load %arg3[%c28] : memref<144xf32, #tpu.memory_space<smem>>
    %149 = vector.broadcast %148 : f32 to vector<3x3xf32>
    %150 = arith.mulf %149, %147 : vector<3x3xf32>
    %151 = arith.addf %133, %150 : vector<3x3xf32>
    %c64 = arith.constant 64 : index
    %152 = memref.load %arg3[%c64] : memref<144xf32, #tpu.memory_space<smem>>
    %153 = vector.broadcast %152 : f32 to vector<3x3xf32>
    %154 = arith.mulf %153, %147 : vector<3x3xf32>
    %155 = arith.addf %137, %154 : vector<3x3xf32>
    %c100 = arith.constant 100 : index
    %156 = memref.load %arg3[%c100] : memref<144xf32, #tpu.memory_space<smem>>
    %157 = vector.broadcast %156 : f32 to vector<3x3xf32>
    %158 = arith.mulf %157, %147 : vector<3x3xf32>
    %159 = arith.addf %141, %158 : vector<3x3xf32>
    %c136 = arith.constant 136 : index
    %160 = memref.load %arg3[%c136] : memref<144xf32, #tpu.memory_space<smem>>
    %161 = vector.broadcast %160 : f32 to vector<3x3xf32>
    %162 = arith.mulf %161, %147 : vector<3x3xf32>
    %163 = arith.addf %145, %162 : vector<3x3xf32>
    %c0_13 = arith.constant 0 : index
    %c0_14 = arith.constant 0 : index
    %c0_15 = arith.constant 0 : index
    %c2_16 = arith.constant 2 : index
    %164 = vector.load %arg2[%c0_13, %c0_14, %c0_15, %c2_16] : memref<1x4x5x5xf32, #tpu.memory_space<vmem>>, vector<1x4x3x3xf32>
    %165 = vector.shape_cast %164 : vector<1x4x3x3xf32> to vector<4x3x3xf32>
    %166 = vector.extract_strided_slice %165 {offsets = [0, 0, 0], sizes = [1, 3, 3], strides = [1, 1, 1]} : vector<4x3x3xf32> to vector<1x3x3xf32>
    %167 = vector.shape_cast %166 : vector<1x3x3xf32> to vector<3x3xf32>
    %c2_17 = arith.constant 2 : index
    %168 = memref.load %arg3[%c2_17] : memref<144xf32, #tpu.memory_space<smem>>
    %169 = vector.broadcast %168 : f32 to vector<3x3xf32>
    %170 = arith.mulf %169, %167 : vector<3x3xf32>
    %171 = arith.addf %151, %170 : vector<3x3xf32>
    %c38 = arith.constant 38 : index
    %172 = memref.load %arg3[%c38] : memref<144xf32, #tpu.memory_space<smem>>
    %173 = vector.broadcast %172 : f32 to vector<3x3xf32>
    %174 = arith.mulf %173, %167 : vector<3x3xf32>
    %175 = arith.addf %155, %174 : vector<3x3xf32>
    %c74 = arith.constant 74 : index
    %176 = memref.load %arg3[%c74] : memref<144xf32, #tpu.memory_space<smem>>
    %177 = vector.broadcast %176 : f32 to vector<3x3xf32>
    %178 = arith.mulf %177, %167 : vector<3x3xf32>
    %179 = arith.addf %159, %178 : vector<3x3xf32>
    %c110 = arith.constant 110 : index
    %180 = memref.load %arg3[%c110] : memref<144xf32, #tpu.memory_space<smem>>
    %181 = vector.broadcast %180 : f32 to vector<3x3xf32>
    %182 = arith.mulf %181, %167 : vector<3x3xf32>
    %183 = arith.addf %163, %182 : vector<3x3xf32>
    %184 = vector.extract_strided_slice %165 {offsets = [1, 0, 0], sizes = [1, 3, 3], strides = [1, 1, 1]} : vector<4x3x3xf32> to vector<1x3x3xf32>
    %185 = vector.shape_cast %184 : vector<1x3x3xf32> to vector<3x3xf32>
    %c11 = arith.constant 11 : index
    %186 = memref.load %arg3[%c11] : memref<144xf32, #tpu.memory_space<smem>>
    %187 = vector.broadcast %186 : f32 to vector<3x3xf32>
    %188 = arith.mulf %187, %185 : vector<3x3xf32>
    %189 = arith.addf %171, %188 : vector<3x3xf32>
    %c47 = arith.constant 47 : index
    %190 = memref.load %arg3[%c47] : memref<144xf32, #tpu.memory_space<smem>>
    %191 = vector.broadcast %190 : f32 to vector<3x3xf32>
    %192 = arith.mulf %191, %185 : vector<3x3xf32>
    %193 = arith.addf %175, %192 : vector<3x3xf32>
    %c83 = arith.constant 83 : index
    %194 = memref.load %arg3[%c83] : memref<144xf32, #tpu.memory_space<smem>>
    %195 = vector.broadcast %194 : f32 to vector<3x3xf32>
    %196 = arith.mulf %195, %185 : vector<3x3xf32>
    %197 = arith.addf %179, %196 : vector<3x3xf32>
    %c119 = arith.constant 119 : index
    %198 = memref.load %arg3[%c119] : memref<144xf32, #tpu.memory_space<smem>>
    %199 = vector.broadcast %198 : f32 to vector<3x3xf32>
    %200 = arith.mulf %199, %185 : vector<3x3xf32>
    %201 = arith.addf %183, %200 : vector<3x3xf32>
    %202 = vector.extract_strided_slice %165 {offsets = [2, 0, 0], sizes = [1, 3, 3], strides = [1, 1, 1]} : vector<4x3x3xf32> to vector<1x3x3xf32>
    %203 = vector.shape_cast %202 : vector<1x3x3xf32> to vector<3x3xf32>
    %c20 = arith.constant 20 : index
    %204 = memref.load %arg3[%c20] : memref<144xf32, #tpu.memory_space<smem>>
    %205 = vector.broadcast %204 : f32 to vector<3x3xf32>
    %206 = arith.mulf %205, %203 : vector<3x3xf32>
    %207 = arith.addf %189, %206 : vector<3x3xf32>
    %c56 = arith.constant 56 : index
    %208 = memref.load %arg3[%c56] : memref<144xf32, #tpu.memory_space<smem>>
    %209 = vector.broadcast %208 : f32 to vector<3x3xf32>
    %210 = arith.mulf %209, %203 : vector<3x3xf32>
    %211 = arith.addf %193, %210 : vector<3x3xf32>
    %c92 = arith.constant 92 : index
    %212 = memref.load %arg3[%c92] : memref<144xf32, #tpu.memory_space<smem>>
    %213 = vector.broadcast %212 : f32 to vector<3x3xf32>
    %214 = arith.mulf %213, %203 : vector<3x3xf32>
    %215 = arith.addf %197, %214 : vector<3x3xf32>
    %c128 = arith.constant 128 : index
    %216 = memref.load %arg3[%c128] : memref<144xf32, #tpu.memory_space<smem>>
    %217 = vector.broadcast %216 : f32 to vector<3x3xf32>
    %218 = arith.mulf %217, %203 : vector<3x3xf32>
    %219 = arith.addf %201, %218 : vector<3x3xf32>
    %220 = vector.extract_strided_slice %165 {offsets = [3, 0, 0], sizes = [1, 3, 3], strides = [1, 1, 1]} : vector<4x3x3xf32> to vector<1x3x3xf32>
    %221 = vector.shape_cast %220 : vector<1x3x3xf32> to vector<3x3xf32>
    %c29 = arith.constant 29 : index
    %222 = memref.load %arg3[%c29] : memref<144xf32, #tpu.memory_space<smem>>
    %223 = vector.broadcast %222 : f32 to vector<3x3xf32>
    %224 = arith.mulf %223, %221 : vector<3x3xf32>
    %225 = arith.addf %207, %224 : vector<3x3xf32>
    %c65 = arith.constant 65 : index
    %226 = memref.load %arg3[%c65] : memref<144xf32, #tpu.memory_space<smem>>
    %227 = vector.broadcast %226 : f32 to vector<3x3xf32>
    %228 = arith.mulf %227, %221 : vector<3x3xf32>
    %229 = arith.addf %211, %228 : vector<3x3xf32>
    %c101 = arith.constant 101 : index
    %230 = memref.load %arg3[%c101] : memref<144xf32, #tpu.memory_space<smem>>
    %231 = vector.broadcast %230 : f32 to vector<3x3xf32>
    %232 = arith.mulf %231, %221 : vector<3x3xf32>
    %233 = arith.addf %215, %232 : vector<3x3xf32>
    %c137 = arith.constant 137 : index
    %234 = memref.load %arg3[%c137] : memref<144xf32, #tpu.memory_space<smem>>
    %235 = vector.broadcast %234 : f32 to vector<3x3xf32>
    %236 = arith.mulf %235, %221 : vector<3x3xf32>
    %237 = arith.addf %219, %236 : vector<3x3xf32>
    %c0_18 = arith.constant 0 : index
    %c0_19 = arith.constant 0 : index
    %c1_20 = arith.constant 1 : index
    %c0_21 = arith.constant 0 : index
    %238 = vector.load %arg2[%c0_18, %c0_19, %c1_20, %c0_21] : memref<1x4x5x5xf32, #tpu.memory_space<vmem>>, vector<1x4x3x3xf32>
    %239 = vector.shape_cast %238 : vector<1x4x3x3xf32> to vector<4x3x3xf32>
    %240 = vector.extract_strided_slice %239 {offsets = [0, 0, 0], sizes = [1, 3, 3], strides = [1, 1, 1]} : vector<4x3x3xf32> to vector<1x3x3xf32>
    %241 = vector.shape_cast %240 : vector<1x3x3xf32> to vector<3x3xf32>
    %c3_22 = arith.constant 3 : index
    %242 = memref.load %arg3[%c3_22] : memref<144xf32, #tpu.memory_space<smem>>
    %243 = vector.broadcast %242 : f32 to vector<3x3xf32>
    %244 = arith.mulf %243, %241 : vector<3x3xf32>
    %245 = arith.addf %225, %244 : vector<3x3xf32>
    %c39 = arith.constant 39 : index
    %246 = memref.load %arg3[%c39] : memref<144xf32, #tpu.memory_space<smem>>
    %247 = vector.broadcast %246 : f32 to vector<3x3xf32>
    %248 = arith.mulf %247, %241 : vector<3x3xf32>
    %249 = arith.addf %229, %248 : vector<3x3xf32>
    %c75 = arith.constant 75 : index
    %250 = memref.load %arg3[%c75] : memref<144xf32, #tpu.memory_space<smem>>
    %251 = vector.broadcast %250 : f32 to vector<3x3xf32>
    %252 = arith.mulf %251, %241 : vector<3x3xf32>
    %253 = arith.addf %233, %252 : vector<3x3xf32>
    %c111 = arith.constant 111 : index
    %254 = memref.load %arg3[%c111] : memref<144xf32, #tpu.memory_space<smem>>
    %255 = vector.broadcast %254 : f32 to vector<3x3xf32>
    %256 = arith.mulf %255, %241 : vector<3x3xf32>
    %257 = arith.addf %237, %256 : vector<3x3xf32>
    %258 = vector.extract_strided_slice %239 {offsets = [1, 0, 0], sizes = [1, 3, 3], strides = [1, 1, 1]} : vector<4x3x3xf32> to vector<1x3x3xf32>
    %259 = vector.shape_cast %258 : vector<1x3x3xf32> to vector<3x3xf32>
    %c12 = arith.constant 12 : index
    %260 = memref.load %arg3[%c12] : memref<144xf32, #tpu.memory_space<smem>>
    %261 = vector.broadcast %260 : f32 to vector<3x3xf32>
    %262 = arith.mulf %261, %259 : vector<3x3xf32>
    %263 = arith.addf %245, %262 : vector<3x3xf32>
    %c48 = arith.constant 48 : index
    %264 = memref.load %arg3[%c48] : memref<144xf32, #tpu.memory_space<smem>>
    %265 = vector.broadcast %264 : f32 to vector<3x3xf32>
    %266 = arith.mulf %265, %259 : vector<3x3xf32>
    %267 = arith.addf %249, %266 : vector<3x3xf32>
    %c84 = arith.constant 84 : index
    %268 = memref.load %arg3[%c84] : memref<144xf32, #tpu.memory_space<smem>>
    %269 = vector.broadcast %268 : f32 to vector<3x3xf32>
    %270 = arith.mulf %269, %259 : vector<3x3xf32>
    %271 = arith.addf %253, %270 : vector<3x3xf32>
    %c120 = arith.constant 120 : index
    %272 = memref.load %arg3[%c120] : memref<144xf32, #tpu.memory_space<smem>>
    %273 = vector.broadcast %272 : f32 to vector<3x3xf32>
    %274 = arith.mulf %273, %259 : vector<3x3xf32>
    %275 = arith.addf %257, %274 : vector<3x3xf32>
    %276 = vector.extract_strided_slice %239 {offsets = [2, 0, 0], sizes = [1, 3, 3], strides = [1, 1, 1]} : vector<4x3x3xf32> to vector<1x3x3xf32>
    %277 = vector.shape_cast %276 : vector<1x3x3xf32> to vector<3x3xf32>
    %c21 = arith.constant 21 : index
    %278 = memref.load %arg3[%c21] : memref<144xf32, #tpu.memory_space<smem>>
    %279 = vector.broadcast %278 : f32 to vector<3x3xf32>
    %280 = arith.mulf %279, %277 : vector<3x3xf32>
    %281 = arith.addf %263, %280 : vector<3x3xf32>
    %c57 = arith.constant 57 : index
    %282 = memref.load %arg3[%c57] : memref<144xf32, #tpu.memory_space<smem>>
    %283 = vector.broadcast %282 : f32 to vector<3x3xf32>
    %284 = arith.mulf %283, %277 : vector<3x3xf32>
    %285 = arith.addf %267, %284 : vector<3x3xf32>
    %c93 = arith.constant 93 : index
    %286 = memref.load %arg3[%c93] : memref<144xf32, #tpu.memory_space<smem>>
    %287 = vector.broadcast %286 : f32 to vector<3x3xf32>
    %288 = arith.mulf %287, %277 : vector<3x3xf32>
    %289 = arith.addf %271, %288 : vector<3x3xf32>
    %c129 = arith.constant 129 : index
    %290 = memref.load %arg3[%c129] : memref<144xf32, #tpu.memory_space<smem>>
    %291 = vector.broadcast %290 : f32 to vector<3x3xf32>
    %292 = arith.mulf %291, %277 : vector<3x3xf32>
    %293 = arith.addf %275, %292 : vector<3x3xf32>
    %294 = vector.extract_strided_slice %239 {offsets = [3, 0, 0], sizes = [1, 3, 3], strides = [1, 1, 1]} : vector<4x3x3xf32> to vector<1x3x3xf32>
    %295 = vector.shape_cast %294 : vector<1x3x3xf32> to vector<3x3xf32>
    %c30 = arith.constant 30 : index
    %296 = memref.load %arg3[%c30] : memref<144xf32, #tpu.memory_space<smem>>
    %297 = vector.broadcast %296 : f32 to vector<3x3xf32>
    %298 = arith.mulf %297, %295 : vector<3x3xf32>
    %299 = arith.addf %281, %298 : vector<3x3xf32>
    %c66 = arith.constant 66 : index
    %300 = memref.load %arg3[%c66] : memref<144xf32, #tpu.memory_space<smem>>
    %301 = vector.broadcast %300 : f32 to vector<3x3xf32>
    %302 = arith.mulf %301, %295 : vector<3x3xf32>
    %303 = arith.addf %285, %302 : vector<3x3xf32>
    %c102 = arith.constant 102 : index
    %304 = memref.load %arg3[%c102] : memref<144xf32, #tpu.memory_space<smem>>
    %305 = vector.broadcast %304 : f32 to vector<3x3xf32>
    %306 = arith.mulf %305, %295 : vector<3x3xf32>
    %307 = arith.addf %289, %306 : vector<3x3xf32>
    %c138 = arith.constant 138 : index
    %308 = memref.load %arg3[%c138] : memref<144xf32, #tpu.memory_space<smem>>
    %309 = vector.broadcast %308 : f32 to vector<3x3xf32>
    %310 = arith.mulf %309, %295 : vector<3x3xf32>
    %311 = arith.addf %293, %310 : vector<3x3xf32>
    %c0_23 = arith.constant 0 : index
    %c0_24 = arith.constant 0 : index
    %c1_25 = arith.constant 1 : index
    %c1_26 = arith.constant 1 : index
    %312 = vector.load %arg2[%c0_23, %c0_24, %c1_25, %c1_26] : memref<1x4x5x5xf32, #tpu.memory_space<vmem>>, vector<1x4x3x3xf32>
    %313 = vector.shape_cast %312 : vector<1x4x3x3xf32> to vector<4x3x3xf32>
    %314 = vector.extract_strided_slice %313 {offsets = [0, 0, 0], sizes = [1, 3, 3], strides = [1, 1, 1]} : vector<4x3x3xf32> to vector<1x3x3xf32>
    %315 = vector.shape_cast %314 : vector<1x3x3xf32> to vector<3x3xf32>
    %c4 = arith.constant 4 : index
    %316 = memref.load %arg3[%c4] : memref<144xf32, #tpu.memory_space<smem>>
    %317 = vector.broadcast %316 : f32 to vector<3x3xf32>
    %318 = arith.mulf %317, %315 : vector<3x3xf32>
    %319 = arith.addf %299, %318 : vector<3x3xf32>
    %c40 = arith.constant 40 : index
    %320 = memref.load %arg3[%c40] : memref<144xf32, #tpu.memory_space<smem>>
    %321 = vector.broadcast %320 : f32 to vector<3x3xf32>
    %322 = arith.mulf %321, %315 : vector<3x3xf32>
    %323 = arith.addf %303, %322 : vector<3x3xf32>
    %c76 = arith.constant 76 : index
    %324 = memref.load %arg3[%c76] : memref<144xf32, #tpu.memory_space<smem>>
    %325 = vector.broadcast %324 : f32 to vector<3x3xf32>
    %326 = arith.mulf %325, %315 : vector<3x3xf32>
    %327 = arith.addf %307, %326 : vector<3x3xf32>
    %c112 = arith.constant 112 : index
    %328 = memref.load %arg3[%c112] : memref<144xf32, #tpu.memory_space<smem>>
    %329 = vector.broadcast %328 : f32 to vector<3x3xf32>
    %330 = arith.mulf %329, %315 : vector<3x3xf32>
    %331 = arith.addf %311, %330 : vector<3x3xf32>
    %332 = vector.extract_strided_slice %313 {offsets = [1, 0, 0], sizes = [1, 3, 3], strides = [1, 1, 1]} : vector<4x3x3xf32> to vector<1x3x3xf32>
    %333 = vector.shape_cast %332 : vector<1x3x3xf32> to vector<3x3xf32>
    %c13 = arith.constant 13 : index
    %334 = memref.load %arg3[%c13] : memref<144xf32, #tpu.memory_space<smem>>
    %335 = vector.broadcast %334 : f32 to vector<3x3xf32>
    %336 = arith.mulf %335, %333 : vector<3x3xf32>
    %337 = arith.addf %319, %336 : vector<3x3xf32>
    %c49 = arith.constant 49 : index
    %338 = memref.load %arg3[%c49] : memref<144xf32, #tpu.memory_space<smem>>
    %339 = vector.broadcast %338 : f32 to vector<3x3xf32>
    %340 = arith.mulf %339, %333 : vector<3x3xf32>
    %341 = arith.addf %323, %340 : vector<3x3xf32>
    %c85 = arith.constant 85 : index
    %342 = memref.load %arg3[%c85] : memref<144xf32, #tpu.memory_space<smem>>
    %343 = vector.broadcast %342 : f32 to vector<3x3xf32>
    %344 = arith.mulf %343, %333 : vector<3x3xf32>
    %345 = arith.addf %327, %344 : vector<3x3xf32>
    %c121 = arith.constant 121 : index
    %346 = memref.load %arg3[%c121] : memref<144xf32, #tpu.memory_space<smem>>
    %347 = vector.broadcast %346 : f32 to vector<3x3xf32>
    %348 = arith.mulf %347, %333 : vector<3x3xf32>
    %349 = arith.addf %331, %348 : vector<3x3xf32>
    %350 = vector.extract_strided_slice %313 {offsets = [2, 0, 0], sizes = [1, 3, 3], strides = [1, 1, 1]} : vector<4x3x3xf32> to vector<1x3x3xf32>
    %351 = vector.shape_cast %350 : vector<1x3x3xf32> to vector<3x3xf32>
    %c22 = arith.constant 22 : index
    %352 = memref.load %arg3[%c22] : memref<144xf32, #tpu.memory_space<smem>>
    %353 = vector.broadcast %352 : f32 to vector<3x3xf32>
    %354 = arith.mulf %353, %351 : vector<3x3xf32>
    %355 = arith.addf %337, %354 : vector<3x3xf32>
    %c58 = arith.constant 58 : index
    %356 = memref.load %arg3[%c58] : memref<144xf32, #tpu.memory_space<smem>>
    %357 = vector.broadcast %356 : f32 to vector<3x3xf32>
    %358 = arith.mulf %357, %351 : vector<3x3xf32>
    %359 = arith.addf %341, %358 : vector<3x3xf32>
    %c94 = arith.constant 94 : index
    %360 = memref.load %arg3[%c94] : memref<144xf32, #tpu.memory_space<smem>>
    %361 = vector.broadcast %360 : f32 to vector<3x3xf32>
    %362 = arith.mulf %361, %351 : vector<3x3xf32>
    %363 = arith.addf %345, %362 : vector<3x3xf32>
    %c130 = arith.constant 130 : index
    %364 = memref.load %arg3[%c130] : memref<144xf32, #tpu.memory_space<smem>>
    %365 = vector.broadcast %364 : f32 to vector<3x3xf32>
    %366 = arith.mulf %365, %351 : vector<3x3xf32>
    %367 = arith.addf %349, %366 : vector<3x3xf32>
    %368 = vector.extract_strided_slice %313 {offsets = [3, 0, 0], sizes = [1, 3, 3], strides = [1, 1, 1]} : vector<4x3x3xf32> to vector<1x3x3xf32>
    %369 = vector.shape_cast %368 : vector<1x3x3xf32> to vector<3x3xf32>
    %c31 = arith.constant 31 : index
    %370 = memref.load %arg3[%c31] : memref<144xf32, #tpu.memory_space<smem>>
    %371 = vector.broadcast %370 : f32 to vector<3x3xf32>
    %372 = arith.mulf %371, %369 : vector<3x3xf32>
    %373 = arith.addf %355, %372 : vector<3x3xf32>
    %c67 = arith.constant 67 : index
    %374 = memref.load %arg3[%c67] : memref<144xf32, #tpu.memory_space<smem>>
    %375 = vector.broadcast %374 : f32 to vector<3x3xf32>
    %376 = arith.mulf %375, %369 : vector<3x3xf32>
    %377 = arith.addf %359, %376 : vector<3x3xf32>
    %c103 = arith.constant 103 : index
    %378 = memref.load %arg3[%c103] : memref<144xf32, #tpu.memory_space<smem>>
    %379 = vector.broadcast %378 : f32 to vector<3x3xf32>
    %380 = arith.mulf %379, %369 : vector<3x3xf32>
    %381 = arith.addf %363, %380 : vector<3x3xf32>
    %c139 = arith.constant 139 : index
    %382 = memref.load %arg3[%c139] : memref<144xf32, #tpu.memory_space<smem>>
    %383 = vector.broadcast %382 : f32 to vector<3x3xf32>
    %384 = arith.mulf %383, %369 : vector<3x3xf32>
    %385 = arith.addf %367, %384 : vector<3x3xf32>
    %c0_27 = arith.constant 0 : index
    %c0_28 = arith.constant 0 : index
    %c1_29 = arith.constant 1 : index
    %c2_30 = arith.constant 2 : index
    %386 = vector.load %arg2[%c0_27, %c0_28, %c1_29, %c2_30] : memref<1x4x5x5xf32, #tpu.memory_space<vmem>>, vector<1x4x3x3xf32>
    %387 = vector.shape_cast %386 : vector<1x4x3x3xf32> to vector<4x3x3xf32>
    %388 = vector.extract_strided_slice %387 {offsets = [0, 0, 0], sizes = [1, 3, 3], strides = [1, 1, 1]} : vector<4x3x3xf32> to vector<1x3x3xf32>
    %389 = vector.shape_cast %388 : vector<1x3x3xf32> to vector<3x3xf32>
    %c5 = arith.constant 5 : index
    %390 = memref.load %arg3[%c5] : memref<144xf32, #tpu.memory_space<smem>>
    %391 = vector.broadcast %390 : f32 to vector<3x3xf32>
    %392 = arith.mulf %391, %389 : vector<3x3xf32>
    %393 = arith.addf %373, %392 : vector<3x3xf32>
    %c41 = arith.constant 41 : index
    %394 = memref.load %arg3[%c41] : memref<144xf32, #tpu.memory_space<smem>>
    %395 = vector.broadcast %394 : f32 to vector<3x3xf32>
    %396 = arith.mulf %395, %389 : vector<3x3xf32>
    %397 = arith.addf %377, %396 : vector<3x3xf32>
    %c77 = arith.constant 77 : index
    %398 = memref.load %arg3[%c77] : memref<144xf32, #tpu.memory_space<smem>>
    %399 = vector.broadcast %398 : f32 to vector<3x3xf32>
    %400 = arith.mulf %399, %389 : vector<3x3xf32>
    %401 = arith.addf %381, %400 : vector<3x3xf32>
    %c113 = arith.constant 113 : index
    %402 = memref.load %arg3[%c113] : memref<144xf32, #tpu.memory_space<smem>>
    %403 = vector.broadcast %402 : f32 to vector<3x3xf32>
    %404 = arith.mulf %403, %389 : vector<3x3xf32>
    %405 = arith.addf %385, %404 : vector<3x3xf32>
    %406 = vector.extract_strided_slice %387 {offsets = [1, 0, 0], sizes = [1, 3, 3], strides = [1, 1, 1]} : vector<4x3x3xf32> to vector<1x3x3xf32>
    %407 = vector.shape_cast %406 : vector<1x3x3xf32> to vector<3x3xf32>
    %c14 = arith.constant 14 : index
    %408 = memref.load %arg3[%c14] : memref<144xf32, #tpu.memory_space<smem>>
    %409 = vector.broadcast %408 : f32 to vector<3x3xf32>
    %410 = arith.mulf %409, %407 : vector<3x3xf32>
    %411 = arith.addf %393, %410 : vector<3x3xf32>
    %c50 = arith.constant 50 : index
    %412 = memref.load %arg3[%c50] : memref<144xf32, #tpu.memory_space<smem>>
    %413 = vector.broadcast %412 : f32 to vector<3x3xf32>
    %414 = arith.mulf %413, %407 : vector<3x3xf32>
    %415 = arith.addf %397, %414 : vector<3x3xf32>
    %c86 = arith.constant 86 : index
    %416 = memref.load %arg3[%c86] : memref<144xf32, #tpu.memory_space<smem>>
    %417 = vector.broadcast %416 : f32 to vector<3x3xf32>
    %418 = arith.mulf %417, %407 : vector<3x3xf32>
    %419 = arith.addf %401, %418 : vector<3x3xf32>
    %c122 = arith.constant 122 : index
    %420 = memref.load %arg3[%c122] : memref<144xf32, #tpu.memory_space<smem>>
    %421 = vector.broadcast %420 : f32 to vector<3x3xf32>
    %422 = arith.mulf %421, %407 : vector<3x3xf32>
    %423 = arith.addf %405, %422 : vector<3x3xf32>
    %424 = vector.extract_strided_slice %387 {offsets = [2, 0, 0], sizes = [1, 3, 3], strides = [1, 1, 1]} : vector<4x3x3xf32> to vector<1x3x3xf32>
    %425 = vector.shape_cast %424 : vector<1x3x3xf32> to vector<3x3xf32>
    %c23 = arith.constant 23 : index
    %426 = memref.load %arg3[%c23] : memref<144xf32, #tpu.memory_space<smem>>
    %427 = vector.broadcast %426 : f32 to vector<3x3xf32>
    %428 = arith.mulf %427, %425 : vector<3x3xf32>
    %429 = arith.addf %411, %428 : vector<3x3xf32>
    %c59 = arith.constant 59 : index
    %430 = memref.load %arg3[%c59] : memref<144xf32, #tpu.memory_space<smem>>
    %431 = vector.broadcast %430 : f32 to vector<3x3xf32>
    %432 = arith.mulf %431, %425 : vector<3x3xf32>
    %433 = arith.addf %415, %432 : vector<3x3xf32>
    %c95 = arith.constant 95 : index
    %434 = memref.load %arg3[%c95] : memref<144xf32, #tpu.memory_space<smem>>
    %435 = vector.broadcast %434 : f32 to vector<3x3xf32>
    %436 = arith.mulf %435, %425 : vector<3x3xf32>
    %437 = arith.addf %419, %436 : vector<3x3xf32>
    %c131 = arith.constant 131 : index
    %438 = memref.load %arg3[%c131] : memref<144xf32, #tpu.memory_space<smem>>
    %439 = vector.broadcast %438 : f32 to vector<3x3xf32>
    %440 = arith.mulf %439, %425 : vector<3x3xf32>
    %441 = arith.addf %423, %440 : vector<3x3xf32>
    %442 = vector.extract_strided_slice %387 {offsets = [3, 0, 0], sizes = [1, 3, 3], strides = [1, 1, 1]} : vector<4x3x3xf32> to vector<1x3x3xf32>
    %443 = vector.shape_cast %442 : vector<1x3x3xf32> to vector<3x3xf32>
    %c32 = arith.constant 32 : index
    %444 = memref.load %arg3[%c32] : memref<144xf32, #tpu.memory_space<smem>>
    %445 = vector.broadcast %444 : f32 to vector<3x3xf32>
    %446 = arith.mulf %445, %443 : vector<3x3xf32>
    %447 = arith.addf %429, %446 : vector<3x3xf32>
    %c68 = arith.constant 68 : index
    %448 = memref.load %arg3[%c68] : memref<144xf32, #tpu.memory_space<smem>>
    %449 = vector.broadcast %448 : f32 to vector<3x3xf32>
    %450 = arith.mulf %449, %443 : vector<3x3xf32>
    %451 = arith.addf %433, %450 : vector<3x3xf32>
    %c104 = arith.constant 104 : index
    %452 = memref.load %arg3[%c104] : memref<144xf32, #tpu.memory_space<smem>>
    %453 = vector.broadcast %452 : f32 to vector<3x3xf32>
    %454 = arith.mulf %453, %443 : vector<3x3xf32>
    %455 = arith.addf %437, %454 : vector<3x3xf32>
    %c140 = arith.constant 140 : index
    %456 = memref.load %arg3[%c140] : memref<144xf32, #tpu.memory_space<smem>>
    %457 = vector.broadcast %456 : f32 to vector<3x3xf32>
    %458 = arith.mulf %457, %443 : vector<3x3xf32>
    %459 = arith.addf %441, %458 : vector<3x3xf32>
    %c0_31 = arith.constant 0 : index
    %c0_32 = arith.constant 0 : index
    %c2_33 = arith.constant 2 : index
    %c0_34 = arith.constant 0 : index
    %460 = vector.load %arg2[%c0_31, %c0_32, %c2_33, %c0_34] : memref<1x4x5x5xf32, #tpu.memory_space<vmem>>, vector<1x4x3x3xf32>
    %461 = vector.shape_cast %460 : vector<1x4x3x3xf32> to vector<4x3x3xf32>
    %462 = vector.extract_strided_slice %461 {offsets = [0, 0, 0], sizes = [1, 3, 3], strides = [1, 1, 1]} : vector<4x3x3xf32> to vector<1x3x3xf32>
    %463 = vector.shape_cast %462 : vector<1x3x3xf32> to vector<3x3xf32>
    %c6 = arith.constant 6 : index
    %464 = memref.load %arg3[%c6] : memref<144xf32, #tpu.memory_space<smem>>
    %465 = vector.broadcast %464 : f32 to vector<3x3xf32>
    %466 = arith.mulf %465, %463 : vector<3x3xf32>
    %467 = arith.addf %447, %466 : vector<3x3xf32>
    %c42 = arith.constant 42 : index
    %468 = memref.load %arg3[%c42] : memref<144xf32, #tpu.memory_space<smem>>
    %469 = vector.broadcast %468 : f32 to vector<3x3xf32>
    %470 = arith.mulf %469, %463 : vector<3x3xf32>
    %471 = arith.addf %451, %470 : vector<3x3xf32>
    %c78 = arith.constant 78 : index
    %472 = memref.load %arg3[%c78] : memref<144xf32, #tpu.memory_space<smem>>
    %473 = vector.broadcast %472 : f32 to vector<3x3xf32>
    %474 = arith.mulf %473, %463 : vector<3x3xf32>
    %475 = arith.addf %455, %474 : vector<3x3xf32>
    %c114 = arith.constant 114 : index
    %476 = memref.load %arg3[%c114] : memref<144xf32, #tpu.memory_space<smem>>
    %477 = vector.broadcast %476 : f32 to vector<3x3xf32>
    %478 = arith.mulf %477, %463 : vector<3x3xf32>
    %479 = arith.addf %459, %478 : vector<3x3xf32>
    %480 = vector.extract_strided_slice %461 {offsets = [1, 0, 0], sizes = [1, 3, 3], strides = [1, 1, 1]} : vector<4x3x3xf32> to vector<1x3x3xf32>
    %481 = vector.shape_cast %480 : vector<1x3x3xf32> to vector<3x3xf32>
    %c15 = arith.constant 15 : index
    %482 = memref.load %arg3[%c15] : memref<144xf32, #tpu.memory_space<smem>>
    %483 = vector.broadcast %482 : f32 to vector<3x3xf32>
    %484 = arith.mulf %483, %481 : vector<3x3xf32>
    %485 = arith.addf %467, %484 : vector<3x3xf32>
    %c51 = arith.constant 51 : index
    %486 = memref.load %arg3[%c51] : memref<144xf32, #tpu.memory_space<smem>>
    %487 = vector.broadcast %486 : f32 to vector<3x3xf32>
    %488 = arith.mulf %487, %481 : vector<3x3xf32>
    %489 = arith.addf %471, %488 : vector<3x3xf32>
    %c87 = arith.constant 87 : index
    %490 = memref.load %arg3[%c87] : memref<144xf32, #tpu.memory_space<smem>>
    %491 = vector.broadcast %490 : f32 to vector<3x3xf32>
    %492 = arith.mulf %491, %481 : vector<3x3xf32>
    %493 = arith.addf %475, %492 : vector<3x3xf32>
    %c123 = arith.constant 123 : index
    %494 = memref.load %arg3[%c123] : memref<144xf32, #tpu.memory_space<smem>>
    %495 = vector.broadcast %494 : f32 to vector<3x3xf32>
    %496 = arith.mulf %495, %481 : vector<3x3xf32>
    %497 = arith.addf %479, %496 : vector<3x3xf32>
    %498 = vector.extract_strided_slice %461 {offsets = [2, 0, 0], sizes = [1, 3, 3], strides = [1, 1, 1]} : vector<4x3x3xf32> to vector<1x3x3xf32>
    %499 = vector.shape_cast %498 : vector<1x3x3xf32> to vector<3x3xf32>
    %c24 = arith.constant 24 : index
    %500 = memref.load %arg3[%c24] : memref<144xf32, #tpu.memory_space<smem>>
    %501 = vector.broadcast %500 : f32 to vector<3x3xf32>
    %502 = arith.mulf %501, %499 : vector<3x3xf32>
    %503 = arith.addf %485, %502 : vector<3x3xf32>
    %c60 = arith.constant 60 : index
    %504 = memref.load %arg3[%c60] : memref<144xf32, #tpu.memory_space<smem>>
    %505 = vector.broadcast %504 : f32 to vector<3x3xf32>
    %506 = arith.mulf %505, %499 : vector<3x3xf32>
    %507 = arith.addf %489, %506 : vector<3x3xf32>
    %c96 = arith.constant 96 : index
    %508 = memref.load %arg3[%c96] : memref<144xf32, #tpu.memory_space<smem>>
    %509 = vector.broadcast %508 : f32 to vector<3x3xf32>
    %510 = arith.mulf %509, %499 : vector<3x3xf32>
    %511 = arith.addf %493, %510 : vector<3x3xf32>
    %c132 = arith.constant 132 : index
    %512 = memref.load %arg3[%c132] : memref<144xf32, #tpu.memory_space<smem>>
    %513 = vector.broadcast %512 : f32 to vector<3x3xf32>
    %514 = arith.mulf %513, %499 : vector<3x3xf32>
    %515 = arith.addf %497, %514 : vector<3x3xf32>
    %516 = vector.extract_strided_slice %461 {offsets = [3, 0, 0], sizes = [1, 3, 3], strides = [1, 1, 1]} : vector<4x3x3xf32> to vector<1x3x3xf32>
    %517 = vector.shape_cast %516 : vector<1x3x3xf32> to vector<3x3xf32>
    %c33 = arith.constant 33 : index
    %518 = memref.load %arg3[%c33] : memref<144xf32, #tpu.memory_space<smem>>
    %519 = vector.broadcast %518 : f32 to vector<3x3xf32>
    %520 = arith.mulf %519, %517 : vector<3x3xf32>
    %521 = arith.addf %503, %520 : vector<3x3xf32>
    %c69 = arith.constant 69 : index
    %522 = memref.load %arg3[%c69] : memref<144xf32, #tpu.memory_space<smem>>
    %523 = vector.broadcast %522 : f32 to vector<3x3xf32>
    %524 = arith.mulf %523, %517 : vector<3x3xf32>
    %525 = arith.addf %507, %524 : vector<3x3xf32>
    %c105 = arith.constant 105 : index
    %526 = memref.load %arg3[%c105] : memref<144xf32, #tpu.memory_space<smem>>
    %527 = vector.broadcast %526 : f32 to vector<3x3xf32>
    %528 = arith.mulf %527, %517 : vector<3x3xf32>
    %529 = arith.addf %511, %528 : vector<3x3xf32>
    %c141 = arith.constant 141 : index
    %530 = memref.load %arg3[%c141] : memref<144xf32, #tpu.memory_space<smem>>
    %531 = vector.broadcast %530 : f32 to vector<3x3xf32>
    %532 = arith.mulf %531, %517 : vector<3x3xf32>
    %533 = arith.addf %515, %532 : vector<3x3xf32>
    %c0_35 = arith.constant 0 : index
    %c0_36 = arith.constant 0 : index
    %c2_37 = arith.constant 2 : index
    %c1_38 = arith.constant 1 : index
    %534 = vector.load %arg2[%c0_35, %c0_36, %c2_37, %c1_38] : memref<1x4x5x5xf32, #tpu.memory_space<vmem>>, vector<1x4x3x3xf32>
    %535 = vector.shape_cast %534 : vector<1x4x3x3xf32> to vector<4x3x3xf32>
    %536 = vector.extract_strided_slice %535 {offsets = [0, 0, 0], sizes = [1, 3, 3], strides = [1, 1, 1]} : vector<4x3x3xf32> to vector<1x3x3xf32>
    %537 = vector.shape_cast %536 : vector<1x3x3xf32> to vector<3x3xf32>
    %c7 = arith.constant 7 : index
    %538 = memref.load %arg3[%c7] : memref<144xf32, #tpu.memory_space<smem>>
    %539 = vector.broadcast %538 : f32 to vector<3x3xf32>
    %540 = arith.mulf %539, %537 : vector<3x3xf32>
    %541 = arith.addf %521, %540 : vector<3x3xf32>
    %c43 = arith.constant 43 : index
    %542 = memref.load %arg3[%c43] : memref<144xf32, #tpu.memory_space<smem>>
    %543 = vector.broadcast %542 : f32 to vector<3x3xf32>
    %544 = arith.mulf %543, %537 : vector<3x3xf32>
    %545 = arith.addf %525, %544 : vector<3x3xf32>
    %c79 = arith.constant 79 : index
    %546 = memref.load %arg3[%c79] : memref<144xf32, #tpu.memory_space<smem>>
    %547 = vector.broadcast %546 : f32 to vector<3x3xf32>
    %548 = arith.mulf %547, %537 : vector<3x3xf32>
    %549 = arith.addf %529, %548 : vector<3x3xf32>
    %c115 = arith.constant 115 : index
    %550 = memref.load %arg3[%c115] : memref<144xf32, #tpu.memory_space<smem>>
    %551 = vector.broadcast %550 : f32 to vector<3x3xf32>
    %552 = arith.mulf %551, %537 : vector<3x3xf32>
    %553 = arith.addf %533, %552 : vector<3x3xf32>
    %554 = vector.extract_strided_slice %535 {offsets = [1, 0, 0], sizes = [1, 3, 3], strides = [1, 1, 1]} : vector<4x3x3xf32> to vector<1x3x3xf32>
    %555 = vector.shape_cast %554 : vector<1x3x3xf32> to vector<3x3xf32>
    %c16 = arith.constant 16 : index
    %556 = memref.load %arg3[%c16] : memref<144xf32, #tpu.memory_space<smem>>
    %557 = vector.broadcast %556 : f32 to vector<3x3xf32>
    %558 = arith.mulf %557, %555 : vector<3x3xf32>
    %559 = arith.addf %541, %558 : vector<3x3xf32>
    %c52 = arith.constant 52 : index
    %560 = memref.load %arg3[%c52] : memref<144xf32, #tpu.memory_space<smem>>
    %561 = vector.broadcast %560 : f32 to vector<3x3xf32>
    %562 = arith.mulf %561, %555 : vector<3x3xf32>
    %563 = arith.addf %545, %562 : vector<3x3xf32>
    %c88 = arith.constant 88 : index
    %564 = memref.load %arg3[%c88] : memref<144xf32, #tpu.memory_space<smem>>
    %565 = vector.broadcast %564 : f32 to vector<3x3xf32>
    %566 = arith.mulf %565, %555 : vector<3x3xf32>
    %567 = arith.addf %549, %566 : vector<3x3xf32>
    %c124 = arith.constant 124 : index
    %568 = memref.load %arg3[%c124] : memref<144xf32, #tpu.memory_space<smem>>
    %569 = vector.broadcast %568 : f32 to vector<3x3xf32>
    %570 = arith.mulf %569, %555 : vector<3x3xf32>
    %571 = arith.addf %553, %570 : vector<3x3xf32>
    %572 = vector.extract_strided_slice %535 {offsets = [2, 0, 0], sizes = [1, 3, 3], strides = [1, 1, 1]} : vector<4x3x3xf32> to vector<1x3x3xf32>
    %573 = vector.shape_cast %572 : vector<1x3x3xf32> to vector<3x3xf32>
    %c25 = arith.constant 25 : index
    %574 = memref.load %arg3[%c25] : memref<144xf32, #tpu.memory_space<smem>>
    %575 = vector.broadcast %574 : f32 to vector<3x3xf32>
    %576 = arith.mulf %575, %573 : vector<3x3xf32>
    %577 = arith.addf %559, %576 : vector<3x3xf32>
    %c61 = arith.constant 61 : index
    %578 = memref.load %arg3[%c61] : memref<144xf32, #tpu.memory_space<smem>>
    %579 = vector.broadcast %578 : f32 to vector<3x3xf32>
    %580 = arith.mulf %579, %573 : vector<3x3xf32>
    %581 = arith.addf %563, %580 : vector<3x3xf32>
    %c97 = arith.constant 97 : index
    %582 = memref.load %arg3[%c97] : memref<144xf32, #tpu.memory_space<smem>>
    %583 = vector.broadcast %582 : f32 to vector<3x3xf32>
    %584 = arith.mulf %583, %573 : vector<3x3xf32>
    %585 = arith.addf %567, %584 : vector<3x3xf32>
    %c133 = arith.constant 133 : index
    %586 = memref.load %arg3[%c133] : memref<144xf32, #tpu.memory_space<smem>>
    %587 = vector.broadcast %586 : f32 to vector<3x3xf32>
    %588 = arith.mulf %587, %573 : vector<3x3xf32>
    %589 = arith.addf %571, %588 : vector<3x3xf32>
    %590 = vector.extract_strided_slice %535 {offsets = [3, 0, 0], sizes = [1, 3, 3], strides = [1, 1, 1]} : vector<4x3x3xf32> to vector<1x3x3xf32>
    %591 = vector.shape_cast %590 : vector<1x3x3xf32> to vector<3x3xf32>
    %c34 = arith.constant 34 : index
    %592 = memref.load %arg3[%c34] : memref<144xf32, #tpu.memory_space<smem>>
    %593 = vector.broadcast %592 : f32 to vector<3x3xf32>
    %594 = arith.mulf %593, %591 : vector<3x3xf32>
    %595 = arith.addf %577, %594 : vector<3x3xf32>
    %c70 = arith.constant 70 : index
    %596 = memref.load %arg3[%c70] : memref<144xf32, #tpu.memory_space<smem>>
    %597 = vector.broadcast %596 : f32 to vector<3x3xf32>
    %598 = arith.mulf %597, %591 : vector<3x3xf32>
    %599 = arith.addf %581, %598 : vector<3x3xf32>
    %c106 = arith.constant 106 : index
    %600 = memref.load %arg3[%c106] : memref<144xf32, #tpu.memory_space<smem>>
    %601 = vector.broadcast %600 : f32 to vector<3x3xf32>
    %602 = arith.mulf %601, %591 : vector<3x3xf32>
    %603 = arith.addf %585, %602 : vector<3x3xf32>
    %c142 = arith.constant 142 : index
    %604 = memref.load %arg3[%c142] : memref<144xf32, #tpu.memory_space<smem>>
    %605 = vector.broadcast %604 : f32 to vector<3x3xf32>
    %606 = arith.mulf %605, %591 : vector<3x3xf32>
    %607 = arith.addf %589, %606 : vector<3x3xf32>
    %c0_39 = arith.constant 0 : index
    %c0_40 = arith.constant 0 : index
    %c2_41 = arith.constant 2 : index
    %c2_42 = arith.constant 2 : index
    %608 = vector.load %arg2[%c0_39, %c0_40, %c2_41, %c2_42] : memref<1x4x5x5xf32, #tpu.memory_space<vmem>>, vector<1x4x3x3xf32>
    %609 = vector.shape_cast %608 : vector<1x4x3x3xf32> to vector<4x3x3xf32>
    %610 = vector.extract_strided_slice %609 {offsets = [0, 0, 0], sizes = [1, 3, 3], strides = [1, 1, 1]} : vector<4x3x3xf32> to vector<1x3x3xf32>
    %611 = vector.shape_cast %610 : vector<1x3x3xf32> to vector<3x3xf32>
    %c8 = arith.constant 8 : index
    %612 = memref.load %arg3[%c8] : memref<144xf32, #tpu.memory_space<smem>>
    %613 = vector.broadcast %612 : f32 to vector<3x3xf32>
    %614 = arith.mulf %613, %611 : vector<3x3xf32>
    %615 = arith.addf %595, %614 : vector<3x3xf32>
    %c44 = arith.constant 44 : index
    %616 = memref.load %arg3[%c44] : memref<144xf32, #tpu.memory_space<smem>>
    %617 = vector.broadcast %616 : f32 to vector<3x3xf32>
    %618 = arith.mulf %617, %611 : vector<3x3xf32>
    %619 = arith.addf %599, %618 : vector<3x3xf32>
    %c80 = arith.constant 80 : index
    %620 = memref.load %arg3[%c80] : memref<144xf32, #tpu.memory_space<smem>>
    %621 = vector.broadcast %620 : f32 to vector<3x3xf32>
    %622 = arith.mulf %621, %611 : vector<3x3xf32>
    %623 = arith.addf %603, %622 : vector<3x3xf32>
    %c116 = arith.constant 116 : index
    %624 = memref.load %arg3[%c116] : memref<144xf32, #tpu.memory_space<smem>>
    %625 = vector.broadcast %624 : f32 to vector<3x3xf32>
    %626 = arith.mulf %625, %611 : vector<3x3xf32>
    %627 = arith.addf %607, %626 : vector<3x3xf32>
    %628 = vector.extract_strided_slice %609 {offsets = [1, 0, 0], sizes = [1, 3, 3], strides = [1, 1, 1]} : vector<4x3x3xf32> to vector<1x3x3xf32>
    %629 = vector.shape_cast %628 : vector<1x3x3xf32> to vector<3x3xf32>
    %c17 = arith.constant 17 : index
    %630 = memref.load %arg3[%c17] : memref<144xf32, #tpu.memory_space<smem>>
    %631 = vector.broadcast %630 : f32 to vector<3x3xf32>
    %632 = arith.mulf %631, %629 : vector<3x3xf32>
    %633 = arith.addf %615, %632 : vector<3x3xf32>
    %c53 = arith.constant 53 : index
    %634 = memref.load %arg3[%c53] : memref<144xf32, #tpu.memory_space<smem>>
    %635 = vector.broadcast %634 : f32 to vector<3x3xf32>
    %636 = arith.mulf %635, %629 : vector<3x3xf32>
    %637 = arith.addf %619, %636 : vector<3x3xf32>
    %c89 = arith.constant 89 : index
    %638 = memref.load %arg3[%c89] : memref<144xf32, #tpu.memory_space<smem>>
    %639 = vector.broadcast %638 : f32 to vector<3x3xf32>
    %640 = arith.mulf %639, %629 : vector<3x3xf32>
    %641 = arith.addf %623, %640 : vector<3x3xf32>
    %c125 = arith.constant 125 : index
    %642 = memref.load %arg3[%c125] : memref<144xf32, #tpu.memory_space<smem>>
    %643 = vector.broadcast %642 : f32 to vector<3x3xf32>
    %644 = arith.mulf %643, %629 : vector<3x3xf32>
    %645 = arith.addf %627, %644 : vector<3x3xf32>
    %646 = vector.extract_strided_slice %609 {offsets = [2, 0, 0], sizes = [1, 3, 3], strides = [1, 1, 1]} : vector<4x3x3xf32> to vector<1x3x3xf32>
    %647 = vector.shape_cast %646 : vector<1x3x3xf32> to vector<3x3xf32>
    %c26 = arith.constant 26 : index
    %648 = memref.load %arg3[%c26] : memref<144xf32, #tpu.memory_space<smem>>
    %649 = vector.broadcast %648 : f32 to vector<3x3xf32>
    %650 = arith.mulf %649, %647 : vector<3x3xf32>
    %651 = arith.addf %633, %650 : vector<3x3xf32>
    %c62 = arith.constant 62 : index
    %652 = memref.load %arg3[%c62] : memref<144xf32, #tpu.memory_space<smem>>
    %653 = vector.broadcast %652 : f32 to vector<3x3xf32>
    %654 = arith.mulf %653, %647 : vector<3x3xf32>
    %655 = arith.addf %637, %654 : vector<3x3xf32>
    %c98 = arith.constant 98 : index
    %656 = memref.load %arg3[%c98] : memref<144xf32, #tpu.memory_space<smem>>
    %657 = vector.broadcast %656 : f32 to vector<3x3xf32>
    %658 = arith.mulf %657, %647 : vector<3x3xf32>
    %659 = arith.addf %641, %658 : vector<3x3xf32>
    %c134 = arith.constant 134 : index
    %660 = memref.load %arg3[%c134] : memref<144xf32, #tpu.memory_space<smem>>
    %661 = vector.broadcast %660 : f32 to vector<3x3xf32>
    %662 = arith.mulf %661, %647 : vector<3x3xf32>
    %663 = arith.addf %645, %662 : vector<3x3xf32>
    %664 = vector.extract_strided_slice %609 {offsets = [3, 0, 0], sizes = [1, 3, 3], strides = [1, 1, 1]} : vector<4x3x3xf32> to vector<1x3x3xf32>
    %665 = vector.shape_cast %664 : vector<1x3x3xf32> to vector<3x3xf32>
    %c35 = arith.constant 35 : index
    %666 = memref.load %arg3[%c35] : memref<144xf32, #tpu.memory_space<smem>>
    %667 = vector.broadcast %666 : f32 to vector<3x3xf32>
    %668 = arith.mulf %667, %665 : vector<3x3xf32>
    %669 = arith.addf %651, %668 : vector<3x3xf32>
    %c71 = arith.constant 71 : index
    %670 = memref.load %arg3[%c71] : memref<144xf32, #tpu.memory_space<smem>>
    %671 = vector.broadcast %670 : f32 to vector<3x3xf32>
    %672 = arith.mulf %671, %665 : vector<3x3xf32>
    %673 = arith.addf %655, %672 : vector<3x3xf32>
    %c107 = arith.constant 107 : index
    %674 = memref.load %arg3[%c107] : memref<144xf32, #tpu.memory_space<smem>>
    %675 = vector.broadcast %674 : f32 to vector<3x3xf32>
    %676 = arith.mulf %675, %665 : vector<3x3xf32>
    %677 = arith.addf %659, %676 : vector<3x3xf32>
    %c143 = arith.constant 143 : index
    %678 = memref.load %arg3[%c143] : memref<144xf32, #tpu.memory_space<smem>>
    %679 = vector.broadcast %678 : f32 to vector<3x3xf32>
    %680 = arith.mulf %679, %665 : vector<3x3xf32>
    %681 = arith.addf %663, %680 : vector<3x3xf32>
    %c0_43 = arith.constant 0 : index
    %c0_44 = arith.constant 0 : index
    %c0_45 = arith.constant 0 : index
    %c0_46 = arith.constant 0 : index
    %682 = vector.load %arg5[%c0_43, %c0_44, %c0_45, %c0_46] : memref<1x4x3x3xf32, #tpu.memory_space<vmem>>, vector<1x1x3x3xf32>
    %683 = vector.shape_cast %682 : vector<1x1x3x3xf32> to vector<3x3xf32>
    %684 = vector.shape_cast %669 : vector<3x3xf32> to vector<1x1x3x3xf32>
    tpu.vector_store %arg5[%c0_43, %c0_44, %c0_45, %c0_46], %684 {strides = array<i32>} : memref<1x4x3x3xf32, #tpu.memory_space<vmem>>, vector<1x1x3x3xf32>,
    %c0_47 = arith.constant 0 : index
    %c1_48 = arith.constant 1 : index
    %c0_49 = arith.constant 0 : index
    %c0_50 = arith.constant 0 : index
    %685 = vector.load %arg5[%c0_47, %c1_48, %c0_49, %c0_50] : memref<1x4x3x3xf32, #tpu.memory_space<vmem>>, vector<1x1x3x3xf32>
    %686 = vector.shape_cast %685 : vector<1x1x3x3xf32> to vector<3x3xf32>
    %687 = vector.shape_cast %673 : vector<3x3xf32> to vector<1x1x3x3xf32>
    tpu.vector_store %arg5[%c0_47, %c1_48, %c0_49, %c0_50], %687 {strides = array<i32>} : memref<1x4x3x3xf32, #tpu.memory_space<vmem>>, vector<1x1x3x3xf32>,
    %c0_51 = arith.constant 0 : index
    %c2_52 = arith.constant 2 : index
    %c0_53 = arith.constant 0 : index
    %c0_54 = arith.constant 0 : index
    %688 = vector.load %arg5[%c0_51, %c2_52, %c0_53, %c0_54] : memref<1x4x3x3xf32, #tpu.memory_space<vmem>>, vector<1x1x3x3xf32>
    %689 = vector.shape_cast %688 : vector<1x1x3x3xf32> to vector<3x3xf32>
    %690 = vector.shape_cast %677 : vector<3x3xf32> to vector<1x1x3x3xf32>
    tpu.vector_store %arg5[%c0_51, %c2_52, %c0_53, %c0_54], %690 {strides = array<i32>} : memref<1x4x3x3xf32, #tpu.memory_space<vmem>>, vector<1x1x3x3xf32>,
    %c0_55 = arith.constant 0 : index
    %c3_56 = arith.constant 3 : index
    %c0_57 = arith.constant 0 : index
    %c0_58 = arith.constant 0 : index
    %691 = vector.load %arg5[%c0_55, %c3_56, %c0_57, %c0_58] : memref<1x4x3x3xf32, #tpu.memory_space<vmem>>, vector<1x1x3x3xf32>
    %692 = vector.shape_cast %691 : vector<1x1x3x3xf32> to vector<3x3xf32>
    %693 = vector.shape_cast %681 : vector<3x3xf32> to vector<1x1x3x3xf32>
    tpu.vector_store %arg5[%c0_55, %c3_56, %c0_57, %c0_58], %693 {strides = array<i32>} : memref<1x4x3x3xf32, #tpu.memory_space<vmem>>, vector<1x1x3x3xf32>,
    return
  }
  func.func @transform_0(%arg0: i32, %arg1: i32) -> (i32, i32, i32, i32) {
    %c1_i32 = arith.constant 1 : i32
    %0 = arith.muli %arg0, %c1_i32 : i32
    %1 = arith.addi %0, %arg1 : i32
    %c0_i32 = arith.constant 0 : i32
    %c0_i32_0 = arith.constant 0 : i32
    %c0_i32_1 = arith.constant 0 : i32
    %c0_i32_2 = arith.constant 0 : i32
    return %1, %c0_i32, %c0_i32_0, %c0_i32_1 : i32, i32, i32, i32
  }
  func.func @transform_1(%arg0: i32, %arg1: i32) -> i32 {
    %c0_i32 = arith.constant 0 : i32
    %c0_i32_0 = arith.constant 0 : i32
    return %c0_i32 : i32
  }
  func.func @transform_2(%arg0: i32, %arg1: i32) -> i32 {
    %c0_i32 = arith.constant 0 : i32
    %c0_i32_0 = arith.constant 0 : i32
    return %c0_i32 : i32
  }
  func.func @transform_3(%arg0: i32, %arg1: i32) -> (i32, i32, i32, i32) {
    %c0_i32 = arith.constant 0 : i32
    %c0_i32_0 = arith.constant 0 : i32
    %c0_i32_1 = arith.constant 0 : i32
    return %arg0, %c0_i32, %arg1, %c0_i32_0 : i32, i32, i32, i32
  }
}

module attributes {stable_mosaic.version = 11 : i64} {
  func.func @_tail_kernel(%arg0: i32, %arg1: i32, %arg2: memref<1x8x32x32xf32, #tpu.memory_space<vmem>>, %arg3: memref<1x4x32x32xf32, #tpu.memory_space<vmem>>, %arg4: memref<1x3x24xf32, #tpu.memory_space<vmem>>, %arg5: memref<32x3xf32, #tpu.memory_space<vmem>>, %arg6: memref<3x32xf32, #tpu.memory_space<vmem>>, %arg7: memref<32xf32, #tpu.memory_space<smem>>, %arg8: memref<8xf32, #tpu.memory_space<smem>>, %arg9: memref<1x8x32x32xf32, #tpu.memory_space<vmem>>) attributes {dimension_semantics = [#tpu.dimension_semantics<parallel>, #tpu.dimension_semantics<parallel>], iteration_bounds = array<i64: 2, 1>, scalar_prefetch = 0 : i64, scratch_operands = 0 : i64, tpu.core_type = #tpu.core_type<tc>, window_params = [{transform_indices = @transform_0, window_bounds = array<i64: 1, 8, 32, 32>}, {transform_indices = @transform_1, window_bounds = array<i64: 1, 4, 32, 32>}, {transform_indices = @transform_2, window_bounds = array<i64: 1, 3, 24>}, {transform_indices = @transform_3, window_bounds = array<i64: 32, 3>}, {pipeline_mode = #tpu.pipeline_mode<synchronous>, transform_indices = @transform_4, window_bounds = array<i64: 3, 32>}, {transform_indices = @transform_5, window_bounds = array<i64: 32>}, {transform_indices = @transform_6, window_bounds = array<i64: 8>}, {transform_indices = @transform_7, window_bounds = array<i64: 1, 8, 32, 32>}]} {
    %c0 = arith.constant 0 : index
    %c0_0 = arith.constant 0 : index
    %0 = vector.load %arg6[%c0, %c0_0] : memref<3x32xf32, #tpu.memory_space<vmem>>, vector<3x32xf32>
    %c0_1 = arith.constant 0 : index
    %c0_2 = arith.constant 0 : index
    %1 = vector.load %arg5[%c0_1, %c0_2] : memref<32x3xf32, #tpu.memory_space<vmem>>, vector<32x3xf32>
    %c0_3 = arith.constant 0 : index
    %c0_4 = arith.constant 0 : index
    %c0_5 = arith.constant 0 : index
    %2 = vector.load %arg4[%c0_3, %c0_4, %c0_5] : memref<1x3x24xf32, #tpu.memory_space<vmem>>, vector<1x3x24xf32>
    %3 = vector.shape_cast %2 : vector<1x3x24xf32> to vector<3x24xf32>
    %cst = arith.constant dense<0.000000e+00> : vector<32x24xf32>
    %4 = tpu.matmul %1, %3, %cst {dimension_numbers = #tpu.dot_dimension_numbers<[1], [0], [0], [1], [0, 0, 1, 1], [], []>} : vector<32x3xf32>, vector<3x24xf32>, vector<32x24xf32> -> vector<32x24xf32>
    %c0_6 = arith.constant 0 : index
    %c0_7 = arith.constant 0 : index
    %c0_8 = arith.constant 0 : index
    %c0_9 = arith.constant 0 : index
    %5 = vector.load %arg3[%c0_6, %c0_7, %c0_8, %c0_9] : memref<1x4x32x32xf32, #tpu.memory_space<vmem>>, vector<1x4x32x32xf32>
    %6 = vector.shape_cast %5 : vector<1x4x32x32xf32> to vector<4x32x32xf32>
    %7 = vector.extract_strided_slice %4 {offsets = [0, 0], sizes = [32, 3], strides = [1, 1]} : vector<32x24xf32> to vector<32x3xf32>
    %cst_10 = arith.constant dense<0.000000e+00> : vector<32x32xf32>
    %8 = tpu.matmul %7, %0, %cst_10 {dimension_numbers = #tpu.dot_dimension_numbers<[1], [0], [0], [1], [0, 0, 1, 1], [], []>} : vector<32x3xf32>, vector<3x32xf32>, vector<32x32xf32> -> vector<32x32xf32>
    %c0_11 = arith.constant 0 : index
    %9 = memref.load %arg8[%c0_11] : memref<8xf32, #tpu.memory_space<smem>>
    %10 = vector.broadcast %9 : f32 to vector<32x32xf32>
    %11 = arith.addf %8, %10 : vector<32x32xf32>
    %c0_12 = arith.constant 0 : index
    %12 = memref.load %arg7[%c0_12] : memref<32xf32, #tpu.memory_space<smem>>
    %13 = vector.extract_strided_slice %6 {offsets = [0, 0, 0], sizes = [1, 32, 32], strides = [1, 1, 1]} : vector<4x32x32xf32> to vector<1x32x32xf32>
    %14 = vector.shape_cast %13 : vector<1x32x32xf32> to vector<32x32xf32>
    %15 = vector.broadcast %12 : f32 to vector<32x32xf32>
    %16 = arith.mulf %15, %14 : vector<32x32xf32>
    %17 = arith.addf %11, %16 : vector<32x32xf32>
    %c1 = arith.constant 1 : index
    %18 = memref.load %arg7[%c1] : memref<32xf32, #tpu.memory_space<smem>>
    %19 = vector.extract_strided_slice %6 {offsets = [1, 0, 0], sizes = [1, 32, 32], strides = [1, 1, 1]} : vector<4x32x32xf32> to vector<1x32x32xf32>
    %20 = vector.shape_cast %19 : vector<1x32x32xf32> to vector<32x32xf32>
    %21 = vector.broadcast %18 : f32 to vector<32x32xf32>
    %22 = arith.mulf %21, %20 : vector<32x32xf32>
    %23 = arith.addf %17, %22 : vector<32x32xf32>
    %c2 = arith.constant 2 : index
    %24 = memref.load %arg7[%c2] : memref<32xf32, #tpu.memory_space<smem>>
    %25 = vector.extract_strided_slice %6 {offsets = [2, 0, 0], sizes = [1, 32, 32], strides = [1, 1, 1]} : vector<4x32x32xf32> to vector<1x32x32xf32>
    %26 = vector.shape_cast %25 : vector<1x32x32xf32> to vector<32x32xf32>
    %27 = vector.broadcast %24 : f32 to vector<32x32xf32>
    %28 = arith.mulf %27, %26 : vector<32x32xf32>
    %29 = arith.addf %23, %28 : vector<32x32xf32>
    %c3 = arith.constant 3 : index
    %30 = memref.load %arg7[%c3] : memref<32xf32, #tpu.memory_space<smem>>
    %31 = vector.extract_strided_slice %6 {offsets = [3, 0, 0], sizes = [1, 32, 32], strides = [1, 1, 1]} : vector<4x32x32xf32> to vector<1x32x32xf32>
    %32 = vector.shape_cast %31 : vector<1x32x32xf32> to vector<32x32xf32>
    %33 = vector.broadcast %30 : f32 to vector<32x32xf32>
    %34 = arith.mulf %33, %32 : vector<32x32xf32>
    %35 = arith.addf %29, %34 : vector<32x32xf32>
    %c0_13 = arith.constant 0 : index
    %c0_14 = arith.constant 0 : index
    %c0_15 = arith.constant 0 : index
    %c0_16 = arith.constant 0 : index
    %36 = vector.load %arg2[%c0_13, %c0_14, %c0_15, %c0_16] : memref<1x8x32x32xf32, #tpu.memory_space<vmem>>, vector<1x1x32x32xf32>
    %37 = vector.shape_cast %36 : vector<1x1x32x32xf32> to vector<32x32xf32>
    %38 = arith.negf %35 : vector<32x32xf32>
    %39 = math.exp %38 : vector<32x32xf32>
    %cst_17 = arith.constant 1.000000e+00 : f32
    %40 = vector.broadcast %cst_17 : f32 to vector<32x32xf32>
    %41 = arith.addf %40, %39 : vector<32x32xf32>
    %42 = arith.divf %40, %41 : vector<32x32xf32>
    %43 = arith.mulf %37, %42 : vector<32x32xf32>
    %c0_18 = arith.constant 0 : index
    %c0_19 = arith.constant 0 : index
    %c0_20 = arith.constant 0 : index
    %c0_21 = arith.constant 0 : index
    %44 = vector.load %arg9[%c0_18, %c0_19, %c0_20, %c0_21] : memref<1x8x32x32xf32, #tpu.memory_space<vmem>>, vector<1x1x32x32xf32>
    %45 = vector.shape_cast %44 : vector<1x1x32x32xf32> to vector<32x32xf32>
    %46 = vector.shape_cast %43 : vector<32x32xf32> to vector<1x1x32x32xf32>
    tpu.vector_store %arg9[%c0_18, %c0_19, %c0_20, %c0_21], %46 {strides = array<i32>} : memref<1x8x32x32xf32, #tpu.memory_space<vmem>>, vector<1x1x32x32xf32>,
    %47 = vector.extract_strided_slice %4 {offsets = [0, 3], sizes = [32, 3], strides = [1, 1]} : vector<32x24xf32> to vector<32x3xf32>
    %cst_22 = arith.constant dense<0.000000e+00> : vector<32x32xf32>
    %48 = tpu.matmul %47, %0, %cst_22 {dimension_numbers = #tpu.dot_dimension_numbers<[1], [0], [0], [1], [0, 0, 1, 1], [], []>} : vector<32x3xf32>, vector<3x32xf32>, vector<32x32xf32> -> vector<32x32xf32>
    %c1_23 = arith.constant 1 : index
    %49 = memref.load %arg8[%c1_23] : memref<8xf32, #tpu.memory_space<smem>>
    %50 = vector.broadcast %49 : f32 to vector<32x32xf32>
    %51 = arith.addf %48, %50 : vector<32x32xf32>
    %c4 = arith.constant 4 : index
    %52 = memref.load %arg7[%c4] : memref<32xf32, #tpu.memory_space<smem>>
    %53 = vector.extract_strided_slice %6 {offsets = [0, 0, 0], sizes = [1, 32, 32], strides = [1, 1, 1]} : vector<4x32x32xf32> to vector<1x32x32xf32>
    %54 = vector.shape_cast %53 : vector<1x32x32xf32> to vector<32x32xf32>
    %55 = vector.broadcast %52 : f32 to vector<32x32xf32>
    %56 = arith.mulf %55, %54 : vector<32x32xf32>
    %57 = arith.addf %51, %56 : vector<32x32xf32>
    %c5 = arith.constant 5 : index
    %58 = memref.load %arg7[%c5] : memref<32xf32, #tpu.memory_space<smem>>
    %59 = vector.extract_strided_slice %6 {offsets = [1, 0, 0], sizes = [1, 32, 32], strides = [1, 1, 1]} : vector<4x32x32xf32> to vector<1x32x32xf32>
    %60 = vector.shape_cast %59 : vector<1x32x32xf32> to vector<32x32xf32>
    %61 = vector.broadcast %58 : f32 to vector<32x32xf32>
    %62 = arith.mulf %61, %60 : vector<32x32xf32>
    %63 = arith.addf %57, %62 : vector<32x32xf32>
    %c6 = arith.constant 6 : index
    %64 = memref.load %arg7[%c6] : memref<32xf32, #tpu.memory_space<smem>>
    %65 = vector.extract_strided_slice %6 {offsets = [2, 0, 0], sizes = [1, 32, 32], strides = [1, 1, 1]} : vector<4x32x32xf32> to vector<1x32x32xf32>
    %66 = vector.shape_cast %65 : vector<1x32x32xf32> to vector<32x32xf32>
    %67 = vector.broadcast %64 : f32 to vector<32x32xf32>
    %68 = arith.mulf %67, %66 : vector<32x32xf32>
    %69 = arith.addf %63, %68 : vector<32x32xf32>
    %c7 = arith.constant 7 : index
    %70 = memref.load %arg7[%c7] : memref<32xf32, #tpu.memory_space<smem>>
    %71 = vector.extract_strided_slice %6 {offsets = [3, 0, 0], sizes = [1, 32, 32], strides = [1, 1, 1]} : vector<4x32x32xf32> to vector<1x32x32xf32>
    %72 = vector.shape_cast %71 : vector<1x32x32xf32> to vector<32x32xf32>
    %73 = vector.broadcast %70 : f32 to vector<32x32xf32>
    %74 = arith.mulf %73, %72 : vector<32x32xf32>
    %75 = arith.addf %69, %74 : vector<32x32xf32>
    %c0_24 = arith.constant 0 : index
    %c1_25 = arith.constant 1 : index
    %c0_26 = arith.constant 0 : index
    %c0_27 = arith.constant 0 : index
    %76 = vector.load %arg2[%c0_24, %c1_25, %c0_26, %c0_27] : memref<1x8x32x32xf32, #tpu.memory_space<vmem>>, vector<1x1x32x32xf32>
    %77 = vector.shape_cast %76 : vector<1x1x32x32xf32> to vector<32x32xf32>
    %78 = arith.negf %75 : vector<32x32xf32>
    %79 = math.exp %78 : vector<32x32xf32>
    %cst_28 = arith.constant 1.000000e+00 : f32
    %80 = vector.broadcast %cst_28 : f32 to vector<32x32xf32>
    %81 = arith.addf %80, %79 : vector<32x32xf32>
    %82 = arith.divf %80, %81 : vector<32x32xf32>
    %83 = arith.mulf %77, %82 : vector<32x32xf32>
    %c0_29 = arith.constant 0 : index
    %c1_30 = arith.constant 1 : index
    %c0_31 = arith.constant 0 : index
    %c0_32 = arith.constant 0 : index
    %84 = vector.load %arg9[%c0_29, %c1_30, %c0_31, %c0_32] : memref<1x8x32x32xf32, #tpu.memory_space<vmem>>, vector<1x1x32x32xf32>
    %85 = vector.shape_cast %84 : vector<1x1x32x32xf32> to vector<32x32xf32>
    %86 = vector.shape_cast %83 : vector<32x32xf32> to vector<1x1x32x32xf32>
    tpu.vector_store %arg9[%c0_29, %c1_30, %c0_31, %c0_32], %86 {strides = array<i32>} : memref<1x8x32x32xf32, #tpu.memory_space<vmem>>, vector<1x1x32x32xf32>,
    %87 = vector.extract_strided_slice %4 {offsets = [0, 6], sizes = [32, 3], strides = [1, 1]} : vector<32x24xf32> to vector<32x3xf32>
    %cst_33 = arith.constant dense<0.000000e+00> : vector<32x32xf32>
    %88 = tpu.matmul %87, %0, %cst_33 {dimension_numbers = #tpu.dot_dimension_numbers<[1], [0], [0], [1], [0, 0, 1, 1], [], []>} : vector<32x3xf32>, vector<3x32xf32>, vector<32x32xf32> -> vector<32x32xf32>
    %c2_34 = arith.constant 2 : index
    %89 = memref.load %arg8[%c2_34] : memref<8xf32, #tpu.memory_space<smem>>
    %90 = vector.broadcast %89 : f32 to vector<32x32xf32>
    %91 = arith.addf %88, %90 : vector<32x32xf32>
    %c8 = arith.constant 8 : index
    %92 = memref.load %arg7[%c8] : memref<32xf32, #tpu.memory_space<smem>>
    %93 = vector.extract_strided_slice %6 {offsets = [0, 0, 0], sizes = [1, 32, 32], strides = [1, 1, 1]} : vector<4x32x32xf32> to vector<1x32x32xf32>
    %94 = vector.shape_cast %93 : vector<1x32x32xf32> to vector<32x32xf32>
    %95 = vector.broadcast %92 : f32 to vector<32x32xf32>
    %96 = arith.mulf %95, %94 : vector<32x32xf32>
    %97 = arith.addf %91, %96 : vector<32x32xf32>
    %c9 = arith.constant 9 : index
    %98 = memref.load %arg7[%c9] : memref<32xf32, #tpu.memory_space<smem>>
    %99 = vector.extract_strided_slice %6 {offsets = [1, 0, 0], sizes = [1, 32, 32], strides = [1, 1, 1]} : vector<4x32x32xf32> to vector<1x32x32xf32>
    %100 = vector.shape_cast %99 : vector<1x32x32xf32> to vector<32x32xf32>
    %101 = vector.broadcast %98 : f32 to vector<32x32xf32>
    %102 = arith.mulf %101, %100 : vector<32x32xf32>
    %103 = arith.addf %97, %102 : vector<32x32xf32>
    %c10 = arith.constant 10 : index
    %104 = memref.load %arg7[%c10] : memref<32xf32, #tpu.memory_space<smem>>
    %105 = vector.extract_strided_slice %6 {offsets = [2, 0, 0], sizes = [1, 32, 32], strides = [1, 1, 1]} : vector<4x32x32xf32> to vector<1x32x32xf32>
    %106 = vector.shape_cast %105 : vector<1x32x32xf32> to vector<32x32xf32>
    %107 = vector.broadcast %104 : f32 to vector<32x32xf32>
    %108 = arith.mulf %107, %106 : vector<32x32xf32>
    %109 = arith.addf %103, %108 : vector<32x32xf32>
    %c11 = arith.constant 11 : index
    %110 = memref.load %arg7[%c11] : memref<32xf32, #tpu.memory_space<smem>>
    %111 = vector.extract_strided_slice %6 {offsets = [3, 0, 0], sizes = [1, 32, 32], strides = [1, 1, 1]} : vector<4x32x32xf32> to vector<1x32x32xf32>
    %112 = vector.shape_cast %111 : vector<1x32x32xf32> to vector<32x32xf32>
    %113 = vector.broadcast %110 : f32 to vector<32x32xf32>
    %114 = arith.mulf %113, %112 : vector<32x32xf32>
    %115 = arith.addf %109, %114 : vector<32x32xf32>
    %c0_35 = arith.constant 0 : index
    %c2_36 = arith.constant 2 : index
    %c0_37 = arith.constant 0 : index
    %c0_38 = arith.constant 0 : index
    %116 = vector.load %arg2[%c0_35, %c2_36, %c0_37, %c0_38] : memref<1x8x32x32xf32, #tpu.memory_space<vmem>>, vector<1x1x32x32xf32>
    %117 = vector.shape_cast %116 : vector<1x1x32x32xf32> to vector<32x32xf32>
    %118 = arith.negf %115 : vector<32x32xf32>
    %119 = math.exp %118 : vector<32x32xf32>
    %cst_39 = arith.constant 1.000000e+00 : f32
    %120 = vector.broadcast %cst_39 : f32 to vector<32x32xf32>
    %121 = arith.addf %120, %119 : vector<32x32xf32>
    %122 = arith.divf %120, %121 : vector<32x32xf32>
    %123 = arith.mulf %117, %122 : vector<32x32xf32>
    %c0_40 = arith.constant 0 : index
    %c2_41 = arith.constant 2 : index
    %c0_42 = arith.constant 0 : index
    %c0_43 = arith.constant 0 : index
    %124 = vector.load %arg9[%c0_40, %c2_41, %c0_42, %c0_43] : memref<1x8x32x32xf32, #tpu.memory_space<vmem>>, vector<1x1x32x32xf32>
    %125 = vector.shape_cast %124 : vector<1x1x32x32xf32> to vector<32x32xf32>
    %126 = vector.shape_cast %123 : vector<32x32xf32> to vector<1x1x32x32xf32>
    tpu.vector_store %arg9[%c0_40, %c2_41, %c0_42, %c0_43], %126 {strides = array<i32>} : memref<1x8x32x32xf32, #tpu.memory_space<vmem>>, vector<1x1x32x32xf32>,
    %127 = vector.extract_strided_slice %4 {offsets = [0, 9], sizes = [32, 3], strides = [1, 1]} : vector<32x24xf32> to vector<32x3xf32>
    %cst_44 = arith.constant dense<0.000000e+00> : vector<32x32xf32>
    %128 = tpu.matmul %127, %0, %cst_44 {dimension_numbers = #tpu.dot_dimension_numbers<[1], [0], [0], [1], [0, 0, 1, 1], [], []>} : vector<32x3xf32>, vector<3x32xf32>, vector<32x32xf32> -> vector<32x32xf32>
    %c3_45 = arith.constant 3 : index
    %129 = memref.load %arg8[%c3_45] : memref<8xf32, #tpu.memory_space<smem>>
    %130 = vector.broadcast %129 : f32 to vector<32x32xf32>
    %131 = arith.addf %128, %130 : vector<32x32xf32>
    %c12 = arith.constant 12 : index
    %132 = memref.load %arg7[%c12] : memref<32xf32, #tpu.memory_space<smem>>
    %133 = vector.extract_strided_slice %6 {offsets = [0, 0, 0], sizes = [1, 32, 32], strides = [1, 1, 1]} : vector<4x32x32xf32> to vector<1x32x32xf32>
    %134 = vector.shape_cast %133 : vector<1x32x32xf32> to vector<32x32xf32>
    %135 = vector.broadcast %132 : f32 to vector<32x32xf32>
    %136 = arith.mulf %135, %134 : vector<32x32xf32>
    %137 = arith.addf %131, %136 : vector<32x32xf32>
    %c13 = arith.constant 13 : index
    %138 = memref.load %arg7[%c13] : memref<32xf32, #tpu.memory_space<smem>>
    %139 = vector.extract_strided_slice %6 {offsets = [1, 0, 0], sizes = [1, 32, 32], strides = [1, 1, 1]} : vector<4x32x32xf32> to vector<1x32x32xf32>
    %140 = vector.shape_cast %139 : vector<1x32x32xf32> to vector<32x32xf32>
    %141 = vector.broadcast %138 : f32 to vector<32x32xf32>
    %142 = arith.mulf %141, %140 : vector<32x32xf32>
    %143 = arith.addf %137, %142 : vector<32x32xf32>
    %c14 = arith.constant 14 : index
    %144 = memref.load %arg7[%c14] : memref<32xf32, #tpu.memory_space<smem>>
    %145 = vector.extract_strided_slice %6 {offsets = [2, 0, 0], sizes = [1, 32, 32], strides = [1, 1, 1]} : vector<4x32x32xf32> to vector<1x32x32xf32>
    %146 = vector.shape_cast %145 : vector<1x32x32xf32> to vector<32x32xf32>
    %147 = vector.broadcast %144 : f32 to vector<32x32xf32>
    %148 = arith.mulf %147, %146 : vector<32x32xf32>
    %149 = arith.addf %143, %148 : vector<32x32xf32>
    %c15 = arith.constant 15 : index
    %150 = memref.load %arg7[%c15] : memref<32xf32, #tpu.memory_space<smem>>
    %151 = vector.extract_strided_slice %6 {offsets = [3, 0, 0], sizes = [1, 32, 32], strides = [1, 1, 1]} : vector<4x32x32xf32> to vector<1x32x32xf32>
    %152 = vector.shape_cast %151 : vector<1x32x32xf32> to vector<32x32xf32>
    %153 = vector.broadcast %150 : f32 to vector<32x32xf32>
    %154 = arith.mulf %153, %152 : vector<32x32xf32>
    %155 = arith.addf %149, %154 : vector<32x32xf32>
    %c0_46 = arith.constant 0 : index
    %c3_47 = arith.constant 3 : index
    %c0_48 = arith.constant 0 : index
    %c0_49 = arith.constant 0 : index
    %156 = vector.load %arg2[%c0_46, %c3_47, %c0_48, %c0_49] : memref<1x8x32x32xf32, #tpu.memory_space<vmem>>, vector<1x1x32x32xf32>
    %157 = vector.shape_cast %156 : vector<1x1x32x32xf32> to vector<32x32xf32>
    %158 = arith.negf %155 : vector<32x32xf32>
    %159 = math.exp %158 : vector<32x32xf32>
    %cst_50 = arith.constant 1.000000e+00 : f32
    %160 = vector.broadcast %cst_50 : f32 to vector<32x32xf32>
    %161 = arith.addf %160, %159 : vector<32x32xf32>
    %162 = arith.divf %160, %161 : vector<32x32xf32>
    %163 = arith.mulf %157, %162 : vector<32x32xf32>
    %c0_51 = arith.constant 0 : index
    %c3_52 = arith.constant 3 : index
    %c0_53 = arith.constant 0 : index
    %c0_54 = arith.constant 0 : index
    %164 = vector.load %arg9[%c0_51, %c3_52, %c0_53, %c0_54] : memref<1x8x32x32xf32, #tpu.memory_space<vmem>>, vector<1x1x32x32xf32>
    %165 = vector.shape_cast %164 : vector<1x1x32x32xf32> to vector<32x32xf32>
    %166 = vector.shape_cast %163 : vector<32x32xf32> to vector<1x1x32x32xf32>
    tpu.vector_store %arg9[%c0_51, %c3_52, %c0_53, %c0_54], %166 {strides = array<i32>} : memref<1x8x32x32xf32, #tpu.memory_space<vmem>>, vector<1x1x32x32xf32>,
    %167 = vector.extract_strided_slice %4 {offsets = [0, 12], sizes = [32, 3], strides = [1, 1]} : vector<32x24xf32> to vector<32x3xf32>
    %cst_55 = arith.constant dense<0.000000e+00> : vector<32x32xf32>
    %168 = tpu.matmul %167, %0, %cst_55 {dimension_numbers = #tpu.dot_dimension_numbers<[1], [0], [0], [1], [0, 0, 1, 1], [], []>} : vector<32x3xf32>, vector<3x32xf32>, vector<32x32xf32> -> vector<32x32xf32>
    %c4_56 = arith.constant 4 : index
    %169 = memref.load %arg8[%c4_56] : memref<8xf32, #tpu.memory_space<smem>>
    %170 = vector.broadcast %169 : f32 to vector<32x32xf32>
    %171 = arith.addf %168, %170 : vector<32x32xf32>
    %c16 = arith.constant 16 : index
    %172 = memref.load %arg7[%c16] : memref<32xf32, #tpu.memory_space<smem>>
    %173 = vector.extract_strided_slice %6 {offsets = [0, 0, 0], sizes = [1, 32, 32], strides = [1, 1, 1]} : vector<4x32x32xf32> to vector<1x32x32xf32>
    %174 = vector.shape_cast %173 : vector<1x32x32xf32> to vector<32x32xf32>
    %175 = vector.broadcast %172 : f32 to vector<32x32xf32>
    %176 = arith.mulf %175, %174 : vector<32x32xf32>
    %177 = arith.addf %171, %176 : vector<32x32xf32>
    %c17 = arith.constant 17 : index
    %178 = memref.load %arg7[%c17] : memref<32xf32, #tpu.memory_space<smem>>
    %179 = vector.extract_strided_slice %6 {offsets = [1, 0, 0], sizes = [1, 32, 32], strides = [1, 1, 1]} : vector<4x32x32xf32> to vector<1x32x32xf32>
    %180 = vector.shape_cast %179 : vector<1x32x32xf32> to vector<32x32xf32>
    %181 = vector.broadcast %178 : f32 to vector<32x32xf32>
    %182 = arith.mulf %181, %180 : vector<32x32xf32>
    %183 = arith.addf %177, %182 : vector<32x32xf32>
    %c18 = arith.constant 18 : index
    %184 = memref.load %arg7[%c18] : memref<32xf32, #tpu.memory_space<smem>>
    %185 = vector.extract_strided_slice %6 {offsets = [2, 0, 0], sizes = [1, 32, 32], strides = [1, 1, 1]} : vector<4x32x32xf32> to vector<1x32x32xf32>
    %186 = vector.shape_cast %185 : vector<1x32x32xf32> to vector<32x32xf32>
    %187 = vector.broadcast %184 : f32 to vector<32x32xf32>
    %188 = arith.mulf %187, %186 : vector<32x32xf32>
    %189 = arith.addf %183, %188 : vector<32x32xf32>
    %c19 = arith.constant 19 : index
    %190 = memref.load %arg7[%c19] : memref<32xf32, #tpu.memory_space<smem>>
    %191 = vector.extract_strided_slice %6 {offsets = [3, 0, 0], sizes = [1, 32, 32], strides = [1, 1, 1]} : vector<4x32x32xf32> to vector<1x32x32xf32>
    %192 = vector.shape_cast %191 : vector<1x32x32xf32> to vector<32x32xf32>
    %193 = vector.broadcast %190 : f32 to vector<32x32xf32>
    %194 = arith.mulf %193, %192 : vector<32x32xf32>
    %195 = arith.addf %189, %194 : vector<32x32xf32>
    %c0_57 = arith.constant 0 : index
    %c4_58 = arith.constant 4 : index
    %c0_59 = arith.constant 0 : index
    %c0_60 = arith.constant 0 : index
    %196 = vector.load %arg2[%c0_57, %c4_58, %c0_59, %c0_60] : memref<1x8x32x32xf32, #tpu.memory_space<vmem>>, vector<1x1x32x32xf32>
    %197 = vector.shape_cast %196 : vector<1x1x32x32xf32> to vector<32x32xf32>
    %198 = arith.negf %195 : vector<32x32xf32>
    %199 = math.exp %198 : vector<32x32xf32>
    %cst_61 = arith.constant 1.000000e+00 : f32
    %200 = vector.broadcast %cst_61 : f32 to vector<32x32xf32>
    %201 = arith.addf %200, %199 : vector<32x32xf32>
    %202 = arith.divf %200, %201 : vector<32x32xf32>
    %203 = arith.mulf %197, %202 : vector<32x32xf32>
    %c0_62 = arith.constant 0 : index
    %c4_63 = arith.constant 4 : index
    %c0_64 = arith.constant 0 : index
    %c0_65 = arith.constant 0 : index
    %204 = vector.load %arg9[%c0_62, %c4_63, %c0_64, %c0_65] : memref<1x8x32x32xf32, #tpu.memory_space<vmem>>, vector<1x1x32x32xf32>
    %205 = vector.shape_cast %204 : vector<1x1x32x32xf32> to vector<32x32xf32>
    %206 = vector.shape_cast %203 : vector<32x32xf32> to vector<1x1x32x32xf32>
    tpu.vector_store %arg9[%c0_62, %c4_63, %c0_64, %c0_65], %206 {strides = array<i32>} : memref<1x8x32x32xf32, #tpu.memory_space<vmem>>, vector<1x1x32x32xf32>,
    %207 = vector.extract_strided_slice %4 {offsets = [0, 15], sizes = [32, 3], strides = [1, 1]} : vector<32x24xf32> to vector<32x3xf32>
    %cst_66 = arith.constant dense<0.000000e+00> : vector<32x32xf32>
    %208 = tpu.matmul %207, %0, %cst_66 {dimension_numbers = #tpu.dot_dimension_numbers<[1], [0], [0], [1], [0, 0, 1, 1], [], []>} : vector<32x3xf32>, vector<3x32xf32>, vector<32x32xf32> -> vector<32x32xf32>
    %c5_67 = arith.constant 5 : index
    %209 = memref.load %arg8[%c5_67] : memref<8xf32, #tpu.memory_space<smem>>
    %210 = vector.broadcast %209 : f32 to vector<32x32xf32>
    %211 = arith.addf %208, %210 : vector<32x32xf32>
    %c20 = arith.constant 20 : index
    %212 = memref.load %arg7[%c20] : memref<32xf32, #tpu.memory_space<smem>>
    %213 = vector.extract_strided_slice %6 {offsets = [0, 0, 0], sizes = [1, 32, 32], strides = [1, 1, 1]} : vector<4x32x32xf32> to vector<1x32x32xf32>
    %214 = vector.shape_cast %213 : vector<1x32x32xf32> to vector<32x32xf32>
    %215 = vector.broadcast %212 : f32 to vector<32x32xf32>
    %216 = arith.mulf %215, %214 : vector<32x32xf32>
    %217 = arith.addf %211, %216 : vector<32x32xf32>
    %c21 = arith.constant 21 : index
    %218 = memref.load %arg7[%c21] : memref<32xf32, #tpu.memory_space<smem>>
    %219 = vector.extract_strided_slice %6 {offsets = [1, 0, 0], sizes = [1, 32, 32], strides = [1, 1, 1]} : vector<4x32x32xf32> to vector<1x32x32xf32>
    %220 = vector.shape_cast %219 : vector<1x32x32xf32> to vector<32x32xf32>
    %221 = vector.broadcast %218 : f32 to vector<32x32xf32>
    %222 = arith.mulf %221, %220 : vector<32x32xf32>
    %223 = arith.addf %217, %222 : vector<32x32xf32>
    %c22 = arith.constant 22 : index
    %224 = memref.load %arg7[%c22] : memref<32xf32, #tpu.memory_space<smem>>
    %225 = vector.extract_strided_slice %6 {offsets = [2, 0, 0], sizes = [1, 32, 32], strides = [1, 1, 1]} : vector<4x32x32xf32> to vector<1x32x32xf32>
    %226 = vector.shape_cast %225 : vector<1x32x32xf32> to vector<32x32xf32>
    %227 = vector.broadcast %224 : f32 to vector<32x32xf32>
    %228 = arith.mulf %227, %226 : vector<32x32xf32>
    %229 = arith.addf %223, %228 : vector<32x32xf32>
    %c23 = arith.constant 23 : index
    %230 = memref.load %arg7[%c23] : memref<32xf32, #tpu.memory_space<smem>>
    %231 = vector.extract_strided_slice %6 {offsets = [3, 0, 0], sizes = [1, 32, 32], strides = [1, 1, 1]} : vector<4x32x32xf32> to vector<1x32x32xf32>
    %232 = vector.shape_cast %231 : vector<1x32x32xf32> to vector<32x32xf32>
    %233 = vector.broadcast %230 : f32 to vector<32x32xf32>
    %234 = arith.mulf %233, %232 : vector<32x32xf32>
    %235 = arith.addf %229, %234 : vector<32x32xf32>
    %c0_68 = arith.constant 0 : index
    %c5_69 = arith.constant 5 : index
    %c0_70 = arith.constant 0 : index
    %c0_71 = arith.constant 0 : index
    %236 = vector.load %arg2[%c0_68, %c5_69, %c0_70, %c0_71] : memref<1x8x32x32xf32, #tpu.memory_space<vmem>>, vector<1x1x32x32xf32>
    %237 = vector.shape_cast %236 : vector<1x1x32x32xf32> to vector<32x32xf32>
    %238 = arith.negf %235 : vector<32x32xf32>
    %239 = math.exp %238 : vector<32x32xf32>
    %cst_72 = arith.constant 1.000000e+00 : f32
    %240 = vector.broadcast %cst_72 : f32 to vector<32x32xf32>
    %241 = arith.addf %240, %239 : vector<32x32xf32>
    %242 = arith.divf %240, %241 : vector<32x32xf32>
    %243 = arith.mulf %237, %242 : vector<32x32xf32>
    %c0_73 = arith.constant 0 : index
    %c5_74 = arith.constant 5 : index
    %c0_75 = arith.constant 0 : index
    %c0_76 = arith.constant 0 : index
    %244 = vector.load %arg9[%c0_73, %c5_74, %c0_75, %c0_76] : memref<1x8x32x32xf32, #tpu.memory_space<vmem>>, vector<1x1x32x32xf32>
    %245 = vector.shape_cast %244 : vector<1x1x32x32xf32> to vector<32x32xf32>
    %246 = vector.shape_cast %243 : vector<32x32xf32> to vector<1x1x32x32xf32>
    tpu.vector_store %arg9[%c0_73, %c5_74, %c0_75, %c0_76], %246 {strides = array<i32>} : memref<1x8x32x32xf32, #tpu.memory_space<vmem>>, vector<1x1x32x32xf32>,
    %247 = vector.extract_strided_slice %4 {offsets = [0, 18], sizes = [32, 3], strides = [1, 1]} : vector<32x24xf32> to vector<32x3xf32>
    %cst_77 = arith.constant dense<0.000000e+00> : vector<32x32xf32>
    %248 = tpu.matmul %247, %0, %cst_77 {dimension_numbers = #tpu.dot_dimension_numbers<[1], [0], [0], [1], [0, 0, 1, 1], [], []>} : vector<32x3xf32>, vector<3x32xf32>, vector<32x32xf32> -> vector<32x32xf32>
    %c6_78 = arith.constant 6 : index
    %249 = memref.load %arg8[%c6_78] : memref<8xf32, #tpu.memory_space<smem>>
    %250 = vector.broadcast %249 : f32 to vector<32x32xf32>
    %251 = arith.addf %248, %250 : vector<32x32xf32>
    %c24 = arith.constant 24 : index
    %252 = memref.load %arg7[%c24] : memref<32xf32, #tpu.memory_space<smem>>
    %253 = vector.extract_strided_slice %6 {offsets = [0, 0, 0], sizes = [1, 32, 32], strides = [1, 1, 1]} : vector<4x32x32xf32> to vector<1x32x32xf32>
    %254 = vector.shape_cast %253 : vector<1x32x32xf32> to vector<32x32xf32>
    %255 = vector.broadcast %252 : f32 to vector<32x32xf32>
    %256 = arith.mulf %255, %254 : vector<32x32xf32>
    %257 = arith.addf %251, %256 : vector<32x32xf32>
    %c25 = arith.constant 25 : index
    %258 = memref.load %arg7[%c25] : memref<32xf32, #tpu.memory_space<smem>>
    %259 = vector.extract_strided_slice %6 {offsets = [1, 0, 0], sizes = [1, 32, 32], strides = [1, 1, 1]} : vector<4x32x32xf32> to vector<1x32x32xf32>
    %260 = vector.shape_cast %259 : vector<1x32x32xf32> to vector<32x32xf32>
    %261 = vector.broadcast %258 : f32 to vector<32x32xf32>
    %262 = arith.mulf %261, %260 : vector<32x32xf32>
    %263 = arith.addf %257, %262 : vector<32x32xf32>
    %c26 = arith.constant 26 : index
    %264 = memref.load %arg7[%c26] : memref<32xf32, #tpu.memory_space<smem>>
    %265 = vector.extract_strided_slice %6 {offsets = [2, 0, 0], sizes = [1, 32, 32], strides = [1, 1, 1]} : vector<4x32x32xf32> to vector<1x32x32xf32>
    %266 = vector.shape_cast %265 : vector<1x32x32xf32> to vector<32x32xf32>
    %267 = vector.broadcast %264 : f32 to vector<32x32xf32>
    %268 = arith.mulf %267, %266 : vector<32x32xf32>
    %269 = arith.addf %263, %268 : vector<32x32xf32>
    %c27 = arith.constant 27 : index
    %270 = memref.load %arg7[%c27] : memref<32xf32, #tpu.memory_space<smem>>
    %271 = vector.extract_strided_slice %6 {offsets = [3, 0, 0], sizes = [1, 32, 32], strides = [1, 1, 1]} : vector<4x32x32xf32> to vector<1x32x32xf32>
    %272 = vector.shape_cast %271 : vector<1x32x32xf32> to vector<32x32xf32>
    %273 = vector.broadcast %270 : f32 to vector<32x32xf32>
    %274 = arith.mulf %273, %272 : vector<32x32xf32>
    %275 = arith.addf %269, %274 : vector<32x32xf32>
    %c0_79 = arith.constant 0 : index
    %c6_80 = arith.constant 6 : index
    %c0_81 = arith.constant 0 : index
    %c0_82 = arith.constant 0 : index
    %276 = vector.load %arg2[%c0_79, %c6_80, %c0_81, %c0_82] : memref<1x8x32x32xf32, #tpu.memory_space<vmem>>, vector<1x1x32x32xf32>
    %277 = vector.shape_cast %276 : vector<1x1x32x32xf32> to vector<32x32xf32>
    %278 = arith.negf %275 : vector<32x32xf32>
    %279 = math.exp %278 : vector<32x32xf32>
    %cst_83 = arith.constant 1.000000e+00 : f32
    %280 = vector.broadcast %cst_83 : f32 to vector<32x32xf32>
    %281 = arith.addf %280, %279 : vector<32x32xf32>
    %282 = arith.divf %280, %281 : vector<32x32xf32>
    %283 = arith.mulf %277, %282 : vector<32x32xf32>
    %c0_84 = arith.constant 0 : index
    %c6_85 = arith.constant 6 : index
    %c0_86 = arith.constant 0 : index
    %c0_87 = arith.constant 0 : index
    %284 = vector.load %arg9[%c0_84, %c6_85, %c0_86, %c0_87] : memref<1x8x32x32xf32, #tpu.memory_space<vmem>>, vector<1x1x32x32xf32>
    %285 = vector.shape_cast %284 : vector<1x1x32x32xf32> to vector<32x32xf32>
    %286 = vector.shape_cast %283 : vector<32x32xf32> to vector<1x1x32x32xf32>
    tpu.vector_store %arg9[%c0_84, %c6_85, %c0_86, %c0_87], %286 {strides = array<i32>} : memref<1x8x32x32xf32, #tpu.memory_space<vmem>>, vector<1x1x32x32xf32>,
    %287 = vector.extract_strided_slice %4 {offsets = [0, 21], sizes = [32, 3], strides = [1, 1]} : vector<32x24xf32> to vector<32x3xf32>
    %cst_88 = arith.constant dense<0.000000e+00> : vector<32x32xf32>
    %288 = tpu.matmul %287, %0, %cst_88 {dimension_numbers = #tpu.dot_dimension_numbers<[1], [0], [0], [1], [0, 0, 1, 1], [], []>} : vector<32x3xf32>, vector<3x32xf32>, vector<32x32xf32> -> vector<32x32xf32>
    %c7_89 = arith.constant 7 : index
    %289 = memref.load %arg8[%c7_89] : memref<8xf32, #tpu.memory_space<smem>>
    %290 = vector.broadcast %289 : f32 to vector<32x32xf32>
    %291 = arith.addf %288, %290 : vector<32x32xf32>
    %c28 = arith.constant 28 : index
    %292 = memref.load %arg7[%c28] : memref<32xf32, #tpu.memory_space<smem>>
    %293 = vector.extract_strided_slice %6 {offsets = [0, 0, 0], sizes = [1, 32, 32], strides = [1, 1, 1]} : vector<4x32x32xf32> to vector<1x32x32xf32>
    %294 = vector.shape_cast %293 : vector<1x32x32xf32> to vector<32x32xf32>
    %295 = vector.broadcast %292 : f32 to vector<32x32xf32>
    %296 = arith.mulf %295, %294 : vector<32x32xf32>
    %297 = arith.addf %291, %296 : vector<32x32xf32>
    %c29 = arith.constant 29 : index
    %298 = memref.load %arg7[%c29] : memref<32xf32, #tpu.memory_space<smem>>
    %299 = vector.extract_strided_slice %6 {offsets = [1, 0, 0], sizes = [1, 32, 32], strides = [1, 1, 1]} : vector<4x32x32xf32> to vector<1x32x32xf32>
    %300 = vector.shape_cast %299 : vector<1x32x32xf32> to vector<32x32xf32>
    %301 = vector.broadcast %298 : f32 to vector<32x32xf32>
    %302 = arith.mulf %301, %300 : vector<32x32xf32>
    %303 = arith.addf %297, %302 : vector<32x32xf32>
    %c30 = arith.constant 30 : index
    %304 = memref.load %arg7[%c30] : memref<32xf32, #tpu.memory_space<smem>>
    %305 = vector.extract_strided_slice %6 {offsets = [2, 0, 0], sizes = [1, 32, 32], strides = [1, 1, 1]} : vector<4x32x32xf32> to vector<1x32x32xf32>
    %306 = vector.shape_cast %305 : vector<1x32x32xf32> to vector<32x32xf32>
    %307 = vector.broadcast %304 : f32 to vector<32x32xf32>
    %308 = arith.mulf %307, %306 : vector<32x32xf32>
    %309 = arith.addf %303, %308 : vector<32x32xf32>
    %c31 = arith.constant 31 : index
    %310 = memref.load %arg7[%c31] : memref<32xf32, #tpu.memory_space<smem>>
    %311 = vector.extract_strided_slice %6 {offsets = [3, 0, 0], sizes = [1, 32, 32], strides = [1, 1, 1]} : vector<4x32x32xf32> to vector<1x32x32xf32>
    %312 = vector.shape_cast %311 : vector<1x32x32xf32> to vector<32x32xf32>
    %313 = vector.broadcast %310 : f32 to vector<32x32xf32>
    %314 = arith.mulf %313, %312 : vector<32x32xf32>
    %315 = arith.addf %309, %314 : vector<32x32xf32>
    %c0_90 = arith.constant 0 : index
    %c7_91 = arith.constant 7 : index
    %c0_92 = arith.constant 0 : index
    %c0_93 = arith.constant 0 : index
    %316 = vector.load %arg2[%c0_90, %c7_91, %c0_92, %c0_93] : memref<1x8x32x32xf32, #tpu.memory_space<vmem>>, vector<1x1x32x32xf32>
    %317 = vector.shape_cast %316 : vector<1x1x32x32xf32> to vector<32x32xf32>
    %318 = arith.negf %315 : vector<32x32xf32>
    %319 = math.exp %318 : vector<32x32xf32>
    %cst_94 = arith.constant 1.000000e+00 : f32
    %320 = vector.broadcast %cst_94 : f32 to vector<32x32xf32>
    %321 = arith.addf %320, %319 : vector<32x32xf32>
    %322 = arith.divf %320, %321 : vector<32x32xf32>
    %323 = arith.mulf %317, %322 : vector<32x32xf32>
    %c0_95 = arith.constant 0 : index
    %c7_96 = arith.constant 7 : index
    %c0_97 = arith.constant 0 : index
    %c0_98 = arith.constant 0 : index
    %324 = vector.load %arg9[%c0_95, %c7_96, %c0_97, %c0_98] : memref<1x8x32x32xf32, #tpu.memory_space<vmem>>, vector<1x1x32x32xf32>
    %325 = vector.shape_cast %324 : vector<1x1x32x32xf32> to vector<32x32xf32>
    %326 = vector.shape_cast %323 : vector<32x32xf32> to vector<1x1x32x32xf32>
    tpu.vector_store %arg9[%c0_95, %c7_96, %c0_97, %c0_98], %326 {strides = array<i32>} : memref<1x8x32x32xf32, #tpu.memory_space<vmem>>, vector<1x1x32x32xf32>,
    return
  }
  func.func @transform_0(%arg0: i32, %arg1: i32) -> (i32, i32, i32, i32) {
    %c0_i32 = arith.constant 0 : i32
    %c0_i32_0 = arith.constant 0 : i32
    %c0_i32_1 = arith.constant 0 : i32
    return %arg0, %c0_i32, %arg1, %c0_i32_0 : i32, i32, i32, i32
  }
  func.func @transform_1(%arg0: i32, %arg1: i32) -> (i32, i32, i32, i32) {
    %c0_i32 = arith.constant 0 : i32
    %c0_i32_0 = arith.constant 0 : i32
    %c0_i32_1 = arith.constant 0 : i32
    return %arg0, %c0_i32, %arg1, %c0_i32_0 : i32, i32, i32, i32
  }
  func.func @transform_2(%arg0: i32, %arg1: i32) -> (i32, i32, i32) {
    %c0_i32 = arith.constant 0 : i32
    %c0_i32_0 = arith.constant 0 : i32
    %c0_i32_1 = arith.constant 0 : i32
    return %arg0, %c0_i32, %c0_i32_0 : i32, i32, i32
  }
  func.func @transform_3(%arg0: i32, %arg1: i32) -> (i32, i32) {
    %c0_i32 = arith.constant 0 : i32
    %c0_i32_0 = arith.constant 0 : i32
    return %arg1, %c0_i32 : i32, i32
  }
  func.func @transform_4(%arg0: i32, %arg1: i32) -> (i32, i32) {
    %c0_i32 = arith.constant 0 : i32
    %c0_i32_0 = arith.constant 0 : i32
    %c0_i32_1 = arith.constant 0 : i32
    return %c0_i32, %c0_i32_0 : i32, i32
  }
  func.func @transform_5(%arg0: i32, %arg1: i32) -> i32 {
    %c0_i32 = arith.constant 0 : i32
    %c0_i32_0 = arith.constant 0 : i32
    return %c0_i32 : i32
  }
  func.func @transform_6(%arg0: i32, %arg1: i32) -> i32 {
    %c0_i32 = arith.constant 0 : i32
    %c0_i32_0 = arith.constant 0 : i32
    return %c0_i32 : i32
  }
  func.func @transform_7(%arg0: i32, %arg1: i32) -> (i32, i32, i32, i32) {
    %c0_i32 = arith.constant 0 : i32
    %c0_i32_0 = arith.constant 0 : i32
    %c0_i32_1 = arith.constant 0 : i32
    return %arg0, %c0_i32, %arg1, %c0_i32_0 : i32, i32, i32, i32
  }
}

</mosaic_0001>

<llo_original>
// kernel: esa_forward.5
$region0: #{esa_forward.5}
  #allocation0 [shape = 'u32[]', space=smem, size = 0x4, offset = 0x4, fixed_abs, tag = 'smem constant byte address 0x4 - core index']
  #allocation1 [shape = 'u32[144,128]{1,0:T(1,128)}', space=vmem, size = 0x12000, scoped, tag = 'internal scratch']
  %s0 = inlined_call_operand.vmem [shape: f32[2,8,1024], index: 0, kind: input, shape index: {}]
  %s1 = inlined_call_operand.vmem [shape: f32[4,8], index: 1, kind: input, shape index: {}]
  %s2 = inlined_call_operand.vmem [shape: f32[4,1], index: 2, kind: input, shape index: {}]
  %s3 = inlined_call_operand.vmem [shape: f32[2,4,1024], index: 3, kind: output, shape index: {}]
  %s4 = sld [smem:[#allocation0]]
  $region45: #{esa_forward.5} parent=0
    _
  %s6 = ssub.s32 1, %s4
  %s7 = scalar_select 0, %s6, %s4
  loop: start=0, step=1, limit=4
  $region2: #{esa_forward.5} parent=0 // loop_pre_header
    _
  $region3: #{esa_forward.5} parent=0 // loop_header
    %s9 = sphi 0, %s13
    %p10 = scmp.ge.s32.totalorder %s9, 4
    %s16 = sphi 0, %s28
    %s17 = sphi 0, %s24
    %s18 = sphi 0, %s16
    %s19 = sphi 0, %s17
    %s20 = sphi 0, %s18
    %s21 = sphi 0, %s19
    %s33 = sphi 0, %s35
    %s36 = sphi 0, %s33
    %s37 = sphi 0, %s36
    %s53 = sphi 0, %s37
    %s57 = sphi 0, %s57
    %s59 = sphi 0, %s57
    %s60 = sphi 0, %s59
    %s74 = sphi 0, %s60
    %s78 = sphi 0, %s78
    %s80 = sphi 0, %s78
    %s81 = sphi 0, %s80
    %s95 = sphi 0, %s81
    %s103 = sphi 0, %s105
    %s106 = sphi 0, %s103
    %s107 = sphi 0, %s106
    %s123 = sphi 0, %s107
  $region4: #{esa_forward.5} parent=0 // loop_header_branch
    %12 = sbr.rel (%p10) target = $region8
  $region5: #{esa_forward.5} parent=0 // loop_body
    %s14 = ssub.s32 %s9, 1
    %s15 = ssub.s32 %s9, 2
    %s22 = sadd.s32 1, %s17
    %p23 = scmp.ge.s32.totalorder %s22, 1
    %s24 = scalar_select %p23, 0, %s22
    %s25 = sadd.s32 1, %s16
    %s26 = scalar_select %p23, %s25, %s16
    %p27 = scmp.ge.s32.totalorder %s26, 2
    %s28 = scalar_select %p27, 0, %s26
    %s29 = ssub.s32 %s16, %s28
    %s30 = ssub.s32 %s17, %s24
    %s31 = sor.u32 %s29, %s30
    %p32 = scmp.eq.s32.totalorder %s31, 0
    %s34 = sadd.s32 %s33, 1
    %s35 = scalar_select %p32, %s33, %s34
    %p38 = pneg %p32
    %p39 = scmp.eq.s32.totalorder %s9, 1
    %p40 = por %p38, %p39
    %p41 = scmp.ne.s32.totalorder %s33, %s36
    %p42 = scmp.eq.s32.totalorder %s9, 0
    %p43 = por %p41, %p42
    %p44 = scmp.ne.s32.totalorder %s33, %s36
    %p45 = scmp.eq.s32.totalorder %s14, 1
    %p46 = por %p44, %p45
    %p47 = scmp.ne.s32.totalorder %s36, %s37
    %p48 = scmp.eq.s32.totalorder %s14, 0
    %p49 = por %p47, %p48
    %p50 = scmp.ne.s32.totalorder %s36, %s37
    %p51 = scmp.eq.s32.totalorder %s15, 1
    %p52 = por %p50, %p51
    %p54 = scmp.ne.s32.totalorder %s37, %s53
    %p55 = scmp.eq.s32.totalorder %s15, 0
    %p56 = por %p54, %p55
    %s58 = sadd.s32 %s57, 1
    %p61 = scmp.eq.s32.totalorder %s9, 1
    %p62 = scmp.ne.s32.totalorder %s57, %s59
    %p63 = scmp.eq.s32.totalorder %s9, 0
    %p64 = por %p62, %p63
    %p65 = scmp.ne.s32.totalorder %s57, %s59
    %p66 = scmp.eq.s32.totalorder %s14, 1
    %p67 = por %p65, %p66
    %p68 = scmp.ne.s32.totalorder %s59, %s60
    %p69 = scmp.eq.s32.totalorder %s14, 0
    %p70 = por %p68, %p69
    %p71 = scmp.ne.s32.totalorder %s59, %s60
    %p72 = scmp.eq.s32.totalorder %s15, 1
    %p73 = por %p71, %p72
    %p75 = scmp.ne.s32.totalorder %s60, %s74
    %p76 = scmp.eq.s32.totalorder %s15, 0
    %p77 = por %p75, %p76
    %s79 = sadd.s32 %s78, 1
    %p82 = scmp.eq.s32.totalorder %s9, 1
    %p83 = scmp.ne.s32.totalorder %s78, %s80
    %p84 = scmp.eq.s32.totalorder %s9, 0
    %p85 = por %p83, %p84
    %p86 = scmp.ne.s32.totalorder %s78, %s80
    %p87 = scmp.eq.s32.totalorder %s14, 1
    %p88 = por %p86, %p87
    %p89 = scmp.ne.s32.totalorder %s80, %s81
    %p90 = scmp.eq.s32.totalorder %s14, 0
    %p91 = por %p89, %p90
    %p92 = scmp.ne.s32.totalorder %s80, %s81
    %p93 = scmp.eq.s32.totalorder %s15, 1
    %p94 = por %p92, %p93
    %p96 = scmp.ne.s32.totalorder %s81, %s95
    %p97 = scmp.eq.s32.totalorder %s15, 0
    %p98 = por %p96, %p97
    %s99 = ssub.s32 %s16, %s28
    %s100 = ssub.s32 %s17, %s24
    %s101 = sor.u32 %s99, %s100
    %p102 = scmp.eq.s32.totalorder %s101, 0
    %s104 = sadd.s32 %s103, 1
    %s105 = scalar_select %p102, %s103, %s104
    %p108 = pneg %p102
    %p109 = scmp.eq.s32.totalorder %s9, 1
    %p110 = por %p108, %p109
    %p111 = scmp.ne.s32.totalorder %s103, %s106
    %p112 = scmp.eq.s32.totalorder %s9, 0
    %p113 = por %p111, %p112
    %p114 = scmp.ne.s32.totalorder %s103, %s106
    %p115 = scmp.eq.s32.totalorder %s14, 1
    %p116 = por %p114, %p115
    %p117 = scmp.ne.s32.totalorder %s106, %s107
    %p118 = scmp.eq.s32.totalorder %s14, 0
    %p119 = por %p117, %p118
    %p120 = scmp.ne.s32.totalorder %s106, %s107
    %p121 = scmp.eq.s32.totalorder %s15, 1
    %p122 = por %p120, %p121
    %p124 = scmp.ne.s32.totalorder %s107, %s123
    %p125 = scmp.eq.s32.totalorder %s15, 0
    %p126 = por %p124, %p125
    %p127 = scmp.le.s32.totalorder 1, %s9
    %p128 = scmp.lt.s32.totalorder %s9, 3
    %p129 = pnand %p127, %p128
    %p130 = pneg %p129
    // Predicated region
    $region9: #{esa_forward.5} parent=5 // pred_check
      _
    $region10: #{esa_forward.5} parent=5 // pred_check_branch
      %132 = sbr.rel (%p129) target = $region12
    $region11: #{esa_forward.5} parent=5 // pred_region
      %s133 = ssub.s32 %s9, 1
      // Predicated region
      $region13: #{esa_forward.5} parent=11 // pred_check
        %p134 = pneg %p70
      $region14: #{esa_forward.5} parent=11 // pred_check_branch
        %136 = sbr.rel (%p134) target = $region16
      $region15: #{esa_forward.5} parent=11 // pred_region
        _
      $region16: #{esa_forward.5} parent=11 // pred_fallthru
        _
      // Predicated region
      $region17: #{esa_forward.5} parent=11 // pred_check
        %p137 = pneg %p91
      $region18: #{esa_forward.5} parent=11 // pred_check_branch
        %139 = sbr.rel (%p137) target = $region20
      $region19: #{esa_forward.5} parent=11 // pred_region
        _
      $region20: #{esa_forward.5} parent=11 // pred_fallthru
        _
    $region12: #{esa_forward.5} parent=5 // pred_fallthru
      _
    %p140 = scmp.lt.s32.totalorder %s9, 2
    // Predicated region
    $region21: #{esa_forward.5} parent=5 // pred_check
      %p141 = pneg %p140
    $region22: #{esa_forward.5} parent=5 // pred_check_branch
      %143 = sbr.rel (%p141) target = $region24
    $region23: #{esa_forward.5} parent=5 // pred_region
      // Predicated region
      $region25: #{esa_forward.5} parent=23 // pred_check
        %p144 = pneg %p43
      $region26: #{esa_forward.5} parent=23 // pred_check_branch
        %146 = sbr.rel (%p144) target = $region28
      $region27: #{esa_forward.5} parent=23 // pred_region
        %s147 = smul.u32 8, %s17
        %p148 = scmp.lt.s32.totalorder %s16, 1
        %s149 = scalar_select %p148, %s16, 1
        %p150 = scmp.lt.s32.totalorder %s147, 7
        %s151 = scalar_select %p150, %s147, 7
        %s152 = smul.addr %s149, 8
        %s153 = sadd.s32 %s151, %s152
        %s154 = smul.addr %s153, 8
        %s155 = scalar_lea.vmem %s0, %s154
        %s156 = smul.u32 8, %s17
      $region28: #{esa_forward.5} parent=23 // pred_fallthru
        _
    $region24: #{esa_forward.5} parent=5 // pred_fallthru
      _
    %p157 = scmp.le.s32.totalorder 1, %s9
    %p158 = scmp.lt.s32.totalorder %s9, 3
    %p159 = pnand %p157, %p158
    %p160 = pneg %p159
    // Predicated region
    $region29: #{esa_forward.5} parent=5 // pred_check
      _
    $region30: #{esa_forward.5} parent=5 // pred_check_branch
      %162 = sbr.rel (%p159) target = $region32
    $region31: #{esa_forward.5} parent=5 // pred_region
      %s163 = ssub.s32 %s9, 1
      %s164 = smul.u32 8, %s19
      %p165 = scmp.lt.s32.totalorder %s18, 1
      %s166 = scalar_select %p165, %s18, 1
      %p167 = scmp.lt.s32.totalorder %s164, 7
      %s168 = scalar_select %p167, %s164, 7
      %s169 = smul.addr %s166, 8
      %s170 = sadd.s32 %s168, %s169
      %s171 = smul.addr %s170, 8
      %s172 = scalar_lea.vmem %s0, %s171
      %p173 = pneg %p49
      %p174 = pneg %p46
      %p175 = pneg %p70
      %p176 = pneg %p67
      %p177 = pneg %p91
      %p178 = pneg %p88
      %p179 = pneg %p119
      %p180 = pneg %p116
      %s181 = smul.u32 8, %s19
      %p182 = scmp.lt.s32.totalorder %s18, 1
      %s183 = scalar_select %p182, %s18, 1
      %p184 = scmp.lt.s32.totalorder %s181, 7
      %s185 = scalar_select %p184, %s181, 7
      %s186 = smul.addr %s183, 8
      %s187 = sadd.s32 %s185, %s186
      %s188 = smul.addr %s187, 4
      %s189 = scalar_lea.vmem %s3, %s188
      %s190 = smul.u32 8, %s19
      %p191 = scmp.lt.s32.totalorder %s18, 1
      %s192 = scalar_select %p191, %s18, 1
      %p193 = scmp.lt.s32.totalorder %s190, 7
      %s194 = scalar_select %p193, %s190, 7
      %s195 = smul.addr %s192, 8
      %s196 = sadd.s32 %s194, %s195
      %s197 = smul.addr %s196, 8
      %s198 = scalar_lea.vmem %s0, %s197
      %s199 = smul.u32 8, %s19
      %s200 = smul.u32 8, %s19
      %p201 = scmp.lt.s32.totalorder %s18, 1
      %s202 = scalar_select %p201, %s18, 1
      %p203 = scmp.lt.s32.totalorder %s200, 7
      %s204 = scalar_select %p203, %s200, 7
      %s205 = smul.addr %s202, 8
      %s206 = sadd.s32 %s204, %s205
      %s207 = smul.addr %s206, 4
      %s208 = scalar_lea.vmem %s3, %s207
      %s209 = smul.u32 8, %s19
      %v210 = vld [vmem:[%s198] sm:$0xff]
      %v211 = vld [vmem:[%s198 + $0x8] sm:$0xff]
      %v212 = vld [vmem:[%s198 + $0x10] sm:$0xff]
      %v213 = vld [vmem:[%s198 + $0x18] sm:$0xff]
      %v214 = vld [vmem:[%s198 + $0x20] sm:$0xff]
      %v215 = vld [vmem:[%s198 + $0x28] sm:$0xff]
      %v216 = vld [vmem:[%s198 + $0x30] sm:$0xff]
      %v217 = vld [vmem:[%s198 + $0x38] sm:$0xff]
      %v218 = vld [vmem:[%s1] sm:$0xf]
      %v219 = vld [vmem:[%s2] sm:$0xf]
      %221 = vset.pattern.permute.xlu0 0
      %222 = vperm.xlu0 %221, %v219
      %v223 = vpop.permute.xlu0 %222
      %vm225 = vcmask 64512
      %v227 = vsel %vm225, %v218, 0
      %229 = vmatprep.subr.mxu0 %v211
      %230 = vmatpush1.msra.mxu0 %v210
      %231 = vmatprep.subr.mxu0 0.0
      %232 = vmatpush1.msra.mxu0 0.0
      %233 = vmatprep.subr.mxu0 0.0
      %234 = vmatpush1.msra.mxu0 0.0
      %235 = vmatprep.subr.mxu0 0.0
      %236 = vmatpush1.msra.mxu0 0.0
      %237 = vmatprep.subr.mxu0 0.0
      %238 = vmatpush1.msra.mxu0 0.0
      %239 = vmatprep.subr.mxu0 0.0
      %240 = vmatpush1.msra.mxu0 0.0
      %241 = vmatprep.subr.mxu0 0.0
      %242 = vmatpush1.msra.mxu0 0.0
      %243 = vmatprep.subr.mxu0 0.0
      %244 = vmatpush1.msra.mxu0 0.0
      %245 = vmatprep.subr.mxu0 0.0
      %246 = vmatpush1.msra.mxu0 0.0
      %247 = vmatprep.subr.mxu0 0.0
      %248 = vmatpush1.msra.mxu0 0.0
      %249 = vmatprep.subr.mxu0 0.0
      %250 = vmatpush1.msra.mxu0 0.0
      %251 = vmatprep.subr.mxu0 0.0
      %252 = vmatpush1.msra.mxu0 0.0
      %253 = vmatprep.subr.mxu0 0.0
      %254 = vmatpush1.msra.mxu0 0.0
      %255 = vmatprep.subr.mxu0 0.0
      %256 = vmatpush1.msra.mxu0 0.0
      %257 = vmatprep.subr.mxu0 0.0
      %258 = vmatpush1.msra.mxu0 0.0
      %259 = vmatprep.subr.mxu0 0.0
      %260 = vmatpush1.msra.mxu0 0.0
      %261 = vmatprep.subr.mxu0 0.0
      %262 = vmatpush1.msra.mxu0 0.0
      %263 = vmatprep.subr.mxu0 0.0
      %264 = vmatpush1.msra.mxu0 0.0
      %265 = vmatprep.subr.mxu0 0.0
      %266 = vmatpush1.msra.mxu0 0.0
      %267 = vmatprep.subr.mxu0 0.0
      %268 = vmatpush1.msra.mxu0 0.0
      %269 = vmatprep.subr.mxu0 0.0
      %270 = vmatpush1.msra.mxu0 0.0
      %271 = vmatprep.subr.mxu0 0.0
      %272 = vmatpush1.msra.mxu0 0.0
      %273 = vmatprep.subr.mxu0 0.0
      %274 = vmatpush1.msra.mxu0 0.0
      %275 = vmatprep.subr.mxu0 0.0
      %276 = vmatpush1.msra.mxu0 0.0
      %277 = vmatprep.subr.mxu0 0.0
      %278 = vmatpush1.msra.mxu0 0.0
      %279 = vmatprep.subr.mxu0 0.0
      %280 = vmatpush1.msra.mxu0 0.0
      %281 = vmatprep.subr.mxu0 0.0
      %282 = vmatpush1.msra.mxu0 0.0
      %283 = vmatprep.subr.mxu0 0.0
      %284 = vmatpush1.msra.mxu0 0.0
      %285 = vmatprep.subr.mxu0 0.0
      %286 = vmatpush1.msra.mxu0 0.0
      %287 = vmatprep.subr.mxu0 0.0
      %288 = vmatpush1.msra.mxu0 0.0
      %289 = vmatprep.subr.mxu0 0.0
      %290 = vmatpush1.msra.mxu0 0.0
      %291 = vmatprep.subr.mxu0 0.0
      %292 = vmatpush1.msra.mxu0 0.0
      %293 = vmatprep.mubr.f32.mxu0 0.0
      %294 = vmatmul.mubr.f32.gmra.mrb[0].mxu0 %v227
      %v295 = vpop.f32.mrb[0].mxu0
      %v296 = vadd.f32 %v223, %v295
      %v297 = vpop.f32.mrb[0].mxu0
      %v298 = vadd.f32 %v223, %v297
      %299 = vdwg.mxu0
      %300 = vmatprep.subr.mxu0 %v213
      %301 = vmatpush1.msra.mxu0 %v212
      %302 = vmatprep.subr.mxu0 0.0
      %303 = vmatpush1.msra.mxu0 0.0
      %304 = vmatprep.subr.mxu0 0.0
      %305 = vmatpush1.msra.mxu0 0.0
      %306 = vmatprep.subr.mxu0 0.0
      %307 = vmatpush1.msra.mxu0 0.0
      %308 = vmatprep.subr.mxu0 0.0
      %309 = vmatpush1.msra.mxu0 0.0
      %310 = vmatprep.subr.mxu0 0.0
      %311 = vmatpush1.msra.mxu0 0.0
      %312 = vmatprep.subr.mxu0 0.0
      %313 = vmatpush1.msra.mxu0 0.0
      %314 = vmatprep.subr.mxu0 0.0
      %315 = vmatpush1.msra.mxu0 0.0
      %316 = vmatprep.subr.mxu0 0.0
      %317 = vmatpush1.msra.mxu0 0.0
      %318 = vmatprep.subr.mxu0 0.0
      %319 = vmatpush1.msra.mxu0 0.0
      %320 = vmatprep.subr.mxu0 0.0
      %321 = vmatpush1.msra.mxu0 0.0
      %322 = vmatprep.subr.mxu0 0.0
      %323 = vmatpush1.msra.mxu0 0.0
      %324 = vmatprep.subr.mxu0 0.0
      %325 = vmatpush1.msra.mxu0 0.0
      %326 = vmatprep.subr.mxu0 0.0
      %327 = vmatpush1.msra.mxu0 0.0
      %328 = vmatprep.subr.mxu0 0.0
      %329 = vmatpush1.msra.mxu0 0.0
      %330 = vmatprep.subr.mxu0 0.0
      %331 = vmatpush1.msra.mxu0 0.0
      %332 = vmatprep.subr.mxu0 0.0
      %333 = vmatpush1.msra.mxu0 0.0
      %334 = vmatprep.subr.mxu0 0.0
      %335 = vmatpush1.msra.mxu0 0.0
      %336 = vmatprep.subr.mxu0 0.0
      %337 = vmatpush1.msra.mxu0 0.0
      %338 = vmatprep.subr.mxu0 0.0
      %339 = vmatpush1.msra.mxu0 0.0
      %340 = vmatprep.subr.mxu0 0.0
      %341 = vmatpush1.msra.mxu0 0.0
      %342 = vmatprep.subr.mxu0 0.0
      %343 = vmatpush1.msra.mxu0 0.0
      %344 = vmatprep.subr.mxu0 0.0
      %345 = vmatpush1.msra.mxu0 0.0
      %346 = vmatprep.subr.mxu0 0.0
      %347 = vmatpush1.msra.mxu0 0.0
      %348 = vmatprep.subr.mxu0 0.0
      %349 = vmatpush1.msra.mxu0 0.0
      %350 = vmatprep.subr.mxu0 0.0
      %351 = vmatpush1.msra.mxu0 0.0
      %352 = vmatprep.subr.mxu0 0.0
      %353 = vmatpush1.msra.mxu0 0.0
      %354 = vmatprep.subr.mxu0 0.0
      %355 = vmatpush1.msra.mxu0 0.0
      %356 = vmatprep.subr.mxu0 0.0
      %357 = vmatpush1.msra.mxu0 0.0
      %358 = vmatprep.subr.mxu0 0.0
      %359 = vmatpush1.msra.mxu0 0.0
      %360 = vmatprep.subr.mxu0 0.0
      %361 = vmatpush1.msra.mxu0 0.0
      %362 = vmatprep.subr.mxu0 0.0
      %363 = vmatpush1.msra.mxu0 0.0
      %364 = vmatprep.mubr.f32.mxu0 0.0
      %365 = vmatmul.mubr.f32.gmra.mrb[0].mxu0 %v227
      %v366 = vpop.f32.mrb[0].mxu0
      %v367 = vadd.f32 %v223, %v366
      %v368 = vpop.f32.mrb[0].mxu0
      %v369 = vadd.f32 %v223, %v368
      %370 = vdwg.mxu0
      %371 = vmatprep.subr.mxu0 %v215
      %372 = vmatpush1.msra.mxu0 %v214
      %373 = vmatprep.subr.mxu0 0.0
      %374 = vmatpush1.msra.mxu0 0.0
      %375 = vmatprep.subr.mxu0 0.0
      %376 = vmatpush1.msra.mxu0 0.0
      %377 = vmatprep.subr.mxu0 0.0
      %378 = vmatpush1.msra.mxu0 0.0
      %379 = vmatprep.subr.mxu0 0.0
      %380 = vmatpush1.msra.mxu0 0.0
      %381 = vmatprep.subr.mxu0 0.0
      %382 = vmatpush1.msra.mxu0 0.0
      %383 = vmatprep.subr.mxu0 0.0
      %384 = vmatpush1.msra.mxu0 0.0
      %385 = vmatprep.subr.mxu0 0.0
      %386 = vmatpush1.msra.mxu0 0.0
      %387 = vmatprep.subr.mxu0 0.0
      %388 = vmatpush1.msra.mxu0 0.0
      %389 = vmatprep.subr.mxu0 0.0
      %390 = vmatpush1.msra.mxu0 0.0
      %391 = vmatprep.subr.mxu0 0.0
      %392 = vmatpush1.msra.mxu0 0.0
      %393 = vmatprep.subr.mxu0 0.0
      %394 = vmatpush1.msra.mxu0 0.0
      %395 = vmatprep.subr.mxu0 0.0
      %396 = vmatpush1.msra.mxu0 0.0
      %397 = vmatprep.subr.mxu0 0.0
      %398 = vmatpush1.msra.mxu0 0.0
      %399 = vmatprep.subr.mxu0 0.0
      %400 = vmatpush1.msra.mxu0 0.0
      %401 = vmatprep.subr.mxu0 0.0
      %402 = vmatpush1.msra.mxu0 0.0
      %403 = vmatprep.subr.mxu0 0.0
      %404 = vmatpush1.msra.mxu0 0.0
      %405 = vmatprep.subr.mxu0 0.0
      %406 = vmatpush1.msra.mxu0 0.0
      %407 = vmatprep.subr.mxu0 0.0
      %408 = vmatpush1.msra.mxu0 0.0
      %409 = vmatprep.subr.mxu0 0.0
      %410 = vmatpush1.msra.mxu0 0.0
      %411 = vmatprep.subr.mxu0 0.0
      %412 = vmatpush1.msra.mxu0 0.0
      %413 = vmatprep.subr.mxu0 0.0
      %414 = vmatpush1.msra.mxu0 0.0
      %415 = vmatprep.subr.mxu0 0.0
      %416 = vmatpush1.msra.mxu0 0.0
      %417 = vmatprep.subr.mxu0 0.0
      %418 = vmatpush1.msra.mxu0 0.0
      %419 = vmatprep.subr.mxu0 0.0
      %420 = vmatpush1.msra.mxu0 0.0
      %421 = vmatprep.subr.mxu0 0.0
      %422 = vmatpush1.msra.mxu0 0.0
      %423 = vmatprep.subr.mxu0 0.0
      %424 = vmatpush1.msra.mxu0 0.0
      %425 = vmatprep.subr.mxu0 0.0
      %426 = vmatpush1.msra.mxu0 0.0
      %427 = vmatprep.subr.mxu0 0.0
      %428 = vmatpush1.msra.mxu0 0.0
      %429 = vmatprep.subr.mxu0 0.0
      %430 = vmatpush1.msra.mxu0 0.0
      %431 = vmatprep.subr.mxu0 0.0
      %432 = vmatpush1.msra.mxu0 0.0
      %433 = vmatprep.subr.mxu0 0.0
      %434 = vmatpush1.msra.mxu0 0.0
      %435 = vmatprep.mubr.f32.mxu0 0.0
      %436 = vmatmul.mubr.f32.gmra.mrb[0].mxu0 %v227
      %v437 = vpop.f32.mrb[0].mxu0
      %v438 = vadd.f32 %v223, %v437
      %v439 = vpop.f32.mrb[0].mxu0
      %v440 = vadd.f32 %v223, %v439
      %441 = vdwg.mxu0
      %442 = vmatprep.subr.mxu0 %v217
      %443 = vmatpush1.msra.mxu0 %v216
      %444 = vmatprep.subr.mxu0 0.0
      %445 = vmatpush1.msra.mxu0 0.0
      %446 = vmatprep.subr.mxu0 0.0
      %447 = vmatpush1.msra.mxu0 0.0
      %448 = vmatprep.subr.mxu0 0.0
      %449 = vmatpush1.msra.mxu0 0.0
      %450 = vmatprep.subr.mxu0 0.0
      %451 = vmatpush1.msra.mxu0 0.0
      %452 = vmatprep.subr.mxu0 0.0
      %453 = vmatpush1.msra.mxu0 0.0
      %454 = vmatprep.subr.mxu0 0.0
      %455 = vmatpush1.msra.mxu0 0.0
      %456 = vmatprep.subr.mxu0 0.0
      %457 = vmatpush1.msra.mxu0 0.0
      %458 = vmatprep.subr.mxu0 0.0
      %459 = vmatpush1.msra.mxu0 0.0
      %460 = vmatprep.subr.mxu0 0.0
      %461 = vmatpush1.msra.mxu0 0.0
      %462 = vmatprep.subr.mxu0 0.0
      %463 = vmatpush1.msra.mxu0 0.0
      %464 = vmatprep.subr.mxu0 0.0
      %465 = vmatpush1.msra.mxu0 0.0
      %466 = vmatprep.subr.mxu0 0.0
      %467 = vmatpush1.msra.mxu0 0.0
      %468 = vmatprep.subr.mxu0 0.0
      %469 = vmatpush1.msra.mxu0 0.0
      %470 = vmatprep.subr.mxu0 0.0
      %471 = vmatpush1.msra.mxu0 0.0
      %472 = vmatprep.subr.mxu0 0.0
      %473 = vmatpush1.msra.mxu0 0.0
      %474 = vmatprep.subr.mxu0 0.0
      %475 = vmatpush1.msra.mxu0 0.0
      %476 = vmatprep.subr.mxu0 0.0
      %477 = vmatpush1.msra.mxu0 0.0
      %478 = vmatprep.subr.mxu0 0.0
      %479 = vmatpush1.msra.mxu0 0.0
      %480 = vmatprep.subr.mxu0 0.0
      %481 = vmatpush1.msra.mxu0 0.0
      %482 = vmatprep.subr.mxu0 0.0
      %483 = vmatpush1.msra.mxu0 0.0
      %484 = vmatprep.subr.mxu0 0.0
      %485 = vmatpush1.msra.mxu0 0.0
      %486 = vmatprep.subr.mxu0 0.0
      %487 = vmatpush1.msra.mxu0 0.0
      %488 = vmatprep.subr.mxu0 0.0
      %489 = vmatpush1.msra.mxu0 0.0
      %490 = vmatprep.subr.mxu0 0.0
      %491 = vmatpush1.msra.mxu0 0.0
      %492 = vmatprep.subr.mxu0 0.0
      %493 = vmatpush1.msra.mxu0 0.0
      %494 = vmatprep.subr.mxu0 0.0
      %495 = vmatpush1.msra.mxu0 0.0
      %496 = vmatprep.subr.mxu0 0.0
      %497 = vmatpush1.msra.mxu0 0.0
      %498 = vmatprep.subr.mxu0 0.0
      %499 = vmatpush1.msra.mxu0 0.0
      %500 = vmatprep.subr.mxu0 0.0
      %501 = vmatpush1.msra.mxu0 0.0
      %502 = vmatprep.subr.mxu0 0.0
      %503 = vmatpush1.msra.mxu0 0.0
      %504 = vmatprep.subr.mxu0 0.0
      %505 = vmatpush1.msra.mxu0 0.0
      %506 = vmatprep.mubr.f32.mxu0 0.0
      %507 = vmatmul.mubr.f32.gmra.mrb[0].mxu0 %v227
      %v508 = vpop.f32.mrb[0].mxu0
      %v509 = vadd.f32 %v223, %v508
      %v510 = vpop.f32.mrb[0].mxu0
      %v511 = vadd.f32 %v223, %v510
      %512 = vdwg.mxu0
      %v521 = vcombine.low %v296, %v298
      %v522 = vcombine.low %v367, %v369
      %v523 = vcombine.low %v438, %v440
      %v524 = vcombine.low %v509, %v511
      %529 = vst [vmem:[%s208] sm:$0xff] %v521
      %530 = vst [vmem:[%s208 + $0x8] sm:$0xff] %v522
      %531 = vst [vmem:[%s208 + $0x10] sm:$0xff] %v523
      %532 = vst [vmem:[%s208 + $0x18] sm:$0xff] %v524
      %s533 = smul.u32 8, %s19
      %p534 = scmp.lt.s32.totalorder %s18, 1
      %s535 = scalar_select %p534, %s18, 1
      %p536 = scmp.lt.s32.totalorder %s533, 7
      %s537 = scalar_select %p536, %s533, 7
      %s538 = smul.addr %s535, 8
      %s539 = sadd.s32 %s537, %s538
      %s540 = smul.addr %s539, 4
      %s541 = scalar_lea.vmem %s3, %s540
      // Predicated region
      $region33: #{esa_forward.5} parent=31 // pred_check
        %p542 = pneg %p116
      $region34: #{esa_forward.5} parent=31 // pred_check_branch
        %544 = sbr.rel (%p542) target = $region36
      $region35: #{esa_forward.5} parent=31 // pred_region
        %s545 = smul.u32 8, %s19
      $region36: #{esa_forward.5} parent=31 // pred_fallthru
        _
    $region32: #{esa_forward.5} parent=5 // pred_fallthru
      _
    %p546 = scmp.le.s32.totalorder 2, %s9
    // Predicated region
    $region37: #{esa_forward.5} parent=5 // pred_check
      %p547 = pneg %p546
    $region38: #{esa_forward.5} parent=5 // pred_check_branch
      %549 = sbr.rel (%p547) target = $region40
    $region39: #{esa_forward.5} parent=5 // pred_region
      %s550 = ssub.s32 %s9, 2
      // Predicated region
      $region41: #{esa_forward.5} parent=39 // pred_check
        %p551 = pneg %p122
      $region42: #{esa_forward.5} parent=39 // pred_check_branch
        %553 = sbr.rel (%p551) target = $region44
      $region43: #{esa_forward.5} parent=39 // pred_region
        %s554 = smul.u32 8, %s21
        %p555 = scmp.lt.s32.totalorder %s20, 1
        %s556 = scalar_select %p555, %s20, 1
        %p557 = scmp.lt.s32.totalorder %s554, 7
        %s558 = scalar_select %p557, %s554, 7
        %s559 = smul.addr %s556, 8
        %s560 = sadd.s32 %s558, %s559
        %s561 = smul.addr %s560, 4
        %s562 = scalar_lea.vmem %s3, %s561
      $region44: #{esa_forward.5} parent=39 // pred_fallthru
        _
    $region40: #{esa_forward.5} parent=5 // pred_fallthru
      _
  $region6: #{esa_forward.5} parent=0 // loop_footer
    %s13 = sadd.s32 1, %s9
  $region7: #{esa_forward.5} parent=0 // loop_footer_branch
    %8 = sbr.rel target = $region3
  $region8: #{esa_forward.5} parent=0 // loop_exit
    _

// kernel: esa_forward.6
$region0: #{esa_forward.6}
  #allocation0 [shape = 'u32[]', space=smem, size = 0x4, offset = 0x4, fixed_abs, tag = 'smem constant byte address 0x4 - core index']
  #allocation1 [shape = 'u32[144,128]{1,0:T(1,128)}', space=vmem, size = 0x12000, scoped, tag = 'internal scratch']
  %s0 = inlined_call_operand.vmem [shape: f32[2,4,16,16], index: 0, kind: input, shape index: {}]
  %s1 = inlined_call_operand.vmem [shape: f32[2,4,16,16], index: 1, kind: input, shape index: {}]
  %s2 = inlined_call_operand.vmem [shape: f32[2,4,16,16], index: 2, kind: input, shape index: {}]
  %s3 = inlined_call_operand.vmem [shape: f32[2,4,16,16], index: 3, kind: input, shape index: {}]
  %s4 = inlined_call_operand.vmem [shape: f32[144], index: 4, kind: input, shape index: {}]
  %s5 = inlined_call_operand.vmem [shape: f32[4], index: 5, kind: input, shape index: {}]
  %s6 = inlined_call_operand.vmem [shape: f32[2,4,15,15], index: 6, kind: output, shape index: {}]
  %s7 = sld [smem:[#allocation0]]
  $region65: #{esa_forward.6} parent=0
    _
  %s9 = ssub.s32 1, %s7
  %s10 = scalar_select 0, %s9, %s7
  $region1: #{esa_forward.6} parent=0
    #allocation2 [shape = 'u8[1024]{0}', space=smem, size = 0x400, scoped, tag = 'input window, operand 4, single buffered']
    #allocation3 [shape = 's32[2]{0}', space=sflag, size = 0x8, scoped, tag = 'scoped memory for esa_forward.6']
    #allocation4 [shape = 'u8[512]{0}', space=smem, size = 0x200, scoped, tag = 'input window, operand 5, single buffered']
    #allocation5 [shape = 's32[1]{0}', space=sflag, size = 0x4, scoped, tag = 'scoped memory for esa_forward.6']
    %11 = vsyncpa [#allocation3], 0
    %12 = vsyncpa [#allocation5], 0
    loop: start=0, step=1, limit=4
    $region2: #{esa_forward.6} parent=1 // loop_pre_header
      _
    $region3: #{esa_forward.6} parent=1 // loop_header
      %s14 = sphi 0, %s18
      %p15 = scmp.ge.s32.totalorder %s14, 4
      %s21 = sphi 0, %s33
      %s22 = sphi 0, %s29
      %s23 = sphi 0, %s21
      %s24 = sphi 0, %s22
      %s25 = sphi 0, %s23
      %s26 = sphi 0, %s24
      %s38 = sphi 0, %s40
      %s41 = sphi 0, %s38
      %s42 = sphi 0, %s41
      %s58 = sphi 0, %s42
      %s66 = sphi 0, %s68
      %s69 = sphi 0, %s66
      %s70 = sphi 0, %s69
      %s86 = sphi 0, %s70
      %s94 = sphi 0, %s96
      %s97 = sphi 0, %s94
      %s98 = sphi 0, %s97
      %s114 = sphi 0, %s98
      %s122 = sphi 0, %s124
      %s125 = sphi 0, %s122
      %s126 = sphi 0, %s125
      %s142 = sphi 0, %s126
      %s146 = sphi 0, %s146
      %s148 = sphi 0, %s146
      %s149 = sphi 0, %s148
      %s163 = sphi 0, %s149
      %s167 = sphi 0, %s167
      %s169 = sphi 0, %s167
      %s170 = sphi 0, %s169
      %s184 = sphi 0, %s170
      %s192 = sphi 0, %s194
      %s195 = sphi 0, %s192
      %s196 = sphi 0, %s195
      %s212 = sphi 0, %s196
    $region4: #{esa_forward.6} parent=1 // loop_header_branch
      %17 = sbr.rel (%p15) target = $region8
    $region5: #{esa_forward.6} parent=1 // loop_body
      %s19 = ssub.s32 %s14, 1
      %s20 = ssub.s32 %s14, 2
      %s27 = sadd.s32 1, %s22
      %p28 = scmp.ge.s32.totalorder %s27, 1
      %s29 = scalar_select %p28, 0, %s27
      %s30 = sadd.s32 1, %s21
      %s31 = scalar_select %p28, %s30, %s21
      %p32 = scmp.ge.s32.totalorder %s31, 2
      %s33 = scalar_select %p32, 0, %s31
      %s34 = sadd.s32 %s21, %s22
      %s35 = sadd.s32 %s33, %s29
      %s36 = ssub.s32 %s34, %s35
      %p37 = scmp.eq.s32.totalorder %s36, 0
      %s39 = sadd.s32 %s38, 1
      %s40 = scalar_select %p37, %s38, %s39
      %p43 = pneg %p37
      %p44 = scmp.eq.s32.totalorder %s14, 1
      %p45 = por %p43, %p44
      %p46 = scmp.ne.s32.totalorder %s38, %s41
      %p47 = scmp.eq.s32.totalorder %s14, 0
      %p48 = por %p46, %p47
      %p49 = scmp.ne.s32.totalorder %s38, %s41
      %p50 = scmp.eq.s32.totalorder %s19, 1
      %p51 = por %p49, %p50
      %p52 = scmp.ne.s32.totalorder %s41, %s42
      %p53 = scmp.eq.s32.totalorder %s19, 0
      %p54 = por %p52, %p53
      %p55 = scmp.ne.s32.totalorder %s41, %s42
      %p56 = scmp.eq.s32.totalorder %s20, 1
      %p57 = por %p55, %p56
      %p59 = scmp.ne.s32.totalorder %s42, %s58
      %p60 = scmp.eq.s32.totalorder %s20, 0
      %p61 = por %p59, %p60
      %s62 = sadd.s32 %s21, %s22
      %s63 = sadd.s32 %s33, %s29
      %s64 = ssub.s32 %s62, %s63
      %p65 = scmp.eq.s32.totalorder %s64, 0
      %s67 = sadd.s32 %s66, 1
      %s68 = scalar_select %p65, %s66, %s67
      %p71 = pneg %p65
      %p72 = scmp.eq.s32.totalorder %s14, 1
      %p73 = por %p71, %p72
      %p74 = scmp.ne.s32.totalorder %s66, %s69
      %p75 = scmp.eq.s32.totalorder %s14, 0
      %p76 = por %p74, %p75
      %p77 = scmp.ne.s32.totalorder %s66, %s69
      %p78 = scmp.eq.s32.totalorder %s19, 1
      %p79 = por %p77, %p78
      %p80 = scmp.ne.s32.totalorder %s69, %s70
      %p81 = scmp.eq.s32.totalorder %s19, 0
      %p82 = por %p80, %p81
      %p83 = scmp.ne.s32.totalorder %s69, %s70
      %p84 = scmp.eq.s32.totalorder %s20, 1
      %p85 = por %p83, %p84
      %p87 = scmp.ne.s32.totalorder %s70, %s86
      %p88 = scmp.eq.s32.totalorder %s20, 0
      %p89 = por %p87, %p88
      %s90 = sadd.s32 %s21, %s22
      %s91 = sadd.s32 %s33, %s29
      %s92 = ssub.s32 %s90, %s91
      %p93 = scmp.eq.s32.totalorder %s92, 0
      %s95 = sadd.s32 %s94, 1
      %s96 = scalar_select %p93, %s94, %s95
      %p99 = pneg %p93
      %p100 = scmp.eq.s32.totalorder %s14, 1
      %p101 = por %p99, %p100
      %p102 = scmp.ne.s32.totalorder %s94, %s97
      %p103 = scmp.eq.s32.totalorder %s14, 0
      %p104 = por %p102, %p103
      %p105 = scmp.ne.s32.totalorder %s94, %s97
      %p106 = scmp.eq.s32.totalorder %s19, 1
      %p107 = por %p105, %p106
      %p108 = scmp.ne.s32.totalorder %s97, %s98
      %p109 = scmp.eq.s32.totalorder %s19, 0
      %p110 = por %p108, %p109
      %p111 = scmp.ne.s32.totalorder %s97, %s98
      %p112 = scmp.eq.s32.totalorder %s20, 1
      %p113 = por %p111, %p112
      %p115 = scmp.ne.s32.totalorder %s98, %s114
      %p116 = scmp.eq.s32.totalorder %s20, 0
      %p117 = por %p115, %p116
      %s118 = sadd.s32 %s21, %s22
      %s119 = sadd.s32 %s33, %s29
      %s120 = ssub.s32 %s118, %s119
      %p121 = scmp.eq.s32.totalorder %s120, 0
      %s123 = sadd.s32 %s122, 1
      %s124 = scalar_select %p121, %s122, %s123
      %p127 = pneg %p121
      %p128 = scmp.eq.s32.totalorder %s14, 1
      %p129 = por %p127, %p128
      %p130 = scmp.ne.s32.totalorder %s122, %s125
      %p131 = scmp.eq.s32.totalorder %s14, 0
      %p132 = por %p130, %p131
      %p133 = scmp.ne.s32.totalorder %s122, %s125
      %p134 = scmp.eq.s32.totalorder %s19, 1
      %p135 = por %p133, %p134
      %p136 = scmp.ne.s32.totalorder %s125, %s126
      %p137 = scmp.eq.s32.totalorder %s19, 0
      %p138 = por %p136, %p137
      %p139 = scmp.ne.s32.totalorder %s125, %s126
      %p140 = scmp.eq.s32.totalorder %s20, 1
      %p141 = por %p139, %p140
      %p143 = scmp.ne.s32.totalorder %s126, %s142
      %p144 = scmp.eq.s32.totalorder %s20, 0
      %p145 = por %p143, %p144
      %s147 = sadd.s32 %s146, 1
      %p150 = scmp.eq.s32.totalorder %s14, 1
      %p151 = scmp.ne.s32.totalorder %s146, %s148
      %p152 = scmp.eq.s32.totalorder %s14, 0
      %p153 = por %p151, %p152
      %p154 = scmp.ne.s32.totalorder %s146, %s148
      %p155 = scmp.eq.s32.totalorder %s19, 1
      %p156 = por %p154, %p155
      %p157 = scmp.ne.s32.totalorder %s148, %s149
      %p158 = scmp.eq.s32.totalorder %s19, 0
      %p159 = por %p157, %p158
      %p160 = scmp.ne.s32.totalorder %s148, %s149
      %p161 = scmp.eq.s32.totalorder %s20, 1
      %p162 = por %p160, %p161
      %p164 = scmp.ne.s32.totalorder %s149, %s163
      %p165 = scmp.eq.s32.totalorder %s20, 0
      %p166 = por %p164, %p165
      %s168 = sadd.s32 %s167, 1
      %p171 = scmp.eq.s32.totalorder %s14, 1
      %p172 = scmp.ne.s32.totalorder %s167, %s169
      %p173 = scmp.eq.s32.totalorder %s14, 0
      %p174 = por %p172, %p173
      %p175 = scmp.ne.s32.totalorder %s167, %s169
      %p176 = scmp.eq.s32.totalorder %s19, 1
      %p177 = por %p175, %p176
      %p178 = scmp.ne.s32.totalorder %s169, %s170
      %p179 = scmp.eq.s32.totalorder %s19, 0
      %p180 = por %p178, %p179
      %p181 = scmp.ne.s32.totalorder %s169, %s170
      %p182 = scmp.eq.s32.totalorder %s20, 1
      %p183 = por %p181, %p182
      %p185 = scmp.ne.s32.totalorder %s170, %s184
      %p186 = scmp.eq.s32.totalorder %s20, 0
      %p187 = por %p185, %p186
      %s188 = ssub.s32 %s21, %s33
      %s189 = ssub.s32 %s22, %s29
      %s190 = sor.u32 %s188, %s189
      %p191 = scmp.eq.s32.totalorder %s190, 0
      %s193 = sadd.s32 %s192, 1
      %s194 = scalar_select %p191, %s192, %s193
      %p197 = pneg %p191
      %p198 = scmp.eq.s32.totalorder %s14, 1
      %p199 = por %p197, %p198
      %p200 = scmp.ne.s32.totalorder %s192, %s195
      %p201 = scmp.eq.s32.totalorder %s14, 0
      %p202 = por %p200, %p201
      %p203 = scmp.ne.s32.totalorder %s192, %s195
      %p204 = scmp.eq.s32.totalorder %s19, 1
      %p205 = por %p203, %p204
      %p206 = scmp.ne.s32.totalorder %s195, %s196
      %p207 = scmp.eq.s32.totalorder %s19, 0
      %p208 = por %p206, %p207
      %p209 = scmp.ne.s32.totalorder %s195, %s196
      %p210 = scmp.eq.s32.totalorder %s20, 1
      %p211 = por %p209, %p210
      %p213 = scmp.ne.s32.totalorder %s196, %s212
      %p214 = scmp.eq.s32.totalorder %s20, 0
      %p215 = por %p213, %p214
      %p216 = scmp.le.s32.totalorder 1, %s14
      %p217 = scmp.lt.s32.totalorder %s14, 3
      %p218 = pnand %p216, %p217
      %p219 = pneg %p218
      // Predicated region
      $region9: #{esa_forward.6} parent=5 // pred_check
        _
      $region10: #{esa_forward.6} parent=5 // pred_check_branch
        %221 = sbr.rel (%p218) target = $region12
      $region11: #{esa_forward.6} parent=5 // pred_region
        %s222 = ssub.s32 %s14, 1
        // Predicated region
        $region13: #{esa_forward.6} parent=11 // pred_check
          %p223 = pneg %p159
        $region14: #{esa_forward.6} parent=11 // pred_check_branch
          %225 = sbr.rel (%p223) target = $region16
        $region15: #{esa_forward.6} parent=11 // pred_region
          %s227 = ssub.s32 32, 32
          %228 = vsyncadd [#allocation3], %s227
          %s230 = sshll.u32 %s4, 4
          %s231 = int_to_ptr.vmem [resolvable:$true] %s230
          %233 = dma.vmem_to_smem %s231, 32, [#allocation2], [#allocation3]
        $region16: #{esa_forward.6} parent=11 // pred_fallthru
          _
        // Predicated region
        $region17: #{esa_forward.6} parent=11 // pred_check
          %p234 = pneg %p180
        $region18: #{esa_forward.6} parent=11 // pred_check_branch
          %236 = sbr.rel (%p234) target = $region20
        $region19: #{esa_forward.6} parent=11 // pred_region
          %s238 = ssub.s32 16, 16
          %239 = vsyncadd [#allocation5], %s238
          %s241 = sshll.u32 %s5, 4
          %s242 = int_to_ptr.vmem [resolvable:$true] %s241
          %244 = dma.vmem_to_smem %s242, 16, [#allocation4], [#allocation5]
        $region20: #{esa_forward.6} parent=11 // pred_fallthru
          _
      $region12: #{esa_forward.6} parent=5 // pred_fallthru
        _
      %p245 = scmp.lt.s32.totalorder %s14, 2
      // Predicated region
      $region21: #{esa_forward.6} parent=5 // pred_check
        %p246 = pneg %p245
      $region22: #{esa_forward.6} parent=5 // pred_check_branch
        %248 = sbr.rel (%p246) target = $region24
      $region23: #{esa_forward.6} parent=5 // pred_region
        // Predicated region
        $region25: #{esa_forward.6} parent=23 // pred_check
          %p249 = pneg %p48
        $region26: #{esa_forward.6} parent=23 // pred_check_branch
          %251 = sbr.rel (%p249) target = $region28
        $region27: #{esa_forward.6} parent=23 // pred_region
          %s252 = sadd.s32 %s21, %s22
          %p253 = scmp.lt.s32.totalorder %s252, 1
          %s254 = scalar_select %p253, %s252, 1
          %s255 = smul.addr %s254, 8
          %s256 = smul.addr %s255, 8
          %s257 = scalar_lea.vmem %s0, %s256
          %s258 = sadd.s32 %s21, %s22
        $region28: #{esa_forward.6} parent=23 // pred_fallthru
          _
        // Predicated region
        $region29: #{esa_forward.6} parent=23 // pred_check
          %p259 = pneg %p76
        $region30: #{esa_forward.6} parent=23 // pred_check_branch
          %261 = sbr.rel (%p259) target = $region32
        $region31: #{esa_forward.6} parent=23 // pred_region
          %s262 = sadd.s32 %s21, %s22
          %p263 = scmp.lt.s32.totalorder %s262, 1
          %s264 = scalar_select %p263, %s262, 1
          %s265 = smul.addr %s264, 8
          %s266 = smul.addr %s265, 8
          %s267 = scalar_lea.vmem %s1, %s266
          %s268 = sadd.s32 %s21, %s22
        $region32: #{esa_forward.6} parent=23 // pred_fallthru
          _
        // Predicated region
        $region33: #{esa_forward.6} parent=23 // pred_check
          %p269 = pneg %p104
        $region34: #{esa_forward.6} parent=23 // pred_check_branch
          %271 = sbr.rel (%p269) target = $region36
        $region35: #{esa_forward.6} parent=23 // pred_region
          %s272 = sadd.s32 %s21, %s22
          %p273 = scmp.lt.s32.totalorder %s272, 1
          %s274 = scalar_select %p273, %s272, 1
          %s275 = smul.addr %s274, 8
          %s276 = smul.addr %s275, 8
          %s277 = scalar_lea.vmem %s2, %s276
          %s278 = sadd.s32 %s21, %s22
        $region36: #{esa_forward.6} parent=23 // pred_fallthru
          _
        // Predicated region
        $region37: #{esa_forward.6} parent=23 // pred_check
          %p279 = pneg %p132
        $region38: #{esa_forward.6} parent=23 // pred_check_branch
          %281 = sbr.rel (%p279) target = $region40
        $region39: #{esa_forward.6} parent=23 // pred_region
          %s282 = sadd.s32 %s21, %s22
          %p283 = scmp.lt.s32.totalorder %s282, 1
          %s284 = scalar_select %p283, %s282, 1
          %s285 = smul.addr %s284, 8
          %s286 = smul.addr %s285, 8
          %s287 = scalar_lea.vmem %s3, %s286
          %s288 = sadd.s32 %s21, %s22
        $region40: #{esa_forward.6} parent=23 // pred_fallthru
          _
      $region24: #{esa_forward.6} parent=5 // pred_fallthru
        _
      %p289 = scmp.le.s32.totalorder 1, %s14
      %p290 = scmp.lt.s32.totalorder %s14, 3
      %p291 = pnand %p289, %p290
      %p292 = pneg %p291
      // Predicated region
      $region41: #{esa_forward.6} parent=5 // pred_check
        _
      $region42: #{esa_forward.6} parent=5 // pred_check_branch
        %294 = sbr.rel (%p291) target = $region44
      $region43: #{esa_forward.6} parent=5 // pred_region
        %s295 = ssub.s32 %s14, 1
        // Predicated region
        $region45: #{esa_forward.6} parent=43 // pred_check
          %p296 = pneg %p159
        $region46: #{esa_forward.6} parent=43 // pred_check_branch
          %298 = sbr.rel (%p296) target = $region48
        $region47: #{esa_forward.6} parent=43 // pred_region
          %299 = dma.done [#allocation3], 32
        $region48: #{esa_forward.6} parent=43 // pred_fallthru
          _
        // Predicated region
        $region49: #{esa_forward.6} parent=43 // pred_check
          %p300 = pneg %p180
        $region50: #{esa_forward.6} parent=43 // pred_check_branch
          %302 = sbr.rel (%p300) target = $region52
        $region51: #{esa_forward.6} parent=43 // pred_region
          %303 = dma.done [#allocation5], 16
        $region52: #{esa_forward.6} parent=43 // pred_fallthru
          _
        %304 = sfence
        %s305 = sadd.s32 %s23, %s24
        %p306 = scmp.lt.s32.totalorder %s305, 1
        %s307 = scalar_select %p306, %s305, 1
        %s308 = smul.addr %s307, 8
        %s309 = smul.addr %s308, 8
        %s310 = scalar_lea.vmem %s0, %s309
        %p311 = pneg %p54
        %p312 = pneg %p51
        %s313 = sadd.s32 %s23, %s24
        %p314 = scmp.lt.s32.totalorder %s313, 1
        %s315 = scalar_select %p314, %s313, 1
        %s316 = smul.addr %s315, 8
        %s317 = smul.addr %s316, 8
        %s318 = scalar_lea.vmem %s1, %s317
        %p319 = pneg %p82
        %p320 = pneg %p79
        %s321 = sadd.s32 %s23, %s24
        %p322 = scmp.lt.s32.totalorder %s321, 1
        %s323 = scalar_select %p322, %s321, 1
        %s324 = smul.addr %s323, 8
        %s325 = smul.addr %s324, 8
        %s326 = scalar_lea.vmem %s2, %s325
        %p327 = pneg %p110
        %p328 = pneg %p107
        %s329 = sadd.s32 %s23, %s24
        %p330 = scmp.lt.s32.totalorder %s329, 1
        %s331 = scalar_select %p330, %s329, 1
        %s332 = smul.addr %s331, 8
        %s333 = smul.addr %s332, 8
        %s334 = scalar_lea.vmem %s3, %s333
        %p335 = pneg %p138
        %p336 = pneg %p135
        %p337 = pneg %p159
        %p338 = pneg %p156
        %p339 = pneg %p180
        %p340 = pneg %p177
        %p341 = pneg %p208
        %p342 = pneg %p205
        %s343 = smul.u32 2, %s24
        %p344 = scmp.lt.s32.totalorder %s23, 1
        %s345 = scalar_select %p344, %s23, 1
        %p346 = scmp.lt.s32.totalorder %s343, 1
        %s347 = scalar_select %p346, %s343, 1
        %s348 = smul.addr %s345, 8
        %s349 = sadd.s32 %s347, %s348
        %s350 = smul.addr %s349, 8
        %s351 = scalar_lea.vmem %s6, %s350
        %s352 = sadd.s32 %s23, %s24
        %p353 = scmp.lt.s32.totalorder %s352, 1
        %s354 = scalar_select %p353, %s352, 1
        %s355 = smul.addr %s354, 8
        %s356 = smul.addr %s355, 8
        %s357 = scalar_lea.vmem %s0, %s356
        %s358 = sadd.s32 %s23, %s24
        %s359 = sadd.s32 %s23, %s24
        %p360 = scmp.lt.s32.totalorder %s359, 1
        %s361 = scalar_select %p360, %s359, 1
        %s362 = smul.addr %s361, 8
        %s363 = smul.addr %s362, 8
        %s364 = scalar_lea.vmem %s1, %s363
        %s365 = sadd.s32 %s23, %s24
        %s366 = sadd.s32 %s23, %s24
        %p367 = scmp.lt.s32.totalorder %s366, 1
        %s368 = scalar_select %p367, %s366, 1
        %s369 = smul.addr %s368, 8
        %s370 = smul.addr %s369, 8
        %s371 = scalar_lea.vmem %s2, %s370
        %s372 = sadd.s32 %s23, %s24
        %s373 = sadd.s32 %s23, %s24
        %p374 = scmp.lt.s32.totalorder %s373, 1
        %s375 = scalar_select %p374, %s373, 1
        %s376 = smul.addr %s375, 8
        %s377 = smul.addr %s376, 8
        %s378 = scalar_lea.vmem %s3, %s377
        %s379 = sadd.s32 %s23, %s24
        %s380 = smul.u32 2, %s24
        %p381 = scmp.lt.s32.totalorder %s23, 1
        %s382 = scalar_select %p381, %s23, 1
        %p383 = scmp.lt.s32.totalorder %s380, 1
        %s384 = scalar_select %p383, %s380, 1
        %s385 = smul.addr %s382, 8
        %s386 = sadd.s32 %s384, %s385
        %s387 = smul.addr %s386, 8
        %s388 = scalar_lea.vmem %s6, %s387
        %s389 = smul.u32 2, %s24
        %s390 = sld [smem:[#allocation4]]
        %v391 = vstv %s390
        %v392 = vadd.f32 %v391, 0.0
        %s393 = sld [smem:[#allocation4 + $0x1]]
        %v394 = vstv %s393
        %v395 = vadd.f32 %v394, 0.0
        %s396 = sld [smem:[#allocation4 + $0x2]]
        %v397 = vstv %s396
        %v398 = vadd.f32 %v397, 0.0
        %s399 = sld [smem:[#allocation4 + $0x3]]
        %v400 = vstv %s399
        %v401 = vadd.f32 %v400, 0.0
        %v402 = vld [vmem:[%s357] sm:$0xff]
        %v403 = vld [vmem:[%s357 + $0x8] sm:$0x7f]
        %v404 = vld [vmem:[%s357 + $0x10] sm:$0xff]
        %v405 = vld [vmem:[%s357 + $0x18] sm:$0x7f]
        %v406 = vld [vmem:[%s357 + $0x20] sm:$0xff]
        %v407 = vld [vmem:[%s357 + $0x28] sm:$0x7f]
        %v408 = vld [vmem:[%s357 + $0x30] sm:$0xff]
        %v409 = vld [vmem:[%s357 + $0x38] sm:$0x7f]
        %s410 = sld [smem:[#allocation2]]
        %v411 = vstv %s410
        %v412 = vmul.f32 %v411, %v402
        %v413 = vmul.f32 %v411, %v403
        %v414 = vadd.f32 %v392, %v412
        %v415 = vadd.f32 %v392, %v413
        %s416 = sld [smem:[#allocation2 + $0x24]]
        %v417 = vstv %s416
        %v418 = vmul.f32 %v417, %v402
        %v419 = vmul.f32 %v417, %v403
        %v420 = vadd.f32 %v395, %v418
        %v421 = vadd.f32 %v395, %v419
        %s422 = sld [smem:[#allocation2 + $0x48]]
        %v423 = vstv %s422
        %v424 = vmul.f32 %v423, %v402
        %v425 = vmul.f32 %v423, %v403
        %v426 = vadd.f32 %v398, %v424
        %v427 = vadd.f32 %v398, %v425
        %s428 = sld [smem:[#allocation2 + $0x6c]]
        %v429 = vstv %s428
        %v430 = vmul.f32 %v429, %v402
        %v431 = vmul.f32 %v429, %v403
        %v432 = vadd.f32 %v401, %v430
        %v433 = vadd.f32 %v401, %v431
        %s434 = sld [smem:[#allocation2 + $0x9]]
        %v435 = vstv %s434
        %v436 = vmul.f32 %v435, %v404
        %v437 = vmul.f32 %v435, %v405
        %v438 = vadd.f32 %v414, %v436
        %v439 = vadd.f32 %v415, %v437
        %s440 = sld [smem:[#allocation2 + $0x2d]]
        %v441 = vstv %s440
        %v442 = vmul.f32 %v441, %v404
        %v443 = vmul.f32 %v441, %v405
        %v444 = vadd.f32 %v420, %v442
        %v445 = vadd.f32 %v421, %v443
        %s446 = sld [smem:[#allocation2 + $0x51]]
        %v447 = vstv %s446
        %v448 = vmul.f32 %v447, %v404
        %v449 = vmul.f32 %v447, %v405
        %v450 = vadd.f32 %v426, %v448
        %v451 = vadd.f32 %v427, %v449
        %s452 = sld [smem:[#allocation2 + $0x75]]
        %v453 = vstv %s452
        %v454 = vmul.f32 %v453, %v404
        %v455 = vmul.f32 %v453, %v405
        %v456 = vadd.f32 %v432, %v454
        %v457 = vadd.f32 %v433, %v455
        %s458 = sld [smem:[#allocation2 + $0x12]]
        %v459 = vstv %s458
        %v460 = vmul.f32 %v459, %v406
        %v461 = vmul.f32 %v459, %v407
        %v462 = vadd.f32 %v438, %v460
        %v463 = vadd.f32 %v439, %v461
        %s464 = sld [smem:[#allocation2 + $0x36]]
        %v465 = vstv %s464
        %v466 = vmul.f32 %v465, %v406
        %v467 = vmul.f32 %v465, %v407
        %v468 = vadd.f32 %v444, %v466
        %v469 = vadd.f32 %v445, %v467
        %s470 = sld [smem:[#allocation2 + $0x5a]]
        %v471 = vstv %s470
        %v472 = vmul.f32 %v471, %v406
        %v473 = vmul.f32 %v471, %v407
        %v474 = vadd.f32 %v450, %v472
        %v475 = vadd.f32 %v451, %v473
        %s476 = sld [smem:[#allocation2 + $0x7e]]
        %v477 = vstv %s476
        %v478 = vmul.f32 %v477, %v406
        %v479 = vmul.f32 %v477, %v407
        %v480 = vadd.f32 %v456, %v478
        %v481 = vadd.f32 %v457, %v479
        %s482 = sld [smem:[#allocation2 + $0x1b]]
        %v483 = vstv %s482
        %v484 = vmul.f32 %v483, %v408
        %v485 = vmul.f32 %v483, %v409
        %v486 = vadd.f32 %v462, %v484
        %v487 = vadd.f32 %v463, %v485
        %s488 = sld [smem:[#allocation2 + $0x3f]]
        %v489 = vstv %s488
        %v490 = vmul.f32 %v489, %v408
        %v491 = vmul.f32 %v489, %v409
        %v492 = vadd.f32 %v468, %v490
        %v493 = vadd.f32 %v469, %v491
        %s494 = sld [smem:[#allocation2 + $0x63]]
        %v495 = vstv %s494
        %v496 = vmul.f32 %v495, %v408
        %v497 = vmul.f32 %v495, %v409
        %v498 = vadd.f32 %v474, %v496
        %v499 = vadd.f32 %v475, %v497
        %s500 = sld [smem:[#allocation2 + $0x87]]
        %v501 = vstv %s500
        %v502 = vmul.f32 %v501, %v408
        %v503 = vmul.f32 %v501, %v409
        %v504 = vadd.f32 %v480, %v502
        %v505 = vadd.f32 %v481, %v503
        %v506 = vld [vmem:[%s364] sm:$0xff]
        %v507 = vld [vmem:[%s364 + $0x8] sm:$0x7f]
        %v508 = vld [vmem:[%s364 + $0x10] sm:$0xff]
        %v509 = vld [vmem:[%s364 + $0x18] sm:$0x7f]
        %v510 = vld [vmem:[%s364 + $0x20] sm:$0xff]
        %v511 = vld [vmem:[%s364 + $0x28] sm:$0x7f]
        %v512 = vld [vmem:[%s364 + $0x30] sm:$0xff]
        %v513 = vld [vmem:[%s364 + $0x38] sm:$0x7f]
        %s514 = sld [smem:[#allocation2 + $0x1]]
        %v515 = vstv %s514
        %v516 = vmul.f32 %v515, %v506
        %v517 = vmul.f32 %v515, %v507
        %v518 = vadd.f32 %v486, %v516
        %v519 = vadd.f32 %v487, %v517
        %s520 = sld [smem:[#allocation2 + $0x25]]
        %v521 = vstv %s520
        %v522 = vmul.f32 %v521, %v506
        %v523 = vmul.f32 %v521, %v507
        %v524 = vadd.f32 %v492, %v522
        %v525 = vadd.f32 %v493, %v523
        %s526 = sld [smem:[#allocation2 + $0x49]]
        %v527 = vstv %s526
        %v528 = vmul.f32 %v527, %v506
        %v529 = vmul.f32 %v527, %v507
        %v530 = vadd.f32 %v498, %v528
        %v531 = vadd.f32 %v499, %v529
        %s532 = sld [smem:[#allocation2 + $0x6d]]
        %v533 = vstv %s532
        %v534 = vmul.f32 %v533, %v506
        %v535 = vmul.f32 %v533, %v507
        %v536 = vadd.f32 %v504, %v534
        %v537 = vadd.f32 %v505, %v535
        %s538 = sld [smem:[#allocation2 + $0xa]]
        %v539 = vstv %s538
        %v540 = vmul.f32 %v539, %v508
        %v541 = vmul.f32 %v539, %v509
        %v542 = vadd.f32 %v518, %v540
        %v543 = vadd.f32 %v519, %v541
        %s544 = sld [smem:[#allocation2 + $0x2e]]
        %v545 = vstv %s544
        %v546 = vmul.f32 %v545, %v508
        %v547 = vmul.f32 %v545, %v509
        %v548 = vadd.f32 %v524, %v546
        %v549 = vadd.f32 %v525, %v547
        %s550 = sld [smem:[#allocation2 + $0x52]]
        %v551 = vstv %s550
        %v552 = vmul.f32 %v551, %v508
        %v553 = vmul.f32 %v551, %v509
        %v554 = vadd.f32 %v530, %v552
        %v555 = vadd.f32 %v531, %v553
        %s556 = sld [smem:[#allocation2 + $0x76]]
        %v557 = vstv %s556
        %v558 = vmul.f32 %v557, %v508
        %v559 = vmul.f32 %v557, %v509
        %v560 = vadd.f32 %v536, %v558
        %v561 = vadd.f32 %v537, %v559
        %s562 = sld [smem:[#allocation2 + $0x13]]
        %v563 = vstv %s562
        %v564 = vmul.f32 %v563, %v510
        %v565 = vmul.f32 %v563, %v511
        %v566 = vadd.f32 %v542, %v564
        %v567 = vadd.f32 %v543, %v565
        %s568 = sld [smem:[#allocation2 + $0x37]]
        %v569 = vstv %s568
        %v570 = vmul.f32 %v569, %v510
        %v571 = vmul.f32 %v569, %v511
        %v572 = vadd.f32 %v548, %v570
        %v573 = vadd.f32 %v549, %v571
        %s574 = sld [smem:[#allocation2 + $0x5b]]
        %v575 = vstv %s574
        %v576 = vmul.f32 %v575, %v510
        %v577 = vmul.f32 %v575, %v511
        %v578 = vadd.f32 %v554, %v576
        %v579 = vadd.f32 %v555, %v577
        %s580 = sld [smem:[#allocation2 + $0x7f]]
        %v581 = vstv %s580
        %v582 = vmul.f32 %v581, %v510
        %v583 = vmul.f32 %v581, %v511
        %v584 = vadd.f32 %v560, %v582
        %v585 = vadd.f32 %v561, %v583
        %s586 = sld [smem:[#allocation2 + $0x1c]]
        %v587 = vstv %s586
        %v588 = vmul.f32 %v587, %v512
        %v589 = vmul.f32 %v587, %v513
        %v590 = vadd.f32 %v566, %v588
        %v591 = vadd.f32 %v567, %v589
        %s592 = sld [smem:[#allocation2 + $0x40]]
        %v593 = vstv %s592
        %v594 = vmul.f32 %v593, %v512
        %v595 = vmul.f32 %v593, %v513
        %v596 = vadd.f32 %v572, %v594
        %v597 = vadd.f32 %v573, %v595
        %s598 = sld [smem:[#allocation2 + $0x64]]
        %v599 = vstv %s598
        %v600 = vmul.f32 %v599, %v512
        %v601 = vmul.f32 %v599, %v513
        %v602 = vadd.f32 %v578, %v600
        %v603 = vadd.f32 %v579, %v601
        %s604 = sld [smem:[#allocation2 + $0x88]]
        %v605 = vstv %s604
        %v606 = vmul.f32 %v605, %v512
        %v607 = vmul.f32 %v605, %v513
        %v608 = vadd.f32 %v584, %v606
        %v609 = vadd.f32 %v585, %v607
        %s610 = sld [smem:[#allocation2 + $0x2]]
        %v611 = vstv %s610
        %v612 = vmul.f32 %v611, %v402
        %v613 = vmul.f32 %v611, %v403
        %616 = vrot.lane.b32.xlu0 %v612, 127
        %v617 = vpop.permute.xlu0 %616
        %618 = vrot.lane.b32.xlu0 %v613, 127
        %v619 = vpop.permute.xlu0 %618
        %v622 = vadd.f32 %v590, %v617
        %v623 = vadd.f32 %v591, %v619
        %s624 = sld [smem:[#allocation2 + $0x26]]
        %v625 = vstv %s624
        %v626 = vmul.f32 %v625, %v402
        %v627 = vmul.f32 %v625, %v403
        %630 = vrot.lane.b32.xlu0 %v626, 127
        %v631 = vpop.permute.xlu0 %630
        %632 = vrot.lane.b32.xlu0 %v627, 127
        %v633 = vpop.permute.xlu0 %632
        %v636 = vadd.f32 %v596, %v631
        %v637 = vadd.f32 %v597, %v633
        %s638 = sld [smem:[#allocation2 + $0x4a]]
        %v639 = vstv %s638
        %v640 = vmul.f32 %v639, %v402
        %v641 = vmul.f32 %v639, %v403
        %644 = vrot.lane.b32.xlu0 %v640, 127
        %v645 = vpop.permute.xlu0 %644
        %646 = vrot.lane.b32.xlu0 %v641, 127
        %v647 = vpop.permute.xlu0 %646
        %v650 = vadd.f32 %v602, %v645
        %v651 = vadd.f32 %v603, %v647
        %s652 = sld [smem:[#allocation2 + $0x6e]]
        %v653 = vstv %s652
        %v654 = vmul.f32 %v653, %v402
        %v655 = vmul.f32 %v653, %v403
        %658 = vrot.lane.b32.xlu0 %v654, 127
        %v659 = vpop.permute.xlu0 %658
        %660 = vrot.lane.b32.xlu0 %v655, 127
        %v661 = vpop.permute.xlu0 %660
        %v664 = vadd.f32 %v608, %v659
        %v665 = vadd.f32 %v609, %v661
        %s666 = sld [smem:[#allocation2 + $0xb]]
        %v667 = vstv %s666
        %v668 = vmul.f32 %v667, %v404
        %v669 = vmul.f32 %v667, %v405
        %672 = vrot.lane.b32.xlu0 %v668, 127
        %v673 = vpop.permute.xlu0 %672
        %674 = vrot.lane.b32.xlu0 %v669, 127
        %v675 = vpop.permute.xlu0 %674
        %v678 = vadd.f32 %v622, %v673
        %v679 = vadd.f32 %v623, %v675
        %s680 = sld [smem:[#allocation2 + $0x2f]]
        %v681 = vstv %s680
        %v682 = vmul.f32 %v681, %v404
        %v683 = vmul.f32 %v681, %v405
        %686 = vrot.lane.b32.xlu0 %v682, 127
        %v687 = vpop.permute.xlu0 %686
        %688 = vrot.lane.b32.xlu0 %v683, 127
        %v689 = vpop.permute.xlu0 %688
        %v692 = vadd.f32 %v636, %v687
        %v693 = vadd.f32 %v637, %v689
        %s694 = sld [smem:[#allocation2 + $0x53]]
        %v695 = vstv %s694
        %v696 = vmul.f32 %v695, %v404
        %v697 = vmul.f32 %v695, %v405
        %700 = vrot.lane.b32.xlu0 %v696, 127
        %v701 = vpop.permute.xlu0 %700
        %702 = vrot.lane.b32.xlu0 %v697, 127
        %v703 = vpop.permute.xlu0 %702
        %v706 = vadd.f32 %v650, %v701
        %v707 = vadd.f32 %v651, %v703
        %s708 = sld [smem:[#allocation2 + $0x77]]
        %v709 = vstv %s708
        %v710 = vmul.f32 %v709, %v404
        %v711 = vmul.f32 %v709, %v405
        %714 = vrot.lane.b32.xlu0 %v710, 127
        %v715 = vpop.permute.xlu0 %714
        %716 = vrot.lane.b32.xlu0 %v711, 127
        %v717 = vpop.permute.xlu0 %716
        %v720 = vadd.f32 %v664, %v715
        %v721 = vadd.f32 %v665, %v717
        %s722 = sld [smem:[#allocation2 + $0x14]]
        %v723 = vstv %s722
        %v724 = vmul.f32 %v723, %v406
        %v725 = vmul.f32 %v723, %v407
        %728 = vrot.lane.b32.xlu0 %v724, 127
        %v729 = vpop.permute.xlu0 %728
        %730 = vrot.lane.b32.xlu0 %v725, 127
        %v731 = vpop.permute.xlu0 %730
        %v734 = vadd.f32 %v678, %v729
        %v735 = vadd.f32 %v679, %v731
        %s736 = sld [smem:[#allocation2 + $0x38]]
        %v737 = vstv %s736
        %v738 = vmul.f32 %v737, %v406
        %v739 = vmul.f32 %v737, %v407
        %742 = vrot.lane.b32.xlu0 %v738, 127
        %v743 = vpop.permute.xlu0 %742
        %744 = vrot.lane.b32.xlu0 %v739, 127
        %v745 = vpop.permute.xlu0 %744
        %v748 = vadd.f32 %v692, %v743
        %v749 = vadd.f32 %v693, %v745
        %s750 = sld [smem:[#allocation2 + $0x5c]]
        %v751 = vstv %s750
        %v752 = vmul.f32 %v751, %v406
        %v753 = vmul.f32 %v751, %v407
        %756 = vrot.lane.b32.xlu0 %v752, 127
        %v757 = vpop.permute.xlu0 %756
        %758 = vrot.lane.b32.xlu0 %v753, 127
        %v759 = vpop.permute.xlu0 %758
        %v762 = vadd.f32 %v706, %v757
        %v763 = vadd.f32 %v707, %v759
        %s764 = sld [smem:[#allocation2 + $0x80]]
        %v765 = vstv %s764
        %v766 = vmul.f32 %v765, %v406
        %v767 = vmul.f32 %v765, %v407
        %770 = vrot.lane.b32.xlu0 %v766, 127
        %v771 = vpop.permute.xlu0 %770
        %772 = vrot.lane.b32.xlu0 %v767, 127
        %v773 = vpop.permute.xlu0 %772
        %v776 = vadd.f32 %v720, %v771
        %v777 = vadd.f32 %v721, %v773
        %s778 = sld [smem:[#allocation2 + $0x1d]]
        %v779 = vstv %s778
        %v780 = vmul.f32 %v779, %v408
        %v781 = vmul.f32 %v779, %v409
        %784 = vrot.lane.b32.xlu0 %v780, 127
        %v785 = vpop.permute.xlu0 %784
        %786 = vrot.lane.b32.xlu0 %v781, 127
        %v787 = vpop.permute.xlu0 %786
        %v790 = vadd.f32 %v734, %v785
        %v791 = vadd.f32 %v735, %v787
        %s792 = sld [smem:[#allocation2 + $0x41]]
        %v793 = vstv %s792
        %v794 = vmul.f32 %v793, %v408
        %v795 = vmul.f32 %v793, %v409
        %798 = vrot.lane.b32.xlu0 %v794, 127
        %v799 = vpop.permute.xlu0 %798
        %800 = vrot.lane.b32.xlu0 %v795, 127
        %v801 = vpop.permute.xlu0 %800
        %v804 = vadd.f32 %v748, %v799
        %v805 = vadd.f32 %v749, %v801
        %s806 = sld [smem:[#allocation2 + $0x65]]
        %v807 = vstv %s806
        %v808 = vmul.f32 %v807, %v408
        %v809 = vmul.f32 %v807, %v409
        %812 = vrot.lane.b32.xlu0 %v808, 127
        %v813 = vpop.permute.xlu0 %812
        %814 = vrot.lane.b32.xlu0 %v809, 127
        %v815 = vpop.permute.xlu0 %814
        %v818 = vadd.f32 %v762, %v813
        %v819 = vadd.f32 %v763, %v815
        %s820 = sld [smem:[#allocation2 + $0x89]]
        %v821 = vstv %s820
        %v822 = vmul.f32 %v821, %v408
        %v823 = vmul.f32 %v821, %v409
        %826 = vrot.lane.b32.xlu0 %v822, 127
        %v827 = vpop.permute.xlu0 %826
        %828 = vrot.lane.b32.xlu0 %v823, 127
        %v829 = vpop.permute.xlu0 %828
        %v832 = vadd.f32 %v776, %v827
        %v833 = vadd.f32 %v777, %v829
        %v834 = vld [vmem:[%s371] sm:$0xff]
        %v835 = vld [vmem:[%s371 + $0x8] sm:$0x7f]
        %v836 = vld [vmem:[%s371 + $0x10] sm:$0xff]
        %v837 = vld [vmem:[%s371 + $0x18] sm:$0x7f]
        %v838 = vld [vmem:[%s371 + $0x20] sm:$0xff]
        %v839 = vld [vmem:[%s371 + $0x28] sm:$0x7f]
        %v840 = vld [vmem:[%s371 + $0x30] sm:$0xff]
        %v841 = vld [vmem:[%s371 + $0x38] sm:$0x7f]
        %s842 = sld [smem:[#allocation2 + $0x3]]
        %v843 = vstv %s842
        %v844 = vmul.f32 %v843, %v834
        %v845 = vmul.f32 %v843, %v835
        %v846 = vadd.f32 %v790, %v844
        %v847 = vadd.f32 %v791, %v845
        %s848 = sld [smem:[#allocation2 + $0x27]]
        %v849 = vstv %s848
        %v850 = vmul.f32 %v849, %v834
        %v851 = vmul.f32 %v849, %v835
        %v852 = vadd.f32 %v804, %v850
        %v853 = vadd.f32 %v805, %v851
        %s854 = sld [smem:[#allocation2 + $0x4b]]
        %v855 = vstv %s854
        %v856 = vmul.f32 %v855, %v834
        %v857 = vmul.f32 %v855, %v835
        %v858 = vadd.f32 %v818, %v856
        %v859 = vadd.f32 %v819, %v857
        %s860 = sld [smem:[#allocation2 + $0x6f]]
        %v861 = vstv %s860
        %v862 = vmul.f32 %v861, %v834
        %v863 = vmul.f32 %v861, %v835
        %v864 = vadd.f32 %v832, %v862
        %v865 = vadd.f32 %v833, %v863
        %s866 = sld [smem:[#allocation2 + $0xc]]
        %v867 = vstv %s866
        %v868 = vmul.f32 %v867, %v836
        %v869 = vmul.f32 %v867, %v837
        %v870 = vadd.f32 %v846, %v868
        %v871 = vadd.f32 %v847, %v869
        %s872 = sld [smem:[#allocation2 + $0x30]]
        %v873 = vstv %s872
        %v874 = vmul.f32 %v873, %v836
        %v875 = vmul.f32 %v873, %v837
        %v876 = vadd.f32 %v852, %v874
        %v877 = vadd.f32 %v853, %v875
        %s878 = sld [smem:[#allocation2 + $0x54]]
        %v879 = vstv %s878
        %v880 = vmul.f32 %v879, %v836
        %v881 = vmul.f32 %v879, %v837
        %v882 = vadd.f32 %v858, %v880
        %v883 = vadd.f32 %v859, %v881
        %s884 = sld [smem:[#allocation2 + $0x78]]
        %v885 = vstv %s884
        %v886 = vmul.f32 %v885, %v836
        %v887 = vmul.f32 %v885, %v837
        %v888 = vadd.f32 %v864, %v886
        %v889 = vadd.f32 %v865, %v887
        %s890 = sld [smem:[#allocation2 + $0x15]]
        %v891 = vstv %s890
        %v892 = vmul.f32 %v891, %v838
        %v893 = vmul.f32 %v891, %v839
        %v894 = vadd.f32 %v870, %v892
        %v895 = vadd.f32 %v871, %v893
        %s896 = sld [smem:[#allocation2 + $0x39]]
        %v897 = vstv %s896
        %v898 = vmul.f32 %v897, %v838
        %v899 = vmul.f32 %v897, %v839
        %v900 = vadd.f32 %v876, %v898
        %v901 = vadd.f32 %v877, %v899
        %s902 = sld [smem:[#allocation2 + $0x5d]]
        %v903 = vstv %s902
        %v904 = vmul.f32 %v903, %v838
        %v905 = vmul.f32 %v903, %v839
        %v906 = vadd.f32 %v882, %v904
        %v907 = vadd.f32 %v883, %v905
        %s908 = sld [smem:[#allocation2 + $0x81]]
        %v909 = vstv %s908
        %v910 = vmul.f32 %v909, %v838
        %v911 = vmul.f32 %v909, %v839
        %v912 = vadd.f32 %v888, %v910
        %v913 = vadd.f32 %v889, %v911
        %s914 = sld [smem:[#allocation2 + $0x1e]]
        %v915 = vstv %s914
        %v916 = vmul.f32 %v915, %v840
        %v917 = vmul.f32 %v915, %v841
        %v918 = vadd.f32 %v894, %v916
        %v919 = vadd.f32 %v895, %v917
        %s920 = sld [smem:[#allocation2 + $0x42]]
        %v921 = vstv %s920
        %v922 = vmul.f32 %v921, %v840
        %v923 = vmul.f32 %v921, %v841
        %v924 = vadd.f32 %v900, %v922
        %v925 = vadd.f32 %v901, %v923
        %s926 = sld [smem:[#allocation2 + $0x66]]
        %v927 = vstv %s926
        %v928 = vmul.f32 %v927, %v840
        %v929 = vmul.f32 %v927, %v841
        %v930 = vadd.f32 %v906, %v928
        %v931 = vadd.f32 %v907, %v929
        %s932 = sld [smem:[#allocation2 + $0x8a]]
        %v933 = vstv %s932
        %v934 = vmul.f32 %v933, %v840
        %v935 = vmul.f32 %v933, %v841
        %v936 = vadd.f32 %v912, %v934
        %v937 = vadd.f32 %v913, %v935
        %v938 = vld [vmem:[%s378] sm:$0xff]
        %v939 = vld [vmem:[%s378 + $0x8] sm:$0x7f]
        %v940 = vld [vmem:[%s378 + $0x10] sm:$0xff]
        %v941 = vld [vmem:[%s378 + $0x18] sm:$0x7f]
        %v942 = vld [vmem:[%s378 + $0x20] sm:$0xff]
        %v943 = vld [vmem:[%s378 + $0x28] sm:$0x7f]
        %v944 = vld [vmem:[%s378 + $0x30] sm:$0xff]
        %v945 = vld [vmem:[%s378 + $0x38] sm:$0x7f]
        %s946 = sld [smem:[#allocation2 + $0x4]]
        %v947 = vstv %s946
        %v948 = vmul.f32 %v947, %v938
        %v949 = vmul.f32 %v947, %v939
        %v950 = vadd.f32 %v918, %v948
        %v951 = vadd.f32 %v919, %v949
        %s952 = sld [smem:[#allocation2 + $0x28]]
        %v953 = vstv %s952
        %v954 = vmul.f32 %v953, %v938
        %v955 = vmul.f32 %v953, %v939
        %v956 = vadd.f32 %v924, %v954
        %v957 = vadd.f32 %v925, %v955
        %s958 = sld [smem:[#allocation2 + $0x4c]]
        %v959 = vstv %s958
        %v960 = vmul.f32 %v959, %v938
        %v961 = vmul.f32 %v959, %v939
        %v962 = vadd.f32 %v930, %v960
        %v963 = vadd.f32 %v931, %v961
        %s964 = sld [smem:[#allocation2 + $0x70]]
        %v965 = vstv %s964
        %v966 = vmul.f32 %v965, %v938
        %v967 = vmul.f32 %v965, %v939
        %v968 = vadd.f32 %v936, %v966
        %v969 = vadd.f32 %v937, %v967
        %s970 = sld [smem:[#allocation2 + $0xd]]
        %v971 = vstv %s970
        %v972 = vmul.f32 %v971, %v940
        %v973 = vmul.f32 %v971, %v941
        %v974 = vadd.f32 %v950, %v972
        %v975 = vadd.f32 %v951, %v973
        %s976 = sld [smem:[#allocation2 + $0x31]]
        %v977 = vstv %s976
        %v978 = vmul.f32 %v977, %v940
        %v979 = vmul.f32 %v977, %v941
        %v980 = vadd.f32 %v956, %v978
        %v981 = vadd.f32 %v957, %v979
        %s982 = sld [smem:[#allocation2 + $0x55]]
        %v983 = vstv %s982
        %v984 = vmul.f32 %v983, %v940
        %v985 = vmul.f32 %v983, %v941
        %v986 = vadd.f32 %v962, %v984
        %v987 = vadd.f32 %v963, %v985
        %s988 = sld [smem:[#allocation2 + $0x79]]
        %v989 = vstv %s988
        %v990 = vmul.f32 %v989, %v940
        %v991 = vmul.f32 %v989, %v941
        %v992 = vadd.f32 %v968, %v990
        %v993 = vadd.f32 %v969, %v991
        %s994 = sld [smem:[#allocation2 + $0x16]]
        %v995 = vstv %s994
        %v996 = vmul.f32 %v995, %v942
        %v997 = vmul.f32 %v995, %v943
        %v998 = vadd.f32 %v974, %v996
        %v999 = vadd.f32 %v975, %v997
        %s1000 = sld [smem:[#allocation2 + $0x3a]]
        %v1001 = vstv %s1000
        %v1002 = vmul.f32 %v1001, %v942
        %v1003 = vmul.f32 %v1001, %v943
        %v1004 = vadd.f32 %v980, %v1002
        %v1005 = vadd.f32 %v981, %v1003
        %s1006 = sld [smem:[#allocation2 + $0x5e]]
        %v1007 = vstv %s1006
        %v1008 = vmul.f32 %v1007, %v942
        %v1009 = vmul.f32 %v1007, %v943
        %v1010 = vadd.f32 %v986, %v1008
        %v1011 = vadd.f32 %v987, %v1009
        %s1012 = sld [smem:[#allocation2 + $0x82]]
        %v1013 = vstv %s1012
        %v1014 = vmul.f32 %v1013, %v942
        %v1015 = vmul.f32 %v1013, %v943
        %v1016 = vadd.f32 %v992, %v1014
        %v1017 = vadd.f32 %v993, %v1015
        %s1018 = sld [smem:[#allocation2 + $0x1f]]
        %v1019 = vstv %s1018
        %v1020 = vmul.f32 %v1019, %v944
        %v1021 = vmul.f32 %v1019, %v945
        %v1022 = vadd.f32 %v998, %v1020
        %v1023 = vadd.f32 %v999, %v1021
        %s1024 = sld [smem:[#allocation2 + $0x43]]
        %v1025 = vstv %s1024
        %v1026 = vmul.f32 %v1025, %v944
        %v1027 = vmul.f32 %v1025, %v945
        %v1028 = vadd.f32 %v1004, %v1026
        %v1029 = vadd.f32 %v1005, %v1027
        %s1030 = sld [smem:[#allocation2 + $0x67]]
        %v1031 = vstv %s1030
        %v1032 = vmul.f32 %v1031, %v944
        %v1033 = vmul.f32 %v1031, %v945
        %v1034 = vadd.f32 %v1010, %v1032
        %v1035 = vadd.f32 %v1011, %v1033
        %s1036 = sld [smem:[#allocation2 + $0x8b]]
        %v1037 = vstv %s1036
        %v1038 = vmul.f32 %v1037, %v944
        %v1039 = vmul.f32 %v1037, %v945
        %v1040 = vadd.f32 %v1016, %v1038
        %v1041 = vadd.f32 %v1017, %v1039
        %s1042 = sld [smem:[#allocation2 + $0x5]]
        %v1043 = vstv %s1042
        %v1044 = vmul.f32 %v1043, %v834
        %v1045 = vmul.f32 %v1043, %v835
        %1048 = vrot.lane.b32.xlu0 %v1044, 127
        %v1049 = vpop.permute.xlu0 %1048
        %1050 = vrot.lane.b32.xlu0 %v1045, 127
        %v1051 = vpop.permute.xlu0 %1050
        %v1054 = vadd.f32 %v1022, %v1049
        %v1055 = vadd.f32 %v1023, %v1051
        %s1056 = sld [smem:[#allocation2 + $0x29]]
        %v1057 = vstv %s1056
        %v1058 = vmul.f32 %v1057, %v834
        %v1059 = vmul.f32 %v1057, %v835
        %1062 = vrot.lane.b32.xlu0 %v1058, 127
        %v1063 = vpop.permute.xlu0 %1062
        %1064 = vrot.lane.b32.xlu0 %v1059, 127
        %v1065 = vpop.permute.xlu0 %1064
        %v1068 = vadd.f32 %v1028, %v1063
        %v1069 = vadd.f32 %v1029, %v1065
        %s1070 = sld [smem:[#allocation2 + $0x4d]]
        %v1071 = vstv %s1070
        %v1072 = vmul.f32 %v1071, %v834
        %v1073 = vmul.f32 %v1071, %v835
        %1076 = vrot.lane.b32.xlu0 %v1072, 127
        %v1077 = vpop.permute.xlu0 %1076
        %1078 = vrot.lane.b32.xlu0 %v1073, 127
        %v1079 = vpop.permute.xlu0 %1078
        %v1082 = vadd.f32 %v1034, %v1077
        %v1083 = vadd.f32 %v1035, %v1079
        %s1084 = sld [smem:[#allocation2 + $0x71]]
        %v1085 = vstv %s1084
        %v1086 = vmul.f32 %v1085, %v834
        %v1087 = vmul.f32 %v1085, %v835
        %1090 = vrot.lane.b32.xlu0 %v1086, 127
        %v1091 = vpop.permute.xlu0 %1090
        %1092 = vrot.lane.b32.xlu0 %v1087, 127
        %v1093 = vpop.permute.xlu0 %1092
        %v1096 = vadd.f32 %v1040, %v1091
        %v1097 = vadd.f32 %v1041, %v1093
        %s1098 = sld [smem:[#allocation2 + $0xe]]
        %v1099 = vstv %s1098
        %v1100 = vmul.f32 %v1099, %v836
        %v1101 = vmul.f32 %v1099, %v837
        %1104 = vrot.lane.b32.xlu0 %v1100, 127
        %v1105 = vpop.permute.xlu0 %1104
        %1106 = vrot.lane.b32.xlu0 %v1101, 127
        %v1107 = vpop.permute.xlu0 %1106
        %v1110 = vadd.f32 %v1054, %v1105
        %v1111 = vadd.f32 %v1055, %v1107
        %s1112 = sld [smem:[#allocation2 + $0x32]]
        %v1113 = vstv %s1112
        %v1114 = vmul.f32 %v1113, %v836
        %v1115 = vmul.f32 %v1113, %v837
        %1118 = vrot.lane.b32.xlu0 %v1114, 127
        %v1119 = vpop.permute.xlu0 %1118
        %1120 = vrot.lane.b32.xlu0 %v1115, 127
        %v1121 = vpop.permute.xlu0 %1120
        %v1124 = vadd.f32 %v1068, %v1119
        %v1125 = vadd.f32 %v1069, %v1121
        %s1126 = sld [smem:[#allocation2 + $0x56]]
        %v1127 = vstv %s1126
        %v1128 = vmul.f32 %v1127, %v836
        %v1129 = vmul.f32 %v1127, %v837
        %1132 = vrot.lane.b32.xlu0 %v1128, 127
        %v1133 = vpop.permute.xlu0 %1132
        %1134 = vrot.lane.b32.xlu0 %v1129, 127
        %v1135 = vpop.permute.xlu0 %1134
        %v1138 = vadd.f32 %v1082, %v1133
        %v1139 = vadd.f32 %v1083, %v1135
        %s1140 = sld [smem:[#allocation2 + $0x7a]]
        %v1141 = vstv %s1140
        %v1142 = vmul.f32 %v1141, %v836
        %v1143 = vmul.f32 %v1141, %v837
        %1146 = vrot.lane.b32.xlu0 %v1142, 127
        %v1147 = vpop.permute.xlu0 %1146
        %1148 = vrot.lane.b32.xlu0 %v1143, 127
        %v1149 = vpop.permute.xlu0 %1148
        %v1152 = vadd.f32 %v1096, %v1147
        %v1153 = vadd.f32 %v1097, %v1149
        %s1154 = sld [smem:[#allocation2 + $0x17]]
        %v1155 = vstv %s1154
        %v1156 = vmul.f32 %v1155, %v838
        %v1157 = vmul.f32 %v1155, %v839
        %1160 = vrot.lane.b32.xlu0 %v1156, 127
        %v1161 = vpop.permute.xlu0 %1160
        %1162 = vrot.lane.b32.xlu0 %v1157, 127
        %v1163 = vpop.permute.xlu0 %1162
        %v1166 = vadd.f32 %v1110, %v1161
        %v1167 = vadd.f32 %v1111, %v1163
        %s1168 = sld [smem:[#allocation2 + $0x3b]]
        %v1169 = vstv %s1168
        %v1170 = vmul.f32 %v1169, %v838
        %v1171 = vmul.f32 %v1169, %v839
        %1174 = vrot.lane.b32.xlu0 %v1170, 127
        %v1175 = vpop.permute.xlu0 %1174
        %1176 = vrot.lane.b32.xlu0 %v1171, 127
        %v1177 = vpop.permute.xlu0 %1176
        %v1180 = vadd.f32 %v1124, %v1175
        %v1181 = vadd.f32 %v1125, %v1177
        %s1182 = sld [smem:[#allocation2 + $0x5f]]
        %v1183 = vstv %s1182
        %v1184 = vmul.f32 %v1183, %v838
        %v1185 = vmul.f32 %v1183, %v839
        %1188 = vrot.lane.b32.xlu0 %v1184, 127
        %v1189 = vpop.permute.xlu0 %1188
        %1190 = vrot.lane.b32.xlu0 %v1185, 127
        %v1191 = vpop.permute.xlu0 %1190
        %v1194 = vadd.f32 %v1138, %v1189
        %v1195 = vadd.f32 %v1139, %v1191
        %s1196 = sld [smem:[#allocation2 + $0x83]]
        %v1197 = vstv %s1196
        %v1198 = vmul.f32 %v1197, %v838
        %v1199 = vmul.f32 %v1197, %v839
        %1202 = vrot.lane.b32.xlu0 %v1198, 127
        %v1203 = vpop.permute.xlu0 %1202
        %1204 = vrot.lane.b32.xlu0 %v1199, 127
        %v1205 = vpop.permute.xlu0 %1204
        %v1208 = vadd.f32 %v1152, %v1203
        %v1209 = vadd.f32 %v1153, %v1205
        %s1210 = sld [smem:[#allocation2 + $0x20]]
        %v1211 = vstv %s1210
        %v1212 = vmul.f32 %v1211, %v840
        %v1213 = vmul.f32 %v1211, %v841
        %1216 = vrot.lane.b32.xlu0 %v1212, 127
        %v1217 = vpop.permute.xlu0 %1216
        %1218 = vrot.lane.b32.xlu0 %v1213, 127
        %v1219 = vpop.permute.xlu0 %1218
        %v1222 = vadd.f32 %v1166, %v1217
        %v1223 = vadd.f32 %v1167, %v1219
        %s1224 = sld [smem:[#allocation2 + $0x44]]
        %v1225 = vstv %s1224
        %v1226 = vmul.f32 %v1225, %v840
        %v1227 = vmul.f32 %v1225, %v841
        %1230 = vrot.lane.b32.xlu0 %v1226, 127
        %v1231 = vpop.permute.xlu0 %1230
        %1232 = vrot.lane.b32.xlu0 %v1227, 127
        %v1233 = vpop.permute.xlu0 %1232
        %v1236 = vadd.f32 %v1180, %v1231
        %v1237 = vadd.f32 %v1181, %v1233
        %s1238 = sld [smem:[#allocation2 + $0x68]]
        %v1239 = vstv %s1238
        %v1240 = vmul.f32 %v1239, %v840
        %v1241 = vmul.f32 %v1239, %v841
        %1244 = vrot.lane.b32.xlu0 %v1240, 127
        %v1245 = vpop.permute.xlu0 %1244
        %1246 = vrot.lane.b32.xlu0 %v1241, 127
        %v1247 = vpop.permute.xlu0 %1246
        %v1250 = vadd.f32 %v1194, %v1245
        %v1251 = vadd.f32 %v1195, %v1247
        %s1252 = sld [smem:[#allocation2 + $0x8c]]
        %v1253 = vstv %s1252
        %v1254 = vmul.f32 %v1253, %v840
        %v1255 = vmul.f32 %v1253, %v841
        %1258 = vrot.lane.b32.xlu0 %v1254, 127
        %v1259 = vpop.permute.xlu0 %1258
        %1260 = vrot.lane.b32.xlu0 %v1255, 127
        %v1261 = vpop.permute.xlu0 %1260
        %v1264 = vadd.f32 %v1208, %v1259
        %v1265 = vadd.f32 %v1209, %v1261
        %v1266 = vld [vmem:[%s357 + $0x1] sm:$0xff]
        %v1267 = vld [vmem:[%s357 + $0x9] sm:$0x7f]
        %v1268 = vld [vmem:[%s357 + $0x11] sm:$0xff]
        %v1269 = vld [vmem:[%s357 + $0x19] sm:$0x7f]
        %v1270 = vld [vmem:[%s357 + $0x21] sm:$0xff]
        %v1271 = vld [vmem:[%s357 + $0x29] sm:$0x7f]
        %v1272 = vld [vmem:[%s357 + $0x31] sm:$0xff]
        %v1273 = vld [vmem:[%s357 + $0x39] sm:$0x7f]
        %s1274 = sld [smem:[#allocation2 + $0x6]]
        %v1275 = vstv %s1274
        %v1276 = vmul.f32 %v1275, %v1266
        %v1277 = vmul.f32 %v1275, %v1267
        %v1278 = vadd.f32 %v1222, %v1276
        %v1279 = vadd.f32 %v1223, %v1277
        %s1280 = sld [smem:[#allocation2 + $0x2a]]
        %v1281 = vstv %s1280
        %v1282 = vmul.f32 %v1281, %v1266
        %v1283 = vmul.f32 %v1281, %v1267
        %v1284 = vadd.f32 %v1236, %v1282
        %v1285 = vadd.f32 %v1237, %v1283
        %s1286 = sld [smem:[#allocation2 + $0x4e]]
        %v1287 = vstv %s1286
        %v1288 = vmul.f32 %v1287, %v1266
        %v1289 = vmul.f32 %v1287, %v1267
        %v1290 = vadd.f32 %v1250, %v1288
        %v1291 = vadd.f32 %v1251, %v1289
        %s1292 = sld [smem:[#allocation2 + $0x72]]
        %v1293 = vstv %s1292
        %v1294 = vmul.f32 %v1293, %v1266
        %v1295 = vmul.f32 %v1293, %v1267
        %v1296 = vadd.f32 %v1264, %v1294
        %v1297 = vadd.f32 %v1265, %v1295
        %s1298 = sld [smem:[#allocation2 + $0xf]]
        %v1299 = vstv %s1298
        %v1300 = vmul.f32 %v1299, %v1268
        %v1301 = vmul.f32 %v1299, %v1269
        %v1302 = vadd.f32 %v1278, %v1300
        %v1303 = vadd.f32 %v1279, %v1301
        %s1304 = sld [smem:[#allocation2 + $0x33]]
        %v1305 = vstv %s1304
        %v1306 = vmul.f32 %v1305, %v1268
        %v1307 = vmul.f32 %v1305, %v1269
        %v1308 = vadd.f32 %v1284, %v1306
        %v1309 = vadd.f32 %v1285, %v1307
        %s1310 = sld [smem:[#allocation2 + $0x57]]
        %v1311 = vstv %s1310
        %v1312 = vmul.f32 %v1311, %v1268
        %v1313 = vmul.f32 %v1311, %v1269
        %v1314 = vadd.f32 %v1290, %v1312
        %v1315 = vadd.f32 %v1291, %v1313
        %s1316 = sld [smem:[#allocation2 + $0x7b]]
        %v1317 = vstv %s1316
        %v1318 = vmul.f32 %v1317, %v1268
        %v1319 = vmul.f32 %v1317, %v1269
        %v1320 = vadd.f32 %v1296, %v1318
        %v1321 = vadd.f32 %v1297, %v1319
        %s1322 = sld [smem:[#allocation2 + $0x18]]
        %v1323 = vstv %s1322
        %v1324 = vmul.f32 %v1323, %v1270
        %v1325 = vmul.f32 %v1323, %v1271
        %v1326 = vadd.f32 %v1302, %v1324
        %v1327 = vadd.f32 %v1303, %v1325
        %s1328 = sld [smem:[#allocation2 + $0x3c]]
        %v1329 = vstv %s1328
        %v1330 = vmul.f32 %v1329, %v1270
        %v1331 = vmul.f32 %v1329, %v1271
        %v1332 = vadd.f32 %v1308, %v1330
        %v1333 = vadd.f32 %v1309, %v1331
        %s1334 = sld [smem:[#allocation2 + $0x60]]
        %v1335 = vstv %s1334
        %v1336 = vmul.f32 %v1335, %v1270
        %v1337 = vmul.f32 %v1335, %v1271
        %v1338 = vadd.f32 %v1314, %v1336
        %v1339 = vadd.f32 %v1315, %v1337
        %s1340 = sld [smem:[#allocation2 + $0x84]]
        %v1341 = vstv %s1340
        %v1342 = vmul.f32 %v1341, %v1270
        %v1343 = vmul.f32 %v1341, %v1271
        %v1344 = vadd.f32 %v1320, %v1342
        %v1345 = vadd.f32 %v1321, %v1343
        %s1346 = sld [smem:[#allocation2 + $0x21]]
        %v1347 = vstv %s1346
        %v1348 = vmul.f32 %v1347, %v1272
        %v1349 = vmul.f32 %v1347, %v1273
        %v1350 = vadd.f32 %v1326, %v1348
        %v1351 = vadd.f32 %v1327, %v1349
        %s1352 = sld [smem:[#allocation2 + $0x45]]
        %v1353 = vstv %s1352
        %v1354 = vmul.f32 %v1353, %v1272
        %v1355 = vmul.f32 %v1353, %v1273
        %v1356 = vadd.f32 %v1332, %v1354
        %v1357 = vadd.f32 %v1333, %v1355
        %s1358 = sld [smem:[#allocation2 + $0x69]]
        %v1359 = vstv %s1358
        %v1360 = vmul.f32 %v1359, %v1272
        %v1361 = vmul.f32 %v1359, %v1273
        %v1362 = vadd.f32 %v1338, %v1360
        %v1363 = vadd.f32 %v1339, %v1361
        %s1364 = sld [smem:[#allocation2 + $0x8d]]
        %v1365 = vstv %s1364
        %v1366 = vmul.f32 %v1365, %v1272
        %v1367 = vmul.f32 %v1365, %v1273
        %v1368 = vadd.f32 %v1344, %v1366
        %v1369 = vadd.f32 %v1345, %v1367
        %v1370 = vld [vmem:[%s364 + $0x1] sm:$0xff]
        %v1371 = vld [vmem:[%s364 + $0x9] sm:$0x7f]
        %v1372 = vld [vmem:[%s364 + $0x11] sm:$0xff]
        %v1373 = vld [vmem:[%s364 + $0x19] sm:$0x7f]
        %v1374 = vld [vmem:[%s364 + $0x21] sm:$0xff]
        %v1375 = vld [vmem:[%s364 + $0x29] sm:$0x7f]
        %v1376 = vld [vmem:[%s364 + $0x31] sm:$0xff]
        %v1377 = vld [vmem:[%s364 + $0x39] sm:$0x7f]
        %s1378 = sld [smem:[#allocation2 + $0x7]]
        %v1379 = vstv %s1378
        %v1380 = vmul.f32 %v1379, %v1370
        %v1381 = vmul.f32 %v1379, %v1371
        %v1382 = vadd.f32 %v1350, %v1380
        %v1383 = vadd.f32 %v1351, %v1381
        %s1384 = sld [smem:[#allocation2 + $0x2b]]
        %v1385 = vstv %s1384
        %v1386 = vmul.f32 %v1385, %v1370
        %v1387 = vmul.f32 %v1385, %v1371
        %v1388 = vadd.f32 %v1356, %v1386
        %v1389 = vadd.f32 %v1357, %v1387
        %s1390 = sld [smem:[#allocation2 + $0x4f]]
        %v1391 = vstv %s1390
        %v1392 = vmul.f32 %v1391, %v1370
        %v1393 = vmul.f32 %v1391, %v1371
        %v1394 = vadd.f32 %v1362, %v1392
        %v1395 = vadd.f32 %v1363, %v1393
        %s1396 = sld [smem:[#allocation2 + $0x73]]
        %v1397 = vstv %s1396
        %v1398 = vmul.f32 %v1397, %v1370
        %v1399 = vmul.f32 %v1397, %v1371
        %v1400 = vadd.f32 %v1368, %v1398
        %v1401 = vadd.f32 %v1369, %v1399
        %s1402 = sld [smem:[#allocation2 + $0x10]]
        %v1403 = vstv %s1402
        %v1404 = vmul.f32 %v1403, %v1372
        %v1405 = vmul.f32 %v1403, %v1373
        %v1406 = vadd.f32 %v1382, %v1404
        %v1407 = vadd.f32 %v1383, %v1405
        %s1408 = sld [smem:[#allocation2 + $0x34]]
        %v1409 = vstv %s1408
        %v1410 = vmul.f32 %v1409, %v1372
        %v1411 = vmul.f32 %v1409, %v1373
        %v1412 = vadd.f32 %v1388, %v1410
        %v1413 = vadd.f32 %v1389, %v1411
        %s1414 = sld [smem:[#allocation2 + $0x58]]
        %v1415 = vstv %s1414
        %v1416 = vmul.f32 %v1415, %v1372
        %v1417 = vmul.f32 %v1415, %v1373
        %v1418 = vadd.f32 %v1394, %v1416
        %v1419 = vadd.f32 %v1395, %v1417
        %s1420 = sld [smem:[#allocation2 + $0x7c]]
        %v1421 = vstv %s1420
        %v1422 = vmul.f32 %v1421, %v1372
        %v1423 = vmul.f32 %v1421, %v1373
        %v1424 = vadd.f32 %v1400, %v1422
        %v1425 = vadd.f32 %v1401, %v1423
        %s1426 = sld [smem:[#allocation2 + $0x19]]
        %v1427 = vstv %s1426
        %v1428 = vmul.f32 %v1427, %v1374
        %v1429 = vmul.f32 %v1427, %v1375
        %v1430 = vadd.f32 %v1406, %v1428
        %v1431 = vadd.f32 %v1407, %v1429
        %s1432 = sld [smem:[#allocation2 + $0x3d]]
        %v1433 = vstv %s1432
        %v1434 = vmul.f32 %v1433, %v1374
        %v1435 = vmul.f32 %v1433, %v1375
        %v1436 = vadd.f32 %v1412, %v1434
        %v1437 = vadd.f32 %v1413, %v1435
        %s1438 = sld [smem:[#allocation2 + $0x61]]
        %v1439 = vstv %s1438
        %v1440 = vmul.f32 %v1439, %v1374
        %v1441 = vmul.f32 %v1439, %v1375
        %v1442 = vadd.f32 %v1418, %v1440
        %v1443 = vadd.f32 %v1419, %v1441
        %s1444 = sld [smem:[#allocation2 + $0x85]]
        %v1445 = vstv %s1444
        %v1446 = vmul.f32 %v1445, %v1374
        %v1447 = vmul.f32 %v1445, %v1375
        %v1448 = vadd.f32 %v1424, %v1446
        %v1449 = vadd.f32 %v1425, %v1447
        %s1450 = sld [smem:[#allocation2 + $0x22]]
        %v1451 = vstv %s1450
        %v1452 = vmul.f32 %v1451, %v1376
        %v1453 = vmul.f32 %v1451, %v1377
        %v1454 = vadd.f32 %v1430, %v1452
        %v1455 = vadd.f32 %v1431, %v1453
        %s1456 = sld [smem:[#allocation2 + $0x46]]
        %v1457 = vstv %s1456
        %v1458 = vmul.f32 %v1457, %v1376
        %v1459 = vmul.f32 %v1457, %v1377
        %v1460 = vadd.f32 %v1436, %v1458
        %v1461 = vadd.f32 %v1437, %v1459
        %s1462 = sld [smem:[#allocation2 + $0x6a]]
        %v1463 = vstv %s1462
        %v1464 = vmul.f32 %v1463, %v1376
        %v1465 = vmul.f32 %v1463, %v1377
        %v1466 = vadd.f32 %v1442, %v1464
        %v1467 = vadd.f32 %v1443, %v1465
        %s1468 = sld [smem:[#allocation2 + $0x8e]]
        %v1469 = vstv %s1468
        %v1470 = vmul.f32 %v1469, %v1376
        %v1471 = vmul.f32 %v1469, %v1377
        %v1472 = vadd.f32 %v1448, %v1470
        %v1473 = vadd.f32 %v1449, %v1471
        %s1474 = sld [smem:[#allocation2 + $0x8]]
        %v1475 = vstv %s1474
        %v1476 = vmul.f32 %v1475, %v1266
        %v1477 = vmul.f32 %v1475, %v1267
        %1480 = vrot.lane.b32.xlu0 %v1476, 127
        %v1481 = vpop.permute.xlu0 %1480
        %1482 = vrot.lane.b32.xlu0 %v1477, 127
        %v1483 = vpop.permute.xlu0 %1482
        %v1486 = vadd.f32 %v1454, %v1481
        %v1487 = vadd.f32 %v1455, %v1483
        %s1488 = sld [smem:[#allocation2 + $0x2c]]
        %v1489 = vstv %s1488
        %v1490 = vmul.f32 %v1489, %v1266
        %v1491 = vmul.f32 %v1489, %v1267
        %1494 = vrot.lane.b32.xlu0 %v1490, 127
        %v1495 = vpop.permute.xlu0 %1494
        %1496 = vrot.lane.b32.xlu0 %v1491, 127
        %v1497 = vpop.permute.xlu0 %1496
        %v1500 = vadd.f32 %v1460, %v1495
        %v1501 = vadd.f32 %v1461, %v1497
        %s1502 = sld [smem:[#allocation2 + $0x50]]
        %v1503 = vstv %s1502
        %v1504 = vmul.f32 %v1503, %v1266
        %v1505 = vmul.f32 %v1503, %v1267
        %1508 = vrot.lane.b32.xlu0 %v1504, 127
        %v1509 = vpop.permute.xlu0 %1508
        %1510 = vrot.lane.b32.xlu0 %v1505, 127
        %v1511 = vpop.permute.xlu0 %1510
        %v1514 = vadd.f32 %v1466, %v1509
        %v1515 = vadd.f32 %v1467, %v1511
        %s1516 = sld [smem:[#allocation2 + $0x74]]
        %v1517 = vstv %s1516
        %v1518 = vmul.f32 %v1517, %v1266
        %v1519 = vmul.f32 %v1517, %v1267
        %1522 = vrot.lane.b32.xlu0 %v1518, 127
        %v1523 = vpop.permute.xlu0 %1522
        %1524 = vrot.lane.b32.xlu0 %v1519, 127
        %v1525 = vpop.permute.xlu0 %1524
        %v1528 = vadd.f32 %v1472, %v1523
        %v1529 = vadd.f32 %v1473, %v1525
        %s1530 = sld [smem:[#allocation2 + $0x11]]
        %v1531 = vstv %s1530
        %v1532 = vmul.f32 %v1531, %v1268
        %v1533 = vmul.f32 %v1531, %v1269
        %1536 = vrot.lane.b32.xlu0 %v1532, 127
        %v1537 = vpop.permute.xlu0 %1536
        %1538 = vrot.lane.b32.xlu0 %v1533, 127
        %v1539 = vpop.permute.xlu0 %1538
        %v1542 = vadd.f32 %v1486, %v1537
        %v1543 = vadd.f32 %v1487, %v1539
        %s1544 = sld [smem:[#allocation2 + $0x35]]
        %v1545 = vstv %s1544
        %v1546 = vmul.f32 %v1545, %v1268
        %v1547 = vmul.f32 %v1545, %v1269
        %1550 = vrot.lane.b32.xlu0 %v1546, 127
        %v1551 = vpop.permute.xlu0 %1550
        %1552 = vrot.lane.b32.xlu0 %v1547, 127
        %v1553 = vpop.permute.xlu0 %1552
        %v1556 = vadd.f32 %v1500, %v1551
        %v1557 = vadd.f32 %v1501, %v1553
        %s1558 = sld [smem:[#allocation2 + $0x59]]
        %v1559 = vstv %s1558
        %v1560 = vmul.f32 %v1559, %v1268
        %v1561 = vmul.f32 %v1559, %v1269
        %1564 = vrot.lane.b32.xlu0 %v1560, 127
        %v1565 = vpop.permute.xlu0 %1564
        %1566 = vrot.lane.b32.xlu0 %v1561, 127
        %v1567 = vpop.permute.xlu0 %1566
        %v1570 = vadd.f32 %v1514, %v1565
        %v1571 = vadd.f32 %v1515, %v1567
        %s1572 = sld [smem:[#allocation2 + $0x7d]]
        %v1573 = vstv %s1572
        %v1574 = vmul.f32 %v1573, %v1268
        %v1575 = vmul.f32 %v1573, %v1269
        %1578 = vrot.lane.b32.xlu0 %v1574, 127
        %v1579 = vpop.permute.xlu0 %1578
        %1580 = vrot.lane.b32.xlu0 %v1575, 127
        %v1581 = vpop.permute.xlu0 %1580
        %v1584 = vadd.f32 %v1528, %v1579
        %v1585 = vadd.f32 %v1529, %v1581
        %s1586 = sld [smem:[#allocation2 + $0x1a]]
        %v1587 = vstv %s1586
        %v1588 = vmul.f32 %v1587, %v1270
        %v1589 = vmul.f32 %v1587, %v1271
        %1592 = vrot.lane.b32.xlu0 %v1588, 127
        %v1593 = vpop.permute.xlu0 %1592
        %1594 = vrot.lane.b32.xlu0 %v1589, 127
        %v1595 = vpop.permute.xlu0 %1594
        %v1598 = vadd.f32 %v1542, %v1593
        %v1599 = vadd.f32 %v1543, %v1595
        %s1600 = sld [smem:[#allocation2 + $0x3e]]
        %v1601 = vstv %s1600
        %v1602 = vmul.f32 %v1601, %v1270
        %v1603 = vmul.f32 %v1601, %v1271
        %1606 = vrot.lane.b32.xlu0 %v1602, 127
        %v1607 = vpop.permute.xlu0 %1606
        %1608 = vrot.lane.b32.xlu0 %v1603, 127
        %v1609 = vpop.permute.xlu0 %1608
        %v1612 = vadd.f32 %v1556, %v1607
        %v1613 = vadd.f32 %v1557, %v1609
        %s1614 = sld [smem:[#allocation2 + $0x62]]
        %v1615 = vstv %s1614
        %v1616 = vmul.f32 %v1615, %v1270
        %v1617 = vmul.f32 %v1615, %v1271
        %1620 = vrot.lane.b32.xlu0 %v1616, 127
        %v1621 = vpop.permute.xlu0 %1620
        %1622 = vrot.lane.b32.xlu0 %v1617, 127
        %v1623 = vpop.permute.xlu0 %1622
        %v1626 = vadd.f32 %v1570, %v1621
        %v1627 = vadd.f32 %v1571, %v1623
        %s1628 = sld [smem:[#allocation2 + $0x86]]
        %v1629 = vstv %s1628
        %v1630 = vmul.f32 %v1629, %v1270
        %v1631 = vmul.f32 %v1629, %v1271
        %1634 = vrot.lane.b32.xlu0 %v1630, 127
        %v1635 = vpop.permute.xlu0 %1634
        %1636 = vrot.lane.b32.xlu0 %v1631, 127
        %v1637 = vpop.permute.xlu0 %1636
        %v1640 = vadd.f32 %v1584, %v1635
        %v1641 = vadd.f32 %v1585, %v1637
        %s1642 = sld [smem:[#allocation2 + $0x23]]
        %v1643 = vstv %s1642
        %v1644 = vmul.f32 %v1643, %v1272
        %v1645 = vmul.f32 %v1643, %v1273
        %1648 = vrot.lane.b32.xlu0 %v1644, 127
        %v1649 = vpop.permute.xlu0 %1648
        %1650 = vrot.lane.b32.xlu0 %v1645, 127
        %v1651 = vpop.permute.xlu0 %1650
        %v1654 = vadd.f32 %v1598, %v1649
        %v1655 = vadd.f32 %v1599, %v1651
        %s1656 = sld [smem:[#allocation2 + $0x47]]
        %v1657 = vstv %s1656
        %v1658 = vmul.f32 %v1657, %v1272
        %v1659 = vmul.f32 %v1657, %v1273
        %1662 = vrot.lane.b32.xlu0 %v1658, 127
        %v1663 = vpop.permute.xlu0 %1662
        %1664 = vrot.lane.b32.xlu0 %v1659, 127
        %v1665 = vpop.permute.xlu0 %1664
        %v1668 = vadd.f32 %v1612, %v1663
        %v1669 = vadd.f32 %v1613, %v1665
        %s1670 = sld [smem:[#allocation2 + $0x6b]]
        %v1671 = vstv %s1670
        %v1672 = vmul.f32 %v1671, %v1272
        %v1673 = vmul.f32 %v1671, %v1273
        %1676 = vrot.lane.b32.xlu0 %v1672, 127
        %v1677 = vpop.permute.xlu0 %1676
        %1678 = vrot.lane.b32.xlu0 %v1673, 127
        %v1679 = vpop.permute.xlu0 %1678
        %v1682 = vadd.f32 %v1626, %v1677
        %v1683 = vadd.f32 %v1627, %v1679
        %s1684 = sld [smem:[#allocation2 + $0x8f]]
        %v1685 = vstv %s1684
        %v1686 = vmul.f32 %v1685, %v1272
        %v1687 = vmul.f32 %v1685, %v1273
        %1690 = vrot.lane.b32.xlu0 %v1686, 127
        %v1691 = vpop.permute.xlu0 %1690
        %1692 = vrot.lane.b32.xlu0 %v1687, 127
        %v1693 = vpop.permute.xlu0 %1692
        %v1696 = vadd.f32 %v1640, %v1691
        %v1697 = vadd.f32 %v1641, %v1693
        %vm1698 = vcmask 121856
        %1699 = vst.msk [vmem:[%s388] sm:$0xff] %vm1698, %v1654
        %vm1700 = vcmask 120832
        %1701 = vst.msk [vmem:[%s388 + $0x8] sm:$0x7f] %vm1700, %v1655
        %s1702 = scalar_lea.vmem %s388, 16
        %1703 = vst.msk [vmem:[%s1702] sm:$0xff] %vm1698, %v1668
        %1704 = vst.msk [vmem:[%s1702 + $0x8] sm:$0x7f] %vm1700, %v1669
        %s1705 = scalar_lea.vmem %s388, 32
        %1706 = vst.msk [vmem:[%s1705] sm:$0xff] %vm1698, %v1682
        %1707 = vst.msk [vmem:[%s1705 + $0x8] sm:$0x7f] %vm1700, %v1683
        %s1708 = scalar_lea.vmem %s388, 48
        %1709 = vst.msk [vmem:[%s1708] sm:$0xff] %vm1698, %v1696
        %1710 = vst.msk [vmem:[%s1708 + $0x8] sm:$0x7f] %vm1700, %v1697
        %s1711 = smul.u32 2, %s24
        %p1712 = scmp.lt.s32.totalorder %s23, 1
        %s1713 = scalar_select %p1712, %s23, 1
        %p1714 = scmp.lt.s32.totalorder %s1711, 1
        %s1715 = scalar_select %p1714, %s1711, 1
        %s1716 = smul.addr %s1713, 8
        %s1717 = sadd.s32 %s1715, %s1716
        %s1718 = smul.addr %s1717, 8
        %s1719 = scalar_lea.vmem %s6, %s1718
        // Predicated region
        $region53: #{esa_forward.6} parent=43 // pred_check
          %p1720 = pneg %p205
        $region54: #{esa_forward.6} parent=43 // pred_check_branch
          %1722 = sbr.rel (%p1720) target = $region56
        $region55: #{esa_forward.6} parent=43 // pred_region
          %s1723 = smul.u32 2, %s24
        $region56: #{esa_forward.6} parent=43 // pred_fallthru
          _
      $region44: #{esa_forward.6} parent=5 // pred_fallthru
        _
      %p1724 = scmp.le.s32.totalorder 2, %s14
      // Predicated region
      $region57: #{esa_forward.6} parent=5 // pred_check
        %p1725 = pneg %p1724
      $region58: #{esa_forward.6} parent=5 // pred_check_branch
        %1727 = sbr.rel (%p1725) target = $region60
      $region59: #{esa_forward.6} parent=5 // pred_region
        %s1728 = ssub.s32 %s14, 2
        // Predicated region
        $region61: #{esa_forward.6} parent=59 // pred_check
          %p1729 = pneg %p211
        $region62: #{esa_forward.6} parent=59 // pred_check_branch
          %1731 = sbr.rel (%p1729) target = $region64
        $region63: #{esa_forward.6} parent=59 // pred_region
          %s1732 = smul.u32 2, %s26
          %p1733 = scmp.lt.s32.totalorder %s25, 1
          %s1734 = scalar_select %p1733, %s25, 1
          %p1735 = scmp.lt.s32.totalorder %s1732, 1
          %s1736 = scalar_select %p1735, %s1732, 1
          %s1737 = smul.addr %s1734, 8
          %s1738 = sadd.s32 %s1736, %s1737
          %s1739 = smul.addr %s1738, 8
          %s1740 = scalar_lea.vmem %s6, %s1739
        $region64: #{esa_forward.6} parent=59 // pred_fallthru
          _
      $region60: #{esa_forward.6} parent=5 // pred_fallthru
        _
    $region6: #{esa_forward.6} parent=1 // loop_footer
      %s18 = sadd.s32 1, %s14
    $region7: #{esa_forward.6} parent=1 // loop_footer_branch
      %13 = sbr.rel target = $region3
    $region8: #{esa_forward.6} parent=1 // loop_exit
      _
    %1741 = vsyncpa [#allocation3], 1
    %s1742 = scalar_lea.sflag [#allocation3], 1
    %1743 = vsyncpa %s1742, 1
    %1744 = vsyncpa [#allocation5], 1

// kernel: esa_forward.7
$region0: #{esa_forward.7}
  #allocation0 [shape = 'u32[]', space=smem, size = 0x4, offset = 0x4, fixed_abs, tag = 'smem constant byte address 0x4 - core index']
  #allocation1 [shape = 'u32[144,128]{1,0:T(1,128)}', space=vmem, size = 0x12000, scoped, tag = 'internal scratch']
  %s0 = inlined_call_operand.vmem [shape: f32[2,4,5,15], index: 0, kind: input, shape index: {}]
  %s1 = inlined_call_operand.vmem [shape: f32[2,4,5,15], index: 1, kind: input, shape index: {}]
  %s2 = inlined_call_operand.vmem [shape: f32[2,4,5,15], index: 2, kind: input, shape index: {}]
  %s3 = inlined_call_operand.vmem [shape: f32[2,4,3,9], index: 3, kind: output, shape index: {}]
  %s4 = sld [smem:[#allocation0]]
  $region45: #{esa_forward.7} parent=0
    _
  %s6 = ssub.s32 1, %s4
  %s7 = scalar_select 0, %s6, %s4
  loop: start=0, step=1, limit=4
  $region2: #{esa_forward.7} parent=0 // loop_pre_header
    _
  $region3: #{esa_forward.7} parent=0 // loop_header
    %s9 = sphi 0, %s13
    %p10 = scmp.ge.s32.totalorder %s9, 4
    %s16 = sphi 0, %s28
    %s17 = sphi 0, %s24
    %s18 = sphi 0, %s16
    %s19 = sphi 0, %s17
    %s20 = sphi 0, %s18
    %s21 = sphi 0, %s19
    %s33 = sphi 0, %s35
    %s36 = sphi 0, %s33
    %s37 = sphi 0, %s36
    %s53 = sphi 0, %s37
    %s61 = sphi 0, %s63
    %s64 = sphi 0, %s61
    %s65 = sphi 0, %s64
    %s81 = sphi 0, %s65
    %s89 = sphi 0, %s91
    %s92 = sphi 0, %s89
    %s93 = sphi 0, %s92
    %s109 = sphi 0, %s93
    %s117 = sphi 0, %s119
    %s120 = sphi 0, %s117
    %s121 = sphi 0, %s120
    %s137 = sphi 0, %s121
  $region4: #{esa_forward.7} parent=0 // loop_header_branch
    %12 = sbr.rel (%p10) target = $region8
  $region5: #{esa_forward.7} parent=0 // loop_body
    %s14 = ssub.s32 %s9, 1
    %s15 = ssub.s32 %s9, 2
    %s22 = sadd.s32 1, %s17
    %p23 = scmp.ge.s32.totalorder %s22, 1
    %s24 = scalar_select %p23, 0, %s22
    %s25 = sadd.s32 1, %s16
    %s26 = scalar_select %p23, %s25, %s16
    %p27 = scmp.ge.s32.totalorder %s26, 2
    %s28 = scalar_select %p27, 0, %s26
    %s29 = sadd.s32 %s16, %s17
    %s30 = sadd.s32 %s28, %s24
    %s31 = ssub.s32 %s29, %s30
    %p32 = scmp.eq.s32.totalorder %s31, 0
    %s34 = sadd.s32 %s33, 1
    %s35 = scalar_select %p32, %s33, %s34
    %p38 = pneg %p32
    %p39 = scmp.eq.s32.totalorder %s9, 1
    %p40 = por %p38, %p39
    %p41 = scmp.ne.s32.totalorder %s33, %s36
    %p42 = scmp.eq.s32.totalorder %s9, 0
    %p43 = por %p41, %p42
    %p44 = scmp.ne.s32.totalorder %s33, %s36
    %p45 = scmp.eq.s32.totalorder %s14, 1
    %p46 = por %p44, %p45
    %p47 = scmp.ne.s32.totalorder %s36, %s37
    %p48 = scmp.eq.s32.totalorder %s14, 0
    %p49 = por %p47, %p48
    %p50 = scmp.ne.s32.totalorder %s36, %s37
    %p51 = scmp.eq.s32.totalorder %s15, 1
    %p52 = por %p50, %p51
    %p54 = scmp.ne.s32.totalorder %s37, %s53
    %p55 = scmp.eq.s32.totalorder %s15, 0
    %p56 = por %p54, %p55
    %s57 = sadd.s32 %s16, %s17
    %s58 = sadd.s32 %s28, %s24
    %s59 = ssub.s32 %s57, %s58
    %p60 = scmp.eq.s32.totalorder %s59, 0
    %s62 = sadd.s32 %s61, 1
    %s63 = scalar_select %p60, %s61, %s62
    %p66 = pneg %p60
    %p67 = scmp.eq.s32.totalorder %s9, 1
    %p68 = por %p66, %p67
    %p69 = scmp.ne.s32.totalorder %s61, %s64
    %p70 = scmp.eq.s32.totalorder %s9, 0
    %p71 = por %p69, %p70
    %p72 = scmp.ne.s32.totalorder %s61, %s64
    %p73 = scmp.eq.s32.totalorder %s14, 1
    %p74 = por %p72, %p73
    %p75 = scmp.ne.s32.totalorder %s64, %s65
    %p76 = scmp.eq.s32.totalorder %s14, 0
    %p77 = por %p75, %p76
    %p78 = scmp.ne.s32.totalorder %s64, %s65
    %p79 = scmp.eq.s32.totalorder %s15, 1
    %p80 = por %p78, %p79
    %p82 = scmp.ne.s32.totalorder %s65, %s81
    %p83 = scmp.eq.s32.totalorder %s15, 0
    %p84 = por %p82, %p83
    %s85 = sadd.s32 %s16, %s17
    %s86 = sadd.s32 %s28, %s24
    %s87 = ssub.s32 %s85, %s86
    %p88 = scmp.eq.s32.totalorder %s87, 0
    %s90 = sadd.s32 %s89, 1
    %s91 = scalar_select %p88, %s89, %s90
    %p94 = pneg %p88
    %p95 = scmp.eq.s32.totalorder %s9, 1
    %p96 = por %p94, %p95
    %p97 = scmp.ne.s32.totalorder %s89, %s92
    %p98 = scmp.eq.s32.totalorder %s9, 0
    %p99 = por %p97, %p98
    %p100 = scmp.ne.s32.totalorder %s89, %s92
    %p101 = scmp.eq.s32.totalorder %s14, 1
    %p102 = por %p100, %p101
    %p103 = scmp.ne.s32.totalorder %s92, %s93
    %p104 = scmp.eq.s32.totalorder %s14, 0
    %p105 = por %p103, %p104
    %p106 = scmp.ne.s32.totalorder %s92, %s93
    %p107 = scmp.eq.s32.totalorder %s15, 1
    %p108 = por %p106, %p107
    %p110 = scmp.ne.s32.totalorder %s93, %s109
    %p111 = scmp.eq.s32.totalorder %s15, 0
    %p112 = por %p110, %p111
    %s113 = ssub.s32 %s16, %s28
    %s114 = ssub.s32 %s17, %s24
    %s115 = sor.u32 %s113, %s114
    %p116 = scmp.eq.s32.totalorder %s115, 0
    %s118 = sadd.s32 %s117, 1
    %s119 = scalar_select %p116, %s117, %s118
    %p122 = pneg %p116
    %p123 = scmp.eq.s32.totalorder %s9, 1
    %p124 = por %p122, %p123
    %p125 = scmp.ne.s32.totalorder %s117, %s120
    %p126 = scmp.eq.s32.totalorder %s9, 0
    %p127 = por %p125, %p126
    %p128 = scmp.ne.s32.totalorder %s117, %s120
    %p129 = scmp.eq.s32.totalorder %s14, 1
    %p130 = por %p128, %p129
    %p131 = scmp.ne.s32.totalorder %s120, %s121
    %p132 = scmp.eq.s32.totalorder %s14, 0
    %p133 = por %p131, %p132
    %p134 = scmp.ne.s32.totalorder %s120, %s121
    %p135 = scmp.eq.s32.totalorder %s15, 1
    %p136 = por %p134, %p135
    %p138 = scmp.ne.s32.totalorder %s121, %s137
    %p139 = scmp.eq.s32.totalorder %s15, 0
    %p140 = por %p138, %p139
    %p141 = scmp.le.s32.totalorder 1, %s9
    %p142 = scmp.lt.s32.totalorder %s9, 3
    %p143 = pnand %p141, %p142
    %p144 = pneg %p143
    // Predicated region
    $region9: #{esa_forward.7} parent=5 // pred_check
      _
    $region10: #{esa_forward.7} parent=5 // pred_check_branch
      %146 = sbr.rel (%p143) target = $region12
    $region11: #{esa_forward.7} parent=5 // pred_region
      %s147 = ssub.s32 %s9, 1
    $region12: #{esa_forward.7} parent=5 // pred_fallthru
      _
    %p148 = scmp.lt.s32.totalorder %s9, 2
    // Predicated region
    $region13: #{esa_forward.7} parent=5 // pred_check
      %p149 = pneg %p148
    $region14: #{esa_forward.7} parent=5 // pred_check_branch
      %151 = sbr.rel (%p149) target = $region16
    $region15: #{esa_forward.7} parent=5 // pred_region
      // Predicated region
      $region17: #{esa_forward.7} parent=15 // pred_check
        %p152 = pneg %p43
      $region18: #{esa_forward.7} parent=15 // pred_check_branch
        %154 = sbr.rel (%p152) target = $region20
      $region19: #{esa_forward.7} parent=15 // pred_region
        %s155 = sadd.s32 %s16, %s17
        %p156 = scmp.lt.s32.totalorder %s155, 1
        %s157 = scalar_select %p156, %s155, 1
        %s158 = smul.addr %s157, 4
        %s159 = smul.addr %s158, 8
        %s160 = scalar_lea.vmem %s0, %s159
        %s161 = sadd.s32 %s16, %s17
      $region20: #{esa_forward.7} parent=15 // pred_fallthru
        _
      // Predicated region
      $region21: #{esa_forward.7} parent=15 // pred_check
        %p162 = pneg %p71
      $region22: #{esa_forward.7} parent=15 // pred_check_branch
        %164 = sbr.rel (%p162) target = $region24
      $region23: #{esa_forward.7} parent=15 // pred_region
        %s165 = sadd.s32 %s16, %s17
        %p166 = scmp.lt.s32.totalorder %s165, 1
        %s167 = scalar_select %p166, %s165, 1
        %s168 = smul.addr %s167, 4
        %s169 = smul.addr %s168, 8
        %s170 = scalar_lea.vmem %s1, %s169
        %s171 = sadd.s32 %s16, %s17
      $region24: #{esa_forward.7} parent=15 // pred_fallthru
        _
      // Predicated region
      $region25: #{esa_forward.7} parent=15 // pred_check
        %p172 = pneg %p99
      $region26: #{esa_forward.7} parent=15 // pred_check_branch
        %174 = sbr.rel (%p172) target = $region28
      $region27: #{esa_forward.7} parent=15 // pred_region
        %s175 = sadd.s32 %s16, %s17
        %p176 = scmp.lt.s32.totalorder %s175, 1
        %s177 = scalar_select %p176, %s175, 1
        %s178 = smul.addr %s177, 4
        %s179 = smul.addr %s178, 8
        %s180 = scalar_lea.vmem %s2, %s179
        %s181 = sadd.s32 %s16, %s17
      $region28: #{esa_forward.7} parent=15 // pred_fallthru
        _
    $region16: #{esa_forward.7} parent=5 // pred_fallthru
      _
    %p182 = scmp.le.s32.totalorder 1, %s9
    %p183 = scmp.lt.s32.totalorder %s9, 3
    %p184 = pnand %p182, %p183
    %p185 = pneg %p184
    // Predicated region
    $region29: #{esa_forward.7} parent=5 // pred_check
      _
    $region30: #{esa_forward.7} parent=5 // pred_check_branch
      %187 = sbr.rel (%p184) target = $region32
    $region31: #{esa_forward.7} parent=5 // pred_region
      %s188 = ssub.s32 %s9, 1
      %s189 = sadd.s32 %s18, %s19
      %p190 = scmp.lt.s32.totalorder %s189, 1
      %s191 = scalar_select %p190, %s189, 1
      %s192 = smul.addr %s191, 4
      %s193 = smul.addr %s192, 8
      %s194 = scalar_lea.vmem %s0, %s193
      %p195 = pneg %p49
      %p196 = pneg %p46
      %s197 = sadd.s32 %s18, %s19
      %p198 = scmp.lt.s32.totalorder %s197, 1
      %s199 = scalar_select %p198, %s197, 1
      %s200 = smul.addr %s199, 4
      %s201 = smul.addr %s200, 8
      %s202 = scalar_lea.vmem %s1, %s201
      %p203 = pneg %p77
      %p204 = pneg %p74
      %s205 = sadd.s32 %s18, %s19
      %p206 = scmp.lt.s32.totalorder %s205, 1
      %s207 = scalar_select %p206, %s205, 1
      %s208 = smul.addr %s207, 4
      %s209 = smul.addr %s208, 8
      %s210 = scalar_lea.vmem %s2, %s209
      %p211 = pneg %p105
      %p212 = pneg %p102
      %p213 = pneg %p133
      %p214 = pneg %p130
      %p215 = scmp.lt.s32.totalorder %s18, 1
      %s216 = scalar_select %p215, %s18, 1
      %p217 = scmp.lt.s32.totalorder %s19, 0
      %s218 = scalar_select %p217, %s19, 0
      %s219 = smul.addr %s216, 4
      %s220 = sadd.s32 %s218, %s219
      %s221 = smul.addr %s220, 4
      %s222 = scalar_lea.vmem %s3, %s221
      %s223 = sadd.s32 %s18, %s19
      %p224 = scmp.lt.s32.totalorder %s223, 1
      %s225 = scalar_select %p224, %s223, 1
      %s226 = smul.addr %s225, 4
      %s227 = smul.addr %s226, 8
      %s228 = scalar_lea.vmem %s0, %s227
      %s229 = sadd.s32 %s18, %s19
      %s230 = sadd.s32 %s18, %s19
      %p231 = scmp.lt.s32.totalorder %s230, 1
      %s232 = scalar_select %p231, %s230, 1
      %s233 = smul.addr %s232, 4
      %s234 = smul.addr %s233, 8
      %s235 = scalar_lea.vmem %s1, %s234
      %s236 = sadd.s32 %s18, %s19
      %s237 = sadd.s32 %s18, %s19
      %p238 = scmp.lt.s32.totalorder %s237, 1
      %s239 = scalar_select %p238, %s237, 1
      %s240 = smul.addr %s239, 4
      %s241 = smul.addr %s240, 8
      %s242 = scalar_lea.vmem %s2, %s241
      %s243 = sadd.s32 %s18, %s19
      %p244 = scmp.lt.s32.totalorder %s18, 1
      %s245 = scalar_select %p244, %s18, 1
      %p246 = scmp.lt.s32.totalorder %s19, 0
      %s247 = scalar_select %p246, %s19, 0
      %s248 = smul.addr %s245, 4
      %s249 = sadd.s32 %s247, %s248
      %s250 = smul.addr %s249, 4
      %s251 = scalar_lea.vmem %s3, %s250
      %v252 = vld [vmem:[%s228] sm:$0x1f]
      %v253 = vld [vmem:[%s228 + $0x8] sm:$0x1f]
      %v254 = vld [vmem:[%s228 + $0x10] sm:$0x1f]
      %v255 = vld [vmem:[%s228 + $0x18] sm:$0x1f]
      %v256 = vld [vmem:[%s235] sm:$0x1f]
      %v257 = vld [vmem:[%s235 + $0x8] sm:$0x1f]
      %v258 = vld [vmem:[%s235 + $0x10] sm:$0x1f]
      %v259 = vld [vmem:[%s235 + $0x18] sm:$0x1f]
      %v260 = vld [vmem:[%s242] sm:$0x1f]
      %v261 = vld [vmem:[%s242 + $0x8] sm:$0x1f]
      %v262 = vld [vmem:[%s242 + $0x10] sm:$0x1f]
      %v263 = vld [vmem:[%s242 + $0x18] sm:$0x1f]
      %v264 = vmax.f32 %v252, %v256
      %v265 = vmax.f32 %v253, %v257
      %v266 = vmax.f32 %v254, %v258
      %v267 = vmax.f32 %v255, %v259
      %v268 = vmax.f32 %v264, %v260
      %v269 = vmax.f32 %v265, %v261
      %v270 = vmax.f32 %v266, %v262
      %v271 = vmax.f32 %v267, %v263
      %v276 = vrot.slane %v268, 1
      %v277 = vrot.slane %v269, 1
      %v278 = vrot.slane %v270, 1
      %v279 = vrot.slane %v271, 1
      %v284 = vmax.f32 %v268, %v276
      %v285 = vmax.f32 %v269, %v277
      %v286 = vmax.f32 %v270, %v278
      %v287 = vmax.f32 %v271, %v279
      %v292 = vrot.slane %v252, 2
      %v293 = vrot.slane %v253, 2
      %v294 = vrot.slane %v254, 2
      %v295 = vrot.slane %v255, 2
      %v300 = vmax.f32 %v284, %v292
      %v301 = vmax.f32 %v285, %v293
      %v302 = vmax.f32 %v286, %v294
      %v303 = vmax.f32 %v287, %v295
      %308 = vrot.lane.b32.xlu0 %v300, 127
      %v309 = vpop.permute.xlu0 %308
      %310 = vrot.lane.b32.xlu0 %v301, 127
      %v311 = vpop.permute.xlu0 %310
      %312 = vrot.lane.b32.xlu0 %v302, 127
      %v313 = vpop.permute.xlu0 %312
      %314 = vrot.lane.b32.xlu0 %v303, 127
      %v315 = vpop.permute.xlu0 %314
      %v320 = vmax.f32 %v300, %v309
      %v321 = vmax.f32 %v301, %v311
      %v322 = vmax.f32 %v302, %v313
      %v323 = vmax.f32 %v303, %v315
      %324 = vrot.lane.b32.xlu0 %v300, 126
      %v325 = vpop.permute.xlu0 %324
      %326 = vrot.lane.b32.xlu0 %v301, 126
      %v327 = vpop.permute.xlu0 %326
      %328 = vrot.lane.b32.xlu0 %v302, 126
      %v329 = vpop.permute.xlu0 %328
      %330 = vrot.lane.b32.xlu0 %v303, 126
      %v331 = vpop.permute.xlu0 %330
      %v336 = vmax.f32 %v320, %v325
      %v337 = vmax.f32 %v321, %v327
      %v338 = vmax.f32 %v322, %v329
      %v339 = vmax.f32 %v323, %v331
      %340 = vrot.lane.b32.xlu0 %v300, 125
      %v341 = vpop.permute.xlu0 %340
      %342 = vrot.lane.b32.xlu0 %v301, 125
      %v343 = vpop.permute.xlu0 %342
      %344 = vrot.lane.b32.xlu0 %v302, 125
      %v345 = vpop.permute.xlu0 %344
      %346 = vrot.lane.b32.xlu0 %v303, 125
      %v347 = vpop.permute.xlu0 %346
      %v352 = vmax.f32 %v336, %v341
      %v353 = vmax.f32 %v337, %v343
      %v354 = vmax.f32 %v338, %v345
      %v355 = vmax.f32 %v339, %v347
      %356 = vrot.lane.b32.xlu0 %v300, 124
      %v357 = vpop.permute.xlu0 %356
      %358 = vrot.lane.b32.xlu0 %v301, 124
      %v359 = vpop.permute.xlu0 %358
      %360 = vrot.lane.b32.xlu0 %v302, 124
      %v361 = vpop.permute.xlu0 %360
      %362 = vrot.lane.b32.xlu0 %v303, 124
      %v363 = vpop.permute.xlu0 %362
      %v368 = vmax.f32 %v352, %v357
      %v369 = vmax.f32 %v353, %v359
      %v370 = vmax.f32 %v354, %v361
      %v371 = vmax.f32 %v355, %v363
      %372 = vrot.lane.b32.xlu0 %v300, 123
      %v373 = vpop.permute.xlu0 %372
      %374 = vrot.lane.b32.xlu0 %v301, 123
      %v375 = vpop.permute.xlu0 %374
      %376 = vrot.lane.b32.xlu0 %v302, 123
      %v377 = vpop.permute.xlu0 %376
      %378 = vrot.lane.b32.xlu0 %v303, 123
      %v379 = vpop.permute.xlu0 %378
      %v384 = vmax.f32 %v368, %v373
      %v385 = vmax.f32 %v369, %v375
      %v386 = vmax.f32 %v370, %v377
      %v387 = vmax.f32 %v371, %v379
      %388 = vrot.lane.b32.xlu0 %v300, 122
      %v389 = vpop.permute.xlu0 %388
      %390 = vrot.lane.b32.xlu0 %v301, 122
      %v391 = vpop.permute.xlu0 %390
      %392 = vrot.lane.b32.xlu0 %v302, 122
      %v393 = vpop.permute.xlu0 %392
      %394 = vrot.lane.b32.xlu0 %v303, 122
      %v395 = vpop.permute.xlu0 %394
      %v400 = vmax.f32 %v384, %v389
      %v401 = vmax.f32 %v385, %v391
      %v402 = vmax.f32 %v386, %v393
      %v403 = vmax.f32 %v387, %v395
      %vm404 = vcmask 67584
      %405 = vst.msk [vmem:[%s251] sm:$0x7] %vm404, %v400
      %406 = vst.msk [vmem:[%s251 + $0x4] sm:$0x7] %vm404, %v401
      %407 = vst.msk [vmem:[%s251 + $0x8] sm:$0x7] %vm404, %v402
      %408 = vst.msk [vmem:[%s251 + $0xc] sm:$0x7] %vm404, %v403
      %p409 = scmp.lt.s32.totalorder %s18, 1
      %s410 = scalar_select %p409, %s18, 1
      %p411 = scmp.lt.s32.totalorder %s19, 0
      %s412 = scalar_select %p411, %s19, 0
      %s413 = smul.addr %s410, 4
      %s414 = sadd.s32 %s412, %s413
      %s415 = smul.addr %s414, 4
      %s416 = scalar_lea.vmem %s3, %s415
      // Predicated region
      $region33: #{esa_forward.7} parent=31 // pred_check
        %p417 = pneg %p130
      $region34: #{esa_forward.7} parent=31 // pred_check_branch
        %419 = sbr.rel (%p417) target = $region36
      $region35: #{esa_forward.7} parent=31 // pred_region
        _
      $region36: #{esa_forward.7} parent=31 // pred_fallthru
        _
    $region32: #{esa_forward.7} parent=5 // pred_fallthru
      _
    %p420 = scmp.le.s32.totalorder 2, %s9
    // Predicated region
    $region37: #{esa_forward.7} parent=5 // pred_check
      %p421 = pneg %p420
    $region38: #{esa_forward.7} parent=5 // pred_check_branch
      %423 = sbr.rel (%p421) target = $region40
    $region39: #{esa_forward.7} parent=5 // pred_region
      %s424 = ssub.s32 %s9, 2
      // Predicated region
      $region41: #{esa_forward.7} parent=39 // pred_check
        %p425 = pneg %p136
      $region42: #{esa_forward.7} parent=39 // pred_check_branch
        %427 = sbr.rel (%p425) target = $region44
      $region43: #{esa_forward.7} parent=39 // pred_region
        %p428 = scmp.lt.s32.totalorder %s20, 1
        %s429 = scalar_select %p428, %s20, 1
        %p430 = scmp.lt.s32.totalorder %s21, 0
        %s431 = scalar_select %p430, %s21, 0
        %s432 = smul.addr %s429, 4
        %s433 = sadd.s32 %s431, %s432
        %s434 = smul.addr %s433, 4
        %s435 = scalar_lea.vmem %s3, %s434
      $region44: #{esa_forward.7} parent=39 // pred_fallthru
        _
    $region40: #{esa_forward.7} parent=5 // pred_fallthru
      _
  $region6: #{esa_forward.7} parent=0 // loop_footer
    %s13 = sadd.s32 1, %s9
  $region7: #{esa_forward.7} parent=0 // loop_footer_branch
    %8 = sbr.rel target = $region3
  $region8: #{esa_forward.7} parent=0 // loop_exit
    _

// kernel: esa_forward.8
$region0: #{esa_forward.8}
  #allocation0 [shape = 'u32[]', space=smem, size = 0x4, offset = 0x4, fixed_abs, tag = 'smem constant byte address 0x4 - core index']
  #allocation1 [shape = 'u32[144,128]{1,0:T(1,128)}', space=vmem, size = 0x12000, scoped, tag = 'internal scratch']
  %s0 = inlined_call_operand.vmem [shape: f32[2,4,5,5], index: 0, kind: input, shape index: {}]
  %s1 = inlined_call_operand.vmem [shape: f32[144], index: 1, kind: input, shape index: {}]
  %s2 = inlined_call_operand.vmem [shape: f32[4], index: 2, kind: input, shape index: {}]
  %s3 = inlined_call_operand.vmem [shape: f32[2,4,3,3], index: 3, kind: output, shape index: {}]
  %s4 = sld [smem:[#allocation0]]
  $region53: #{esa_forward.8} parent=0
    _
  %s6 = ssub.s32 1, %s4
  %s7 = scalar_select 0, %s6, %s4
  $region1: #{esa_forward.8} parent=0
    #allocation2 [shape = 'u8[1024]{0}', space=smem, size = 0x400, scoped, tag = 'input window, operand 1, single buffered']
    #allocation3 [shape = 's32[2]{0}', space=sflag, size = 0x8, scoped, tag = 'scoped memory for esa_forward.8']
    #allocation4 [shape = 'u8[512]{0}', space=smem, size = 0x200, scoped, tag = 'input window, operand 2, single buffered']
    #allocation5 [shape = 's32[1]{0}', space=sflag, size = 0x4, scoped, tag = 'scoped memory for esa_forward.8']
    %8 = vsyncpa [#allocation3], 0
    %9 = vsyncpa [#allocation5], 0
    loop: start=0, step=1, limit=4
    $region2: #{esa_forward.8} parent=1 // loop_pre_header
      _
    $region3: #{esa_forward.8} parent=1 // loop_header
      %s11 = sphi 0, %s15
      %p12 = scmp.ge.s32.totalorder %s11, 4
      %s18 = sphi 0, %s30
      %s19 = sphi 0, %s26
      %s20 = sphi 0, %s18
      %s21 = sphi 0, %s19
      %s22 = sphi 0, %s20
      %s23 = sphi 0, %s21
      %s35 = sphi 0, %s37
      %s38 = sphi 0, %s35
      %s39 = sphi 0, %s38
      %s55 = sphi 0, %s39
      %s59 = sphi 0, %s59
      %s61 = sphi 0, %s59
      %s62 = sphi 0, %s61
      %s76 = sphi 0, %s62
      %s80 = sphi 0, %s80
      %s82 = sphi 0, %s80
      %s83 = sphi 0, %s82
      %s97 = sphi 0, %s83
      %s105 = sphi 0, %s107
      %s108 = sphi 0, %s105
      %s109 = sphi 0, %s108
      %s125 = sphi 0, %s109
    $region4: #{esa_forward.8} parent=1 // loop_header_branch
      %14 = sbr.rel (%p12) target = $region8
    $region5: #{esa_forward.8} parent=1 // loop_body
      %s16 = ssub.s32 %s11, 1
      %s17 = ssub.s32 %s11, 2
      %s24 = sadd.s32 1, %s19
      %p25 = scmp.ge.s32.totalorder %s24, 1
      %s26 = scalar_select %p25, 0, %s24
      %s27 = sadd.s32 1, %s18
      %s28 = scalar_select %p25, %s27, %s18
      %p29 = scmp.ge.s32.totalorder %s28, 2
      %s30 = scalar_select %p29, 0, %s28
      %s31 = sadd.s32 %s18, %s19
      %s32 = sadd.s32 %s30, %s26
      %s33 = ssub.s32 %s31, %s32
      %p34 = scmp.eq.s32.totalorder %s33, 0
      %s36 = sadd.s32 %s35, 1
      %s37 = scalar_select %p34, %s35, %s36
      %p40 = pneg %p34
      %p41 = scmp.eq.s32.totalorder %s11, 1
      %p42 = por %p40, %p41
      %p43 = scmp.ne.s32.totalorder %s35, %s38
      %p44 = scmp.eq.s32.totalorder %s11, 0
      %p45 = por %p43, %p44
      %p46 = scmp.ne.s32.totalorder %s35, %s38
      %p47 = scmp.eq.s32.totalorder %s16, 1
      %p48 = por %p46, %p47
      %p49 = scmp.ne.s32.totalorder %s38, %s39
      %p50 = scmp.eq.s32.totalorder %s16, 0
      %p51 = por %p49, %p50
      %p52 = scmp.ne.s32.totalorder %s38, %s39
      %p53 = scmp.eq.s32.totalorder %s17, 1
      %p54 = por %p52, %p53
      %p56 = scmp.ne.s32.totalorder %s39, %s55
      %p57 = scmp.eq.s32.totalorder %s17, 0
      %p58 = por %p56, %p57
      %s60 = sadd.s32 %s59, 1
      %p63 = scmp.eq.s32.totalorder %s11, 1
      %p64 = scmp.ne.s32.totalorder %s59, %s61
      %p65 = scmp.eq.s32.totalorder %s11, 0
      %p66 = por %p64, %p65
      %p67 = scmp.ne.s32.totalorder %s59, %s61
      %p68 = scmp.eq.s32.totalorder %s16, 1
      %p69 = por %p67, %p68
      %p70 = scmp.ne.s32.totalorder %s61, %s62
      %p71 = scmp.eq.s32.totalorder %s16, 0
      %p72 = por %p70, %p71
      %p73 = scmp.ne.s32.totalorder %s61, %s62
      %p74 = scmp.eq.s32.totalorder %s17, 1
      %p75 = por %p73, %p74
      %p77 = scmp.ne.s32.totalorder %s62, %s76
      %p78 = scmp.eq.s32.totalorder %s17, 0
      %p79 = por %p77, %p78
      %s81 = sadd.s32 %s80, 1
      %p84 = scmp.eq.s32.totalorder %s11, 1
      %p85 = scmp.ne.s32.totalorder %s80, %s82
      %p86 = scmp.eq.s32.totalorder %s11, 0
      %p87 = por %p85, %p86
      %p88 = scmp.ne.s32.totalorder %s80, %s82
      %p89 = scmp.eq.s32.totalorder %s16, 1
      %p90 = por %p88, %p89
      %p91 = scmp.ne.s32.totalorder %s82, %s83
      %p92 = scmp.eq.s32.totalorder %s16, 0
      %p93 = por %p91, %p92
      %p94 = scmp.ne.s32.totalorder %s82, %s83
      %p95 = scmp.eq.s32.totalorder %s17, 1
      %p96 = por %p94, %p95
      %p98 = scmp.ne.s32.totalorder %s83, %s97
      %p99 = scmp.eq.s32.totalorder %s17, 0
      %p100 = por %p98, %p99
      %s101 = ssub.s32 %s18, %s30
      %s102 = ssub.s32 %s19, %s26
      %s103 = sor.u32 %s101, %s102
      %p104 = scmp.eq.s32.totalorder %s103, 0
      %s106 = sadd.s32 %s105, 1
      %s107 = scalar_select %p104, %s105, %s106
      %p110 = pneg %p104
      %p111 = scmp.eq.s32.totalorder %s11, 1
      %p112 = por %p110, %p111
      %p113 = scmp.ne.s32.totalorder %s105, %s108
      %p114 = scmp.eq.s32.totalorder %s11, 0
      %p115 = por %p113, %p114
      %p116 = scmp.ne.s32.totalorder %s105, %s108
      %p117 = scmp.eq.s32.totalorder %s16, 1
      %p118 = por %p116, %p117
      %p119 = scmp.ne.s32.totalorder %s108, %s109
      %p120 = scmp.eq.s32.totalorder %s16, 0
      %p121 = por %p119, %p120
      %p122 = scmp.ne.s32.totalorder %s108, %s109
      %p123 = scmp.eq.s32.totalorder %s17, 1
      %p124 = por %p122, %p123
      %p126 = scmp.ne.s32.totalorder %s109, %s125
      %p127 = scmp.eq.s32.totalorder %s17, 0
      %p128 = por %p126, %p127
      %p129 = scmp.le.s32.totalorder 1, %s11
      %p130 = scmp.lt.s32.totalorder %s11, 3
      %p131 = pnand %p129, %p130
      %p132 = pneg %p131
      // Predicated region
      $region9: #{esa_forward.8} parent=5 // pred_check
        _
      $region10: #{esa_forward.8} parent=5 // pred_check_branch
        %134 = sbr.rel (%p131) target = $region12
      $region11: #{esa_forward.8} parent=5 // pred_region
        %s135 = ssub.s32 %s11, 1
        // Predicated region
        $region13: #{esa_forward.8} parent=11 // pred_check
          %p136 = pneg %p72
        $region14: #{esa_forward.8} parent=11 // pred_check_branch
          %138 = sbr.rel (%p136) target = $region16
        $region15: #{esa_forward.8} parent=11 // pred_region
          %s140 = ssub.s32 32, 32
          %141 = vsyncadd [#allocation3], %s140
          %s143 = sshll.u32 %s1, 4
          %s144 = int_to_ptr.vmem [resolvable:$true] %s143
          %146 = dma.vmem_to_smem %s144, 32, [#allocation2], [#allocation3]
        $region16: #{esa_forward.8} parent=11 // pred_fallthru
          _
        // Predicated region
        $region17: #{esa_forward.8} parent=11 // pred_check
          %p147 = pneg %p93
        $region18: #{esa_forward.8} parent=11 // pred_check_branch
          %149 = sbr.rel (%p147) target = $region20
        $region19: #{esa_forward.8} parent=11 // pred_region
          %s151 = ssub.s32 16, 16
          %152 = vsyncadd [#allocation5], %s151
          %s154 = sshll.u32 %s2, 4
          %s155 = int_to_ptr.vmem [resolvable:$true] %s154
          %157 = dma.vmem_to_smem %s155, 16, [#allocation4], [#allocation5]
        $region20: #{esa_forward.8} parent=11 // pred_fallthru
          _
      $region12: #{esa_forward.8} parent=5 // pred_fallthru
        _
      %p158 = scmp.lt.s32.totalorder %s11, 2
      // Predicated region
      $region21: #{esa_forward.8} parent=5 // pred_check
        %p159 = pneg %p158
      $region22: #{esa_forward.8} parent=5 // pred_check_branch
        %161 = sbr.rel (%p159) target = $region24
      $region23: #{esa_forward.8} parent=5 // pred_region
        // Predicated region
        $region25: #{esa_forward.8} parent=23 // pred_check
          %p162 = pneg %p45
        $region26: #{esa_forward.8} parent=23 // pred_check_branch
          %164 = sbr.rel (%p162) target = $region28
        $region27: #{esa_forward.8} parent=23 // pred_region
          %s165 = sadd.s32 %s18, %s19
          %p166 = scmp.lt.s32.totalorder %s165, 1
          %s167 = scalar_select %p166, %s165, 1
          %s168 = smul.addr %s167, 4
          %s169 = smul.addr %s168, 8
          %s170 = scalar_lea.vmem %s0, %s169
          %s171 = sadd.s32 %s18, %s19
        $region28: #{esa_forward.8} parent=23 // pred_fallthru
          _
      $region24: #{esa_forward.8} parent=5 // pred_fallthru
        _
      %p172 = scmp.le.s32.totalorder 1, %s11
      %p173 = scmp.lt.s32.totalorder %s11, 3
      %p174 = pnand %p172, %p173
      %p175 = pneg %p174
      // Predicated region
      $region29: #{esa_forward.8} parent=5 // pred_check
        _
      $region30: #{esa_forward.8} parent=5 // pred_check_branch
        %177 = sbr.rel (%p174) target = $region32
      $region31: #{esa_forward.8} parent=5 // pred_region
        %s178 = ssub.s32 %s11, 1
        // Predicated region
        $region33: #{esa_forward.8} parent=31 // pred_check
          %p179 = pneg %p72
        $region34: #{esa_forward.8} parent=31 // pred_check_branch
          %181 = sbr.rel (%p179) target = $region36
        $region35: #{esa_forward.8} parent=31 // pred_region
          %182 = dma.done [#allocation3], 32
        $region36: #{esa_forward.8} parent=31 // pred_fallthru
          _
        // Predicated region
        $region37: #{esa_forward.8} parent=31 // pred_check
          %p183 = pneg %p93
        $region38: #{esa_forward.8} parent=31 // pred_check_branch
          %185 = sbr.rel (%p183) target = $region40
        $region39: #{esa_forward.8} parent=31 // pred_region
          %186 = dma.done [#allocation5], 16
        $region40: #{esa_forward.8} parent=31 // pred_fallthru
          _
        %187 = sfence
        %s188 = sadd.s32 %s20, %s21
        %p189 = scmp.lt.s32.totalorder %s188, 1
        %s190 = scalar_select %p189, %s188, 1
        %s191 = smul.addr %s190, 4
        %s192 = smul.addr %s191, 8
        %s193 = scalar_lea.vmem %s0, %s192
        %p194 = pneg %p51
        %p195 = pneg %p48
        %p196 = pneg %p72
        %p197 = pneg %p69
        %p198 = pneg %p93
        %p199 = pneg %p90
        %p200 = pneg %p121
        %p201 = pneg %p118
        %p202 = scmp.lt.s32.totalorder %s20, 1
        %s203 = scalar_select %p202, %s20, 1
        %p204 = scmp.lt.s32.totalorder %s21, 0
        %s205 = scalar_select %p204, %s21, 0
        %s206 = smul.addr %s203, 4
        %s207 = sadd.s32 %s205, %s206
        %s208 = smul.addr %s207, 4
        %s209 = scalar_lea.vmem %s3, %s208
        %s210 = sadd.s32 %s20, %s21
        %p211 = scmp.lt.s32.totalorder %s210, 1
        %s212 = scalar_select %p211, %s210, 1
        %s213 = smul.addr %s212, 4
        %s214 = smul.addr %s213, 8
        %s215 = scalar_lea.vmem %s0, %s214
        %s216 = sadd.s32 %s20, %s21
        %p217 = scmp.lt.s32.totalorder %s20, 1
        %s218 = scalar_select %p217, %s20, 1
        %p219 = scmp.lt.s32.totalorder %s21, 0
        %s220 = scalar_select %p219, %s21, 0
        %s221 = smul.addr %s218, 4
        %s222 = sadd.s32 %s220, %s221
        %s223 = smul.addr %s222, 4
        %s224 = scalar_lea.vmem %s3, %s223
        %s225 = sld [smem:[#allocation4]]
        %v226 = vstv %s225
        %v227 = vadd.f32 %v226, 0.0
        %s228 = sld [smem:[#allocation4 + $0x1]]
        %v229 = vstv %s228
        %v230 = vadd.f32 %v229, 0.0
        %s231 = sld [smem:[#allocation4 + $0x2]]
        %v232 = vstv %s231
        %v233 = vadd.f32 %v232, 0.0
        %s234 = sld [smem:[#allocation4 + $0x3]]
        %v235 = vstv %s234
        %v236 = vadd.f32 %v235, 0.0
        %v237 = vld [vmem:[%s215] sm:$0x7]
        %v238 = vld [vmem:[%s215 + $0x8] sm:$0x7]
        %v239 = vld [vmem:[%s215 + $0x10] sm:$0x7]
        %v240 = vld [vmem:[%s215 + $0x18] sm:$0x7]
        %s241 = sld [smem:[#allocation2]]
        %v242 = vstv %s241
        %v243 = vmul.f32 %v242, %v237
        %v244 = vadd.f32 %v227, %v243
        %s245 = sld [smem:[#allocation2 + $0x24]]
        %v246 = vstv %s245
        %v247 = vmul.f32 %v246, %v237
        %v248 = vadd.f32 %v230, %v247
        %s249 = sld [smem:[#allocation2 + $0x48]]
        %v250 = vstv %s249
        %v251 = vmul.f32 %v250, %v237
        %v252 = vadd.f32 %v233, %v251
        %s253 = sld [smem:[#allocation2 + $0x6c]]
        %v254 = vstv %s253
        %v255 = vmul.f32 %v254, %v237
        %v256 = vadd.f32 %v236, %v255
        %s257 = sld [smem:[#allocation2 + $0x9]]
        %v258 = vstv %s257
        %v259 = vmul.f32 %v258, %v238
        %v260 = vadd.f32 %v244, %v259
        %s261 = sld [smem:[#allocation2 + $0x2d]]
        %v262 = vstv %s261
        %v263 = vmul.f32 %v262, %v238
        %v264 = vadd.f32 %v248, %v263
        %s265 = sld [smem:[#allocation2 + $0x51]]
        %v266 = vstv %s265
        %v267 = vmul.f32 %v266, %v238
        %v268 = vadd.f32 %v252, %v267
        %s269 = sld [smem:[#allocation2 + $0x75]]
        %v270 = vstv %s269
        %v271 = vmul.f32 %v270, %v238
        %v272 = vadd.f32 %v256, %v271
        %s273 = sld [smem:[#allocation2 + $0x12]]
        %v274 = vstv %s273
        %v275 = vmul.f32 %v274, %v239
        %v276 = vadd.f32 %v260, %v275
        %s277 = sld [smem:[#allocation2 + $0x36]]
        %v278 = vstv %s277
        %v279 = vmul.f32 %v278, %v239
        %v280 = vadd.f32 %v264, %v279
        %s281 = sld [smem:[#allocation2 + $0x5a]]
        %v282 = vstv %s281
        %v283 = vmul.f32 %v282, %v239
        %v284 = vadd.f32 %v268, %v283
        %s285 = sld [smem:[#allocation2 + $0x7e]]
        %v286 = vstv %s285
        %v287 = vmul.f32 %v286, %v239
        %v288 = vadd.f32 %v272, %v287
        %s289 = sld [smem:[#allocation2 + $0x1b]]
        %v290 = vstv %s289
        %v291 = vmul.f32 %v290, %v240
        %v292 = vadd.f32 %v276, %v291
        %s293 = sld [smem:[#allocation2 + $0x3f]]
        %v294 = vstv %s293
        %v295 = vmul.f32 %v294, %v240
        %v296 = vadd.f32 %v280, %v295
        %s297 = sld [smem:[#allocation2 + $0x63]]
        %v298 = vstv %s297
        %v299 = vmul.f32 %v298, %v240
        %v300 = vadd.f32 %v284, %v299
        %s301 = sld [smem:[#allocation2 + $0x87]]
        %v302 = vstv %s301
        %v303 = vmul.f32 %v302, %v240
        %v304 = vadd.f32 %v288, %v303
        %s305 = sld [smem:[#allocation2 + $0x1]]
        %v306 = vstv %s305
        %v307 = vmul.f32 %v306, %v237
        %309 = vrot.lane.b32.xlu0 %v307, 127
        %v310 = vpop.permute.xlu0 %309
        %v312 = vadd.f32 %v292, %v310
        %s313 = sld [smem:[#allocation2 + $0x25]]
        %v314 = vstv %s313
        %v315 = vmul.f32 %v314, %v237
        %317 = vrot.lane.b32.xlu0 %v315, 127
        %v318 = vpop.permute.xlu0 %317
        %v320 = vadd.f32 %v296, %v318
        %s321 = sld [smem:[#allocation2 + $0x49]]
        %v322 = vstv %s321
        %v323 = vmul.f32 %v322, %v237
        %325 = vrot.lane.b32.xlu0 %v323, 127
        %v326 = vpop.permute.xlu0 %325
        %v328 = vadd.f32 %v300, %v326
        %s329 = sld [smem:[#allocation2 + $0x6d]]
        %v330 = vstv %s329
        %v331 = vmul.f32 %v330, %v237
        %333 = vrot.lane.b32.xlu0 %v331, 127
        %v334 = vpop.permute.xlu0 %333
        %v336 = vadd.f32 %v304, %v334
        %s337 = sld [smem:[#allocation2 + $0xa]]
        %v338 = vstv %s337
        %v339 = vmul.f32 %v338, %v238
        %341 = vrot.lane.b32.xlu0 %v339, 127
        %v342 = vpop.permute.xlu0 %341
        %v344 = vadd.f32 %v312, %v342
        %s345 = sld [smem:[#allocation2 + $0x2e]]
        %v346 = vstv %s345
        %v347 = vmul.f32 %v346, %v238
        %349 = vrot.lane.b32.xlu0 %v347, 127
        %v350 = vpop.permute.xlu0 %349
        %v352 = vadd.f32 %v320, %v350
        %s353 = sld [smem:[#allocation2 + $0x52]]
        %v354 = vstv %s353
        %v355 = vmul.f32 %v354, %v238
        %357 = vrot.lane.b32.xlu0 %v355, 127
        %v358 = vpop.permute.xlu0 %357
        %v360 = vadd.f32 %v328, %v358
        %s361 = sld [smem:[#allocation2 + $0x76]]
        %v362 = vstv %s361
        %v363 = vmul.f32 %v362, %v238
        %365 = vrot.lane.b32.xlu0 %v363, 127
        %v366 = vpop.permute.xlu0 %365
        %v368 = vadd.f32 %v336, %v366
        %s369 = sld [smem:[#allocation2 + $0x13]]
        %v370 = vstv %s369
        %v371 = vmul.f32 %v370, %v239
        %373 = vrot.lane.b32.xlu0 %v371, 127
        %v374 = vpop.permute.xlu0 %373
        %v376 = vadd.f32 %v344, %v374
        %s377 = sld [smem:[#allocation2 + $0x37]]
        %v378 = vstv %s377
        %v379 = vmul.f32 %v378, %v239
        %381 = vrot.lane.b32.xlu0 %v379, 127
        %v382 = vpop.permute.xlu0 %381
        %v384 = vadd.f32 %v352, %v382
        %s385 = sld [smem:[#allocation2 + $0x5b]]
        %v386 = vstv %s385
        %v387 = vmul.f32 %v386, %v239
        %389 = vrot.lane.b32.xlu0 %v387, 127
        %v390 = vpop.permute.xlu0 %389
        %v392 = vadd.f32 %v360, %v390
        %s393 = sld [smem:[#allocation2 + $0x7f]]
        %v394 = vstv %s393
        %v395 = vmul.f32 %v394, %v239
        %397 = vrot.lane.b32.xlu0 %v395, 127
        %v398 = vpop.permute.xlu0 %397
        %v400 = vadd.f32 %v368, %v398
        %s401 = sld [smem:[#allocation2 + $0x1c]]
        %v402 = vstv %s401
        %v403 = vmul.f32 %v402, %v240
        %405 = vrot.lane.b32.xlu0 %v403, 127
        %v406 = vpop.permute.xlu0 %405
        %v408 = vadd.f32 %v376, %v406
        %s409 = sld [smem:[#allocation2 + $0x40]]
        %v410 = vstv %s409
        %v411 = vmul.f32 %v410, %v240
        %413 = vrot.lane.b32.xlu0 %v411, 127
        %v414 = vpop.permute.xlu0 %413
        %v416 = vadd.f32 %v384, %v414
        %s417 = sld [smem:[#allocation2 + $0x64]]
        %v418 = vstv %s417
        %v419 = vmul.f32 %v418, %v240
        %421 = vrot.lane.b32.xlu0 %v419, 127
        %v422 = vpop.permute.xlu0 %421
        %v424 = vadd.f32 %v392, %v422
        %s425 = sld [smem:[#allocation2 + $0x88]]
        %v426 = vstv %s425
        %v427 = vmul.f32 %v426, %v240
        %429 = vrot.lane.b32.xlu0 %v427, 127
        %v430 = vpop.permute.xlu0 %429
        %v432 = vadd.f32 %v400, %v430
        %s433 = sld [smem:[#allocation2 + $0x2]]
        %v434 = vstv %s433
        %v435 = vmul.f32 %v434, %v237
        %437 = vrot.lane.b32.xlu0 %v435, 126
        %v438 = vpop.permute.xlu0 %437
        %v440 = vadd.f32 %v408, %v438
        %s441 = sld [smem:[#allocation2 + $0x26]]
        %v442 = vstv %s441
        %v443 = vmul.f32 %v442, %v237
        %445 = vrot.lane.b32.xlu0 %v443, 126
        %v446 = vpop.permute.xlu0 %445
        %v448 = vadd.f32 %v416, %v446
        %s449 = sld [smem:[#allocation2 + $0x4a]]
        %v450 = vstv %s449
        %v451 = vmul.f32 %v450, %v237
        %453 = vrot.lane.b32.xlu0 %v451, 126
        %v454 = vpop.permute.xlu0 %453
        %v456 = vadd.f32 %v424, %v454
        %s457 = sld [smem:[#allocation2 + $0x6e]]
        %v458 = vstv %s457
        %v459 = vmul.f32 %v458, %v237
        %461 = vrot.lane.b32.xlu0 %v459, 126
        %v462 = vpop.permute.xlu0 %461
        %v464 = vadd.f32 %v432, %v462
        %s465 = sld [smem:[#allocation2 + $0xb]]
        %v466 = vstv %s465
        %v467 = vmul.f32 %v466, %v238
        %469 = vrot.lane.b32.xlu0 %v467, 126
        %v470 = vpop.permute.xlu0 %469
        %v472 = vadd.f32 %v440, %v470
        %s473 = sld [smem:[#allocation2 + $0x2f]]
        %v474 = vstv %s473
        %v475 = vmul.f32 %v474, %v238
        %477 = vrot.lane.b32.xlu0 %v475, 126
        %v478 = vpop.permute.xlu0 %477
        %v480 = vadd.f32 %v448, %v478
        %s481 = sld [smem:[#allocation2 + $0x53]]
        %v482 = vstv %s481
        %v483 = vmul.f32 %v482, %v238
        %485 = vrot.lane.b32.xlu0 %v483, 126
        %v486 = vpop.permute.xlu0 %485
        %v488 = vadd.f32 %v456, %v486
        %s489 = sld [smem:[#allocation2 + $0x77]]
        %v490 = vstv %s489
        %v491 = vmul.f32 %v490, %v238
        %493 = vrot.lane.b32.xlu0 %v491, 126
        %v494 = vpop.permute.xlu0 %493
        %v496 = vadd.f32 %v464, %v494
        %s497 = sld [smem:[#allocation2 + $0x14]]
        %v498 = vstv %s497
        %v499 = vmul.f32 %v498, %v239
        %501 = vrot.lane.b32.xlu0 %v499, 126
        %v502 = vpop.permute.xlu0 %501
        %v504 = vadd.f32 %v472, %v502
        %s505 = sld [smem:[#allocation2 + $0x38]]
        %v506 = vstv %s505
        %v507 = vmul.f32 %v506, %v239
        %509 = vrot.lane.b32.xlu0 %v507, 126
        %v510 = vpop.permute.xlu0 %509
        %v512 = vadd.f32 %v480, %v510
        %s513 = sld [smem:[#allocation2 + $0x5c]]
        %v514 = vstv %s513
        %v515 = vmul.f32 %v514, %v239
        %517 = vrot.lane.b32.xlu0 %v515, 126
        %v518 = vpop.permute.xlu0 %517
        %v520 = vadd.f32 %v488, %v518
        %s521 = sld [smem:[#allocation2 + $0x80]]
        %v522 = vstv %s521
        %v523 = vmul.f32 %v522, %v239
        %525 = vrot.lane.b32.xlu0 %v523, 126
        %v526 = vpop.permute.xlu0 %525
        %v528 = vadd.f32 %v496, %v526
        %s529 = sld [smem:[#allocation2 + $0x1d]]
        %v530 = vstv %s529
        %v531 = vmul.f32 %v530, %v240
        %533 = vrot.lane.b32.xlu0 %v531, 126
        %v534 = vpop.permute.xlu0 %533
        %v536 = vadd.f32 %v504, %v534
        %s537 = sld [smem:[#allocation2 + $0x41]]
        %v538 = vstv %s537
        %v539 = vmul.f32 %v538, %v240
        %541 = vrot.lane.b32.xlu0 %v539, 126
        %v542 = vpop.permute.xlu0 %541
        %v544 = vadd.f32 %v512, %v542
        %s545 = sld [smem:[#allocation2 + $0x65]]
        %v546 = vstv %s545
        %v547 = vmul.f32 %v546, %v240
        %549 = vrot.lane.b32.xlu0 %v547, 126
        %v550 = vpop.permute.xlu0 %549
        %v552 = vadd.f32 %v520, %v550
        %s553 = sld [smem:[#allocation2 + $0x89]]
        %v554 = vstv %s553
        %v555 = vmul.f32 %v554, %v240
        %557 = vrot.lane.b32.xlu0 %v555, 126
        %v558 = vpop.permute.xlu0 %557
        %v560 = vadd.f32 %v528, %v558
        %v561 = vld [vmem:[%s215 + $0x1] sm:$0x7]
        %v562 = vld [vmem:[%s215 + $0x9] sm:$0x7]
        %v563 = vld [vmem:[%s215 + $0x11] sm:$0x7]
        %v564 = vld [vmem:[%s215 + $0x19] sm:$0x7]
        %s565 = sld [smem:[#allocation2 + $0x3]]
        %v566 = vstv %s565
        %v567 = vmul.f32 %v566, %v561
        %v568 = vadd.f32 %v536, %v567
        %s569 = sld [smem:[#allocation2 + $0x27]]
        %v570 = vstv %s569
        %v571 = vmul.f32 %v570, %v561
        %v572 = vadd.f32 %v544, %v571
        %s573 = sld [smem:[#allocation2 + $0x4b]]
        %v574 = vstv %s573
        %v575 = vmul.f32 %v574, %v561
        %v576 = vadd.f32 %v552, %v575
        %s577 = sld [smem:[#allocation2 + $0x6f]]
        %v578 = vstv %s577
        %v579 = vmul.f32 %v578, %v561
        %v580 = vadd.f32 %v560, %v579
        %s581 = sld [smem:[#allocation2 + $0xc]]
        %v582 = vstv %s581
        %v583 = vmul.f32 %v582, %v562
        %v584 = vadd.f32 %v568, %v583
        %s585 = sld [smem:[#allocation2 + $0x30]]
        %v586 = vstv %s585
        %v587 = vmul.f32 %v586, %v562
        %v588 = vadd.f32 %v572, %v587
        %s589 = sld [smem:[#allocation2 + $0x54]]
        %v590 = vstv %s589
        %v591 = vmul.f32 %v590, %v562
        %v592 = vadd.f32 %v576, %v591
        %s593 = sld [smem:[#allocation2 + $0x78]]
        %v594 = vstv %s593
        %v595 = vmul.f32 %v594, %v562
        %v596 = vadd.f32 %v580, %v595
        %s597 = sld [smem:[#allocation2 + $0x15]]
        %v598 = vstv %s597
        %v599 = vmul.f32 %v598, %v563
        %v600 = vadd.f32 %v584, %v599
        %s601 = sld [smem:[#allocation2 + $0x39]]
        %v602 = vstv %s601
        %v603 = vmul.f32 %v602, %v563
        %v604 = vadd.f32 %v588, %v603
        %s605 = sld [smem:[#allocation2 + $0x5d]]
        %v606 = vstv %s605
        %v607 = vmul.f32 %v606, %v563
        %v608 = vadd.f32 %v592, %v607
        %s609 = sld [smem:[#allocation2 + $0x81]]
        %v610 = vstv %s609
        %v611 = vmul.f32 %v610, %v563
        %v612 = vadd.f32 %v596, %v611
        %s613 = sld [smem:[#allocation2 + $0x1e]]
        %v614 = vstv %s613
        %v615 = vmul.f32 %v614, %v564
        %v616 = vadd.f32 %v600, %v615
        %s617 = sld [smem:[#allocation2 + $0x42]]
        %v618 = vstv %s617
        %v619 = vmul.f32 %v618, %v564
        %v620 = vadd.f32 %v604, %v619
        %s621 = sld [smem:[#allocation2 + $0x66]]
        %v622 = vstv %s621
        %v623 = vmul.f32 %v622, %v564
        %v624 = vadd.f32 %v608, %v623
        %s625 = sld [smem:[#allocation2 + $0x8a]]
        %v626 = vstv %s625
        %v627 = vmul.f32 %v626, %v564
        %v628 = vadd.f32 %v612, %v627
        %s629 = sld [smem:[#allocation2 + $0x4]]
        %v630 = vstv %s629
        %v631 = vmul.f32 %v630, %v561
        %633 = vrot.lane.b32.xlu0 %v631, 127
        %v634 = vpop.permute.xlu0 %633
        %v636 = vadd.f32 %v616, %v634
        %s637 = sld [smem:[#allocation2 + $0x28]]
        %v638 = vstv %s637
        %v639 = vmul.f32 %v638, %v561
        %641 = vrot.lane.b32.xlu0 %v639, 127
        %v642 = vpop.permute.xlu0 %641
        %v644 = vadd.f32 %v620, %v642
        %s645 = sld [smem:[#allocation2 + $0x4c]]
        %v646 = vstv %s645
        %v647 = vmul.f32 %v646, %v561
        %649 = vrot.lane.b32.xlu0 %v647, 127
        %v650 = vpop.permute.xlu0 %649
        %v652 = vadd.f32 %v624, %v650
        %s653 = sld [smem:[#allocation2 + $0x70]]
        %v654 = vstv %s653
        %v655 = vmul.f32 %v654, %v561
        %657 = vrot.lane.b32.xlu0 %v655, 127
        %v658 = vpop.permute.xlu0 %657
        %v660 = vadd.f32 %v628, %v658
        %s661 = sld [smem:[#allocation2 + $0xd]]
        %v662 = vstv %s661
        %v663 = vmul.f32 %v662, %v562
        %665 = vrot.lane.b32.xlu0 %v663, 127
        %v666 = vpop.permute.xlu0 %665
        %v668 = vadd.f32 %v636, %v666
        %s669 = sld [smem:[#allocation2 + $0x31]]
        %v670 = vstv %s669
        %v671 = vmul.f32 %v670, %v562
        %673 = vrot.lane.b32.xlu0 %v671, 127
        %v674 = vpop.permute.xlu0 %673
        %v676 = vadd.f32 %v644, %v674
        %s677 = sld [smem:[#allocation2 + $0x55]]
        %v678 = vstv %s677
        %v679 = vmul.f32 %v678, %v562
        %681 = vrot.lane.b32.xlu0 %v679, 127
        %v682 = vpop.permute.xlu0 %681
        %v684 = vadd.f32 %v652, %v682
        %s685 = sld [smem:[#allocation2 + $0x79]]
        %v686 = vstv %s685
        %v687 = vmul.f32 %v686, %v562
        %689 = vrot.lane.b32.xlu0 %v687, 127
        %v690 = vpop.permute.xlu0 %689
        %v692 = vadd.f32 %v660, %v690
        %s693 = sld [smem:[#allocation2 + $0x16]]
        %v694 = vstv %s693
        %v695 = vmul.f32 %v694, %v563
        %697 = vrot.lane.b32.xlu0 %v695, 127
        %v698 = vpop.permute.xlu0 %697
        %v700 = vadd.f32 %v668, %v698
        %s701 = sld [smem:[#allocation2 + $0x3a]]
        %v702 = vstv %s701
        %v703 = vmul.f32 %v702, %v563
        %705 = vrot.lane.b32.xlu0 %v703, 127
        %v706 = vpop.permute.xlu0 %705
        %v708 = vadd.f32 %v676, %v706
        %s709 = sld [smem:[#allocation2 + $0x5e]]
        %v710 = vstv %s709
        %v711 = vmul.f32 %v710, %v563
        %713 = vrot.lane.b32.xlu0 %v711, 127
        %v714 = vpop.permute.xlu0 %713
        %v716 = vadd.f32 %v684, %v714
        %s717 = sld [smem:[#allocation2 + $0x82]]
        %v718 = vstv %s717
        %v719 = vmul.f32 %v718, %v563
        %721 = vrot.lane.b32.xlu0 %v719, 127
        %v722 = vpop.permute.xlu0 %721
        %v724 = vadd.f32 %v692, %v722
        %s725 = sld [smem:[#allocation2 + $0x1f]]
        %v726 = vstv %s725
        %v727 = vmul.f32 %v726, %v564
        %729 = vrot.lane.b32.xlu0 %v727, 127
        %v730 = vpop.permute.xlu0 %729
        %v732 = vadd.f32 %v700, %v730
        %s733 = sld [smem:[#allocation2 + $0x43]]
        %v734 = vstv %s733
        %v735 = vmul.f32 %v734, %v564
        %737 = vrot.lane.b32.xlu0 %v735, 127
        %v738 = vpop.permute.xlu0 %737
        %v740 = vadd.f32 %v708, %v738
        %s741 = sld [smem:[#allocation2 + $0x67]]
        %v742 = vstv %s741
        %v743 = vmul.f32 %v742, %v564
        %745 = vrot.lane.b32.xlu0 %v743, 127
        %v746 = vpop.permute.xlu0 %745
        %v748 = vadd.f32 %v716, %v746
        %s749 = sld [smem:[#allocation2 + $0x8b]]
        %v750 = vstv %s749
        %v751 = vmul.f32 %v750, %v564
        %753 = vrot.lane.b32.xlu0 %v751, 127
        %v754 = vpop.permute.xlu0 %753
        %v756 = vadd.f32 %v724, %v754
        %s757 = sld [smem:[#allocation2 + $0x5]]
        %v758 = vstv %s757
        %v759 = vmul.f32 %v758, %v561
        %761 = vrot.lane.b32.xlu0 %v759, 126
        %v762 = vpop.permute.xlu0 %761
        %v764 = vadd.f32 %v732, %v762
        %s765 = sld [smem:[#allocation2 + $0x29]]
        %v766 = vstv %s765
        %v767 = vmul.f32 %v766, %v561
        %769 = vrot.lane.b32.xlu0 %v767, 126
        %v770 = vpop.permute.xlu0 %769
        %v772 = vadd.f32 %v740, %v770
        %s773 = sld [smem:[#allocation2 + $0x4d]]
        %v774 = vstv %s773
        %v775 = vmul.f32 %v774, %v561
        %777 = vrot.lane.b32.xlu0 %v775, 126
        %v778 = vpop.permute.xlu0 %777
        %v780 = vadd.f32 %v748, %v778
        %s781 = sld [smem:[#allocation2 + $0x71]]
        %v782 = vstv %s781
        %v783 = vmul.f32 %v782, %v561
        %785 = vrot.lane.b32.xlu0 %v783, 126
        %v786 = vpop.permute.xlu0 %785
        %v788 = vadd.f32 %v756, %v786
        %s789 = sld [smem:[#allocation2 + $0xe]]
        %v790 = vstv %s789
        %v791 = vmul.f32 %v790, %v562
        %793 = vrot.lane.b32.xlu0 %v791, 126
        %v794 = vpop.permute.xlu0 %793
        %v796 = vadd.f32 %v764, %v794
        %s797 = sld [smem:[#allocation2 + $0x32]]
        %v798 = vstv %s797
        %v799 = vmul.f32 %v798, %v562
        %801 = vrot.lane.b32.xlu0 %v799, 126
        %v802 = vpop.permute.xlu0 %801
        %v804 = vadd.f32 %v772, %v802
        %s805 = sld [smem:[#allocation2 + $0x56]]
        %v806 = vstv %s805
        %v807 = vmul.f32 %v806, %v562
        %809 = vrot.lane.b32.xlu0 %v807, 126
        %v810 = vpop.permute.xlu0 %809
        %v812 = vadd.f32 %v780, %v810
        %s813 = sld [smem:[#allocation2 + $0x7a]]
        %v814 = vstv %s813
        %v815 = vmul.f32 %v814, %v562
        %817 = vrot.lane.b32.xlu0 %v815, 126
        %v818 = vpop.permute.xlu0 %817
        %v820 = vadd.f32 %v788, %v818
        %s821 = sld [smem:[#allocation2 + $0x17]]
        %v822 = vstv %s821
        %v823 = vmul.f32 %v822, %v563
        %825 = vrot.lane.b32.xlu0 %v823, 126
        %v826 = vpop.permute.xlu0 %825
        %v828 = vadd.f32 %v796, %v826
        %s829 = sld [smem:[#allocation2 + $0x3b]]
        %v830 = vstv %s829
        %v831 = vmul.f32 %v830, %v563
        %833 = vrot.lane.b32.xlu0 %v831, 126
        %v834 = vpop.permute.xlu0 %833
        %v836 = vadd.f32 %v804, %v834
        %s837 = sld [smem:[#allocation2 + $0x5f]]
        %v838 = vstv %s837
        %v839 = vmul.f32 %v838, %v563
        %841 = vrot.lane.b32.xlu0 %v839, 126
        %v842 = vpop.permute.xlu0 %841
        %v844 = vadd.f32 %v812, %v842
        %s845 = sld [smem:[#allocation2 + $0x83]]
        %v846 = vstv %s845
        %v847 = vmul.f32 %v846, %v563
        %849 = vrot.lane.b32.xlu0 %v847, 126
        %v850 = vpop.permute.xlu0 %849
        %v852 = vadd.f32 %v820, %v850
        %s853 = sld [smem:[#allocation2 + $0x20]]
        %v854 = vstv %s853
        %v855 = vmul.f32 %v854, %v564
        %857 = vrot.lane.b32.xlu0 %v855, 126
        %v858 = vpop.permute.xlu0 %857
        %v860 = vadd.f32 %v828, %v858
        %s861 = sld [smem:[#allocation2 + $0x44]]
        %v862 = vstv %s861
        %v863 = vmul.f32 %v862, %v564
        %865 = vrot.lane.b32.xlu0 %v863, 126
        %v866 = vpop.permute.xlu0 %865
        %v868 = vadd.f32 %v836, %v866
        %s869 = sld [smem:[#allocation2 + $0x68]]
        %v870 = vstv %s869
        %v871 = vmul.f32 %v870, %v564
        %873 = vrot.lane.b32.xlu0 %v871, 126
        %v874 = vpop.permute.xlu0 %873
        %v876 = vadd.f32 %v844, %v874
        %s877 = sld [smem:[#allocation2 + $0x8c]]
        %v878 = vstv %s877
        %v879 = vmul.f32 %v878, %v564
        %881 = vrot.lane.b32.xlu0 %v879, 126
        %v882 = vpop.permute.xlu0 %881
        %v884 = vadd.f32 %v852, %v882
        %v885 = vld [vmem:[%s215 + $0x2] sm:$0x7]
        %v886 = vld [vmem:[%s215 + $0xa] sm:$0x7]
        %v887 = vld [vmem:[%s215 + $0x12] sm:$0x7]
        %v888 = vld [vmem:[%s215 + $0x1a] sm:$0x7]
        %s889 = sld [smem:[#allocation2 + $0x6]]
        %v890 = vstv %s889
        %v891 = vmul.f32 %v890, %v885
        %v892 = vadd.f32 %v860, %v891
        %s893 = sld [smem:[#allocation2 + $0x2a]]
        %v894 = vstv %s893
        %v895 = vmul.f32 %v894, %v885
        %v896 = vadd.f32 %v868, %v895
        %s897 = sld [smem:[#allocation2 + $0x4e]]
        %v898 = vstv %s897
        %v899 = vmul.f32 %v898, %v885
        %v900 = vadd.f32 %v876, %v899
        %s901 = sld [smem:[#allocation2 + $0x72]]
        %v902 = vstv %s901
        %v903 = vmul.f32 %v902, %v885
        %v904 = vadd.f32 %v884, %v903
        %s905 = sld [smem:[#allocation2 + $0xf]]
        %v906 = vstv %s905
        %v907 = vmul.f32 %v906, %v886
        %v908 = vadd.f32 %v892, %v907
        %s909 = sld [smem:[#allocation2 + $0x33]]
        %v910 = vstv %s909
        %v911 = vmul.f32 %v910, %v886
        %v912 = vadd.f32 %v896, %v911
        %s913 = sld [smem:[#allocation2 + $0x57]]
        %v914 = vstv %s913
        %v915 = vmul.f32 %v914, %v886
        %v916 = vadd.f32 %v900, %v915
        %s917 = sld [smem:[#allocation2 + $0x7b]]
        %v918 = vstv %s917
        %v919 = vmul.f32 %v918, %v886
        %v920 = vadd.f32 %v904, %v919
        %s921 = sld [smem:[#allocation2 + $0x18]]
        %v922 = vstv %s921
        %v923 = vmul.f32 %v922, %v887
        %v924 = vadd.f32 %v908, %v923
        %s925 = sld [smem:[#allocation2 + $0x3c]]
        %v926 = vstv %s925
        %v927 = vmul.f32 %v926, %v887
        %v928 = vadd.f32 %v912, %v927
        %s929 = sld [smem:[#allocation2 + $0x60]]
        %v930 = vstv %s929
        %v931 = vmul.f32 %v930, %v887
        %v932 = vadd.f32 %v916, %v931
        %s933 = sld [smem:[#allocation2 + $0x84]]
        %v934 = vstv %s933
        %v935 = vmul.f32 %v934, %v887
        %v936 = vadd.f32 %v920, %v935
        %s937 = sld [smem:[#allocation2 + $0x21]]
        %v938 = vstv %s937
        %v939 = vmul.f32 %v938, %v888
        %v940 = vadd.f32 %v924, %v939
        %s941 = sld [smem:[#allocation2 + $0x45]]
        %v942 = vstv %s941
        %v943 = vmul.f32 %v942, %v888
        %v944 = vadd.f32 %v928, %v943
        %s945 = sld [smem:[#allocation2 + $0x69]]
        %v946 = vstv %s945
        %v947 = vmul.f32 %v946, %v888
        %v948 = vadd.f32 %v932, %v947
        %s949 = sld [smem:[#allocation2 + $0x8d]]
        %v950 = vstv %s949
        %v951 = vmul.f32 %v950, %v888
        %v952 = vadd.f32 %v936, %v951
        %s953 = sld [smem:[#allocation2 + $0x7]]
        %v954 = vstv %s953
        %v955 = vmul.f32 %v954, %v885
        %957 = vrot.lane.b32.xlu0 %v955, 127
        %v958 = vpop.permute.xlu0 %957
        %v960 = vadd.f32 %v940, %v958
        %s961 = sld [smem:[#allocation2 + $0x2b]]
        %v962 = vstv %s961
        %v963 = vmul.f32 %v962, %v885
        %965 = vrot.lane.b32.xlu0 %v963, 127
        %v966 = vpop.permute.xlu0 %965
        %v968 = vadd.f32 %v944, %v966
        %s969 = sld [smem:[#allocation2 + $0x4f]]
        %v970 = vstv %s969
        %v971 = vmul.f32 %v970, %v885
        %973 = vrot.lane.b32.xlu0 %v971, 127
        %v974 = vpop.permute.xlu0 %973
        %v976 = vadd.f32 %v948, %v974
        %s977 = sld [smem:[#allocation2 + $0x73]]
        %v978 = vstv %s977
        %v979 = vmul.f32 %v978, %v885
        %981 = vrot.lane.b32.xlu0 %v979, 127
        %v982 = vpop.permute.xlu0 %981
        %v984 = vadd.f32 %v952, %v982
        %s985 = sld [smem:[#allocation2 + $0x10]]
        %v986 = vstv %s985
        %v987 = vmul.f32 %v986, %v886
        %989 = vrot.lane.b32.xlu0 %v987, 127
        %v990 = vpop.permute.xlu0 %989
        %v992 = vadd.f32 %v960, %v990
        %s993 = sld [smem:[#allocation2 + $0x34]]
        %v994 = vstv %s993
        %v995 = vmul.f32 %v994, %v886
        %997 = vrot.lane.b32.xlu0 %v995, 127
        %v998 = vpop.permute.xlu0 %997
        %v1000 = vadd.f32 %v968, %v998
        %s1001 = sld [smem:[#allocation2 + $0x58]]
        %v1002 = vstv %s1001
        %v1003 = vmul.f32 %v1002, %v886
        %1005 = vrot.lane.b32.xlu0 %v1003, 127
        %v1006 = vpop.permute.xlu0 %1005
        %v1008 = vadd.f32 %v976, %v1006
        %s1009 = sld [smem:[#allocation2 + $0x7c]]
        %v1010 = vstv %s1009
        %v1011 = vmul.f32 %v1010, %v886
        %1013 = vrot.lane.b32.xlu0 %v1011, 127
        %v1014 = vpop.permute.xlu0 %1013
        %v1016 = vadd.f32 %v984, %v1014
        %s1017 = sld [smem:[#allocation2 + $0x19]]
        %v1018 = vstv %s1017
        %v1019 = vmul.f32 %v1018, %v887
        %1021 = vrot.lane.b32.xlu0 %v1019, 127
        %v1022 = vpop.permute.xlu0 %1021
        %v1024 = vadd.f32 %v992, %v1022
        %s1025 = sld [smem:[#allocation2 + $0x3d]]
        %v1026 = vstv %s1025
        %v1027 = vmul.f32 %v1026, %v887
        %1029 = vrot.lane.b32.xlu0 %v1027, 127
        %v1030 = vpop.permute.xlu0 %1029
        %v1032 = vadd.f32 %v1000, %v1030
        %s1033 = sld [smem:[#allocation2 + $0x61]]
        %v1034 = vstv %s1033
        %v1035 = vmul.f32 %v1034, %v887
        %1037 = vrot.lane.b32.xlu0 %v1035, 127
        %v1038 = vpop.permute.xlu0 %1037
        %v1040 = vadd.f32 %v1008, %v1038
        %s1041 = sld [smem:[#allocation2 + $0x85]]
        %v1042 = vstv %s1041
        %v1043 = vmul.f32 %v1042, %v887
        %1045 = vrot.lane.b32.xlu0 %v1043, 127
        %v1046 = vpop.permute.xlu0 %1045
        %v1048 = vadd.f32 %v1016, %v1046
        %s1049 = sld [smem:[#allocation2 + $0x22]]
        %v1050 = vstv %s1049
        %v1051 = vmul.f32 %v1050, %v888
        %1053 = vrot.lane.b32.xlu0 %v1051, 127
        %v1054 = vpop.permute.xlu0 %1053
        %v1056 = vadd.f32 %v1024, %v1054
        %s1057 = sld [smem:[#allocation2 + $0x46]]
        %v1058 = vstv %s1057
        %v1059 = vmul.f32 %v1058, %v888
        %1061 = vrot.lane.b32.xlu0 %v1059, 127
        %v1062 = vpop.permute.xlu0 %1061
        %v1064 = vadd.f32 %v1032, %v1062
        %s1065 = sld [smem:[#allocation2 + $0x6a]]
        %v1066 = vstv %s1065
        %v1067 = vmul.f32 %v1066, %v888
        %1069 = vrot.lane.b32.xlu0 %v1067, 127
        %v1070 = vpop.permute.xlu0 %1069
        %v1072 = vadd.f32 %v1040, %v1070
        %s1073 = sld [smem:[#allocation2 + $0x8e]]
        %v1074 = vstv %s1073
        %v1075 = vmul.f32 %v1074, %v888
        %1077 = vrot.lane.b32.xlu0 %v1075, 127
        %v1078 = vpop.permute.xlu0 %1077
        %v1080 = vadd.f32 %v1048, %v1078
        %s1081 = sld [smem:[#allocation2 + $0x8]]
        %v1082 = vstv %s1081
        %v1083 = vmul.f32 %v1082, %v885
        %1085 = vrot.lane.b32.xlu0 %v1083, 126
        %v1086 = vpop.permute.xlu0 %1085
        %v1088 = vadd.f32 %v1056, %v1086
        %s1089 = sld [smem:[#allocation2 + $0x2c]]
        %v1090 = vstv %s1089
        %v1091 = vmul.f32 %v1090, %v885
        %1093 = vrot.lane.b32.xlu0 %v1091, 126
        %v1094 = vpop.permute.xlu0 %1093
        %v1096 = vadd.f32 %v1064, %v1094
        %s1097 = sld [smem:[#allocation2 + $0x50]]
        %v1098 = vstv %s1097
        %v1099 = vmul.f32 %v1098, %v885
        %1101 = vrot.lane.b32.xlu0 %v1099, 126
        %v1102 = vpop.permute.xlu0 %1101
        %v1104 = vadd.f32 %v1072, %v1102
        %s1105 = sld [smem:[#allocation2 + $0x74]]
        %v1106 = vstv %s1105
        %v1107 = vmul.f32 %v1106, %v885
        %1109 = vrot.lane.b32.xlu0 %v1107, 126
        %v1110 = vpop.permute.xlu0 %1109
        %v1112 = vadd.f32 %v1080, %v1110
        %s1113 = sld [smem:[#allocation2 + $0x11]]
        %v1114 = vstv %s1113
        %v1115 = vmul.f32 %v1114, %v886
        %1117 = vrot.lane.b32.xlu0 %v1115, 126
        %v1118 = vpop.permute.xlu0 %1117
        %v1120 = vadd.f32 %v1088, %v1118
        %s1121 = sld [smem:[#allocation2 + $0x35]]
        %v1122 = vstv %s1121
        %v1123 = vmul.f32 %v1122, %v886
        %1125 = vrot.lane.b32.xlu0 %v1123, 126
        %v1126 = vpop.permute.xlu0 %1125
        %v1128 = vadd.f32 %v1096, %v1126
        %s1129 = sld [smem:[#allocation2 + $0x59]]
        %v1130 = vstv %s1129
        %v1131 = vmul.f32 %v1130, %v886
        %1133 = vrot.lane.b32.xlu0 %v1131, 126
        %v1134 = vpop.permute.xlu0 %1133
        %v1136 = vadd.f32 %v1104, %v1134
        %s1137 = sld [smem:[#allocation2 + $0x7d]]
        %v1138 = vstv %s1137
        %v1139 = vmul.f32 %v1138, %v886
        %1141 = vrot.lane.b32.xlu0 %v1139, 126
        %v1142 = vpop.permute.xlu0 %1141
        %v1144 = vadd.f32 %v1112, %v1142
        %s1145 = sld [smem:[#allocation2 + $0x1a]]
        %v1146 = vstv %s1145
        %v1147 = vmul.f32 %v1146, %v887
        %1149 = vrot.lane.b32.xlu0 %v1147, 126
        %v1150 = vpop.permute.xlu0 %1149
        %v1152 = vadd.f32 %v1120, %v1150
        %s1153 = sld [smem:[#allocation2 + $0x3e]]
        %v1154 = vstv %s1153
        %v1155 = vmul.f32 %v1154, %v887
        %1157 = vrot.lane.b32.xlu0 %v1155, 126
        %v1158 = vpop.permute.xlu0 %1157
        %v1160 = vadd.f32 %v1128, %v1158
        %s1161 = sld [smem:[#allocation2 + $0x62]]
        %v1162 = vstv %s1161
        %v1163 = vmul.f32 %v1162, %v887
        %1165 = vrot.lane.b32.xlu0 %v1163, 126
        %v1166 = vpop.permute.xlu0 %1165
        %v1168 = vadd.f32 %v1136, %v1166
        %s1169 = sld [smem:[#allocation2 + $0x86]]
        %v1170 = vstv %s1169
        %v1171 = vmul.f32 %v1170, %v887
        %1173 = vrot.lane.b32.xlu0 %v1171, 126
        %v1174 = vpop.permute.xlu0 %1173
        %v1176 = vadd.f32 %v1144, %v1174
        %s1177 = sld [smem:[#allocation2 + $0x23]]
        %v1178 = vstv %s1177
        %v1179 = vmul.f32 %v1178, %v888
        %1181 = vrot.lane.b32.xlu0 %v1179, 126
        %v1182 = vpop.permute.xlu0 %1181
        %v1184 = vadd.f32 %v1152, %v1182
        %s1185 = sld [smem:[#allocation2 + $0x47]]
        %v1186 = vstv %s1185
        %v1187 = vmul.f32 %v1186, %v888
        %1189 = vrot.lane.b32.xlu0 %v1187, 126
        %v1190 = vpop.permute.xlu0 %1189
        %v1192 = vadd.f32 %v1160, %v1190
        %s1193 = sld [smem:[#allocation2 + $0x6b]]
        %v1194 = vstv %s1193
        %v1195 = vmul.f32 %v1194, %v888
        %1197 = vrot.lane.b32.xlu0 %v1195, 126
        %v1198 = vpop.permute.xlu0 %1197
        %v1200 = vadd.f32 %v1168, %v1198
        %s1201 = sld [smem:[#allocation2 + $0x8f]]
        %v1202 = vstv %s1201
        %v1203 = vmul.f32 %v1202, %v888
        %1205 = vrot.lane.b32.xlu0 %v1203, 126
        %v1206 = vpop.permute.xlu0 %1205
        %v1208 = vadd.f32 %v1176, %v1206
        %vm1209 = vcmask 18432
        %1210 = vst.msk [vmem:[%s224] sm:$0x7] %vm1209, %v1184
        %s1211 = scalar_lea.vmem %s224, 4
        %1212 = vst.msk [vmem:[%s1211] sm:$0x7] %vm1209, %v1192
        %s1213 = scalar_lea.vmem %s224, 8
        %1214 = vst.msk [vmem:[%s1213] sm:$0x7] %vm1209, %v1200
        %s1215 = scalar_lea.vmem %s224, 12
        %1216 = vst.msk [vmem:[%s1215] sm:$0x7] %vm1209, %v1208
        %p1217 = scmp.lt.s32.totalorder %s20, 1
        %s1218 = scalar_select %p1217, %s20, 1
        %p1219 = scmp.lt.s32.totalorder %s21, 0
        %s1220 = scalar_select %p1219, %s21, 0
        %s1221 = smul.addr %s1218, 4
        %s1222 = sadd.s32 %s1220, %s1221
        %s1223 = smul.addr %s1222, 4
        %s1224 = scalar_lea.vmem %s3, %s1223
        // Predicated region
        $region41: #{esa_forward.8} parent=31 // pred_check
          %p1225 = pneg %p118
        $region42: #{esa_forward.8} parent=31 // pred_check_branch
          %1227 = sbr.rel (%p1225) target = $region44
        $region43: #{esa_forward.8} parent=31 // pred_region
          _
        $region44: #{esa_forward.8} parent=31 // pred_fallthru
          _
      $region32: #{esa_forward.8} parent=5 // pred_fallthru
        _
      %p1228 = scmp.le.s32.totalorder 2, %s11
      // Predicated region
      $region45: #{esa_forward.8} parent=5 // pred_check
        %p1229 = pneg %p1228
      $region46: #{esa_forward.8} parent=5 // pred_check_branch
        %1231 = sbr.rel (%p1229) target = $region48
      $region47: #{esa_forward.8} parent=5 // pred_region
        %s1232 = ssub.s32 %s11, 2
        // Predicated region
        $region49: #{esa_forward.8} parent=47 // pred_check
          %p1233 = pneg %p124
        $region50: #{esa_forward.8} parent=47 // pred_check_branch
          %1235 = sbr.rel (%p1233) target = $region52
        $region51: #{esa_forward.8} parent=47 // pred_region
          %p1236 = scmp.lt.s32.totalorder %s22, 1
          %s1237 = scalar_select %p1236, %s22, 1
          %p1238 = scmp.lt.s32.totalorder %s23, 0
          %s1239 = scalar_select %p1238, %s23, 0
          %s1240 = smul.addr %s1237, 4
          %s1241 = sadd.s32 %s1239, %s1240
          %s1242 = smul.addr %s1241, 4
          %s1243 = scalar_lea.vmem %s3, %s1242
        $region52: #{esa_forward.8} parent=47 // pred_fallthru
          _
      $region48: #{esa_forward.8} parent=5 // pred_fallthru
        _
    $region6: #{esa_forward.8} parent=1 // loop_footer
      %s15 = sadd.s32 1, %s11
    $region7: #{esa_forward.8} parent=1 // loop_footer_branch
      %10 = sbr.rel target = $region3
    $region8: #{esa_forward.8} parent=1 // loop_exit
      _
    %1244 = vsyncpa [#allocation3], 1
    %s1245 = scalar_lea.sflag [#allocation3], 1
    %1246 = vsyncpa %s1245, 1
    %1247 = vsyncpa [#allocation5], 1

// kernel: esa_forward.9
$region0: #{esa_forward.9}
  #allocation0 [shape = 'u32[]', space=smem, size = 0x4, offset = 0x4, fixed_abs, tag = 'smem constant byte address 0x4 - core index']
  #allocation1 [shape = 'u32[144,128]{1,0:T(1,128)}', space=vmem, size = 0x12000, scoped, tag = 'internal scratch']
  %s0 = inlined_call_operand.vmem [shape: f32[2,8,32,32], index: 0, kind: input, shape index: {}]
  %s1 = inlined_call_operand.vmem [shape: f32[2,4,32,32], index: 1, kind: input, shape index: {}]
  %s2 = inlined_call_operand.vmem [shape: f32[2,3,24], index: 2, kind: input, shape index: {}]
  %s3 = inlined_call_operand.vmem [shape: f32[32,3], index: 3, kind: input, shape index: {}]
  %s4 = inlined_call_operand.vmem [shape: f32[3,32], index: 4, kind: input, shape index: {}]
  %s5 = inlined_call_operand.vmem [shape: f32[32], index: 5, kind: input, shape index: {}]
  %s6 = inlined_call_operand.vmem [shape: f32[8], index: 6, kind: input, shape index: {}]
  %s7 = inlined_call_operand.hbm [shape: f32[2,8,32,32], index: 7, kind: output, shape index: {}]
  %s8 = sld [smem:[#allocation0]]
  $region69: #{esa_forward.9} parent=0
    _
  %s10 = ssub.s32 1, %s8
  %s11 = scalar_select 0, %s10, %s8
  $region1: #{esa_forward.9} parent=0
    #allocation2 [shape = 'u8[512]{0}', space=smem, size = 0x200, scoped, tag = 'input window, operand 5, single buffered']
    #allocation3 [shape = 's32[2]{0}', space=sflag, size = 0x8, scoped, tag = 'scoped memory for esa_forward.9']
    #allocation4 [shape = 's32[2]{0}', space=sflag, size = 0x8, scoped, tag = 'scoped memory for esa_forward.9']
    #allocation5 [shape = 'u8[512]{0}', space=smem, size = 0x200, scoped, tag = 'input window, operand 6, single buffered']
    #allocation6 [shape = 's32[1]{0}', space=sflag, size = 0x4, scoped, tag = 'scoped memory for esa_forward.9']
    #allocation7 [shape = 'u8[262144]{0}', space=vmem, size = 0x40000, scoped, tag = 'output window, operand 0']
    %12 = vsyncpa [#allocation4], 0
    %13 = vsyncpa [#allocation6], 0
    %14 = vsyncpa [#allocation3], 0
    %s15 = scalar_lea.sflag [#allocation3], 1
    %16 = vsyncpa %s15, 0
    loop: start=0, step=1, limit=4
    $region2: #{esa_forward.9} parent=1 // loop_pre_header
      _
    $region3: #{esa_forward.9} parent=1 // loop_header
      %s18 = sphi 0, %s22
      %p19 = scmp.ge.s32.totalorder %s18, 4
      %s25 = sphi 0, %s37
      %s26 = sphi 0, %s33
      %s27 = sphi 0, %s25
      %s28 = sphi 0, %s26
      %s29 = sphi 0, %s27
      %s30 = sphi 0, %s28
      %s42 = sphi 0, %s44
      %s45 = sphi 0, %s42
      %s46 = sphi 0, %s45
      %s62 = sphi 0, %s46
      %s70 = sphi 0, %s72
      %s73 = sphi 0, %s70
      %s74 = sphi 0, %s73
      %s90 = sphi 0, %s74
      %s96 = sphi 0, %s98
      %s99 = sphi 0, %s96
      %s100 = sphi 0, %s99
      %s116 = sphi 0, %s100
      %s122 = sphi 0, %s124
      %s125 = sphi 0, %s122
      %s126 = sphi 0, %s125
      %s142 = sphi 0, %s126
      %s146 = sphi 0, %s146
      %s148 = sphi 0, %s146
      %s149 = sphi 0, %s148
      %s163 = sphi 0, %s149
      %s167 = sphi 0, %s167
      %s169 = sphi 0, %s167
      %s170 = sphi 0, %s169
      %s184 = sphi 0, %s170
      %s188 = sphi 0, %s188
      %s190 = sphi 0, %s188
      %s191 = sphi 0, %s190
      %s205 = sphi 0, %s191
      %s213 = sphi 0, %s215
      %s216 = sphi 0, %s213
      %s217 = sphi 0, %s216
      %s233 = sphi 0, %s217
    $region4: #{esa_forward.9} parent=1 // loop_header_branch
      %21 = sbr.rel (%p19) target = $region8
    $region5: #{esa_forward.9} parent=1 // loop_body
      %s23 = ssub.s32 %s18, 1
      %s24 = ssub.s32 %s18, 2
      %s31 = sadd.s32 1, %s26
      %p32 = scmp.ge.s32.totalorder %s31, 1
      %s33 = scalar_select %p32, 0, %s31
      %s34 = sadd.s32 1, %s25
      %s35 = scalar_select %p32, %s34, %s25
      %p36 = scmp.ge.s32.totalorder %s35, 2
      %s37 = scalar_select %p36, 0, %s35
      %s38 = ssub.s32 %s25, %s37
      %s39 = ssub.s32 %s26, %s33
      %s40 = sor.u32 %s38, %s39
      %p41 = scmp.eq.s32.totalorder %s40, 0
      %s43 = sadd.s32 %s42, 1
      %s44 = scalar_select %p41, %s42, %s43
      %p47 = pneg %p41
      %p48 = scmp.eq.s32.totalorder %s18, 1
      %p49 = por %p47, %p48
      %p50 = scmp.ne.s32.totalorder %s42, %s45
      %p51 = scmp.eq.s32.totalorder %s18, 0
      %p52 = por %p50, %p51
      %p53 = scmp.ne.s32.totalorder %s42, %s45
      %p54 = scmp.eq.s32.totalorder %s23, 1
      %p55 = por %p53, %p54
      %p56 = scmp.ne.s32.totalorder %s45, %s46
      %p57 = scmp.eq.s32.totalorder %s23, 0
      %p58 = por %p56, %p57
      %p59 = scmp.ne.s32.totalorder %s45, %s46
      %p60 = scmp.eq.s32.totalorder %s24, 1
      %p61 = por %p59, %p60
      %p63 = scmp.ne.s32.totalorder %s46, %s62
      %p64 = scmp.eq.s32.totalorder %s24, 0
      %p65 = por %p63, %p64
      %s66 = ssub.s32 %s25, %s37
      %s67 = ssub.s32 %s26, %s33
      %s68 = sor.u32 %s66, %s67
      %p69 = scmp.eq.s32.totalorder %s68, 0
      %s71 = sadd.s32 %s70, 1
      %s72 = scalar_select %p69, %s70, %s71
      %p75 = pneg %p69
      %p76 = scmp.eq.s32.totalorder %s18, 1
      %p77 = por %p75, %p76
      %p78 = scmp.ne.s32.totalorder %s70, %s73
      %p79 = scmp.eq.s32.totalorder %s18, 0
      %p80 = por %p78, %p79
      %p81 = scmp.ne.s32.totalorder %s70, %s73
      %p82 = scmp.eq.s32.totalorder %s23, 1
      %p83 = por %p81, %p82
      %p84 = scmp.ne.s32.totalorder %s73, %s74
      %p85 = scmp.eq.s32.totalorder %s23, 0
      %p86 = por %p84, %p85
      %p87 = scmp.ne.s32.totalorder %s73, %s74
      %p88 = scmp.eq.s32.totalorder %s24, 1
      %p89 = por %p87, %p88
      %p91 = scmp.ne.s32.totalorder %s74, %s90
      %p92 = scmp.eq.s32.totalorder %s24, 0
      %p93 = por %p91, %p92
      %s94 = ssub.s32 %s25, %s37
      %p95 = scmp.eq.s32.totalorder %s94, 0
      %s97 = sadd.s32 %s96, 1
      %s98 = scalar_select %p95, %s96, %s97
      %p101 = pneg %p95
      %p102 = scmp.eq.s32.totalorder %s18, 1
      %p103 = por %p101, %p102
      %p104 = scmp.ne.s32.totalorder %s96, %s99
      %p105 = scmp.eq.s32.totalorder %s18, 0
      %p106 = por %p104, %p105
      %p107 = scmp.ne.s32.totalorder %s96, %s99
      %p108 = scmp.eq.s32.totalorder %s23, 1
      %p109 = por %p107, %p108
      %p110 = scmp.ne.s32.totalorder %s99, %s100
      %p111 = scmp.eq.s32.totalorder %s23, 0
      %p112 = por %p110, %p111
      %p113 = scmp.ne.s32.totalorder %s99, %s100
      %p114 = scmp.eq.s32.totalorder %s24, 1
      %p115 = por %p113, %p114
      %p117 = scmp.ne.s32.totalorder %s100, %s116
      %p118 = scmp.eq.s32.totalorder %s24, 0
      %p119 = por %p117, %p118
      %s120 = ssub.s32 %s26, %s33
      %p121 = scmp.eq.s32.totalorder %s120, 0
      %s123 = sadd.s32 %s122, 1
      %s124 = scalar_select %p121, %s122, %s123
      %p127 = pneg %p121
      %p128 = scmp.eq.s32.totalorder %s18, 1
      %p129 = por %p127, %p128
      %p130 = scmp.ne.s32.totalorder %s122, %s125
      %p131 = scmp.eq.s32.totalorder %s18, 0
      %p132 = por %p130, %p131
      %p133 = scmp.ne.s32.totalorder %s122, %s125
      %p134 = scmp.eq.s32.totalorder %s23, 1
      %p135 = por %p133, %p134
      %p136 = scmp.ne.s32.totalorder %s125, %s126
      %p137 = scmp.eq.s32.totalorder %s23, 0
      %p138 = por %p136, %p137
      %p139 = scmp.ne.s32.totalorder %s125, %s126
      %p140 = scmp.eq.s32.totalorder %s24, 1
      %p141 = por %p139, %p140
      %p143 = scmp.ne.s32.totalorder %s126, %s142
      %p144 = scmp.eq.s32.totalorder %s24, 0
      %p145 = por %p143, %p144
      %s147 = sadd.s32 %s146, 1
      %p150 = scmp.eq.s32.totalorder %s18, 1
      %p151 = scmp.ne.s32.totalorder %s146, %s148
      %p152 = scmp.eq.s32.totalorder %s18, 0
      %p153 = por %p151, %p152
      %p154 = scmp.ne.s32.totalorder %s146, %s148
      %p155 = scmp.eq.s32.totalorder %s23, 1
      %p156 = por %p154, %p155
      %p157 = scmp.ne.s32.totalorder %s148, %s149
      %p158 = scmp.eq.s32.totalorder %s23, 0
      %p159 = por %p157, %p158
      %p160 = scmp.ne.s32.totalorder %s148, %s149
      %p161 = scmp.eq.s32.totalorder %s24, 1
      %p162 = por %p160, %p161
      %p164 = scmp.ne.s32.totalorder %s149, %s163
      %p165 = scmp.eq.s32.totalorder %s24, 0
      %p166 = por %p164, %p165
      %s168 = sadd.s32 %s167, 1
      %p171 = scmp.eq.s32.totalorder %s18, 1
      %p172 = scmp.ne.s32.totalorder %s167, %s169
      %p173 = scmp.eq.s32.totalorder %s18, 0
      %p174 = por %p172, %p173
      %p175 = scmp.ne.s32.totalorder %s167, %s169
      %p176 = scmp.eq.s32.totalorder %s23, 1
      %p177 = por %p175, %p176
      %p178 = scmp.ne.s32.totalorder %s169, %s170
      %p179 = scmp.eq.s32.totalorder %s23, 0
      %p180 = por %p178, %p179
      %p181 = scmp.ne.s32.totalorder %s169, %s170
      %p182 = scmp.eq.s32.totalorder %s24, 1
      %p183 = por %p181, %p182
      %p185 = scmp.ne.s32.totalorder %s170, %s184
      %p186 = scmp.eq.s32.totalorder %s24, 0
      %p187 = por %p185, %p186
      %s189 = sadd.s32 %s188, 1
      %p192 = scmp.eq.s32.totalorder %s18, 1
      %p193 = scmp.ne.s32.totalorder %s188, %s190
      %p194 = scmp.eq.s32.totalorder %s18, 0
      %p195 = por %p193, %p194
      %p196 = scmp.ne.s32.totalorder %s188, %s190
      %p197 = scmp.eq.s32.totalorder %s23, 1
      %p198 = por %p196, %p197
      %p199 = scmp.ne.s32.totalorder %s190, %s191
      %p200 = scmp.eq.s32.totalorder %s23, 0
      %p201 = por %p199, %p200
      %p202 = scmp.ne.s32.totalorder %s190, %s191
      %p203 = scmp.eq.s32.totalorder %s24, 1
      %p204 = por %p202, %p203
      %p206 = scmp.ne.s32.totalorder %s191, %s205
      %p207 = scmp.eq.s32.totalorder %s24, 0
      %p208 = por %p206, %p207
      %s209 = ssub.s32 %s25, %s37
      %s210 = ssub.s32 %s26, %s33
      %s211 = sor.u32 %s209, %s210
      %p212 = scmp.eq.s32.totalorder %s211, 0
      %s214 = sadd.s32 %s213, 1
      %s215 = scalar_select %p212, %s213, %s214
      %p218 = pneg %p212
      %p219 = scmp.eq.s32.totalorder %s18, 1
      %p220 = por %p218, %p219
      %p221 = scmp.ne.s32.totalorder %s213, %s216
      %p222 = scmp.eq.s32.totalorder %s18, 0
      %p223 = por %p221, %p222
      %p224 = scmp.ne.s32.totalorder %s213, %s216
      %p225 = scmp.eq.s32.totalorder %s23, 1
      %p226 = por %p224, %p225
      %p227 = scmp.ne.s32.totalorder %s216, %s217
      %p228 = scmp.eq.s32.totalorder %s23, 0
      %p229 = por %p227, %p228
      %p230 = scmp.ne.s32.totalorder %s216, %s217
      %p231 = scmp.eq.s32.totalorder %s24, 1
      %p232 = por %p230, %p231
      %p234 = scmp.ne.s32.totalorder %s217, %s233
      %p235 = scmp.eq.s32.totalorder %s24, 0
      %p236 = por %p234, %p235
      %p237 = scmp.le.s32.totalorder 1, %s18
      %p238 = scmp.lt.s32.totalorder %s18, 3
      %p239 = pnand %p237, %p238
      %p240 = pneg %p239
      // Predicated region
      $region9: #{esa_forward.9} parent=5 // pred_check
        _
      $region10: #{esa_forward.9} parent=5 // pred_check_branch
        %242 = sbr.rel (%p239) target = $region12
      $region11: #{esa_forward.9} parent=5 // pred_region
        %s243 = ssub.s32 %s18, 1
        // Predicated region
        $region13: #{esa_forward.9} parent=11 // pred_check
          %p244 = pneg %p138
        $region14: #{esa_forward.9} parent=11 // pred_check_branch
          %246 = sbr.rel (%p244) target = $region16
        $region15: #{esa_forward.9} parent=11 // pred_region
          %s247 = smul.u32 4, %s28
          %p248 = scmp.lt.s32.totalorder %s247, 3
          %s249 = scalar_select %p248, %s247, 3
          %s250 = smul.addr %s249, 8
          %s251 = scalar_lea.vmem %s3, %s250
          %s252 = smul.u32 4, %s28
        $region16: #{esa_forward.9} parent=11 // pred_fallthru
          _
        // Predicated region
        $region17: #{esa_forward.9} parent=11 // pred_check
          %p253 = pneg %p159
        $region18: #{esa_forward.9} parent=11 // pred_check_branch
          %255 = sbr.rel (%p253) target = $region20
        $region19: #{esa_forward.9} parent=11 // pred_region
          _
        $region20: #{esa_forward.9} parent=11 // pred_fallthru
          _
        // Predicated region
        $region21: #{esa_forward.9} parent=11 // pred_check
          %p256 = pneg %p180
        $region22: #{esa_forward.9} parent=11 // pred_check_branch
          %258 = sbr.rel (%p256) target = $region24
        $region23: #{esa_forward.9} parent=11 // pred_region
          %s260 = ssub.s32 16, 16
          %261 = vsyncadd [#allocation4], %s260
          %s263 = sshll.u32 %s5, 4
          %s264 = int_to_ptr.vmem [resolvable:$true] %s263
          %266 = dma.vmem_to_smem %s264, 16, [#allocation2], [#allocation4]
        $region24: #{esa_forward.9} parent=11 // pred_fallthru
          _
        // Predicated region
        $region25: #{esa_forward.9} parent=11 // pred_check
          %p267 = pneg %p201
        $region26: #{esa_forward.9} parent=11 // pred_check_branch
          %269 = sbr.rel (%p267) target = $region28
        $region27: #{esa_forward.9} parent=11 // pred_region
          %s271 = ssub.s32 16, 16
          %272 = vsyncadd [#allocation6], %s271
          %s274 = sshll.u32 %s6, 4
          %s275 = int_to_ptr.vmem [resolvable:$true] %s274
          %277 = dma.vmem_to_smem %s275, 16, [#allocation5], [#allocation6]
        $region28: #{esa_forward.9} parent=11 // pred_fallthru
          _
      $region12: #{esa_forward.9} parent=5 // pred_fallthru
        _
      %p278 = scmp.lt.s32.totalorder %s18, 2
      // Predicated region
      $region29: #{esa_forward.9} parent=5 // pred_check
        %p279 = pneg %p278
      $region30: #{esa_forward.9} parent=5 // pred_check_branch
        %281 = sbr.rel (%p279) target = $region32
      $region31: #{esa_forward.9} parent=5 // pred_region
        // Predicated region
        $region33: #{esa_forward.9} parent=31 // pred_check
          %p282 = pneg %p52
        $region34: #{esa_forward.9} parent=31 // pred_check_branch
          %284 = sbr.rel (%p282) target = $region36
        $region35: #{esa_forward.9} parent=31 // pred_region
          %s285 = smul.u32 4, %s26
          %p286 = scmp.lt.s32.totalorder %s25, 1
          %s287 = scalar_select %p286, %s25, 1
          %p288 = scmp.lt.s32.totalorder %s285, 3
          %s289 = scalar_select %p288, %s285, 3
          %s290 = smul.addr %s287, 32
          %s291 = sadd.s32 %s289, %s290
          %s292 = smul.addr %s291, 8
          %s293 = scalar_lea.vmem %s0, %s292
          %s294 = smul.u32 4, %s26
        $region36: #{esa_forward.9} parent=31 // pred_fallthru
          _
        // Predicated region
        $region37: #{esa_forward.9} parent=31 // pred_check
          %p295 = pneg %p80
        $region38: #{esa_forward.9} parent=31 // pred_check_branch
          %297 = sbr.rel (%p295) target = $region40
        $region39: #{esa_forward.9} parent=31 // pred_region
          %s298 = smul.u32 4, %s26
          %p299 = scmp.lt.s32.totalorder %s25, 1
          %s300 = scalar_select %p299, %s25, 1
          %p301 = scmp.lt.s32.totalorder %s298, 3
          %s302 = scalar_select %p301, %s298, 3
          %s303 = smul.addr %s300, 16
          %s304 = sadd.s32 %s302, %s303
          %s305 = smul.addr %s304, 8
          %s306 = scalar_lea.vmem %s1, %s305
          %s307 = smul.u32 4, %s26
        $region40: #{esa_forward.9} parent=31 // pred_fallthru
          _
        // Predicated region
        $region41: #{esa_forward.9} parent=31 // pred_check
          %p308 = pneg %p106
        $region42: #{esa_forward.9} parent=31 // pred_check_branch
          %310 = sbr.rel (%p308) target = $region44
        $region43: #{esa_forward.9} parent=31 // pred_region
          %p311 = scmp.lt.s32.totalorder %s25, 1
          %s312 = scalar_select %p311, %s25, 1
          %s313 = smul.addr %s312, 4
          %s314 = scalar_lea.vmem %s2, %s313
        $region44: #{esa_forward.9} parent=31 // pred_fallthru
          _
      $region32: #{esa_forward.9} parent=5 // pred_fallthru
        _
      %p315 = scmp.le.s32.totalorder 1, %s18
      %p316 = scmp.lt.s32.totalorder %s18, 3
      %p317 = pnand %p315, %p316
      %p318 = pneg %p317
      // Predicated region
      $region45: #{esa_forward.9} parent=5 // pred_check
        _
      $region46: #{esa_forward.9} parent=5 // pred_check_branch
        %320 = sbr.rel (%p317) target = $region48
      $region47: #{esa_forward.9} parent=5 // pred_region
        %s321 = ssub.s32 %s18, 1
        // Predicated region
        $region49: #{esa_forward.9} parent=47 // pred_check
          %p322 = pneg %p180
        $region50: #{esa_forward.9} parent=47 // pred_check_branch
          %324 = sbr.rel (%p322) target = $region52
        $region51: #{esa_forward.9} parent=47 // pred_region
          %325 = dma.done [#allocation4], 16
        $region52: #{esa_forward.9} parent=47 // pred_fallthru
          _
        // Predicated region
        $region53: #{esa_forward.9} parent=47 // pred_check
          %p326 = pneg %p201
        $region54: #{esa_forward.9} parent=47 // pred_check_branch
          %328 = sbr.rel (%p326) target = $region56
        $region55: #{esa_forward.9} parent=47 // pred_region
          %329 = dma.done [#allocation6], 16
        $region56: #{esa_forward.9} parent=47 // pred_fallthru
          _
        %330 = sfence
        %s331 = smul.u32 4, %s28
        %p332 = scmp.lt.s32.totalorder %s27, 1
        %s333 = scalar_select %p332, %s27, 1
        %p334 = scmp.lt.s32.totalorder %s331, 3
        %s335 = scalar_select %p334, %s331, 3
        %s336 = smul.addr %s333, 32
        %s337 = sadd.s32 %s335, %s336
        %s338 = smul.addr %s337, 8
        %s339 = scalar_lea.vmem %s0, %s338
        %p340 = pneg %p58
        %p341 = pneg %p55
        %s342 = smul.u32 4, %s28
        %p343 = scmp.lt.s32.totalorder %s27, 1
        %s344 = scalar_select %p343, %s27, 1
        %p345 = scmp.lt.s32.totalorder %s342, 3
        %s346 = scalar_select %p345, %s342, 3
        %s347 = smul.addr %s344, 16
        %s348 = sadd.s32 %s346, %s347
        %s349 = smul.addr %s348, 8
        %s350 = scalar_lea.vmem %s1, %s349
        %p351 = pneg %p86
        %p352 = pneg %p83
        %p353 = scmp.lt.s32.totalorder %s27, 1
        %s354 = scalar_select %p353, %s27, 1
        %s355 = smul.addr %s354, 4
        %s356 = scalar_lea.vmem %s2, %s355
        %p357 = pneg %p112
        %p358 = pneg %p109
        %s359 = smul.u32 4, %s28
        %p360 = scmp.lt.s32.totalorder %s359, 3
        %s361 = scalar_select %p360, %s359, 3
        %s362 = smul.addr %s361, 8
        %s363 = scalar_lea.vmem %s3, %s362
        %p364 = pneg %p138
        %p365 = pneg %p135
        %p366 = pneg %p159
        %p367 = pneg %p156
        %p368 = pneg %p180
        %p369 = pneg %p177
        %p370 = pneg %p201
        %p371 = pneg %p198
        %p372 = pneg %p229
        %p373 = pneg %p226
        %s374 = sand.u32 %s216, 1
        %s375 = scalar_lea.sflag [#allocation3], %s374
        %s376 = sand.u32 %s216, 1
        %s377 = smul.addr %s376, 256
        %s378 = scalar_lea.vmem [#allocation7], %s377
        %s379 = smul.u32 4, %s28
        %p380 = scmp.lt.s32.totalorder %s27, 1
        %s381 = scalar_select %p380, %s27, 1
        %p382 = scmp.lt.s32.totalorder %s379, 3
        %s383 = scalar_select %p382, %s379, 3
        %s384 = smul.addr %s381, 32
        %s385 = sadd.s32 %s383, %s384
        %s386 = smul.addr %s385, 8
        %s387 = scalar_lea.vmem %s0, %s386
        %s388 = smul.u32 4, %s28
        %s389 = smul.u32 4, %s28
        %p390 = scmp.lt.s32.totalorder %s27, 1
        %s391 = scalar_select %p390, %s27, 1
        %p392 = scmp.lt.s32.totalorder %s389, 3
        %s393 = scalar_select %p392, %s389, 3
        %s394 = smul.addr %s391, 16
        %s395 = sadd.s32 %s393, %s394
        %s396 = smul.addr %s395, 8
        %s397 = scalar_lea.vmem %s1, %s396
        %s398 = smul.u32 4, %s28
        %p399 = scmp.lt.s32.totalorder %s27, 1
        %s400 = scalar_select %p399, %s27, 1
        %s401 = smul.addr %s400, 4
        %s402 = scalar_lea.vmem %s2, %s401
        %s403 = smul.u32 4, %s28
        %p404 = scmp.lt.s32.totalorder %s403, 3
        %s405 = scalar_select %p404, %s403, 3
        %s406 = smul.addr %s405, 8
        %s407 = scalar_lea.vmem %s3, %s406
        %s408 = smul.u32 4, %s28
        %s409 = smul.u32 4, %s28
        %v410 = vld [vmem:[%s4] sm:$0x7]
        %v411 = vld [vmem:[%s407] sm:$0xff]
        %v412 = vld [vmem:[%s407 + $0x8] sm:$0xff]
        %v413 = vld [vmem:[%s407 + $0x10] sm:$0xff]
        %v414 = vld [vmem:[%s407 + $0x18] sm:$0xff]
        %v415 = vld [vmem:[%s402] sm:$0x7]
        %vm416 = vcmask 23552
        %v418 = vsel %vm416, %v411, 0
        %v421 = vsel %vm416, %v412, 0
        %v424 = vsel %vm416, %v413, 0
        %v427 = vsel %vm416, %v414, 0
        %vm429 = vcmask 1042432
        %v431 = vsel %vm429, %v415, 0
        %433 = vmatprep.subr.mxu0 0.0
        %434 = vmatpush1.msra.mxu0 %v431
        %435 = vmatprep.subr.mxu0 0.0
        %436 = vmatpush1.msra.mxu0 0.0
        %437 = vmatprep.subr.mxu0 0.0
        %438 = vmatpush1.msra.mxu0 0.0
        %439 = vmatprep.subr.mxu0 0.0
        %440 = vmatpush1.msra.mxu0 0.0
        %441 = vmatprep.subr.mxu0 0.0
        %442 = vmatpush1.msra.mxu0 0.0
        %443 = vmatprep.subr.mxu0 0.0
        %444 = vmatpush1.msra.mxu0 0.0
        %445 = vmatprep.subr.mxu0 0.0
        %446 = vmatpush1.msra.mxu0 0.0
        %447 = vmatprep.subr.mxu0 0.0
        %448 = vmatpush1.msra.mxu0 0.0
        %449 = vmatprep.subr.mxu0 0.0
        %450 = vmatpush1.msra.mxu0 0.0
        %451 = vmatprep.subr.mxu0 0.0
        %452 = vmatpush1.msra.mxu0 0.0
        %453 = vmatprep.subr.mxu0 0.0
        %454 = vmatpush1.msra.mxu0 0.0
        %455 = vmatprep.subr.mxu0 0.0
        %456 = vmatpush1.msra.mxu0 0.0
        %457 = vmatprep.subr.mxu0 0.0
        %458 = vmatpush1.msra.mxu0 0.0
        %459 = vmatprep.subr.mxu0 0.0
        %460 = vmatpush1.msra.mxu0 0.0
        %461 = vmatprep.subr.mxu0 0.0
        %462 = vmatpush1.msra.mxu0 0.0
        %463 = vmatprep.subr.mxu0 0.0
        %464 = vmatpush1.msra.mxu0 0.0
        %465 = vmatprep.subr.mxu0 0.0
        %466 = vmatpush1.msra.mxu0 0.0
        %467 = vmatprep.subr.mxu0 0.0
        %468 = vmatpush1.msra.mxu0 0.0
        %469 = vmatprep.subr.mxu0 0.0
        %470 = vmatpush1.msra.mxu0 0.0
        %471 = vmatprep.subr.mxu0 0.0
        %472 = vmatpush1.msra.mxu0 0.0
        %473 = vmatprep.subr.mxu0 0.0
        %474 = vmatpush1.msra.mxu0 0.0
        %475 = vmatprep.subr.mxu0 0.0
        %476 = vmatpush1.msra.mxu0 0.0
        %477 = vmatprep.subr.mxu0 0.0
        %478 = vmatpush1.msra.mxu0 0.0
        %479 = vmatprep.subr.mxu0 0.0
        %480 = vmatpush1.msra.mxu0 0.0
        %481 = vmatprep.subr.mxu0 0.0
        %482 = vmatpush1.msra.mxu0 0.0
        %483 = vmatprep.subr.mxu0 0.0
        %484 = vmatpush1.msra.mxu0 0.0
        %485 = vmatprep.subr.mxu0 0.0
        %486 = vmatpush1.msra.mxu0 0.0
        %487 = vmatprep.subr.mxu0 0.0
        %488 = vmatpush1.msra.mxu0 0.0
        %489 = vmatprep.subr.mxu0 0.0
        %490 = vmatpush1.msra.mxu0 0.0
        %491 = vmatprep.subr.mxu0 0.0
        %492 = vmatpush1.msra.mxu0 0.0
        %493 = vmatprep.subr.mxu0 0.0
        %494 = vmatpush1.msra.mxu0 0.0
        %495 = vmatprep.subr.mxu0 0.0
        %496 = vmatpush1.msra.mxu0 0.0
        %497 = vmatprep.mubr.f32.mxu0 0.0
        %498 = vmatmul.mubr.f32.gmra.mrb[0].mxu0 %v418
        %v499 = vpop.f32.mrb[0].mxu0
        %v500 = vadd.f32 0.0, %v499
        %v501 = vpop.f32.mrb[0].mxu0
        %502 = vmatprep.mubr.f32.mxu0 0.0
        %503 = vmatmul.mubr.f32.gmra.mrb[0].mxu0 %v421
        %v504 = vpop.f32.mrb[0].mxu0
        %v505 = vadd.f32 0.0, %v504
        %v506 = vpop.f32.mrb[0].mxu0
        %507 = vmatprep.mubr.f32.mxu0 0.0
        %508 = vmatmul.mubr.f32.gmra.mrb[0].mxu0 %v424
        %v509 = vpop.f32.mrb[0].mxu0
        %v510 = vadd.f32 0.0, %v509
        %v511 = vpop.f32.mrb[0].mxu0
        %512 = vmatprep.mubr.f32.mxu0 0.0
        %513 = vmatmul.mubr.f32.gmra.mrb[0].mxu0 %v427
        %v514 = vpop.f32.mrb[0].mxu0
        %v515 = vadd.f32 0.0, %v514
        %v516 = vpop.f32.mrb[0].mxu0
        %517 = vdwg.mxu0
        %v518 = vld [vmem:[%s397] sm:$0xff]
        %v519 = vld [vmem:[%s397 + $0x8] sm:$0xff]
        %v520 = vld [vmem:[%s397 + $0x10] sm:$0xff]
        %v521 = vld [vmem:[%s397 + $0x18] sm:$0xff]
        %v522 = vld [vmem:[%s397 + $0x20] sm:$0xff]
        %v523 = vld [vmem:[%s397 + $0x28] sm:$0xff]
        %v524 = vld [vmem:[%s397 + $0x30] sm:$0xff]
        %v525 = vld [vmem:[%s397 + $0x38] sm:$0xff]
        %v526 = vld [vmem:[%s397 + $0x40] sm:$0xff]
        %v527 = vld [vmem:[%s397 + $0x48] sm:$0xff]
        %v528 = vld [vmem:[%s397 + $0x50] sm:$0xff]
        %v529 = vld [vmem:[%s397 + $0x58] sm:$0xff]
        %v530 = vld [vmem:[%s397 + $0x60] sm:$0xff]
        %v531 = vld [vmem:[%s397 + $0x68] sm:$0xff]
        %v532 = vld [vmem:[%s397 + $0x70] sm:$0xff]
        %v533 = vld [vmem:[%s397 + $0x78] sm:$0xff]
        %s534 = sld [smem:[#allocation5]]
        %v535 = vstv %s534
        %v537 = vsel %vm416, %v500, 0
        %v540 = vsel %vm416, %v505, 0
        %v543 = vsel %vm416, %v510, 0
        %v546 = vsel %vm416, %v515, 0
        %v549 = vsel %vm429, %v410, 0
        %551 = vmatprep.subr.mxu0 0.0
        %552 = vmatpush1.msra.mxu0 %v549
        %553 = vmatprep.subr.mxu0 0.0
        %554 = vmatpush1.msra.mxu0 0.0
        %555 = vmatprep.subr.mxu0 0.0
        %556 = vmatpush1.msra.mxu0 0.0
        %557 = vmatprep.subr.mxu0 0.0
        %558 = vmatpush1.msra.mxu0 0.0
        %559 = vmatprep.subr.mxu0 0.0
        %560 = vmatpush1.msra.mxu0 0.0
        %561 = vmatprep.subr.mxu0 0.0
        %562 = vmatpush1.msra.mxu0 0.0
        %563 = vmatprep.subr.mxu0 0.0
        %564 = vmatpush1.msra.mxu0 0.0
        %565 = vmatprep.subr.mxu0 0.0
        %566 = vmatpush1.msra.mxu0 0.0
        %567 = vmatprep.subr.mxu0 0.0
        %568 = vmatpush1.msra.mxu0 0.0
        %569 = vmatprep.subr.mxu0 0.0
        %570 = vmatpush1.msra.mxu0 0.0
        %571 = vmatprep.subr.mxu0 0.0
        %572 = vmatpush1.msra.mxu0 0.0
        %573 = vmatprep.subr.mxu0 0.0
        %574 = vmatpush1.msra.mxu0 0.0
        %575 = vmatprep.subr.mxu0 0.0
        %576 = vmatpush1.msra.mxu0 0.0
        %577 = vmatprep.subr.mxu0 0.0
        %578 = vmatpush1.msra.mxu0 0.0
        %579 = vmatprep.subr.mxu0 0.0
        %580 = vmatpush1.msra.mxu0 0.0
        %581 = vmatprep.subr.mxu0 0.0
        %582 = vmatpush1.msra.mxu0 0.0
        %583 = vmatprep.subr.mxu0 0.0
        %584 = vmatpush1.msra.mxu0 0.0
        %585 = vmatprep.subr.mxu0 0.0
        %586 = vmatpush1.msra.mxu0 0.0
        %587 = vmatprep.subr.mxu0 0.0
        %588 = vmatpush1.msra.mxu0 0.0
        %589 = vmatprep.subr.mxu0 0.0
        %590 = vmatpush1.msra.mxu0 0.0
        %591 = vmatprep.subr.mxu0 0.0
        %592 = vmatpush1.msra.mxu0 0.0
        %593 = vmatprep.subr.mxu0 0.0
        %594 = vmatpush1.msra.mxu0 0.0
        %595 = vmatprep.subr.mxu0 0.0
        %596 = vmatpush1.msra.mxu0 0.0
        %597 = vmatprep.subr.mxu0 0.0
        %598 = vmatpush1.msra.mxu0 0.0
        %599 = vmatprep.subr.mxu0 0.0
        %600 = vmatpush1.msra.mxu0 0.0
        %601 = vmatprep.subr.mxu0 0.0
        %602 = vmatpush1.msra.mxu0 0.0
        %603 = vmatprep.subr.mxu0 0.0
        %604 = vmatpush1.msra.mxu0 0.0
        %605 = vmatprep.subr.mxu0 0.0
        %606 = vmatpush1.msra.mxu0 0.0
        %607 = vmatprep.subr.mxu0 0.0
        %608 = vmatpush1.msra.mxu0 0.0
        %609 = vmatprep.subr.mxu0 0.0
        %610 = vmatpush1.msra.mxu0 0.0
        %611 = vmatprep.subr.mxu0 0.0
        %612 = vmatpush1.msra.mxu0 0.0
        %613 = vmatprep.subr.mxu0 0.0
        %614 = vmatpush1.msra.mxu0 0.0
        %615 = vmatprep.mubr.f32.mxu0 0.0
        %616 = vmatmul.mubr.f32.gmra.mrb[0].mxu0 %v537
        %v617 = vpop.f32.mrb[0].mxu0
        %v618 = vadd.f32 %v535, %v617
        %v619 = vpop.f32.mrb[0].mxu0
        %620 = vmatprep.mubr.f32.mxu0 0.0
        %621 = vmatmul.mubr.f32.gmra.mrb[0].mxu0 %v540
        %v622 = vpop.f32.mrb[0].mxu0
        %v623 = vadd.f32 %v535, %v622
        %v624 = vpop.f32.mrb[0].mxu0
        %625 = vmatprep.mubr.f32.mxu0 0.0
        %626 = vmatmul.mubr.f32.gmra.mrb[0].mxu0 %v543
        %v627 = vpop.f32.mrb[0].mxu0
        %v628 = vadd.f32 %v535, %v627
        %v629 = vpop.f32.mrb[0].mxu0
        %630 = vmatprep.mubr.f32.mxu0 0.0
        %631 = vmatmul.mubr.f32.gmra.mrb[0].mxu0 %v546
        %v632 = vpop.f32.mrb[0].mxu0
        %v633 = vadd.f32 %v535, %v632
        %v634 = vpop.f32.mrb[0].mxu0
        %635 = vdwg.mxu0
        %s636 = sld [smem:[#allocation2]]
        %v637 = vstv %s636
        %v638 = vmul.f32 %v637, %v518
        %v639 = vmul.f32 %v637, %v519
        %v640 = vmul.f32 %v637, %v520
        %v641 = vmul.f32 %v637, %v521
        %v642 = vadd.f32 %v618, %v638
        %v643 = vadd.f32 %v623, %v639
        %v644 = vadd.f32 %v628, %v640
        %v645 = vadd.f32 %v633, %v641
        %s646 = sld [smem:[#allocation2 + $0x1]]
        %v647 = vstv %s646
        %v648 = vmul.f32 %v647, %v522
        %v649 = vmul.f32 %v647, %v523
        %v650 = vmul.f32 %v647, %v524
        %v651 = vmul.f32 %v647, %v525
        %v652 = vadd.f32 %v642, %v648
        %v653 = vadd.f32 %v643, %v649
        %v654 = vadd.f32 %v644, %v650
        %v655 = vadd.f32 %v645, %v651
        %s656 = sld [smem:[#allocation2 + $0x2]]
        %v657 = vstv %s656
        %v658 = vmul.f32 %v657, %v526
        %v659 = vmul.f32 %v657, %v527
        %v660 = vmul.f32 %v657, %v528
        %v661 = vmul.f32 %v657, %v529
        %v662 = vadd.f32 %v652, %v658
        %v663 = vadd.f32 %v653, %v659
        %v664 = vadd.f32 %v654, %v660
        %v665 = vadd.f32 %v655, %v661
        %s666 = sld [smem:[#allocation2 + $0x3]]
        %v667 = vstv %s666
        %v668 = vmul.f32 %v667, %v530
        %v669 = vmul.f32 %v667, %v531
        %v670 = vmul.f32 %v667, %v532
        %v671 = vmul.f32 %v667, %v533
        %v672 = vadd.f32 %v662, %v668
        %v673 = vadd.f32 %v663, %v669
        %v674 = vadd.f32 %v664, %v670
        %v675 = vadd.f32 %v665, %v671
        %v676 = vld [vmem:[%s387] sm:$0xff]
        %v677 = vld [vmem:[%s387 + $0x8] sm:$0xff]
        %v678 = vld [vmem:[%s387 + $0x10] sm:$0xff]
        %v679 = vld [vmem:[%s387 + $0x18] sm:$0xff]
        %v680 = vxor.u32 %v672, 2147483648
        %v681 = vxor.u32 %v673, 2147483648
        %v682 = vxor.u32 %v674, 2147483648
        %v683 = vxor.u32 %v675, 2147483648
        %v684 = vmul.f32 %v680, 1.442695
        %v685 = vpow.pop %v684
        %v686 = vmul.f32 %v681, 1.442695
        %v687 = vpow.pop %v686
        %v688 = vmul.f32 %v682, 1.442695
        %v689 = vpow.pop %v688
        %v690 = vmul.f32 %v683, 1.442695
        %v691 = vpow.pop %v690
        %v692 = vadd.f32 %v685, 1.0
        %v693 = vadd.f32 %v687, 1.0
        %v694 = vadd.f32 %v689, 1.0
        %v695 = vadd.f32 %v691, 1.0
        %v696 = vrcp.pop %v692
        %v697 = vmul.f32 1.0, %v696
        %v698 = vrcp.pop %v693
        %v699 = vmul.f32 1.0, %v698
        %v700 = vrcp.pop %v694
        %v701 = vmul.f32 1.0, %v700
        %v702 = vrcp.pop %v695
        %v703 = vmul.f32 1.0, %v702
        %v704 = vmul.f32 %v676, %v697
        %v705 = vmul.f32 %v677, %v699
        %v706 = vmul.f32 %v678, %v701
        %v707 = vmul.f32 %v679, %v703
        %vm708 = vcmask 261120
        %709 = vst.msk [vmem:[%s378] sm:$0xff] %vm708, %v704
        %710 = vst.msk [vmem:[%s378 + $0x8] sm:$0xff] %vm708, %v705
        %711 = vst.msk [vmem:[%s378 + $0x10] sm:$0xff] %vm708, %v706
        %712 = vst.msk [vmem:[%s378 + $0x18] sm:$0xff] %vm708, %v707
        %s713 = sld [smem:[#allocation5 + $0x1]]
        %v714 = vstv %s713
        %715 = vrot.lane.b32.xlu0 %v500, 125
        %v716 = vpop.permute.xlu0 %715
        %717 = vrot.lane.b32.xlu0 %v505, 125
        %v718 = vpop.permute.xlu0 %717
        %719 = vrot.lane.b32.xlu0 %v510, 125
        %v720 = vpop.permute.xlu0 %719
        %721 = vrot.lane.b32.xlu0 %v515, 125
        %v722 = vpop.permute.xlu0 %721
        %v723 = vsel %vm416, %v716, 0
        %v725 = vsel %vm416, %v718, 0
        %v727 = vsel %vm416, %v720, 0
        %v729 = vsel %vm416, %v722, 0
        %731 = vmatprep.subr.mxu0 0.0
        %732 = vmatpush1.msra.mxu0 %v549
        %733 = vmatprep.subr.mxu0 0.0
        %734 = vmatpush1.msra.mxu0 0.0
        %735 = vmatprep.subr.mxu0 0.0
        %736 = vmatpush1.msra.mxu0 0.0
        %737 = vmatprep.subr.mxu0 0.0
        %738 = vmatpush1.msra.mxu0 0.0
        %739 = vmatprep.subr.mxu0 0.0
        %740 = vmatpush1.msra.mxu0 0.0
        %741 = vmatprep.subr.mxu0 0.0
        %742 = vmatpush1.msra.mxu0 0.0
        %743 = vmatprep.subr.mxu0 0.0
        %744 = vmatpush1.msra.mxu0 0.0
        %745 = vmatprep.subr.mxu0 0.0
        %746 = vmatpush1.msra.mxu0 0.0
        %747 = vmatprep.subr.mxu0 0.0
        %748 = vmatpush1.msra.mxu0 0.0
        %749 = vmatprep.subr.mxu0 0.0
        %750 = vmatpush1.msra.mxu0 0.0
        %751 = vmatprep.subr.mxu0 0.0
        %752 = vmatpush1.msra.mxu0 0.0
        %753 = vmatprep.subr.mxu0 0.0
        %754 = vmatpush1.msra.mxu0 0.0
        %755 = vmatprep.subr.mxu0 0.0
        %756 = vmatpush1.msra.mxu0 0.0
        %757 = vmatprep.subr.mxu0 0.0
        %758 = vmatpush1.msra.mxu0 0.0
        %759 = vmatprep.subr.mxu0 0.0
        %760 = vmatpush1.msra.mxu0 0.0
        %761 = vmatprep.subr.mxu0 0.0
        %762 = vmatpush1.msra.mxu0 0.0
        %763 = vmatprep.subr.mxu0 0.0
        %764 = vmatpush1.msra.mxu0 0.0
        %765 = vmatprep.subr.mxu0 0.0
        %766 = vmatpush1.msra.mxu0 0.0
        %767 = vmatprep.subr.mxu0 0.0
        %768 = vmatpush1.msra.mxu0 0.0
        %769 = vmatprep.subr.mxu0 0.0
        %770 = vmatpush1.msra.mxu0 0.0
        %771 = vmatprep.subr.mxu0 0.0
        %772 = vmatpush1.msra.mxu0 0.0
        %773 = vmatprep.subr.mxu0 0.0
        %774 = vmatpush1.msra.mxu0 0.0
        %775 = vmatprep.subr.mxu0 0.0
        %776 = vmatpush1.msra.mxu0 0.0
        %777 = vmatprep.subr.mxu0 0.0
        %778 = vmatpush1.msra.mxu0 0.0
        %779 = vmatprep.subr.mxu0 0.0
        %780 = vmatpush1.msra.mxu0 0.0
        %781 = vmatprep.subr.mxu0 0.0
        %782 = vmatpush1.msra.mxu0 0.0
        %783 = vmatprep.subr.mxu0 0.0
        %784 = vmatpush1.msra.mxu0 0.0
        %785 = vmatprep.subr.mxu0 0.0
        %786 = vmatpush1.msra.mxu0 0.0
        %787 = vmatprep.subr.mxu0 0.0
        %788 = vmatpush1.msra.mxu0 0.0
        %789 = vmatprep.subr.mxu0 0.0
        %790 = vmatpush1.msra.mxu0 0.0
        %791 = vmatprep.subr.mxu0 0.0
        %792 = vmatpush1.msra.mxu0 0.0
        %793 = vmatprep.subr.mxu0 0.0
        %794 = vmatpush1.msra.mxu0 0.0
        %795 = vmatprep.mubr.f32.mxu0 0.0
        %796 = vmatmul.mubr.f32.gmra.mrb[0].mxu0 %v723
        %v797 = vpop.f32.mrb[0].mxu0
        %v798 = vadd.f32 %v714, %v797
        %v799 = vpop.f32.mrb[0].mxu0
        %800 = vmatprep.mubr.f32.mxu0 0.0
        %801 = vmatmul.mubr.f32.gmra.mrb[0].mxu0 %v725
        %v802 = vpop.f32.mrb[0].mxu0
        %v803 = vadd.f32 %v714, %v802
        %v804 = vpop.f32.mrb[0].mxu0
        %805 = vmatprep.mubr.f32.mxu0 0.0
        %806 = vmatmul.mubr.f32.gmra.mrb[0].mxu0 %v727
        %v807 = vpop.f32.mrb[0].mxu0
        %v808 = vadd.f32 %v714, %v807
        %v809 = vpop.f32.mrb[0].mxu0
        %810 = vmatprep.mubr.f32.mxu0 0.0
        %811 = vmatmul.mubr.f32.gmra.mrb[0].mxu0 %v729
        %v812 = vpop.f32.mrb[0].mxu0
        %v813 = vadd.f32 %v714, %v812
        %v814 = vpop.f32.mrb[0].mxu0
        %815 = vdwg.mxu0
        %s816 = sld [smem:[#allocation2 + $0x4]]
        %v817 = vstv %s816
        %v818 = vmul.f32 %v817, %v518
        %v819 = vmul.f32 %v817, %v519
        %v820 = vmul.f32 %v817, %v520
        %v821 = vmul.f32 %v817, %v521
        %v822 = vadd.f32 %v798, %v818
        %v823 = vadd.f32 %v803, %v819
        %v824 = vadd.f32 %v808, %v820
        %v825 = vadd.f32 %v813, %v821
        %s826 = sld [smem:[#allocation2 + $0x5]]
        %v827 = vstv %s826
        %v828 = vmul.f32 %v827, %v522
        %v829 = vmul.f32 %v827, %v523
        %v830 = vmul.f32 %v827, %v524
        %v831 = vmul.f32 %v827, %v525
        %v832 = vadd.f32 %v822, %v828
        %v833 = vadd.f32 %v823, %v829
        %v834 = vadd.f32 %v824, %v830
        %v835 = vadd.f32 %v825, %v831
        %s836 = sld [smem:[#allocation2 + $0x6]]
        %v837 = vstv %s836
        %v838 = vmul.f32 %v837, %v526
        %v839 = vmul.f32 %v837, %v527
        %v840 = vmul.f32 %v837, %v528
        %v841 = vmul.f32 %v837, %v529
        %v842 = vadd.f32 %v832, %v838
        %v843 = vadd.f32 %v833, %v839
        %v844 = vadd.f32 %v834, %v840
        %v845 = vadd.f32 %v835, %v841
        %s846 = sld [smem:[#allocation2 + $0x7]]
        %v847 = vstv %s846
        %v848 = vmul.f32 %v847, %v530
        %v849 = vmul.f32 %v847, %v531
        %v850 = vmul.f32 %v847, %v532
        %v851 = vmul.f32 %v847, %v533
        %v852 = vadd.f32 %v842, %v848
        %v853 = vadd.f32 %v843, %v849
        %v854 = vadd.f32 %v844, %v850
        %v855 = vadd.f32 %v845, %v851
        %s856 = scalar_lea.vmem %s387, 32
        %v857 = vld [vmem:[%s856] sm:$0xff]
        %v858 = vld [vmem:[%s856 + $0x8] sm:$0xff]
        %v859 = vld [vmem:[%s856 + $0x10] sm:$0xff]
        %v860 = vld [vmem:[%s856 + $0x18] sm:$0xff]
        %v861 = vxor.u32 %v852, 2147483648
        %v862 = vxor.u32 %v853, 2147483648
        %v863 = vxor.u32 %v854, 2147483648
        %v864 = vxor.u32 %v855, 2147483648
        %v865 = vmul.f32 %v861, 1.442695
        %v866 = vpow.pop %v865
        %v867 = vmul.f32 %v862, 1.442695
        %v868 = vpow.pop %v867
        %v869 = vmul.f32 %v863, 1.442695
        %v870 = vpow.pop %v869
        %v871 = vmul.f32 %v864, 1.442695
        %v872 = vpow.pop %v871
        %v873 = vadd.f32 %v866, 1.0
        %v874 = vadd.f32 %v868, 1.0
        %v875 = vadd.f32 %v870, 1.0
        %v876 = vadd.f32 %v872, 1.0
        %v877 = vrcp.pop %v873
        %v878 = vmul.f32 1.0, %v877
        %v879 = vrcp.pop %v874
        %v880 = vmul.f32 1.0, %v879
        %v881 = vrcp.pop %v875
        %v882 = vmul.f32 1.0, %v881
        %v883 = vrcp.pop %v876
        %v884 = vmul.f32 1.0, %v883
        %v885 = vmul.f32 %v857, %v878
        %v886 = vmul.f32 %v858, %v880
        %v887 = vmul.f32 %v859, %v882
        %v888 = vmul.f32 %v860, %v884
        %s889 = scalar_lea.vmem %s378, 32 [#allocation7]
        %890 = vst.msk [vmem:[%s889] sm:$0xff] %vm708, %v885
        %891 = vst.msk [vmem:[%s889 + $0x8] sm:$0xff] %vm708, %v886
        %892 = vst.msk [vmem:[%s889 + $0x10] sm:$0xff] %vm708, %v887
        %893 = vst.msk [vmem:[%s889 + $0x18] sm:$0xff] %vm708, %v888
        %s894 = sld [smem:[#allocation5 + $0x2]]
        %v895 = vstv %s894
        %896 = vrot.lane.b32.xlu0 %v500, 122
        %v897 = vpop.permute.xlu0 %896
        %898 = vrot.lane.b32.xlu0 %v505, 122
        %v899 = vpop.permute.xlu0 %898
        %900 = vrot.lane.b32.xlu0 %v510, 122
        %v901 = vpop.permute.xlu0 %900
        %902 = vrot.lane.b32.xlu0 %v515, 122
        %v903 = vpop.permute.xlu0 %902
        %v904 = vsel %vm416, %v897, 0
        %v906 = vsel %vm416, %v899, 0
        %v908 = vsel %vm416, %v901, 0
        %v910 = vsel %vm416, %v903, 0
        %912 = vmatprep.subr.mxu0 0.0
        %913 = vmatpush1.msra.mxu0 %v549
        %914 = vmatprep.subr.mxu0 0.0
        %915 = vmatpush1.msra.mxu0 0.0
        %916 = vmatprep.subr.mxu0 0.0
        %917 = vmatpush1.msra.mxu0 0.0
        %918 = vmatprep.subr.mxu0 0.0
        %919 = vmatpush1.msra.mxu0 0.0
        %920 = vmatprep.subr.mxu0 0.0
        %921 = vmatpush1.msra.mxu0 0.0
        %922 = vmatprep.subr.mxu0 0.0
        %923 = vmatpush1.msra.mxu0 0.0
        %924 = vmatprep.subr.mxu0 0.0
        %925 = vmatpush1.msra.mxu0 0.0
        %926 = vmatprep.subr.mxu0 0.0
        %927 = vmatpush1.msra.mxu0 0.0
        %928 = vmatprep.subr.mxu0 0.0
        %929 = vmatpush1.msra.mxu0 0.0
        %930 = vmatprep.subr.mxu0 0.0
        %931 = vmatpush1.msra.mxu0 0.0
        %932 = vmatprep.subr.mxu0 0.0
        %933 = vmatpush1.msra.mxu0 0.0
        %934 = vmatprep.subr.mxu0 0.0
        %935 = vmatpush1.msra.mxu0 0.0
        %936 = vmatprep.subr.mxu0 0.0
        %937 = vmatpush1.msra.mxu0 0.0
        %938 = vmatprep.subr.mxu0 0.0
        %939 = vmatpush1.msra.mxu0 0.0
        %940 = vmatprep.subr.mxu0 0.0
        %941 = vmatpush1.msra.mxu0 0.0
        %942 = vmatprep.subr.mxu0 0.0
        %943 = vmatpush1.msra.mxu0 0.0
        %944 = vmatprep.subr.mxu0 0.0
        %945 = vmatpush1.msra.mxu0 0.0
        %946 = vmatprep.subr.mxu0 0.0
        %947 = vmatpush1.msra.mxu0 0.0
        %948 = vmatprep.subr.mxu0 0.0
        %949 = vmatpush1.msra.mxu0 0.0
        %950 = vmatprep.subr.mxu0 0.0
        %951 = vmatpush1.msra.mxu0 0.0
        %952 = vmatprep.subr.mxu0 0.0
        %953 = vmatpush1.msra.mxu0 0.0
        %954 = vmatprep.subr.mxu0 0.0
        %955 = vmatpush1.msra.mxu0 0.0
        %956 = vmatprep.subr.mxu0 0.0
        %957 = vmatpush1.msra.mxu0 0.0
        %958 = vmatprep.subr.mxu0 0.0
        %959 = vmatpush1.msra.mxu0 0.0
        %960 = vmatprep.subr.mxu0 0.0
        %961 = vmatpush1.msra.mxu0 0.0
        %962 = vmatprep.subr.mxu0 0.0
        %963 = vmatpush1.msra.mxu0 0.0
        %964 = vmatprep.subr.mxu0 0.0
        %965 = vmatpush1.msra.mxu0 0.0
        %966 = vmatprep.subr.mxu0 0.0
        %967 = vmatpush1.msra.mxu0 0.0
        %968 = vmatprep.subr.mxu0 0.0
        %969 = vmatpush1.msra.mxu0 0.0
        %970 = vmatprep.subr.mxu0 0.0
        %971 = vmatpush1.msra.mxu0 0.0
        %972 = vmatprep.subr.mxu0 0.0
        %973 = vmatpush1.msra.mxu0 0.0
        %974 = vmatprep.subr.mxu0 0.0
        %975 = vmatpush1.msra.mxu0 0.0
        %976 = vmatprep.mubr.f32.mxu0 0.0
        %977 = vmatmul.mubr.f32.gmra.mrb[0].mxu0 %v904
        %v978 = vpop.f32.mrb[0].mxu0
        %v979 = vadd.f32 %v895, %v978
        %v980 = vpop.f32.mrb[0].mxu0
        %981 = vmatprep.mubr.f32.mxu0 0.0
        %982 = vmatmul.mubr.f32.gmra.mrb[0].mxu0 %v906
        %v983 = vpop.f32.mrb[0].mxu0
        %v984 = vadd.f32 %v895, %v983
        %v985 = vpop.f32.mrb[0].mxu0
        %986 = vmatprep.mubr.f32.mxu0 0.0
        %987 = vmatmul.mubr.f32.gmra.mrb[0].mxu0 %v908
        %v988 = vpop.f32.mrb[0].mxu0
        %v989 = vadd.f32 %v895, %v988
        %v990 = vpop.f32.mrb[0].mxu0
        %991 = vmatprep.mubr.f32.mxu0 0.0
        %992 = vmatmul.mubr.f32.gmra.mrb[0].mxu0 %v910
        %v993 = vpop.f32.mrb[0].mxu0
        %v994 = vadd.f32 %v895, %v993
        %v995 = vpop.f32.mrb[0].mxu0
        %996 = vdwg.mxu0
        %s997 = sld [smem:[#allocation2 + $0x8]]
        %v998 = vstv %s997
        %v999 = vmul.f32 %v998, %v518
        %v1000 = vmul.f32 %v998, %v519
        %v1001 = vmul.f32 %v998, %v520
        %v1002 = vmul.f32 %v998, %v521
        %v1003 = vadd.f32 %v979, %v999
        %v1004 = vadd.f32 %v984, %v1000
        %v1005 = vadd.f32 %v989, %v1001
        %v1006 = vadd.f32 %v994, %v1002
        %s1007 = sld [smem:[#allocation2 + $0x9]]
        %v1008 = vstv %s1007
        %v1009 = vmul.f32 %v1008, %v522
        %v1010 = vmul.f32 %v1008, %v523
        %v1011 = vmul.f32 %v1008, %v524
        %v1012 = vmul.f32 %v1008, %v525
        %v1013 = vadd.f32 %v1003, %v1009
        %v1014 = vadd.f32 %v1004, %v1010
        %v1015 = vadd.f32 %v1005, %v1011
        %v1016 = vadd.f32 %v1006, %v1012
        %s1017 = sld [smem:[#allocation2 + $0xa]]
        %v1018 = vstv %s1017
        %v1019 = vmul.f32 %v1018, %v526
        %v1020 = vmul.f32 %v1018, %v527
        %v1021 = vmul.f32 %v1018, %v528
        %v1022 = vmul.f32 %v1018, %v529
        %v1023 = vadd.f32 %v1013, %v1019
        %v1024 = vadd.f32 %v1014, %v1020
        %v1025 = vadd.f32 %v1015, %v1021
        %v1026 = vadd.f32 %v1016, %v1022
        %s1027 = sld [smem:[#allocation2 + $0xb]]
        %v1028 = vstv %s1027
        %v1029 = vmul.f32 %v1028, %v530
        %v1030 = vmul.f32 %v1028, %v531
        %v1031 = vmul.f32 %v1028, %v532
        %v1032 = vmul.f32 %v1028, %v533
        %v1033 = vadd.f32 %v1023, %v1029
        %v1034 = vadd.f32 %v1024, %v1030
        %v1035 = vadd.f32 %v1025, %v1031
        %v1036 = vadd.f32 %v1026, %v1032
        %s1037 = scalar_lea.vmem %s387, 64
        %v1038 = vld [vmem:[%s1037] sm:$0xff]
        %v1039 = vld [vmem:[%s1037 + $0x8] sm:$0xff]
        %v1040 = vld [vmem:[%s1037 + $0x10] sm:$0xff]
        %v1041 = vld [vmem:[%s1037 + $0x18] sm:$0xff]
        %v1042 = vxor.u32 %v1033, 2147483648
        %v1043 = vxor.u32 %v1034, 2147483648
        %v1044 = vxor.u32 %v1035, 2147483648
        %v1045 = vxor.u32 %v1036, 2147483648
        %v1046 = vmul.f32 %v1042, 1.442695
        %v1047 = vpow.pop %v1046
        %v1048 = vmul.f32 %v1043, 1.442695
        %v1049 = vpow.pop %v1048
        %v1050 = vmul.f32 %v1044, 1.442695
        %v1051 = vpow.pop %v1050
        %v1052 = vmul.f32 %v1045, 1.442695
        %v1053 = vpow.pop %v1052
        %v1054 = vadd.f32 %v1047, 1.0
        %v1055 = vadd.f32 %v1049, 1.0
        %v1056 = vadd.f32 %v1051, 1.0
        %v1057 = vadd.f32 %v1053, 1.0
        %v1058 = vrcp.pop %v1054
        %v1059 = vmul.f32 1.0, %v1058
        %v1060 = vrcp.pop %v1055
        %v1061 = vmul.f32 1.0, %v1060
        %v1062 = vrcp.pop %v1056
        %v1063 = vmul.f32 1.0, %v1062
        %v1064 = vrcp.pop %v1057
        %v1065 = vmul.f32 1.0, %v1064
        %v1066 = vmul.f32 %v1038, %v1059
        %v1067 = vmul.f32 %v1039, %v1061
        %v1068 = vmul.f32 %v1040, %v1063
        %v1069 = vmul.f32 %v1041, %v1065
        %s1070 = scalar_lea.vmem %s378, 64 [#allocation7]
        %1071 = vst.msk [vmem:[%s1070] sm:$0xff] %vm708, %v1066
        %1072 = vst.msk [vmem:[%s1070 + $0x8] sm:$0xff] %vm708, %v1067
        %1073 = vst.msk [vmem:[%s1070 + $0x10] sm:$0xff] %vm708, %v1068
        %1074 = vst.msk [vmem:[%s1070 + $0x18] sm:$0xff] %vm708, %v1069
        %s1075 = sld [smem:[#allocation5 + $0x3]]
        %v1076 = vstv %s1075
        %1077 = vrot.lane.b32.xlu0 %v500, 119
        %v1078 = vpop.permute.xlu0 %1077
        %1079 = vrot.lane.b32.xlu0 %v505, 119
        %v1080 = vpop.permute.xlu0 %1079
        %1081 = vrot.lane.b32.xlu0 %v510, 119
        %v1082 = vpop.permute.xlu0 %1081
        %1083 = vrot.lane.b32.xlu0 %v515, 119
        %v1084 = vpop.permute.xlu0 %1083
        %v1085 = vsel %vm416, %v1078, 0
        %v1087 = vsel %vm416, %v1080, 0
        %v1089 = vsel %vm416, %v1082, 0
        %v1091 = vsel %vm416, %v1084, 0
        %1093 = vmatprep.subr.mxu0 0.0
        %1094 = vmatpush1.msra.mxu0 %v549
        %1095 = vmatprep.subr.mxu0 0.0
        %1096 = vmatpush1.msra.mxu0 0.0
        %1097 = vmatprep.subr.mxu0 0.0
        %1098 = vmatpush1.msra.mxu0 0.0
        %1099 = vmatprep.subr.mxu0 0.0
        %1100 = vmatpush1.msra.mxu0 0.0
        %1101 = vmatprep.subr.mxu0 0.0
        %1102 = vmatpush1.msra.mxu0 0.0
        %1103 = vmatprep.subr.mxu0 0.0
        %1104 = vmatpush1.msra.mxu0 0.0
        %1105 = vmatprep.subr.mxu0 0.0
        %1106 = vmatpush1.msra.mxu0 0.0
        %1107 = vmatprep.subr.mxu0 0.0
        %1108 = vmatpush1.msra.mxu0 0.0
        %1109 = vmatprep.subr.mxu0 0.0
        %1110 = vmatpush1.msra.mxu0 0.0
        %1111 = vmatprep.subr.mxu0 0.0
        %1112 = vmatpush1.msra.mxu0 0.0
        %1113 = vmatprep.subr.mxu0 0.0
        %1114 = vmatpush1.msra.mxu0 0.0
        %1115 = vmatprep.subr.mxu0 0.0
        %1116 = vmatpush1.msra.mxu0 0.0
        %1117 = vmatprep.subr.mxu0 0.0
        %1118 = vmatpush1.msra.mxu0 0.0
        %1119 = vmatprep.subr.mxu0 0.0
        %1120 = vmatpush1.msra.mxu0 0.0
        %1121 = vmatprep.subr.mxu0 0.0
        %1122 = vmatpush1.msra.mxu0 0.0
        %1123 = vmatprep.subr.mxu0 0.0
        %1124 = vmatpush1.msra.mxu0 0.0
        %1125 = vmatprep.subr.mxu0 0.0
        %1126 = vmatpush1.msra.mxu0 0.0
        %1127 = vmatprep.subr.mxu0 0.0
        %1128 = vmatpush1.msra.mxu0 0.0
        %1129 = vmatprep.subr.mxu0 0.0
        %1130 = vmatpush1.msra.mxu0 0.0
        %1131 = vmatprep.subr.mxu0 0.0
        %1132 = vmatpush1.msra.mxu0 0.0
        %1133 = vmatprep.subr.mxu0 0.0
        %1134 = vmatpush1.msra.mxu0 0.0
        %1135 = vmatprep.subr.mxu0 0.0
        %1136 = vmatpush1.msra.mxu0 0.0
        %1137 = vmatprep.subr.mxu0 0.0
        %1138 = vmatpush1.msra.mxu0 0.0
        %1139 = vmatprep.subr.mxu0 0.0
        %1140 = vmatpush1.msra.mxu0 0.0
        %1141 = vmatprep.subr.mxu0 0.0
        %1142 = vmatpush1.msra.mxu0 0.0
        %1143 = vmatprep.subr.mxu0 0.0
        %1144 = vmatpush1.msra.mxu0 0.0
        %1145 = vmatprep.subr.mxu0 0.0
        %1146 = vmatpush1.msra.mxu0 0.0
        %1147 = vmatprep.subr.mxu0 0.0
        %1148 = vmatpush1.msra.mxu0 0.0
        %1149 = vmatprep.subr.mxu0 0.0
        %1150 = vmatpush1.msra.mxu0 0.0
        %1151 = vmatprep.subr.mxu0 0.0
        %1152 = vmatpush1.msra.mxu0 0.0
        %1153 = vmatprep.subr.mxu0 0.0
        %1154 = vmatpush1.msra.mxu0 0.0
        %1155 = vmatprep.subr.mxu0 0.0
        %1156 = vmatpush1.msra.mxu0 0.0
        %1157 = vmatprep.mubr.f32.mxu0 0.0
        %1158 = vmatmul.mubr.f32.gmra.mrb[0].mxu0 %v1085
        %v1159 = vpop.f32.mrb[0].mxu0
        %v1160 = vadd.f32 %v1076, %v1159
        %v1161 = vpop.f32.mrb[0].mxu0
        %1162 = vmatprep.mubr.f32.mxu0 0.0
        %1163 = vmatmul.mubr.f32.gmra.mrb[0].mxu0 %v1087
        %v1164 = vpop.f32.mrb[0].mxu0
        %v1165 = vadd.f32 %v1076, %v1164
        %v1166 = vpop.f32.mrb[0].mxu0
        %1167 = vmatprep.mubr.f32.mxu0 0.0
        %1168 = vmatmul.mubr.f32.gmra.mrb[0].mxu0 %v1089
        %v1169 = vpop.f32.mrb[0].mxu0
        %v1170 = vadd.f32 %v1076, %v1169
        %v1171 = vpop.f32.mrb[0].mxu0
        %1172 = vmatprep.mubr.f32.mxu0 0.0
        %1173 = vmatmul.mubr.f32.gmra.mrb[0].mxu0 %v1091
        %v1174 = vpop.f32.mrb[0].mxu0
        %v1175 = vadd.f32 %v1076, %v1174
        %v1176 = vpop.f32.mrb[0].mxu0
        %1177 = vdwg.mxu0
        %s1178 = sld [smem:[#allocation2 + $0xc]]
        %v1179 = vstv %s1178
        %v1180 = vmul.f32 %v1179, %v518
        %v1181 = vmul.f32 %v1179, %v519
        %v1182 = vmul.f32 %v1179, %v520
        %v1183 = vmul.f32 %v1179, %v521
        %v1184 = vadd.f32 %v1160, %v1180
        %v1185 = vadd.f32 %v1165, %v1181
        %v1186 = vadd.f32 %v1170, %v1182
        %v1187 = vadd.f32 %v1175, %v1183
        %s1188 = sld [smem:[#allocation2 + $0xd]]
        %v1189 = vstv %s1188
        %v1190 = vmul.f32 %v1189, %v522
        %v1191 = vmul.f32 %v1189, %v523
        %v1192 = vmul.f32 %v1189, %v524
        %v1193 = vmul.f32 %v1189, %v525
        %v1194 = vadd.f32 %v1184, %v1190
        %v1195 = vadd.f32 %v1185, %v1191
        %v1196 = vadd.f32 %v1186, %v1192
        %v1197 = vadd.f32 %v1187, %v1193
        %s1198 = sld [smem:[#allocation2 + $0xe]]
        %v1199 = vstv %s1198
        %v1200 = vmul.f32 %v1199, %v526
        %v1201 = vmul.f32 %v1199, %v527
        %v1202 = vmul.f32 %v1199, %v528
        %v1203 = vmul.f32 %v1199, %v529
        %v1204 = vadd.f32 %v1194, %v1200
        %v1205 = vadd.f32 %v1195, %v1201
        %v1206 = vadd.f32 %v1196, %v1202
        %v1207 = vadd.f32 %v1197, %v1203
        %s1208 = sld [smem:[#allocation2 + $0xf]]
        %v1209 = vstv %s1208
        %v1210 = vmul.f32 %v1209, %v530
        %v1211 = vmul.f32 %v1209, %v531
        %v1212 = vmul.f32 %v1209, %v532
        %v1213 = vmul.f32 %v1209, %v533
        %v1214 = vadd.f32 %v1204, %v1210
        %v1215 = vadd.f32 %v1205, %v1211
        %v1216 = vadd.f32 %v1206, %v1212
        %v1217 = vadd.f32 %v1207, %v1213
        %s1218 = scalar_lea.vmem %s387, 96
        %v1219 = vld [vmem:[%s1218] sm:$0xff]
        %v1220 = vld [vmem:[%s1218 + $0x8] sm:$0xff]
        %v1221 = vld [vmem:[%s1218 + $0x10] sm:$0xff]
        %v1222 = vld [vmem:[%s1218 + $0x18] sm:$0xff]
        %v1223 = vxor.u32 %v1214, 2147483648
        %v1224 = vxor.u32 %v1215, 2147483648
        %v1225 = vxor.u32 %v1216, 2147483648
        %v1226 = vxor.u32 %v1217, 2147483648
        %v1227 = vmul.f32 %v1223, 1.442695
        %v1228 = vpow.pop %v1227
        %v1229 = vmul.f32 %v1224, 1.442695
        %v1230 = vpow.pop %v1229
        %v1231 = vmul.f32 %v1225, 1.442695
        %v1232 = vpow.pop %v1231
        %v1233 = vmul.f32 %v1226, 1.442695
        %v1234 = vpow.pop %v1233
        %v1235 = vadd.f32 %v1228, 1.0
        %v1236 = vadd.f32 %v1230, 1.0
        %v1237 = vadd.f32 %v1232, 1.0
        %v1238 = vadd.f32 %v1234, 1.0
        %v1239 = vrcp.pop %v1235
        %v1240 = vmul.f32 1.0, %v1239
        %v1241 = vrcp.pop %v1236
        %v1242 = vmul.f32 1.0, %v1241
        %v1243 = vrcp.pop %v1237
        %v1244 = vmul.f32 1.0, %v1243
        %v1245 = vrcp.pop %v1238
        %v1246 = vmul.f32 1.0, %v1245
        %v1247 = vmul.f32 %v1219, %v1240
        %v1248 = vmul.f32 %v1220, %v1242
        %v1249 = vmul.f32 %v1221, %v1244
        %v1250 = vmul.f32 %v1222, %v1246
        %s1251 = scalar_lea.vmem %s378, 96 [#allocation7]
        %1252 = vst.msk [vmem:[%s1251] sm:$0xff] %vm708, %v1247
        %1253 = vst.msk [vmem:[%s1251 + $0x8] sm:$0xff] %vm708, %v1248
        %1254 = vst.msk [vmem:[%s1251 + $0x10] sm:$0xff] %vm708, %v1249
        %1255 = vst.msk [vmem:[%s1251 + $0x18] sm:$0xff] %vm708, %v1250
        %s1256 = sld [smem:[#allocation5 + $0x4]]
        %v1257 = vstv %s1256
        %1258 = vrot.lane.b32.xlu0 %v500, 116
        %v1259 = vpop.permute.xlu0 %1258
        %1260 = vrot.lane.b32.xlu0 %v505, 116
        %v1261 = vpop.permute.xlu0 %1260
        %1262 = vrot.lane.b32.xlu0 %v510, 116
        %v1263 = vpop.permute.xlu0 %1262
        %1264 = vrot.lane.b32.xlu0 %v515, 116
        %v1265 = vpop.permute.xlu0 %1264
        %v1266 = vsel %vm416, %v1259, 0
        %v1268 = vsel %vm416, %v1261, 0
        %v1270 = vsel %vm416, %v1263, 0
        %v1272 = vsel %vm416, %v1265, 0
        %1274 = vmatprep.subr.mxu0 0.0
        %1275 = vmatpush1.msra.mxu0 %v549
        %1276 = vmatprep.subr.mxu0 0.0
        %1277 = vmatpush1.msra.mxu0 0.0
        %1278 = vmatprep.subr.mxu0 0.0
        %1279 = vmatpush1.msra.mxu0 0.0
        %1280 = vmatprep.subr.mxu0 0.0
        %1281 = vmatpush1.msra.mxu0 0.0
        %1282 = vmatprep.subr.mxu0 0.0
        %1283 = vmatpush1.msra.mxu0 0.0
        %1284 = vmatprep.subr.mxu0 0.0
        %1285 = vmatpush1.msra.mxu0 0.0
        %1286 = vmatprep.subr.mxu0 0.0
        %1287 = vmatpush1.msra.mxu0 0.0
        %1288 = vmatprep.subr.mxu0 0.0
        %1289 = vmatpush1.msra.mxu0 0.0
        %1290 = vmatprep.subr.mxu0 0.0
        %1291 = vmatpush1.msra.mxu0 0.0
        %1292 = vmatprep.subr.mxu0 0.0
        %1293 = vmatpush1.msra.mxu0 0.0
        %1294 = vmatprep.subr.mxu0 0.0
        %1295 = vmatpush1.msra.mxu0 0.0
        %1296 = vmatprep.subr.mxu0 0.0
        %1297 = vmatpush1.msra.mxu0 0.0
        %1298 = vmatprep.subr.mxu0 0.0
        %1299 = vmatpush1.msra.mxu0 0.0
        %1300 = vmatprep.subr.mxu0 0.0
        %1301 = vmatpush1.msra.mxu0 0.0
        %1302 = vmatprep.subr.mxu0 0.0
        %1303 = vmatpush1.msra.mxu0 0.0
        %1304 = vmatprep.subr.mxu0 0.0
        %1305 = vmatpush1.msra.mxu0 0.0
        %1306 = vmatprep.subr.mxu0 0.0
        %1307 = vmatpush1.msra.mxu0 0.0
        %1308 = vmatprep.subr.mxu0 0.0
        %1309 = vmatpush1.msra.mxu0 0.0
        %1310 = vmatprep.subr.mxu0 0.0
        %1311 = vmatpush1.msra.mxu0 0.0
        %1312 = vmatprep.subr.mxu0 0.0
        %1313 = vmatpush1.msra.mxu0 0.0
        %1314 = vmatprep.subr.mxu0 0.0
        %1315 = vmatpush1.msra.mxu0 0.0
        %1316 = vmatprep.subr.mxu0 0.0
        %1317 = vmatpush1.msra.mxu0 0.0
        %1318 = vmatprep.subr.mxu0 0.0
        %1319 = vmatpush1.msra.mxu0 0.0
        %1320 = vmatprep.subr.mxu0 0.0
        %1321 = vmatpush1.msra.mxu0 0.0
        %1322 = vmatprep.subr.mxu0 0.0
        %1323 = vmatpush1.msra.mxu0 0.0
        %1324 = vmatprep.subr.mxu0 0.0
        %1325 = vmatpush1.msra.mxu0 0.0
        %1326 = vmatprep.subr.mxu0 0.0
        %1327 = vmatpush1.msra.mxu0 0.0
        %1328 = vmatprep.subr.mxu0 0.0
        %1329 = vmatpush1.msra.mxu0 0.0
        %1330 = vmatprep.subr.mxu0 0.0
        %1331 = vmatpush1.msra.mxu0 0.0
        %1332 = vmatprep.subr.mxu0 0.0
        %1333 = vmatpush1.msra.mxu0 0.0
        %1334 = vmatprep.subr.mxu0 0.0
        %1335 = vmatpush1.msra.mxu0 0.0
        %1336 = vmatprep.subr.mxu0 0.0
        %1337 = vmatpush1.msra.mxu0 0.0
        %1338 = vmatprep.mubr.f32.mxu0 0.0
        %1339 = vmatmul.mubr.f32.gmra.mrb[0].mxu0 %v1266
        %v1340 = vpop.f32.mrb[0].mxu0
        %v1341 = vadd.f32 %v1257, %v1340
        %v1342 = vpop.f32.mrb[0].mxu0
        %1343 = vmatprep.mubr.f32.mxu0 0.0
        %1344 = vmatmul.mubr.f32.gmra.mrb[0].mxu0 %v1268
        %v1345 = vpop.f32.mrb[0].mxu0
        %v1346 = vadd.f32 %v1257, %v1345
        %v1347 = vpop.f32.mrb[0].mxu0
        %1348 = vmatprep.mubr.f32.mxu0 0.0
        %1349 = vmatmul.mubr.f32.gmra.mrb[0].mxu0 %v1270
        %v1350 = vpop.f32.mrb[0].mxu0
        %v1351 = vadd.f32 %v1257, %v1350
        %v1352 = vpop.f32.mrb[0].mxu0
        %1353 = vmatprep.mubr.f32.mxu0 0.0
        %1354 = vmatmul.mubr.f32.gmra.mrb[0].mxu0 %v1272
        %v1355 = vpop.f32.mrb[0].mxu0
        %v1356 = vadd.f32 %v1257, %v1355
        %v1357 = vpop.f32.mrb[0].mxu0
        %1358 = vdwg.mxu0
        %s1359 = sld [smem:[#allocation2 + $0x10]]
        %v1360 = vstv %s1359
        %v1361 = vmul.f32 %v1360, %v518
        %v1362 = vmul.f32 %v1360, %v519
        %v1363 = vmul.f32 %v1360, %v520
        %v1364 = vmul.f32 %v1360, %v521
        %v1365 = vadd.f32 %v1341, %v1361
        %v1366 = vadd.f32 %v1346, %v1362
        %v1367 = vadd.f32 %v1351, %v1363
        %v1368 = vadd.f32 %v1356, %v1364
        %s1369 = sld [smem:[#allocation2 + $0x11]]
        %v1370 = vstv %s1369
        %v1371 = vmul.f32 %v1370, %v522
        %v1372 = vmul.f32 %v1370, %v523
        %v1373 = vmul.f32 %v1370, %v524
        %v1374 = vmul.f32 %v1370, %v525
        %v1375 = vadd.f32 %v1365, %v1371
        %v1376 = vadd.f32 %v1366, %v1372
        %v1377 = vadd.f32 %v1367, %v1373
        %v1378 = vadd.f32 %v1368, %v1374
        %s1379 = sld [smem:[#allocation2 + $0x12]]
        %v1380 = vstv %s1379
        %v1381 = vmul.f32 %v1380, %v526
        %v1382 = vmul.f32 %v1380, %v527
        %v1383 = vmul.f32 %v1380, %v528
        %v1384 = vmul.f32 %v1380, %v529
        %v1385 = vadd.f32 %v1375, %v1381
        %v1386 = vadd.f32 %v1376, %v1382
        %v1387 = vadd.f32 %v1377, %v1383
        %v1388 = vadd.f32 %v1378, %v1384
        %s1389 = sld [smem:[#allocation2 + $0x13]]
        %v1390 = vstv %s1389
        %v1391 = vmul.f32 %v1390, %v530
        %v1392 = vmul.f32 %v1390, %v531
        %v1393 = vmul.f32 %v1390, %v532
        %v1394 = vmul.f32 %v1390, %v533
        %v1395 = vadd.f32 %v1385, %v1391
        %v1396 = vadd.f32 %v1386, %v1392
        %v1397 = vadd.f32 %v1387, %v1393
        %v1398 = vadd.f32 %v1388, %v1394
        %s1399 = scalar_lea.vmem %s387, 128
        %v1400 = vld [vmem:[%s1399] sm:$0xff]
        %v1401 = vld [vmem:[%s1399 + $0x8] sm:$0xff]
        %v1402 = vld [vmem:[%s1399 + $0x10] sm:$0xff]
        %v1403 = vld [vmem:[%s1399 + $0x18] sm:$0xff]
        %v1404 = vxor.u32 %v1395, 2147483648
        %v1405 = vxor.u32 %v1396, 2147483648
        %v1406 = vxor.u32 %v1397, 2147483648
        %v1407 = vxor.u32 %v1398, 2147483648
        %v1408 = vmul.f32 %v1404, 1.442695
        %v1409 = vpow.pop %v1408
        %v1410 = vmul.f32 %v1405, 1.442695
        %v1411 = vpow.pop %v1410
        %v1412 = vmul.f32 %v1406, 1.442695
        %v1413 = vpow.pop %v1412
        %v1414 = vmul.f32 %v1407, 1.442695
        %v1415 = vpow.pop %v1414
        %v1416 = vadd.f32 %v1409, 1.0
        %v1417 = vadd.f32 %v1411, 1.0
        %v1418 = vadd.f32 %v1413, 1.0
        %v1419 = vadd.f32 %v1415, 1.0
        %v1420 = vrcp.pop %v1416
        %v1421 = vmul.f32 1.0, %v1420
        %v1422 = vrcp.pop %v1417
        %v1423 = vmul.f32 1.0, %v1422
        %v1424 = vrcp.pop %v1418
        %v1425 = vmul.f32 1.0, %v1424
        %v1426 = vrcp.pop %v1419
        %v1427 = vmul.f32 1.0, %v1426
        %v1428 = vmul.f32 %v1400, %v1421
        %v1429 = vmul.f32 %v1401, %v1423
        %v1430 = vmul.f32 %v1402, %v1425
        %v1431 = vmul.f32 %v1403, %v1427
        %s1432 = scalar_lea.vmem %s378, 128 [#allocation7]
        %1433 = vst.msk [vmem:[%s1432] sm:$0xff] %vm708, %v1428
        %1434 = vst.msk [vmem:[%s1432 + $0x8] sm:$0xff] %vm708, %v1429
        %1435 = vst.msk [vmem:[%s1432 + $0x10] sm:$0xff] %vm708, %v1430
        %1436 = vst.msk [vmem:[%s1432 + $0x18] sm:$0xff] %vm708, %v1431
        %s1437 = sld [smem:[#allocation5 + $0x5]]
        %v1438 = vstv %s1437
        %1439 = vrot.lane.b32.xlu0 %v500, 113
        %v1440 = vpop.permute.xlu0 %1439
        %1441 = vrot.lane.b32.xlu0 %v505, 113
        %v1442 = vpop.permute.xlu0 %1441
        %1443 = vrot.lane.b32.xlu0 %v510, 113
        %v1444 = vpop.permute.xlu0 %1443
        %1445 = vrot.lane.b32.xlu0 %v515, 113
        %v1446 = vpop.permute.xlu0 %1445
        %v1447 = vsel %vm416, %v1440, 0
        %v1449 = vsel %vm416, %v1442, 0
        %v1451 = vsel %vm416, %v1444, 0
        %v1453 = vsel %vm416, %v1446, 0
        %1455 = vmatprep.subr.mxu0 0.0
        %1456 = vmatpush1.msra.mxu0 %v549
        %1457 = vmatprep.subr.mxu0 0.0
        %1458 = vmatpush1.msra.mxu0 0.0
        %1459 = vmatprep.subr.mxu0 0.0
        %1460 = vmatpush1.msra.mxu0 0.0
        %1461 = vmatprep.subr.mxu0 0.0
        %1462 = vmatpush1.msra.mxu0 0.0
        %1463 = vmatprep.subr.mxu0 0.0
        %1464 = vmatpush1.msra.mxu0 0.0
        %1465 = vmatprep.subr.mxu0 0.0
        %1466 = vmatpush1.msra.mxu0 0.0
        %1467 = vmatprep.subr.mxu0 0.0
        %1468 = vmatpush1.msra.mxu0 0.0
        %1469 = vmatprep.subr.mxu0 0.0
        %1470 = vmatpush1.msra.mxu0 0.0
        %1471 = vmatprep.subr.mxu0 0.0
        %1472 = vmatpush1.msra.mxu0 0.0
        %1473 = vmatprep.subr.mxu0 0.0
        %1474 = vmatpush1.msra.mxu0 0.0
        %1475 = vmatprep.subr.mxu0 0.0
        %1476 = vmatpush1.msra.mxu0 0.0
        %1477 = vmatprep.subr.mxu0 0.0
        %1478 = vmatpush1.msra.mxu0 0.0
        %1479 = vmatprep.subr.mxu0 0.0
        %1480 = vmatpush1.msra.mxu0 0.0
        %1481 = vmatprep.subr.mxu0 0.0
        %1482 = vmatpush1.msra.mxu0 0.0
        %1483 = vmatprep.subr.mxu0 0.0
        %1484 = vmatpush1.msra.mxu0 0.0
        %1485 = vmatprep.subr.mxu0 0.0
        %1486 = vmatpush1.msra.mxu0 0.0
        %1487 = vmatprep.subr.mxu0 0.0
        %1488 = vmatpush1.msra.mxu0 0.0
        %1489 = vmatprep.subr.mxu0 0.0
        %1490 = vmatpush1.msra.mxu0 0.0
        %1491 = vmatprep.subr.mxu0 0.0
        %1492 = vmatpush1.msra.mxu0 0.0
        %1493 = vmatprep.subr.mxu0 0.0
        %1494 = vmatpush1.msra.mxu0 0.0
        %1495 = vmatprep.subr.mxu0 0.0
        %1496 = vmatpush1.msra.mxu0 0.0
        %1497 = vmatprep.subr.mxu0 0.0
        %1498 = vmatpush1.msra.mxu0 0.0
        %1499 = vmatprep.subr.mxu0 0.0
        %1500 = vmatpush1.msra.mxu0 0.0
        %1501 = vmatprep.subr.mxu0 0.0
        %1502 = vmatpush1.msra.mxu0 0.0
        %1503 = vmatprep.subr.mxu0 0.0
        %1504 = vmatpush1.msra.mxu0 0.0
        %1505 = vmatprep.subr.mxu0 0.0
        %1506 = vmatpush1.msra.mxu0 0.0
        %1507 = vmatprep.subr.mxu0 0.0
        %1508 = vmatpush1.msra.mxu0 0.0
        %1509 = vmatprep.subr.mxu0 0.0
        %1510 = vmatpush1.msra.mxu0 0.0
        %1511 = vmatprep.subr.mxu0 0.0
        %1512 = vmatpush1.msra.mxu0 0.0
        %1513 = vmatprep.subr.mxu0 0.0
        %1514 = vmatpush1.msra.mxu0 0.0
        %1515 = vmatprep.subr.mxu0 0.0
        %1516 = vmatpush1.msra.mxu0 0.0
        %1517 = vmatprep.subr.mxu0 0.0
        %1518 = vmatpush1.msra.mxu0 0.0
        %1519 = vmatprep.mubr.f32.mxu0 0.0
        %1520 = vmatmul.mubr.f32.gmra.mrb[0].mxu0 %v1447
        %v1521 = vpop.f32.mrb[0].mxu0
        %v1522 = vadd.f32 %v1438, %v1521
        %v1523 = vpop.f32.mrb[0].mxu0
        %1524 = vmatprep.mubr.f32.mxu0 0.0
        %1525 = vmatmul.mubr.f32.gmra.mrb[0].mxu0 %v1449
        %v1526 = vpop.f32.mrb[0].mxu0
        %v1527 = vadd.f32 %v1438, %v1526
        %v1528 = vpop.f32.mrb[0].mxu0
        %1529 = vmatprep.mubr.f32.mxu0 0.0
        %1530 = vmatmul.mubr.f32.gmra.mrb[0].mxu0 %v1451
        %v1531 = vpop.f32.mrb[0].mxu0
        %v1532 = vadd.f32 %v1438, %v1531
        %v1533 = vpop.f32.mrb[0].mxu0
        %1534 = vmatprep.mubr.f32.mxu0 0.0
        %1535 = vmatmul.mubr.f32.gmra.mrb[0].mxu0 %v1453
        %v1536 = vpop.f32.mrb[0].mxu0
        %v1537 = vadd.f32 %v1438, %v1536
        %v1538 = vpop.f32.mrb[0].mxu0
        %1539 = vdwg.mxu0
        %s1540 = sld [smem:[#allocation2 + $0x14]]
        %v1541 = vstv %s1540
        %v1542 = vmul.f32 %v1541, %v518
        %v1543 = vmul.f32 %v1541, %v519
        %v1544 = vmul.f32 %v1541, %v520
        %v1545 = vmul.f32 %v1541, %v521
        %v1546 = vadd.f32 %v1522, %v1542
        %v1547 = vadd.f32 %v1527, %v1543
        %v1548 = vadd.f32 %v1532, %v1544
        %v1549 = vadd.f32 %v1537, %v1545
        %s1550 = sld [smem:[#allocation2 + $0x15]]
        %v1551 = vstv %s1550
        %v1552 = vmul.f32 %v1551, %v522
        %v1553 = vmul.f32 %v1551, %v523
        %v1554 = vmul.f32 %v1551, %v524
        %v1555 = vmul.f32 %v1551, %v525
        %v1556 = vadd.f32 %v1546, %v1552
        %v1557 = vadd.f32 %v1547, %v1553
        %v1558 = vadd.f32 %v1548, %v1554
        %v1559 = vadd.f32 %v1549, %v1555
        %s1560 = sld [smem:[#allocation2 + $0x16]]
        %v1561 = vstv %s1560
        %v1562 = vmul.f32 %v1561, %v526
        %v1563 = vmul.f32 %v1561, %v527
        %v1564 = vmul.f32 %v1561, %v528
        %v1565 = vmul.f32 %v1561, %v529
        %v1566 = vadd.f32 %v1556, %v1562
        %v1567 = vadd.f32 %v1557, %v1563
        %v1568 = vadd.f32 %v1558, %v1564
        %v1569 = vadd.f32 %v1559, %v1565
        %s1570 = sld [smem:[#allocation2 + $0x17]]
        %v1571 = vstv %s1570
        %v1572 = vmul.f32 %v1571, %v530
        %v1573 = vmul.f32 %v1571, %v531
        %v1574 = vmul.f32 %v1571, %v532
        %v1575 = vmul.f32 %v1571, %v533
        %v1576 = vadd.f32 %v1566, %v1572
        %v1577 = vadd.f32 %v1567, %v1573
        %v1578 = vadd.f32 %v1568, %v1574
        %v1579 = vadd.f32 %v1569, %v1575
        %s1580 = scalar_lea.vmem %s387, 160
        %v1581 = vld [vmem:[%s1580] sm:$0xff]
        %v1582 = vld [vmem:[%s1580 + $0x8] sm:$0xff]
        %v1583 = vld [vmem:[%s1580 + $0x10] sm:$0xff]
        %v1584 = vld [vmem:[%s1580 + $0x18] sm:$0xff]
        %v1585 = vxor.u32 %v1576, 2147483648
        %v1586 = vxor.u32 %v1577, 2147483648
        %v1587 = vxor.u32 %v1578, 2147483648
        %v1588 = vxor.u32 %v1579, 2147483648
        %v1589 = vmul.f32 %v1585, 1.442695
        %v1590 = vpow.pop %v1589
        %v1591 = vmul.f32 %v1586, 1.442695
        %v1592 = vpow.pop %v1591
        %v1593 = vmul.f32 %v1587, 1.442695
        %v1594 = vpow.pop %v1593
        %v1595 = vmul.f32 %v1588, 1.442695
        %v1596 = vpow.pop %v1595
        %v1597 = vadd.f32 %v1590, 1.0
        %v1598 = vadd.f32 %v1592, 1.0
        %v1599 = vadd.f32 %v1594, 1.0
        %v1600 = vadd.f32 %v1596, 1.0
        %v1601 = vrcp.pop %v1597
        %v1602 = vmul.f32 1.0, %v1601
        %v1603 = vrcp.pop %v1598
        %v1604 = vmul.f32 1.0, %v1603
        %v1605 = vrcp.pop %v1599
        %v1606 = vmul.f32 1.0, %v1605
        %v1607 = vrcp.pop %v1600
        %v1608 = vmul.f32 1.0, %v1607
        %v1609 = vmul.f32 %v1581, %v1602
        %v1610 = vmul.f32 %v1582, %v1604
        %v1611 = vmul.f32 %v1583, %v1606
        %v1612 = vmul.f32 %v1584, %v1608
        %s1613 = scalar_lea.vmem %s378, 160 [#allocation7]
        %1614 = vst.msk [vmem:[%s1613] sm:$0xff] %vm708, %v1609
        %1615 = vst.msk [vmem:[%s1613 + $0x8] sm:$0xff] %vm708, %v1610
        %1616 = vst.msk [vmem:[%s1613 + $0x10] sm:$0xff] %vm708, %v1611
        %1617 = vst.msk [vmem:[%s1613 + $0x18] sm:$0xff] %vm708, %v1612
        %s1618 = sld [smem:[#allocation5 + $0x6]]
        %v1619 = vstv %s1618
        %1620 = vrot.lane.b32.xlu0 %v500, 110
        %v1621 = vpop.permute.xlu0 %1620
        %1622 = vrot.lane.b32.xlu0 %v505, 110
        %v1623 = vpop.permute.xlu0 %1622
        %1624 = vrot.lane.b32.xlu0 %v510, 110
        %v1625 = vpop.permute.xlu0 %1624
        %1626 = vrot.lane.b32.xlu0 %v515, 110
        %v1627 = vpop.permute.xlu0 %1626
        %v1628 = vsel %vm416, %v1621, 0
        %v1630 = vsel %vm416, %v1623, 0
        %v1632 = vsel %vm416, %v1625, 0
        %v1634 = vsel %vm416, %v1627, 0
        %1636 = vmatprep.subr.mxu0 0.0
        %1637 = vmatpush1.msra.mxu0 %v549
        %1638 = vmatprep.subr.mxu0 0.0
        %1639 = vmatpush1.msra.mxu0 0.0
        %1640 = vmatprep.subr.mxu0 0.0
        %1641 = vmatpush1.msra.mxu0 0.0
        %1642 = vmatprep.subr.mxu0 0.0
        %1643 = vmatpush1.msra.mxu0 0.0
        %1644 = vmatprep.subr.mxu0 0.0
        %1645 = vmatpush1.msra.mxu0 0.0
        %1646 = vmatprep.subr.mxu0 0.0
        %1647 = vmatpush1.msra.mxu0 0.0
        %1648 = vmatprep.subr.mxu0 0.0
        %1649 = vmatpush1.msra.mxu0 0.0
        %1650 = vmatprep.subr.mxu0 0.0
        %1651 = vmatpush1.msra.mxu0 0.0
        %1652 = vmatprep.subr.mxu0 0.0
        %1653 = vmatpush1.msra.mxu0 0.0
        %1654 = vmatprep.subr.mxu0 0.0
        %1655 = vmatpush1.msra.mxu0 0.0
        %1656 = vmatprep.subr.mxu0 0.0
        %1657 = vmatpush1.msra.mxu0 0.0
        %1658 = vmatprep.subr.mxu0 0.0
        %1659 = vmatpush1.msra.mxu0 0.0
        %1660 = vmatprep.subr.mxu0 0.0
        %1661 = vmatpush1.msra.mxu0 0.0
        %1662 = vmatprep.subr.mxu0 0.0
        %1663 = vmatpush1.msra.mxu0 0.0
        %1664 = vmatprep.subr.mxu0 0.0
        %1665 = vmatpush1.msra.mxu0 0.0
        %1666 = vmatprep.subr.mxu0 0.0
        %1667 = vmatpush1.msra.mxu0 0.0
        %1668 = vmatprep.subr.mxu0 0.0
        %1669 = vmatpush1.msra.mxu0 0.0
        %1670 = vmatprep.subr.mxu0 0.0
        %1671 = vmatpush1.msra.mxu0 0.0
        %1672 = vmatprep.subr.mxu0 0.0
        %1673 = vmatpush1.msra.mxu0 0.0
        %1674 = vmatprep.subr.mxu0 0.0
        %1675 = vmatpush1.msra.mxu0 0.0
        %1676 = vmatprep.subr.mxu0 0.0
        %1677 = vmatpush1.msra.mxu0 0.0
        %1678 = vmatprep.subr.mxu0 0.0
        %1679 = vmatpush1.msra.mxu0 0.0
        %1680 = vmatprep.subr.mxu0 0.0
        %1681 = vmatpush1.msra.mxu0 0.0
        %1682 = vmatprep.subr.mxu0 0.0
        %1683 = vmatpush1.msra.mxu0 0.0
        %1684 = vmatprep.subr.mxu0 0.0
        %1685 = vmatpush1.msra.mxu0 0.0
        %1686 = vmatprep.subr.mxu0 0.0
        %1687 = vmatpush1.msra.mxu0 0.0
        %1688 = vmatprep.subr.mxu0 0.0
        %1689 = vmatpush1.msra.mxu0 0.0
        %1690 = vmatprep.subr.mxu0 0.0
        %1691 = vmatpush1.msra.mxu0 0.0
        %1692 = vmatprep.subr.mxu0 0.0
        %1693 = vmatpush1.msra.mxu0 0.0
        %1694 = vmatprep.subr.mxu0 0.0
        %1695 = vmatpush1.msra.mxu0 0.0
        %1696 = vmatprep.subr.mxu0 0.0
        %1697 = vmatpush1.msra.mxu0 0.0
        %1698 = vmatprep.subr.mxu0 0.0
        %1699 = vmatpush1.msra.mxu0 0.0
        %1700 = vmatprep.mubr.f32.mxu0 0.0
        %1701 = vmatmul.mubr.f32.gmra.mrb[0].mxu0 %v1628
        %v1702 = vpop.f32.mrb[0].mxu0
        %v1703 = vadd.f32 %v1619, %v1702
        %v1704 = vpop.f32.mrb[0].mxu0
        %1705 = vmatprep.mubr.f32.mxu0 0.0
        %1706 = vmatmul.mubr.f32.gmra.mrb[0].mxu0 %v1630
        %v1707 = vpop.f32.mrb[0].mxu0
        %v1708 = vadd.f32 %v1619, %v1707
        %v1709 = vpop.f32.mrb[0].mxu0
        %1710 = vmatprep.mubr.f32.mxu0 0.0
        %1711 = vmatmul.mubr.f32.gmra.mrb[0].mxu0 %v1632
        %v1712 = vpop.f32.mrb[0].mxu0
        %v1713 = vadd.f32 %v1619, %v1712
        %v1714 = vpop.f32.mrb[0].mxu0
        %1715 = vmatprep.mubr.f32.mxu0 0.0
        %1716 = vmatmul.mubr.f32.gmra.mrb[0].mxu0 %v1634
        %v1717 = vpop.f32.mrb[0].mxu0
        %v1718 = vadd.f32 %v1619, %v1717
        %v1719 = vpop.f32.mrb[0].mxu0
        %1720 = vdwg.mxu0
        %s1721 = sld [smem:[#allocation2 + $0x18]]
        %v1722 = vstv %s1721
        %v1723 = vmul.f32 %v1722, %v518
        %v1724 = vmul.f32 %v1722, %v519
        %v1725 = vmul.f32 %v1722, %v520
        %v1726 = vmul.f32 %v1722, %v521
        %v1727 = vadd.f32 %v1703, %v1723
        %v1728 = vadd.f32 %v1708, %v1724
        %v1729 = vadd.f32 %v1713, %v1725
        %v1730 = vadd.f32 %v1718, %v1726
        %s1731 = sld [smem:[#allocation2 + $0x19]]
        %v1732 = vstv %s1731
        %v1733 = vmul.f32 %v1732, %v522
        %v1734 = vmul.f32 %v1732, %v523
        %v1735 = vmul.f32 %v1732, %v524
        %v1736 = vmul.f32 %v1732, %v525
        %v1737 = vadd.f32 %v1727, %v1733
        %v1738 = vadd.f32 %v1728, %v1734
        %v1739 = vadd.f32 %v1729, %v1735
        %v1740 = vadd.f32 %v1730, %v1736
        %s1741 = sld [smem:[#allocation2 + $0x1a]]
        %v1742 = vstv %s1741
        %v1743 = vmul.f32 %v1742, %v526
        %v1744 = vmul.f32 %v1742, %v527
        %v1745 = vmul.f32 %v1742, %v528
        %v1746 = vmul.f32 %v1742, %v529
        %v1747 = vadd.f32 %v1737, %v1743
        %v1748 = vadd.f32 %v1738, %v1744
        %v1749 = vadd.f32 %v1739, %v1745
        %v1750 = vadd.f32 %v1740, %v1746
        %s1751 = sld [smem:[#allocation2 + $0x1b]]
        %v1752 = vstv %s1751
        %v1753 = vmul.f32 %v1752, %v530
        %v1754 = vmul.f32 %v1752, %v531
        %v1755 = vmul.f32 %v1752, %v532
        %v1756 = vmul.f32 %v1752, %v533
        %v1757 = vadd.f32 %v1747, %v1753
        %v1758 = vadd.f32 %v1748, %v1754
        %v1759 = vadd.f32 %v1749, %v1755
        %v1760 = vadd.f32 %v1750, %v1756
        %s1761 = scalar_lea.vmem %s387, 192
        %v1762 = vld [vmem:[%s1761] sm:$0xff]
        %v1763 = vld [vmem:[%s1761 + $0x8] sm:$0xff]
        %v1764 = vld [vmem:[%s1761 + $0x10] sm:$0xff]
        %v1765 = vld [vmem:[%s1761 + $0x18] sm:$0xff]
        %v1766 = vxor.u32 %v1757, 2147483648
        %v1767 = vxor.u32 %v1758, 2147483648
        %v1768 = vxor.u32 %v1759, 2147483648
        %v1769 = vxor.u32 %v1760, 2147483648
        %v1770 = vmul.f32 %v1766, 1.442695
        %v1771 = vpow.pop %v1770
        %v1772 = vmul.f32 %v1767, 1.442695
        %v1773 = vpow.pop %v1772
        %v1774 = vmul.f32 %v1768, 1.442695
        %v1775 = vpow.pop %v1774
        %v1776 = vmul.f32 %v1769, 1.442695
        %v1777 = vpow.pop %v1776
        %v1778 = vadd.f32 %v1771, 1.0
        %v1779 = vadd.f32 %v1773, 1.0
        %v1780 = vadd.f32 %v1775, 1.0
        %v1781 = vadd.f32 %v1777, 1.0
        %v1782 = vrcp.pop %v1778
        %v1783 = vmul.f32 1.0, %v1782
        %v1784 = vrcp.pop %v1779
        %v1785 = vmul.f32 1.0, %v1784
        %v1786 = vrcp.pop %v1780
        %v1787 = vmul.f32 1.0, %v1786
        %v1788 = vrcp.pop %v1781
        %v1789 = vmul.f32 1.0, %v1788
        %v1790 = vmul.f32 %v1762, %v1783
        %v1791 = vmul.f32 %v1763, %v1785
        %v1792 = vmul.f32 %v1764, %v1787
        %v1793 = vmul.f32 %v1765, %v1789
        %s1794 = scalar_lea.vmem %s378, 192 [#allocation7]
        %1795 = vst.msk [vmem:[%s1794] sm:$0xff] %vm708, %v1790
        %1796 = vst.msk [vmem:[%s1794 + $0x8] sm:$0xff] %vm708, %v1791
        %1797 = vst.msk [vmem:[%s1794 + $0x10] sm:$0xff] %vm708, %v1792
        %1798 = vst.msk [vmem:[%s1794 + $0x18] sm:$0xff] %vm708, %v1793
        %s1799 = sld [smem:[#allocation5 + $0x7]]
        %v1800 = vstv %s1799
        %1801 = vrot.lane.b32.xlu0 %v500, 107
        %v1802 = vpop.permute.xlu0 %1801
        %1803 = vrot.lane.b32.xlu0 %v505, 107
        %v1804 = vpop.permute.xlu0 %1803
        %1805 = vrot.lane.b32.xlu0 %v510, 107
        %v1806 = vpop.permute.xlu0 %1805
        %1807 = vrot.lane.b32.xlu0 %v515, 107
        %v1808 = vpop.permute.xlu0 %1807
        %v1809 = vsel %vm416, %v1802, 0
        %v1811 = vsel %vm416, %v1804, 0
        %v1813 = vsel %vm416, %v1806, 0
        %v1815 = vsel %vm416, %v1808, 0
        %1817 = vmatprep.subr.mxu0 0.0
        %1818 = vmatpush1.msra.mxu0 %v549
        %1819 = vmatprep.subr.mxu0 0.0
        %1820 = vmatpush1.msra.mxu0 0.0
        %1821 = vmatprep.subr.mxu0 0.0
        %1822 = vmatpush1.msra.mxu0 0.0
        %1823 = vmatprep.subr.mxu0 0.0
        %1824 = vmatpush1.msra.mxu0 0.0
        %1825 = vmatprep.subr.mxu0 0.0
        %1826 = vmatpush1.msra.mxu0 0.0
        %1827 = vmatprep.subr.mxu0 0.0
        %1828 = vmatpush1.msra.mxu0 0.0
        %1829 = vmatprep.subr.mxu0 0.0
        %1830 = vmatpush1.msra.mxu0 0.0
        %1831 = vmatprep.subr.mxu0 0.0
        %1832 = vmatpush1.msra.mxu0 0.0
        %1833 = vmatprep.subr.mxu0 0.0
        %1834 = vmatpush1.msra.mxu0 0.0
        %1835 = vmatprep.subr.mxu0 0.0
        %1836 = vmatpush1.msra.mxu0 0.0
        %1837 = vmatprep.subr.mxu0 0.0
        %1838 = vmatpush1.msra.mxu0 0.0
        %1839 = vmatprep.subr.mxu0 0.0
        %1840 = vmatpush1.msra.mxu0 0.0
        %1841 = vmatprep.subr.mxu0 0.0
        %1842 = vmatpush1.msra.mxu0 0.0
        %1843 = vmatprep.subr.mxu0 0.0
        %1844 = vmatpush1.msra.mxu0 0.0
        %1845 = vmatprep.subr.mxu0 0.0
        %1846 = vmatpush1.msra.mxu0 0.0
        %1847 = vmatprep.subr.mxu0 0.0
        %1848 = vmatpush1.msra.mxu0 0.0
        %1849 = vmatprep.subr.mxu0 0.0
        %1850 = vmatpush1.msra.mxu0 0.0
        %1851 = vmatprep.subr.mxu0 0.0
        %1852 = vmatpush1.msra.mxu0 0.0
        %1853 = vmatprep.subr.mxu0 0.0
        %1854 = vmatpush1.msra.mxu0 0.0
        %1855 = vmatprep.subr.mxu0 0.0
        %1856 = vmatpush1.msra.mxu0 0.0
        %1857 = vmatprep.subr.mxu0 0.0
        %1858 = vmatpush1.msra.mxu0 0.0
        %1859 = vmatprep.subr.mxu0 0.0
        %1860 = vmatpush1.msra.mxu0 0.0
        %1861 = vmatprep.subr.mxu0 0.0
        %1862 = vmatpush1.msra.mxu0 0.0
        %1863 = vmatprep.subr.mxu0 0.0
        %1864 = vmatpush1.msra.mxu0 0.0
        %1865 = vmatprep.subr.mxu0 0.0
        %1866 = vmatpush1.msra.mxu0 0.0
        %1867 = vmatprep.subr.mxu0 0.0
        %1868 = vmatpush1.msra.mxu0 0.0
        %1869 = vmatprep.subr.mxu0 0.0
        %1870 = vmatpush1.msra.mxu0 0.0
        %1871 = vmatprep.subr.mxu0 0.0
        %1872 = vmatpush1.msra.mxu0 0.0
        %1873 = vmatprep.subr.mxu0 0.0
        %1874 = vmatpush1.msra.mxu0 0.0
        %1875 = vmatprep.subr.mxu0 0.0
        %1876 = vmatpush1.msra.mxu0 0.0
        %1877 = vmatprep.subr.mxu0 0.0
        %1878 = vmatpush1.msra.mxu0 0.0
        %1879 = vmatprep.subr.mxu0 0.0
        %1880 = vmatpush1.msra.mxu0 0.0
        %1881 = vmatprep.mubr.f32.mxu0 0.0
        %1882 = vmatmul.mubr.f32.gmra.mrb[0].mxu0 %v1809
        %v1883 = vpop.f32.mrb[0].mxu0
        %v1884 = vadd.f32 %v1800, %v1883
        %v1885 = vpop.f32.mrb[0].mxu0
        %1886 = vmatprep.mubr.f32.mxu0 0.0
        %1887 = vmatmul.mubr.f32.gmra.mrb[0].mxu0 %v1811
        %v1888 = vpop.f32.mrb[0].mxu0
        %v1889 = vadd.f32 %v1800, %v1888
        %v1890 = vpop.f32.mrb[0].mxu0
        %1891 = vmatprep.mubr.f32.mxu0 0.0
        %1892 = vmatmul.mubr.f32.gmra.mrb[0].mxu0 %v1813
        %v1893 = vpop.f32.mrb[0].mxu0
        %v1894 = vadd.f32 %v1800, %v1893
        %v1895 = vpop.f32.mrb[0].mxu0
        %1896 = vmatprep.mubr.f32.mxu0 0.0
        %1897 = vmatmul.mubr.f32.gmra.mrb[0].mxu0 %v1815
        %v1898 = vpop.f32.mrb[0].mxu0
        %v1899 = vadd.f32 %v1800, %v1898
        %v1900 = vpop.f32.mrb[0].mxu0
        %1901 = vdwg.mxu0
        %s1902 = sld [smem:[#allocation2 + $0x1c]]
        %v1903 = vstv %s1902
        %v1904 = vmul.f32 %v1903, %v518
        %v1905 = vmul.f32 %v1903, %v519
        %v1906 = vmul.f32 %v1903, %v520
        %v1907 = vmul.f32 %v1903, %v521
        %v1908 = vadd.f32 %v1884, %v1904
        %v1909 = vadd.f32 %v1889, %v1905
        %v1910 = vadd.f32 %v1894, %v1906
        %v1911 = vadd.f32 %v1899, %v1907
        %s1912 = sld [smem:[#allocation2 + $0x1d]]
        %v1913 = vstv %s1912
        %v1914 = vmul.f32 %v1913, %v522
        %v1915 = vmul.f32 %v1913, %v523
        %v1916 = vmul.f32 %v1913, %v524
        %v1917 = vmul.f32 %v1913, %v525
        %v1918 = vadd.f32 %v1908, %v1914
        %v1919 = vadd.f32 %v1909, %v1915
        %v1920 = vadd.f32 %v1910, %v1916
        %v1921 = vadd.f32 %v1911, %v1917
        %s1922 = sld [smem:[#allocation2 + $0x1e]]
        %v1923 = vstv %s1922
        %v1924 = vmul.f32 %v1923, %v526
        %v1925 = vmul.f32 %v1923, %v527
        %v1926 = vmul.f32 %v1923, %v528
        %v1927 = vmul.f32 %v1923, %v529
        %v1928 = vadd.f32 %v1918, %v1924
        %v1929 = vadd.f32 %v1919, %v1925
        %v1930 = vadd.f32 %v1920, %v1926
        %v1931 = vadd.f32 %v1921, %v1927
        %s1932 = sld [smem:[#allocation2 + $0x1f]]
        %v1933 = vstv %s1932
        %v1934 = vmul.f32 %v1933, %v530
        %v1935 = vmul.f32 %v1933, %v531
        %v1936 = vmul.f32 %v1933, %v532
        %v1937 = vmul.f32 %v1933, %v533
        %v1938 = vadd.f32 %v1928, %v1934
        %v1939 = vadd.f32 %v1929, %v1935
        %v1940 = vadd.f32 %v1930, %v1936
        %v1941 = vadd.f32 %v1931, %v1937
        %s1942 = scalar_lea.vmem %s387, 224
        %v1943 = vld [vmem:[%s1942] sm:$0xff]
        %v1944 = vld [vmem:[%s1942 + $0x8] sm:$0xff]
        %v1945 = vld [vmem:[%s1942 + $0x10] sm:$0xff]
        %v1946 = vld [vmem:[%s1942 + $0x18] sm:$0xff]
        %v1947 = vxor.u32 %v1938, 2147483648
        %v1948 = vxor.u32 %v1939, 2147483648
        %v1949 = vxor.u32 %v1940, 2147483648
        %v1950 = vxor.u32 %v1941, 2147483648
        %v1951 = vmul.f32 %v1947, 1.442695
        %v1952 = vpow.pop %v1951
        %v1953 = vmul.f32 %v1948, 1.442695
        %v1954 = vpow.pop %v1953
        %v1955 = vmul.f32 %v1949, 1.442695
        %v1956 = vpow.pop %v1955
        %v1957 = vmul.f32 %v1950, 1.442695
        %v1958 = vpow.pop %v1957
        %v1959 = vadd.f32 %v1952, 1.0
        %v1960 = vadd.f32 %v1954, 1.0
        %v1961 = vadd.f32 %v1956, 1.0
        %v1962 = vadd.f32 %v1958, 1.0
        %v1963 = vrcp.pop %v1959
        %v1964 = vmul.f32 1.0, %v1963
        %v1965 = vrcp.pop %v1960
        %v1966 = vmul.f32 1.0, %v1965
        %v1967 = vrcp.pop %v1961
        %v1968 = vmul.f32 1.0, %v1967
        %v1969 = vrcp.pop %v1962
        %v1970 = vmul.f32 1.0, %v1969
        %v1971 = vmul.f32 %v1943, %v1964
        %v1972 = vmul.f32 %v1944, %v1966
        %v1973 = vmul.f32 %v1945, %v1968
        %v1974 = vmul.f32 %v1946, %v1970
        %s1975 = scalar_lea.vmem %s378, 224 [#allocation7]
        %1976 = vst.msk [vmem:[%s1975] sm:$0xff] %vm708, %v1971
        %1977 = vst.msk [vmem:[%s1975 + $0x8] sm:$0xff] %vm708, %v1972
        %1978 = vst.msk [vmem:[%s1975 + $0x10] sm:$0xff] %vm708, %v1973
        %1979 = vst.msk [vmem:[%s1975 + $0x18] sm:$0xff] %vm708, %v1974
        %s1980 = sand.u32 %s216, 1
        %s1981 = scalar_lea.sflag [#allocation3], %s1980
        %s1982 = sand.u32 %s216, 1
        %s1983 = smul.addr %s1982, 256
        %s1984 = scalar_lea.vmem [#allocation7], %s1983
        // Predicated region
        $region57: #{esa_forward.9} parent=47 // pred_check
          %p1985 = pneg %p226
        $region58: #{esa_forward.9} parent=47 // pred_check_branch
          %1987 = sbr.rel (%p1985) target = $region60
        $region59: #{esa_forward.9} parent=47 // pred_region
          %s1988 = smul.u32 4, %s28
          %s1990 = ssub.s32 4096, 4096
          %1991 = vsyncadd %s1981, %s1990
          %s1992 = smul.addr %s27, 32
          %s1993 = sadd.s32 %s1988, %s1992
          %s1994 = smul.addr %s1993, 128
          %s1995 = scalar_lea.hbm %s7, %s1994
          %s1996 = sshll.u32 %s1984, 4
          %s1997 = int_to_ptr.vmem [resolvable:$true] %s1996
          %2002 = dma.vmem_to_hbm [thread:$0]  %s1997, 4096, %s1995, %s1981, 128, 128, 8
        $region60: #{esa_forward.9} parent=47 // pred_fallthru
          _
      $region48: #{esa_forward.9} parent=5 // pred_fallthru
        _
      %p2003 = scmp.le.s32.totalorder 2, %s18
      // Predicated region
      $region61: #{esa_forward.9} parent=5 // pred_check
        %p2004 = pneg %p2003
      $region62: #{esa_forward.9} parent=5 // pred_check_branch
        %2006 = sbr.rel (%p2004) target = $region64
      $region63: #{esa_forward.9} parent=5 // pred_region
        %s2007 = ssub.s32 %s18, 2
        // Predicated region
        $region65: #{esa_forward.9} parent=63 // pred_check
          %p2008 = pneg %p232
        $region66: #{esa_forward.9} parent=63 // pred_check_branch
          %2010 = sbr.rel (%p2008) target = $region68
        $region67: #{esa_forward.9} parent=63 // pred_region
          %s2011 = sand.u32 %s217, 1
          %s2012 = scalar_lea.sflag [#allocation3], %s2011
          %s2013 = sand.u32 %s217, 1
          %s2014 = smul.addr %s2013, 256
          %s2015 = scalar_lea.vmem [#allocation7], %s2014
          %2016 = dma.done %s2012, 4096
        $region68: #{esa_forward.9} parent=63 // pred_fallthru
          _
      $region64: #{esa_forward.9} parent=5 // pred_fallthru
        _
    $region6: #{esa_forward.9} parent=1 // loop_footer
      %s22 = sadd.s32 1, %s18
    $region7: #{esa_forward.9} parent=1 // loop_footer_branch
      %17 = sbr.rel target = $region3
    $region8: #{esa_forward.9} parent=1 // loop_exit
      _
    %2017 = vsyncpa [#allocation3], 1
    %s2018 = scalar_lea.sflag [#allocation3], 1
    %2019 = vsyncpa %s2018, 1
    %2020 = vsyncpa [#allocation4], 1
    %s2021 = scalar_lea.sflag [#allocation4], 1
    %2022 = vsyncpa %s2021, 1
    %2023 = vsyncpa [#allocation6], 1

</llo_original>
